<compile_context>
chip_gen: v7x
topology: tpu7x:2x2x1
jax: 0.10.0
libtpu: 0.0.40
codegen_flags: <defaults>
</compile_context>

<pallas_src>
import functools

import numpy as np

import jax
import jax.numpy as jnp
from jax.experimental import pallas as pl
from jax.experimental.pallas import tpu as pltpu


# ----------------------------------------------------------------------------
# Static network geometry (from the PyTorch module).
# ----------------------------------------------------------------------------
C0, C1, C2 = 3, 32, 64            # channels: input, conv1, conv2
KS, ST = 3, 2                     # conv kernel size / stride
H0 = W0 = 28                      # input spatial size (28 -> 13 -> 6, as fc1 needs)
H1 = W1 = (H0 - KS) // ST + 1     # 13
H2 = W2 = (H1 - KS) // ST + 1     # 6
FC1_IN = C2 * H2 * W2             # 2304
FC1_OUT = 128
FC2_OUT = 3
FC2_PAD = 128                     # fc2 padded to a lane-dense 128-wide store
K1 = C0 * KS * KS                 # 27
K1_PAD = 32                       # conv1 K padded to a sublane-friendly size
K2 = C1 * KS * KS                 # 288


def _round_up(n, m):
    return ((n + m - 1) // m) * m


# ----------------------------------------------------------------------------
# Fused forward kernel (grid=()): conv1+relu, conv2+relu, fc1+relu, fc2.
# ----------------------------------------------------------------------------
def _cnn_kernel(p1_ref, w1_ref, w2_ref, wf_ref, bias_ref, out_ref, *, bp):
    f32, bf16 = jnp.float32, jnp.bfloat16
    m2 = H2 * W2 * bp                       # rows per conv2-tap block (= a2 rows)

    b1 = bias_ref[0:1, 0:C1]                # packed biases, f32, one DMA
    b2 = bias_ref[1:2, 0:C2]
    bf1 = bias_ref[2:3, :]
    bf2 = bias_ref[3:4, :]

    # conv1 + ReLU over the fused (conv2-tap, oh2, ow2, b) patch rows: one GEMM.
    a1 = jnp.dot(p1_ref[...], w1_ref[...], preferred_element_type=f32)
    a1 = jnp.maximum(a1 + b1, 0.0).astype(bf16)                      # [9*m2, C1]

    # conv2: f32-accumulated matmuls over the 9 static, 16-row-aligned tap slices
    # of a1 (the stride-2 gather was folded into the host-side im2col row order).
    acc = jnp.dot(a1[0:m2, :], w2_ref[0:C1, :], preferred_element_type=f32)
    for t in range(1, KS * KS):
        acc = acc + jnp.dot(a1[t * m2:(t + 1) * m2, :],
                            w2_ref[t * C1:(t + 1) * C1, :],
                            preferred_element_type=f32)
    a2 = jnp.maximum(acc + b2, 0.0)                                  # [m2, C2] f32

    # fc1: f32-accumulated matmuls over the 36 sublane-aligned spatial slices of a2.
    # wf1's rows were pre-permuted to NHWC order, so this matches torch's NCHW flatten.
    h = jnp.dot(a2[0:bp, :].astype(bf16), wf_ref[0:C2, :],
                preferred_element_type=f32)
    for m in range(1, H2 * W2):
        h = h + jnp.dot(a2[m * bp:(m + 1) * bp, :].astype(bf16),
                        wf_ref[m * C2:(m + 1) * C2, :],
                        preferred_element_type=f32)
    h = jnp.maximum(h + bf1, 0.0).astype(bf16)                       # [bp, 128]

    # fc2 into a lane-dense, 128-wide padded store (real cols = 3, sliced outside).
    y = jnp.dot(h, wf_ref[FC1_IN:FC1_IN + FC2_PAD, :], preferred_element_type=f32)
    out_ref[...] = y + bf2


# ----------------------------------------------------------------------------
# Host-side (traced) im2col: conv1 patches pre-gathered in conv2's access order.
# ----------------------------------------------------------------------------
def _im2col_fused(x, bp):
    """x: [B, C0, 28, 28] f32 NCHW -> bf16 patch matrix [9*H2*W2*bp, K1_PAD].

    Row order is (conv2-tap t=kh*3+kw, oh2, ow2, b); columns are (cin, k1h, k1w).
    For conv2 tap (kh,kw) at output (oh2,ow2), the needed conv1 activation sits at
    (2*oh2+kh, 2*ow2+kw), whose conv1 patch covers input rows 4*oh2 + 2*kh + k1h
    and cols 4*ow2 + 2*kw + k1w.  Batch is zero-padded to bp rows per position so
    every in-kernel slice is sublane-aligned; padded rows only ever contaminate
    padded output rows, which are dropped."""
    B = x.shape[0]
    xp = jnp.pad(x, ((0, bp - B), (0, 0), (0, 0), (0, 0)))           # [bp, C0, 28, 28]
    xf = xp.reshape(bp, C0, H0 * W0)

    kh, kw = np.divmod(np.arange(KS * KS), KS)                       # conv2 taps
    k1h, k1w = np.divmod(np.arange(KS * KS), KS)                     # conv1 taps
    oh2, ow2 = np.meshgrid(np.arange(H2), np.arange(W2), indexing="ij")
    r = (ST * ST * oh2[None, :, :, None] + ST * kh[:, None, None, None]
         + k1h[None, None, None, :])                                 # [9, 6, 6, 9]
    c = (ST * ST * ow2[None, :, :, None] + ST * kw[:, None, None, None]
         + k1w[None, None, None, :])
    idx = r * W0 + c                                                 # static int array

    g = xf[:, :, idx]                                                # [bp, C0, 9, 6, 6, 9]
    g = g.transpose(2, 3, 4, 0, 1, 5)                                # [9, 6, 6, bp, C0, 9]
    p = g.reshape(KS * KS * H2 * W2 * bp, K1)                        # rows (t,oh2,ow2,b)
    p = jnp.pad(p, ((0, 0), (0, K1_PAD - K1)))
    return p.astype(jnp.bfloat16)


# ----------------------------------------------------------------------------
# One-time host-side weight repack (PyTorch layouts -> kernel layouts).
# ----------------------------------------------------------------------------
def prepare_params(params):
    # conv1: [Cout, Cin, kh, kw] -> rows (cin, kh, kw), cols Cout; K padded 27 -> 32.
    w1m = params["w1"].reshape(C1, K1).T
    w1m = jnp.pad(w1m, ((0, K1_PAD - K1), (0, 0))).astype(jnp.bfloat16)      # [32, 32]

    # conv2: [Cout, Cin, kh, kw] -> rows (kh, kw, cin), cols Cout. One packed array.
    w2m = params["w2"].transpose(2, 3, 1, 0).reshape(K2, C2).astype(jnp.bfloat16)  # [288,64]

    # fc1: permute weight rows from PyTorch's NCHW flatten (c*36 + m2) to the
    # kernel's NHWC flatten (m2*64 + c); fc2 transposed and lane-padded 3 -> 128.
    # Both packed into one bf16 array -> one DMA for all FC weights.
    wf1p = params["wf1"].reshape(FC1_OUT, C2, H2 * W2).transpose(2, 1, 0)
    wf1p = wf1p.reshape(FC1_IN, FC1_OUT)                                     # [2304, 128]
    wf2p = jnp.pad(params["wf2"].T, ((0, 0), (0, FC2_PAD - FC2_OUT)))        # [128, 128]
    wf = jnp.concatenate([wf1p, wf2p], axis=0).astype(jnp.bfloat16)          # [2432, 128]

    # All biases packed into one f32 [4, 128] array (1 DMA instead of 4).
    def _row(b):
        return jnp.pad(b.astype(jnp.float32), (0, FC2_PAD - b.shape[0]))
    biases = jnp.stack([_row(params["b1"]), _row(params["b2"]),
                        _row(params["bf1"]), _row(params["bf2"])], axis=0)   # [4, 128]

    return dict(w1m=w1m, w2m=w2m, wf=wf, biases=biases)


# ----------------------------------------------------------------------------
# Forward pass.
# ----------------------------------------------------------------------------
def cnn_forward(x, prepped):
    """x: [B, 3, 28, 28] f32 (NCHW, as in PyTorch) -> logits [B, 3] f32."""
    batch = x.shape[0]
    bp = _round_up(batch, 8)              # aligned rows per conv2 output position
    patches1 = _im2col_fused(x, bp)       # [9*36*bp, 32] bf16

    vmem = pl.BlockSpec(memory_space=pltpu.MemorySpace.VMEM)
    out = pl.pallas_call(
        functools.partial(_cnn_kernel, bp=bp),
        out_shape=jax.ShapeDtypeStruct((bp, FC2_PAD), jnp.float32),
        in_specs=[vmem] * 5,
        out_specs=vmem,
        # Working set (weights ~0.67 MB + activations) sits comfortably in VMEM;
        # at this size one grid-less call avoids per-step pipelining overhead.
        # TODO(synk): for large batch, add a ("parallel",) grid over row-tiles of
        # patches1/out so v7x's second TensorCore gets work and the fc1 weight
        # DMA overlaps the conv stack.
    )(patches1, prepped["w1m"], prepped["w2m"], prepped["wf"], prepped["biases"])
    return out[:batch, :FC2_OUT]


# ----------------------------------------------------------------------------
# Pure-JAX f32 reference (matches the PyTorch module) and init.
# ----------------------------------------------------------------------------
def cnn_reference(x, params):
    hp = jax.lax.Precision.HIGHEST
    dn = ("NCHW", "OIHW", "NCHW")
    y = jax.lax.conv_general_dilated(x, params["w1"], (ST, ST), "VALID",
                                     dimension_numbers=dn, precision=hp)
    y = jax.nn.relu(y + params["b1"][None, :, None, None])
    y = jax.lax.conv_general_dilated(y, params["w2"], (ST, ST), "VALID",
                                     dimension_numbers=dn, precision=hp)
    y = jax.nn.relu(y + params["b2"][None, :, None, None])
    y = y.reshape(y.shape[0], -1)
    y = jax.nn.relu(jnp.dot(y, params["wf1"].T, precision=hp) + params["bf1"])
    return jnp.dot(y, params["wf2"].T, precision=hp) + params["bf2"]


def init_params(key):
    ks = jax.random.split(key, 8)
    s = 0.05
    # PyTorch layouts: conv [Cout, Cin, kh, kw]; linear [out, in].
    return {
        "w1": s * jax.random.normal(ks[0], (C1, C0, KS, KS), jnp.float32),
        "b1": s * jax.random.normal(ks[1], (C1,), jnp.float32),
        "w2": s * jax.random.normal(ks[2], (C2, C1, KS, KS), jnp.float32),
        "b2": s * jax.random.normal(ks[3], (C2,), jnp.float32),
        "wf1": s * jax.random.normal(ks[4], (FC1_OUT, FC1_IN), jnp.float32),
        "bf1": s * jax.random.normal(ks[5], (FC1_OUT,), jnp.float32),
        "wf2": s * jax.random.normal(ks[6], (FC2_OUT, FC1_OUT), jnp.float32),
        "bf2": s * jax.random.normal(ks[7], (FC2_OUT,), jnp.float32),
    }


if __name__ == "__main__":
    key = jax.random.PRNGKey(0)
    kx, kp = jax.random.split(key)
    batch = 2
    # 28x28 input so the conv stack yields 6x6 spatial, as fc1 (64*6*6) requires.
    x = jax.random.normal(kx, (batch, C0, H0, W0), jnp.float32)
    params = init_params(kp)
    prepped = prepare_params(params)          # one-time host-side weight repack

    fwd = jax.jit(cnn_forward)
    out = jax.block_until_ready(fwd(x, prepped))
    assert out.shape == (batch, FC2_OUT), out.shape

    ref = jax.block_until_ready(cnn_reference(x, params))
    np.testing.assert_allclose(np.asarray(out), np.asarray(ref), rtol=3e-2, atol=3e-2)
    print("KERNEL_OK")
</pallas_src>

<mosaic_0001>
module attributes {stable_mosaic.version = 11 : i64} {
  func.func @_cnn_kernel(%arg0: memref<2592x32xbf16, #tpu.memory_space<vmem>>, %arg1: memref<32x32xbf16, #tpu.memory_space<vmem>>, %arg2: memref<288x64xbf16, #tpu.memory_space<vmem>>, %arg3: memref<2432x128xbf16, #tpu.memory_space<vmem>>, %arg4: memref<4x128xf32, #tpu.memory_space<vmem>>, %arg5: memref<8x128xf32, #tpu.memory_space<vmem>>) attributes {dimension_semantics = [], scalar_prefetch = 0 : i64, scratch_operands = 0 : i64, tpu.core_type = #tpu.core_type<tc>} {
    %c0 = arith.constant 0 : index
    %c0_0 = arith.constant 0 : index
    %0 = vector.load %arg4[%c0, %c0_0] : memref<4x128xf32, #tpu.memory_space<vmem>>, vector<1x32xf32>
    %c1 = arith.constant 1 : index
    %c0_1 = arith.constant 0 : index
    %1 = vector.load %arg4[%c1, %c0_1] : memref<4x128xf32, #tpu.memory_space<vmem>>, vector<1x64xf32>
    %c2 = arith.constant 2 : index
    %c0_2 = arith.constant 0 : index
    %2 = vector.load %arg4[%c2, %c0_2] : memref<4x128xf32, #tpu.memory_space<vmem>>, vector<1x128xf32>
    %c3 = arith.constant 3 : index
    %c0_3 = arith.constant 0 : index
    %3 = vector.load %arg4[%c3, %c0_3] : memref<4x128xf32, #tpu.memory_space<vmem>>, vector<1x128xf32>
    %c0_4 = arith.constant 0 : index
    %c0_5 = arith.constant 0 : index
    %4 = vector.load %arg0[%c0_4, %c0_5] : memref<2592x32xbf16, #tpu.memory_space<vmem>>, vector<2592x32xbf16>
    %c0_6 = arith.constant 0 : index
    %c0_7 = arith.constant 0 : index
    %5 = vector.load %arg1[%c0_6, %c0_7] : memref<32x32xbf16, #tpu.memory_space<vmem>>, vector<32x32xbf16>
    %cst = arith.constant dense<0.000000e+00> : vector<2592x32xf32>
    %6 = tpu.matmul %4, %5, %cst {dimension_numbers = #tpu.dot_dimension_numbers<[1], [0], [0], [1], [0, 0, 1, 1], [], []>} : vector<2592x32xbf16>, vector<32x32xbf16>, vector<2592x32xf32> -> vector<2592x32xf32>
    %7 = vector.broadcast %0 : vector<1x32xf32> to vector<2592x32xf32>
    %8 = arith.addf %6, %7 : vector<2592x32xf32>
    %cst_8 = arith.constant 0.000000e+00 : f32
    %9 = vector.broadcast %cst_8 : f32 to vector<2592x32xf32>
    %10 = arith.maximumf %8, %9 : vector<2592x32xf32>
    %11 = arith.truncf %10 : vector<2592x32xf32> to vector<2592x32xbf16>
    %12 = vector.extract_strided_slice %11 {offsets = [0, 0], sizes = [288, 32], strides = [1, 1]} : vector<2592x32xbf16> to vector<288x32xbf16>
    %c0_9 = arith.constant 0 : index
    %c0_10 = arith.constant 0 : index
    %13 = vector.load %arg2[%c0_9, %c0_10] : memref<288x64xbf16, #tpu.memory_space<vmem>>, vector<32x64xbf16>
    %cst_11 = arith.constant dense<0.000000e+00> : vector<288x64xf32>
    %14 = tpu.matmul %12, %13, %cst_11 {dimension_numbers = #tpu.dot_dimension_numbers<[1], [0], [0], [1], [0, 0, 1, 1], [], []>} : vector<288x32xbf16>, vector<32x64xbf16>, vector<288x64xf32> -> vector<288x64xf32>
    %15 = vector.extract_strided_slice %11 {offsets = [288, 0], sizes = [288, 32], strides = [1, 1]} : vector<2592x32xbf16> to vector<288x32xbf16>
    %c32 = arith.constant 32 : index
    %c0_12 = arith.constant 0 : index
    %16 = vector.load %arg2[%c32, %c0_12] : memref<288x64xbf16, #tpu.memory_space<vmem>>, vector<32x64xbf16>
    %cst_13 = arith.constant dense<0.000000e+00> : vector<288x64xf32>
    %17 = tpu.matmul %15, %16, %cst_13 {dimension_numbers = #tpu.dot_dimension_numbers<[1], [0], [0], [1], [0, 0, 1, 1], [], []>} : vector<288x32xbf16>, vector<32x64xbf16>, vector<288x64xf32> -> vector<288x64xf32>
    %18 = arith.addf %14, %17 : vector<288x64xf32>
    %19 = vector.extract_strided_slice %11 {offsets = [576, 0], sizes = [288, 32], strides = [1, 1]} : vector<2592x32xbf16> to vector<288x32xbf16>
    %c64 = arith.constant 64 : index
    %c0_14 = arith.constant 0 : index
    %20 = vector.load %arg2[%c64, %c0_14] : memref<288x64xbf16, #tpu.memory_space<vmem>>, vector<32x64xbf16>
    %cst_15 = arith.constant dense<0.000000e+00> : vector<288x64xf32>
    %21 = tpu.matmul %19, %20, %cst_15 {dimension_numbers = #tpu.dot_dimension_numbers<[1], [0], [0], [1], [0, 0, 1, 1], [], []>} : vector<288x32xbf16>, vector<32x64xbf16>, vector<288x64xf32> -> vector<288x64xf32>
    %22 = arith.addf %18, %21 : vector<288x64xf32>
    %23 = vector.extract_strided_slice %11 {offsets = [864, 0], sizes = [288, 32], strides = [1, 1]} : vector<2592x32xbf16> to vector<288x32xbf16>
    %c96 = arith.constant 96 : index
    %c0_16 = arith.constant 0 : index
    %24 = vector.load %arg2[%c96, %c0_16] : memref<288x64xbf16, #tpu.memory_space<vmem>>, vector<32x64xbf16>
    %cst_17 = arith.constant dense<0.000000e+00> : vector<288x64xf32>
    %25 = tpu.matmul %23, %24, %cst_17 {dimension_numbers = #tpu.dot_dimension_numbers<[1], [0], [0], [1], [0, 0, 1, 1], [], []>} : vector<288x32xbf16>, vector<32x64xbf16>, vector<288x64xf32> -> vector<288x64xf32>
    %26 = arith.addf %22, %25 : vector<288x64xf32>
    %27 = vector.extract_strided_slice %11 {offsets = [1152, 0], sizes = [288, 32], strides = [1, 1]} : vector<2592x32xbf16> to vector<288x32xbf16>
    %c128 = arith.constant 128 : index
    %c0_18 = arith.constant 0 : index
    %28 = vector.load %arg2[%c128, %c0_18] : memref<288x64xbf16, #tpu.memory_space<vmem>>, vector<32x64xbf16>
    %cst_19 = arith.constant dense<0.000000e+00> : vector<288x64xf32>
    %29 = tpu.matmul %27, %28, %cst_19 {dimension_numbers = #tpu.dot_dimension_numbers<[1], [0], [0], [1], [0, 0, 1, 1], [], []>} : vector<288x32xbf16>, vector<32x64xbf16>, vector<288x64xf32> -> vector<288x64xf32>
    %30 = arith.addf %26, %29 : vector<288x64xf32>
    %31 = vector.extract_strided_slice %11 {offsets = [1440, 0], sizes = [288, 32], strides = [1, 1]} : vector<2592x32xbf16> to vector<288x32xbf16>
    %c160 = arith.constant 160 : index
    %c0_20 = arith.constant 0 : index
    %32 = vector.load %arg2[%c160, %c0_20] : memref<288x64xbf16, #tpu.memory_space<vmem>>, vector<32x64xbf16>
    %cst_21 = arith.constant dense<0.000000e+00> : vector<288x64xf32>
    %33 = tpu.matmul %31, %32, %cst_21 {dimension_numbers = #tpu.dot_dimension_numbers<[1], [0], [0], [1], [0, 0, 1, 1], [], []>} : vector<288x32xbf16>, vector<32x64xbf16>, vector<288x64xf32> -> vector<288x64xf32>
    %34 = arith.addf %30, %33 : vector<288x64xf32>
    %35 = vector.extract_strided_slice %11 {offsets = [1728, 0], sizes = [288, 32], strides = [1, 1]} : vector<2592x32xbf16> to vector<288x32xbf16>
    %c192 = arith.constant 192 : index
    %c0_22 = arith.constant 0 : index
    %36 = vector.load %arg2[%c192, %c0_22] : memref<288x64xbf16, #tpu.memory_space<vmem>>, vector<32x64xbf16>
    %cst_23 = arith.constant dense<0.000000e+00> : vector<288x64xf32>
    %37 = tpu.matmul %35, %36, %cst_23 {dimension_numbers = #tpu.dot_dimension_numbers<[1], [0], [0], [1], [0, 0, 1, 1], [], []>} : vector<288x32xbf16>, vector<32x64xbf16>, vector<288x64xf32> -> vector<288x64xf32>
    %38 = arith.addf %34, %37 : vector<288x64xf32>
    %39 = vector.extract_strided_slice %11 {offsets = [2016, 0], sizes = [288, 32], strides = [1, 1]} : vector<2592x32xbf16> to vector<288x32xbf16>
    %c224 = arith.constant 224 : index
    %c0_24 = arith.constant 0 : index
    %40 = vector.load %arg2[%c224, %c0_24] : memref<288x64xbf16, #tpu.memory_space<vmem>>, vector<32x64xbf16>
    %cst_25 = arith.constant dense<0.000000e+00> : vector<288x64xf32>
    %41 = tpu.matmul %39, %40, %cst_25 {dimension_numbers = #tpu.dot_dimension_numbers<[1], [0], [0], [1], [0, 0, 1, 1], [], []>} : vector<288x32xbf16>, vector<32x64xbf16>, vector<288x64xf32> -> vector<288x64xf32>
    %42 = arith.addf %38, %41 : vector<288x64xf32>
    %43 = vector.extract_strided_slice %11 {offsets = [2304, 0], sizes = [288, 32], strides = [1, 1]} : vector<2592x32xbf16> to vector<288x32xbf16>
    %c256 = arith.constant 256 : index
    %c0_26 = arith.constant 0 : index
    %44 = vector.load %arg2[%c256, %c0_26] : memref<288x64xbf16, #tpu.memory_space<vmem>>, vector<32x64xbf16>
    %cst_27 = arith.constant dense<0.000000e+00> : vector<288x64xf32>
    %45 = tpu.matmul %43, %44, %cst_27 {dimension_numbers = #tpu.dot_dimension_numbers<[1], [0], [0], [1], [0, 0, 1, 1], [], []>} : vector<288x32xbf16>, vector<32x64xbf16>, vector<288x64xf32> -> vector<288x64xf32>
    %46 = arith.addf %42, %45 : vector<288x64xf32>
    %47 = vector.broadcast %1 : vector<1x64xf32> to vector<288x64xf32>
    %48 = arith.addf %46, %47 : vector<288x64xf32>
    %cst_28 = arith.constant 0.000000e+00 : f32
    %49 = vector.broadcast %cst_28 : f32 to vector<288x64xf32>
    %50 = arith.maximumf %48, %49 : vector<288x64xf32>
    %51 = vector.extract_strided_slice %50 {offsets = [0, 0], sizes = [8, 64], strides = [1, 1]} : vector<288x64xf32> to vector<8x64xf32>
    %52 = arith.truncf %51 : vector<8x64xf32> to vector<8x64xbf16>
    %c0_29 = arith.constant 0 : index
    %c0_30 = arith.constant 0 : index
    %53 = vector.load %arg3[%c0_29, %c0_30] : memref<2432x128xbf16, #tpu.memory_space<vmem>>, vector<64x128xbf16>
    %cst_31 = arith.constant dense<0.000000e+00> : vector<8x128xf32>
    %54 = tpu.matmul %52, %53, %cst_31 {dimension_numbers = #tpu.dot_dimension_numbers<[1], [0], [0], [1], [0, 0, 1, 1], [], []>} : vector<8x64xbf16>, vector<64x128xbf16>, vector<8x128xf32> -> vector<8x128xf32>
    %55 = vector.extract_strided_slice %50 {offsets = [8, 0], sizes = [8, 64], strides = [1, 1]} : vector<288x64xf32> to vector<8x64xf32>
    %56 = arith.truncf %55 : vector<8x64xf32> to vector<8x64xbf16>
    %c64_32 = arith.constant 64 : index
    %c0_33 = arith.constant 0 : index
    %57 = vector.load %arg3[%c64_32, %c0_33] : memref<2432x128xbf16, #tpu.memory_space<vmem>>, vector<64x128xbf16>
    %cst_34 = arith.constant dense<0.000000e+00> : vector<8x128xf32>
    %58 = tpu.matmul %56, %57, %cst_34 {dimension_numbers = #tpu.dot_dimension_numbers<[1], [0], [0], [1], [0, 0, 1, 1], [], []>} : vector<8x64xbf16>, vector<64x128xbf16>, vector<8x128xf32> -> vector<8x128xf32>
    %59 = arith.addf %54, %58 : vector<8x128xf32>
    %60 = vector.extract_strided_slice %50 {offsets = [16, 0], sizes = [8, 64], strides = [1, 1]} : vector<288x64xf32> to vector<8x64xf32>
    %61 = arith.truncf %60 : vector<8x64xf32> to vector<8x64xbf16>
    %c128_35 = arith.constant 128 : index
    %c0_36 = arith.constant 0 : index
    %62 = vector.load %arg3[%c128_35, %c0_36] : memref<2432x128xbf16, #tpu.memory_space<vmem>>, vector<64x128xbf16>
    %cst_37 = arith.constant dense<0.000000e+00> : vector<8x128xf32>
    %63 = tpu.matmul %61, %62, %cst_37 {dimension_numbers = #tpu.dot_dimension_numbers<[1], [0], [0], [1], [0, 0, 1, 1], [], []>} : vector<8x64xbf16>, vector<64x128xbf16>, vector<8x128xf32> -> vector<8x128xf32>
    %64 = arith.addf %59, %63 : vector<8x128xf32>
    %65 = vector.extract_strided_slice %50 {offsets = [24, 0], sizes = [8, 64], strides = [1, 1]} : vector<288x64xf32> to vector<8x64xf32>
    %66 = arith.truncf %65 : vector<8x64xf32> to vector<8x64xbf16>
    %c192_38 = arith.constant 192 : index
    %c0_39 = arith.constant 0 : index
    %67 = vector.load %arg3[%c192_38, %c0_39] : memref<2432x128xbf16, #tpu.memory_space<vmem>>, vector<64x128xbf16>
    %cst_40 = arith.constant dense<0.000000e+00> : vector<8x128xf32>
    %68 = tpu.matmul %66, %67, %cst_40 {dimension_numbers = #tpu.dot_dimension_numbers<[1], [0], [0], [1], [0, 0, 1, 1], [], []>} : vector<8x64xbf16>, vector<64x128xbf16>, vector<8x128xf32> -> vector<8x128xf32>
    %69 = arith.addf %64, %68 : vector<8x128xf32>
    %70 = vector.extract_strided_slice %50 {offsets = [32, 0], sizes = [8, 64], strides = [1, 1]} : vector<288x64xf32> to vector<8x64xf32>
    %71 = arith.truncf %70 : vector<8x64xf32> to vector<8x64xbf16>
    %c256_41 = arith.constant 256 : index
    %c0_42 = arith.constant 0 : index
    %72 = vector.load %arg3[%c256_41, %c0_42] : memref<2432x128xbf16, #tpu.memory_space<vmem>>, vector<64x128xbf16>
    %cst_43 = arith.constant dense<0.000000e+00> : vector<8x128xf32>
    %73 = tpu.matmul %71, %72, %cst_43 {dimension_numbers = #tpu.dot_dimension_numbers<[1], [0], [0], [1], [0, 0, 1, 1], [], []>} : vector<8x64xbf16>, vector<64x128xbf16>, vector<8x128xf32> -> vector<8x128xf32>
    %74 = arith.addf %69, %73 : vector<8x128xf32>
    %75 = vector.extract_strided_slice %50 {offsets = [40, 0], sizes = [8, 64], strides = [1, 1]} : vector<288x64xf32> to vector<8x64xf32>
    %76 = arith.truncf %75 : vector<8x64xf32> to vector<8x64xbf16>
    %c320 = arith.constant 320 : index
    %c0_44 = arith.constant 0 : index
    %77 = vector.load %arg3[%c320, %c0_44] : memref<2432x128xbf16, #tpu.memory_space<vmem>>, vector<64x128xbf16>
    %cst_45 = arith.constant dense<0.000000e+00> : vector<8x128xf32>
    %78 = tpu.matmul %76, %77, %cst_45 {dimension_numbers = #tpu.dot_dimension_numbers<[1], [0], [0], [1], [0, 0, 1, 1], [], []>} : vector<8x64xbf16>, vector<64x128xbf16>, vector<8x128xf32> -> vector<8x128xf32>
    %79 = arith.addf %74, %78 : vector<8x128xf32>
    %80 = vector.extract_strided_slice %50 {offsets = [48, 0], sizes = [8, 64], strides = [1, 1]} : vector<288x64xf32> to vector<8x64xf32>
    %81 = arith.truncf %80 : vector<8x64xf32> to vector<8x64xbf16>
    %c384 = arith.constant 384 : index
    %c0_46 = arith.constant 0 : index
    %82 = vector.load %arg3[%c384, %c0_46] : memref<2432x128xbf16, #tpu.memory_space<vmem>>, vector<64x128xbf16>
    %cst_47 = arith.constant dense<0.000000e+00> : vector<8x128xf32>
    %83 = tpu.matmul %81, %82, %cst_47 {dimension_numbers = #tpu.dot_dimension_numbers<[1], [0], [0], [1], [0, 0, 1, 1], [], []>} : vector<8x64xbf16>, vector<64x128xbf16>, vector<8x128xf32> -> vector<8x128xf32>
    %84 = arith.addf %79, %83 : vector<8x128xf32>
    %85 = vector.extract_strided_slice %50 {offsets = [56, 0], sizes = [8, 64], strides = [1, 1]} : vector<288x64xf32> to vector<8x64xf32>
    %86 = arith.truncf %85 : vector<8x64xf32> to vector<8x64xbf16>
    %c448 = arith.constant 448 : index
    %c0_48 = arith.constant 0 : index
    %87 = vector.load %arg3[%c448, %c0_48] : memref<2432x128xbf16, #tpu.memory_space<vmem>>, vector<64x128xbf16>
    %cst_49 = arith.constant dense<0.000000e+00> : vector<8x128xf32>
    %88 = tpu.matmul %86, %87, %cst_49 {dimension_numbers = #tpu.dot_dimension_numbers<[1], [0], [0], [1], [0, 0, 1, 1], [], []>} : vector<8x64xbf16>, vector<64x128xbf16>, vector<8x128xf32> -> vector<8x128xf32>
    %89 = arith.addf %84, %88 : vector<8x128xf32>
    %90 = vector.extract_strided_slice %50 {offsets = [64, 0], sizes = [8, 64], strides = [1, 1]} : vector<288x64xf32> to vector<8x64xf32>
    %91 = arith.truncf %90 : vector<8x64xf32> to vector<8x64xbf16>
    %c512 = arith.constant 512 : index
    %c0_50 = arith.constant 0 : index
    %92 = vector.load %arg3[%c512, %c0_50] : memref<2432x128xbf16, #tpu.memory_space<vmem>>, vector<64x128xbf16>
    %cst_51 = arith.constant dense<0.000000e+00> : vector<8x128xf32>
    %93 = tpu.matmul %91, %92, %cst_51 {dimension_numbers = #tpu.dot_dimension_numbers<[1], [0], [0], [1], [0, 0, 1, 1], [], []>} : vector<8x64xbf16>, vector<64x128xbf16>, vector<8x128xf32> -> vector<8x128xf32>
    %94 = arith.addf %89, %93 : vector<8x128xf32>
    %95 = vector.extract_strided_slice %50 {offsets = [72, 0], sizes = [8, 64], strides = [1, 1]} : vector<288x64xf32> to vector<8x64xf32>
    %96 = arith.truncf %95 : vector<8x64xf32> to vector<8x64xbf16>
    %c576 = arith.constant 576 : index
    %c0_52 = arith.constant 0 : index
    %97 = vector.load %arg3[%c576, %c0_52] : memref<2432x128xbf16, #tpu.memory_space<vmem>>, vector<64x128xbf16>
    %cst_53 = arith.constant dense<0.000000e+00> : vector<8x128xf32>
    %98 = tpu.matmul %96, %97, %cst_53 {dimension_numbers = #tpu.dot_dimension_numbers<[1], [0], [0], [1], [0, 0, 1, 1], [], []>} : vector<8x64xbf16>, vector<64x128xbf16>, vector<8x128xf32> -> vector<8x128xf32>
    %99 = arith.addf %94, %98 : vector<8x128xf32>
    %100 = vector.extract_strided_slice %50 {offsets = [80, 0], sizes = [8, 64], strides = [1, 1]} : vector<288x64xf32> to vector<8x64xf32>
    %101 = arith.truncf %100 : vector<8x64xf32> to vector<8x64xbf16>
    %c640 = arith.constant 640 : index
    %c0_54 = arith.constant 0 : index
    %102 = vector.load %arg3[%c640, %c0_54] : memref<2432x128xbf16, #tpu.memory_space<vmem>>, vector<64x128xbf16>
    %cst_55 = arith.constant dense<0.000000e+00> : vector<8x128xf32>
    %103 = tpu.matmul %101, %102, %cst_55 {dimension_numbers = #tpu.dot_dimension_numbers<[1], [0], [0], [1], [0, 0, 1, 1], [], []>} : vector<8x64xbf16>, vector<64x128xbf16>, vector<8x128xf32> -> vector<8x128xf32>
    %104 = arith.addf %99, %103 : vector<8x128xf32>
    %105 = vector.extract_strided_slice %50 {offsets = [88, 0], sizes = [8, 64], strides = [1, 1]} : vector<288x64xf32> to vector<8x64xf32>
    %106 = arith.truncf %105 : vector<8x64xf32> to vector<8x64xbf16>
    %c704 = arith.constant 704 : index
    %c0_56 = arith.constant 0 : index
    %107 = vector.load %arg3[%c704, %c0_56] : memref<2432x128xbf16, #tpu.memory_space<vmem>>, vector<64x128xbf16>
    %cst_57 = arith.constant dense<0.000000e+00> : vector<8x128xf32>
    %108 = tpu.matmul %106, %107, %cst_57 {dimension_numbers = #tpu.dot_dimension_numbers<[1], [0], [0], [1], [0, 0, 1, 1], [], []>} : vector<8x64xbf16>, vector<64x128xbf16>, vector<8x128xf32> -> vector<8x128xf32>
    %109 = arith.addf %104, %108 : vector<8x128xf32>
    %110 = vector.extract_strided_slice %50 {offsets = [96, 0], sizes = [8, 64], strides = [1, 1]} : vector<288x64xf32> to vector<8x64xf32>
    %111 = arith.truncf %110 : vector<8x64xf32> to vector<8x64xbf16>
    %c768 = arith.constant 768 : index
    %c0_58 = arith.constant 0 : index
    %112 = vector.load %arg3[%c768, %c0_58] : memref<2432x128xbf16, #tpu.memory_space<vmem>>, vector<64x128xbf16>
    %cst_59 = arith.constant dense<0.000000e+00> : vector<8x128xf32>
    %113 = tpu.matmul %111, %112, %cst_59 {dimension_numbers = #tpu.dot_dimension_numbers<[1], [0], [0], [1], [0, 0, 1, 1], [], []>} : vector<8x64xbf16>, vector<64x128xbf16>, vector<8x128xf32> -> vector<8x128xf32>
    %114 = arith.addf %109, %113 : vector<8x128xf32>
    %115 = vector.extract_strided_slice %50 {offsets = [104, 0], sizes = [8, 64], strides = [1, 1]} : vector<288x64xf32> to vector<8x64xf32>
    %116 = arith.truncf %115 : vector<8x64xf32> to vector<8x64xbf16>
    %c832 = arith.constant 832 : index
    %c0_60 = arith.constant 0 : index
    %117 = vector.load %arg3[%c832, %c0_60] : memref<2432x128xbf16, #tpu.memory_space<vmem>>, vector<64x128xbf16>
    %cst_61 = arith.constant dense<0.000000e+00> : vector<8x128xf32>
    %118 = tpu.matmul %116, %117, %cst_61 {dimension_numbers = #tpu.dot_dimension_numbers<[1], [0], [0], [1], [0, 0, 1, 1], [], []>} : vector<8x64xbf16>, vector<64x128xbf16>, vector<8x128xf32> -> vector<8x128xf32>
    %119 = arith.addf %114, %118 : vector<8x128xf32>
    %120 = vector.extract_strided_slice %50 {offsets = [112, 0], sizes = [8, 64], strides = [1, 1]} : vector<288x64xf32> to vector<8x64xf32>
    %121 = arith.truncf %120 : vector<8x64xf32> to vector<8x64xbf16>
    %c896 = arith.constant 896 : index
    %c0_62 = arith.constant 0 : index
    %122 = vector.load %arg3[%c896, %c0_62] : memref<2432x128xbf16, #tpu.memory_space<vmem>>, vector<64x128xbf16>
    %cst_63 = arith.constant dense<0.000000e+00> : vector<8x128xf32>
    %123 = tpu.matmul %121, %122, %cst_63 {dimension_numbers = #tpu.dot_dimension_numbers<[1], [0], [0], [1], [0, 0, 1, 1], [], []>} : vector<8x64xbf16>, vector<64x128xbf16>, vector<8x128xf32> -> vector<8x128xf32>
    %124 = arith.addf %119, %123 : vector<8x128xf32>
    %125 = vector.extract_strided_slice %50 {offsets = [120, 0], sizes = [8, 64], strides = [1, 1]} : vector<288x64xf32> to vector<8x64xf32>
    %126 = arith.truncf %125 : vector<8x64xf32> to vector<8x64xbf16>
    %c960 = arith.constant 960 : index
    %c0_64 = arith.constant 0 : index
    %127 = vector.load %arg3[%c960, %c0_64] : memref<2432x128xbf16, #tpu.memory_space<vmem>>, vector<64x128xbf16>
    %cst_65 = arith.constant dense<0.000000e+00> : vector<8x128xf32>
    %128 = tpu.matmul %126, %127, %cst_65 {dimension_numbers = #tpu.dot_dimension_numbers<[1], [0], [0], [1], [0, 0, 1, 1], [], []>} : vector<8x64xbf16>, vector<64x128xbf16>, vector<8x128xf32> -> vector<8x128xf32>
    %129 = arith.addf %124, %128 : vector<8x128xf32>
    %130 = vector.extract_strided_slice %50 {offsets = [128, 0], sizes = [8, 64], strides = [1, 1]} : vector<288x64xf32> to vector<8x64xf32>
    %131 = arith.truncf %130 : vector<8x64xf32> to vector<8x64xbf16>
    %c1024 = arith.constant 1024 : index
    %c0_66 = arith.constant 0 : index
    %132 = vector.load %arg3[%c1024, %c0_66] : memref<2432x128xbf16, #tpu.memory_space<vmem>>, vector<64x128xbf16>
    %cst_67 = arith.constant dense<0.000000e+00> : vector<8x128xf32>
    %133 = tpu.matmul %131, %132, %cst_67 {dimension_numbers = #tpu.dot_dimension_numbers<[1], [0], [0], [1], [0, 0, 1, 1], [], []>} : vector<8x64xbf16>, vector<64x128xbf16>, vector<8x128xf32> -> vector<8x128xf32>
    %134 = arith.addf %129, %133 : vector<8x128xf32>
    %135 = vector.extract_strided_slice %50 {offsets = [136, 0], sizes = [8, 64], strides = [1, 1]} : vector<288x64xf32> to vector<8x64xf32>
    %136 = arith.truncf %135 : vector<8x64xf32> to vector<8x64xbf16>
    %c1088 = arith.constant 1088 : index
    %c0_68 = arith.constant 0 : index
    %137 = vector.load %arg3[%c1088, %c0_68] : memref<2432x128xbf16, #tpu.memory_space<vmem>>, vector<64x128xbf16>
    %cst_69 = arith.constant dense<0.000000e+00> : vector<8x128xf32>
    %138 = tpu.matmul %136, %137, %cst_69 {dimension_numbers = #tpu.dot_dimension_numbers<[1], [0], [0], [1], [0, 0, 1, 1], [], []>} : vector<8x64xbf16>, vector<64x128xbf16>, vector<8x128xf32> -> vector<8x128xf32>
    %139 = arith.addf %134, %138 : vector<8x128xf32>
    %140 = vector.extract_strided_slice %50 {offsets = [144, 0], sizes = [8, 64], strides = [1, 1]} : vector<288x64xf32> to vector<8x64xf32>
    %141 = arith.truncf %140 : vector<8x64xf32> to vector<8x64xbf16>
    %c1152 = arith.constant 1152 : index
    %c0_70 = arith.constant 0 : index
    %142 = vector.load %arg3[%c1152, %c0_70] : memref<2432x128xbf16, #tpu.memory_space<vmem>>, vector<64x128xbf16>
    %cst_71 = arith.constant dense<0.000000e+00> : vector<8x128xf32>
    %143 = tpu.matmul %141, %142, %cst_71 {dimension_numbers = #tpu.dot_dimension_numbers<[1], [0], [0], [1], [0, 0, 1, 1], [], []>} : vector<8x64xbf16>, vector<64x128xbf16>, vector<8x128xf32> -> vector<8x128xf32>
    %144 = arith.addf %139, %143 : vector<8x128xf32>
    %145 = vector.extract_strided_slice %50 {offsets = [152, 0], sizes = [8, 64], strides = [1, 1]} : vector<288x64xf32> to vector<8x64xf32>
    %146 = arith.truncf %145 : vector<8x64xf32> to vector<8x64xbf16>
    %c1216 = arith.constant 1216 : index
    %c0_72 = arith.constant 0 : index
    %147 = vector.load %arg3[%c1216, %c0_72] : memref<2432x128xbf16, #tpu.memory_space<vmem>>, vector<64x128xbf16>
    %cst_73 = arith.constant dense<0.000000e+00> : vector<8x128xf32>
    %148 = tpu.matmul %146, %147, %cst_73 {dimension_numbers = #tpu.dot_dimension_numbers<[1], [0], [0], [1], [0, 0, 1, 1], [], []>} : vector<8x64xbf16>, vector<64x128xbf16>, vector<8x128xf32> -> vector<8x128xf32>
    %149 = arith.addf %144, %148 : vector<8x128xf32>
    %150 = vector.extract_strided_slice %50 {offsets = [160, 0], sizes = [8, 64], strides = [1, 1]} : vector<288x64xf32> to vector<8x64xf32>
    %151 = arith.truncf %150 : vector<8x64xf32> to vector<8x64xbf16>
    %c1280 = arith.constant 1280 : index
    %c0_74 = arith.constant 0 : index
    %152 = vector.load %arg3[%c1280, %c0_74] : memref<2432x128xbf16, #tpu.memory_space<vmem>>, vector<64x128xbf16>
    %cst_75 = arith.constant dense<0.000000e+00> : vector<8x128xf32>
    %153 = tpu.matmul %151, %152, %cst_75 {dimension_numbers = #tpu.dot_dimension_numbers<[1], [0], [0], [1], [0, 0, 1, 1], [], []>} : vector<8x64xbf16>, vector<64x128xbf16>, vector<8x128xf32> -> vector<8x128xf32>
    %154 = arith.addf %149, %153 : vector<8x128xf32>
    %155 = vector.extract_strided_slice %50 {offsets = [168, 0], sizes = [8, 64], strides = [1, 1]} : vector<288x64xf32> to vector<8x64xf32>
    %156 = arith.truncf %155 : vector<8x64xf32> to vector<8x64xbf16>
    %c1344 = arith.constant 1344 : index
    %c0_76 = arith.constant 0 : index
    %157 = vector.load %arg3[%c1344, %c0_76] : memref<2432x128xbf16, #tpu.memory_space<vmem>>, vector<64x128xbf16>
    %cst_77 = arith.constant dense<0.000000e+00> : vector<8x128xf32>
    %158 = tpu.matmul %156, %157, %cst_77 {dimension_numbers = #tpu.dot_dimension_numbers<[1], [0], [0], [1], [0, 0, 1, 1], [], []>} : vector<8x64xbf16>, vector<64x128xbf16>, vector<8x128xf32> -> vector<8x128xf32>
    %159 = arith.addf %154, %158 : vector<8x128xf32>
    %160 = vector.extract_strided_slice %50 {offsets = [176, 0], sizes = [8, 64], strides = [1, 1]} : vector<288x64xf32> to vector<8x64xf32>
    %161 = arith.truncf %160 : vector<8x64xf32> to vector<8x64xbf16>
    %c1408 = arith.constant 1408 : index
    %c0_78 = arith.constant 0 : index
    %162 = vector.load %arg3[%c1408, %c0_78] : memref<2432x128xbf16, #tpu.memory_space<vmem>>, vector<64x128xbf16>
    %cst_79 = arith.constant dense<0.000000e+00> : vector<8x128xf32>
    %163 = tpu.matmul %161, %162, %cst_79 {dimension_numbers = #tpu.dot_dimension_numbers<[1], [0], [0], [1], [0, 0, 1, 1], [], []>} : vector<8x64xbf16>, vector<64x128xbf16>, vector<8x128xf32> -> vector<8x128xf32>
    %164 = arith.addf %159, %163 : vector<8x128xf32>
    %165 = vector.extract_strided_slice %50 {offsets = [184, 0], sizes = [8, 64], strides = [1, 1]} : vector<288x64xf32> to vector<8x64xf32>
    %166 = arith.truncf %165 : vector<8x64xf32> to vector<8x64xbf16>
    %c1472 = arith.constant 1472 : index
    %c0_80 = arith.constant 0 : index
    %167 = vector.load %arg3[%c1472, %c0_80] : memref<2432x128xbf16, #tpu.memory_space<vmem>>, vector<64x128xbf16>
    %cst_81 = arith.constant dense<0.000000e+00> : vector<8x128xf32>
    %168 = tpu.matmul %166, %167, %cst_81 {dimension_numbers = #tpu.dot_dimension_numbers<[1], [0], [0], [1], [0, 0, 1, 1], [], []>} : vector<8x64xbf16>, vector<64x128xbf16>, vector<8x128xf32> -> vector<8x128xf32>
    %169 = arith.addf %164, %168 : vector<8x128xf32>
    %170 = vector.extract_strided_slice %50 {offsets = [192, 0], sizes = [8, 64], strides = [1, 1]} : vector<288x64xf32> to vector<8x64xf32>
    %171 = arith.truncf %170 : vector<8x64xf32> to vector<8x64xbf16>
    %c1536 = arith.constant 1536 : index
    %c0_82 = arith.constant 0 : index
    %172 = vector.load %arg3[%c1536, %c0_82] : memref<2432x128xbf16, #tpu.memory_space<vmem>>, vector<64x128xbf16>
    %cst_83 = arith.constant dense<0.000000e+00> : vector<8x128xf32>
    %173 = tpu.matmul %171, %172, %cst_83 {dimension_numbers = #tpu.dot_dimension_numbers<[1], [0], [0], [1], [0, 0, 1, 1], [], []>} : vector<8x64xbf16>, vector<64x128xbf16>, vector<8x128xf32> -> vector<8x128xf32>
    %174 = arith.addf %169, %173 : vector<8x128xf32>
    %175 = vector.extract_strided_slice %50 {offsets = [200, 0], sizes = [8, 64], strides = [1, 1]} : vector<288x64xf32> to vector<8x64xf32>
    %176 = arith.truncf %175 : vector<8x64xf32> to vector<8x64xbf16>
    %c1600 = arith.constant 1600 : index
    %c0_84 = arith.constant 0 : index
    %177 = vector.load %arg3[%c1600, %c0_84] : memref<2432x128xbf16, #tpu.memory_space<vmem>>, vector<64x128xbf16>
    %cst_85 = arith.constant dense<0.000000e+00> : vector<8x128xf32>
    %178 = tpu.matmul %176, %177, %cst_85 {dimension_numbers = #tpu.dot_dimension_numbers<[1], [0], [0], [1], [0, 0, 1, 1], [], []>} : vector<8x64xbf16>, vector<64x128xbf16>, vector<8x128xf32> -> vector<8x128xf32>
    %179 = arith.addf %174, %178 : vector<8x128xf32>
    %180 = vector.extract_strided_slice %50 {offsets = [208, 0], sizes = [8, 64], strides = [1, 1]} : vector<288x64xf32> to vector<8x64xf32>
    %181 = arith.truncf %180 : vector<8x64xf32> to vector<8x64xbf16>
    %c1664 = arith.constant 1664 : index
    %c0_86 = arith.constant 0 : index
    %182 = vector.load %arg3[%c1664, %c0_86] : memref<2432x128xbf16, #tpu.memory_space<vmem>>, vector<64x128xbf16>
    %cst_87 = arith.constant dense<0.000000e+00> : vector<8x128xf32>
    %183 = tpu.matmul %181, %182, %cst_87 {dimension_numbers = #tpu.dot_dimension_numbers<[1], [0], [0], [1], [0, 0, 1, 1], [], []>} : vector<8x64xbf16>, vector<64x128xbf16>, vector<8x128xf32> -> vector<8x128xf32>
    %184 = arith.addf %179, %183 : vector<8x128xf32>
    %185 = vector.extract_strided_slice %50 {offsets = [216, 0], sizes = [8, 64], strides = [1, 1]} : vector<288x64xf32> to vector<8x64xf32>
    %186 = arith.truncf %185 : vector<8x64xf32> to vector<8x64xbf16>
    %c1728 = arith.constant 1728 : index
    %c0_88 = arith.constant 0 : index
    %187 = vector.load %arg3[%c1728, %c0_88] : memref<2432x128xbf16, #tpu.memory_space<vmem>>, vector<64x128xbf16>
    %cst_89 = arith.constant dense<0.000000e+00> : vector<8x128xf32>
    %188 = tpu.matmul %186, %187, %cst_89 {dimension_numbers = #tpu.dot_dimension_numbers<[1], [0], [0], [1], [0, 0, 1, 1], [], []>} : vector<8x64xbf16>, vector<64x128xbf16>, vector<8x128xf32> -> vector<8x128xf32>
    %189 = arith.addf %184, %188 : vector<8x128xf32>
    %190 = vector.extract_strided_slice %50 {offsets = [224, 0], sizes = [8, 64], strides = [1, 1]} : vector<288x64xf32> to vector<8x64xf32>
    %191 = arith.truncf %190 : vector<8x64xf32> to vector<8x64xbf16>
    %c1792 = arith.constant 1792 : index
    %c0_90 = arith.constant 0 : index
    %192 = vector.load %arg3[%c1792, %c0_90] : memref<2432x128xbf16, #tpu.memory_space<vmem>>, vector<64x128xbf16>
    %cst_91 = arith.constant dense<0.000000e+00> : vector<8x128xf32>
    %193 = tpu.matmul %191, %192, %cst_91 {dimension_numbers = #tpu.dot_dimension_numbers<[1], [0], [0], [1], [0, 0, 1, 1], [], []>} : vector<8x64xbf16>, vector<64x128xbf16>, vector<8x128xf32> -> vector<8x128xf32>
    %194 = arith.addf %189, %193 : vector<8x128xf32>
    %195 = vector.extract_strided_slice %50 {offsets = [232, 0], sizes = [8, 64], strides = [1, 1]} : vector<288x64xf32> to vector<8x64xf32>
    %196 = arith.truncf %195 : vector<8x64xf32> to vector<8x64xbf16>
    %c1856 = arith.constant 1856 : index
    %c0_92 = arith.constant 0 : index
    %197 = vector.load %arg3[%c1856, %c0_92] : memref<2432x128xbf16, #tpu.memory_space<vmem>>, vector<64x128xbf16>
    %cst_93 = arith.constant dense<0.000000e+00> : vector<8x128xf32>
    %198 = tpu.matmul %196, %197, %cst_93 {dimension_numbers = #tpu.dot_dimension_numbers<[1], [0], [0], [1], [0, 0, 1, 1], [], []>} : vector<8x64xbf16>, vector<64x128xbf16>, vector<8x128xf32> -> vector<8x128xf32>
    %199 = arith.addf %194, %198 : vector<8x128xf32>
    %200 = vector.extract_strided_slice %50 {offsets = [240, 0], sizes = [8, 64], strides = [1, 1]} : vector<288x64xf32> to vector<8x64xf32>
    %201 = arith.truncf %200 : vector<8x64xf32> to vector<8x64xbf16>
    %c1920 = arith.constant 1920 : index
    %c0_94 = arith.constant 0 : index
    %202 = vector.load %arg3[%c1920, %c0_94] : memref<2432x128xbf16, #tpu.memory_space<vmem>>, vector<64x128xbf16>
    %cst_95 = arith.constant dense<0.000000e+00> : vector<8x128xf32>
    %203 = tpu.matmul %201, %202, %cst_95 {dimension_numbers = #tpu.dot_dimension_numbers<[1], [0], [0], [1], [0, 0, 1, 1], [], []>} : vector<8x64xbf16>, vector<64x128xbf16>, vector<8x128xf32> -> vector<8x128xf32>
    %204 = arith.addf %199, %203 : vector<8x128xf32>
    %205 = vector.extract_strided_slice %50 {offsets = [248, 0], sizes = [8, 64], strides = [1, 1]} : vector<288x64xf32> to vector<8x64xf32>
    %206 = arith.truncf %205 : vector<8x64xf32> to vector<8x64xbf16>
    %c1984 = arith.constant 1984 : index
    %c0_96 = arith.constant 0 : index
    %207 = vector.load %arg3[%c1984, %c0_96] : memref<2432x128xbf16, #tpu.memory_space<vmem>>, vector<64x128xbf16>
    %cst_97 = arith.constant dense<0.000000e+00> : vector<8x128xf32>
    %208 = tpu.matmul %206, %207, %cst_97 {dimension_numbers = #tpu.dot_dimension_numbers<[1], [0], [0], [1], [0, 0, 1, 1], [], []>} : vector<8x64xbf16>, vector<64x128xbf16>, vector<8x128xf32> -> vector<8x128xf32>
    %209 = arith.addf %204, %208 : vector<8x128xf32>
    %210 = vector.extract_strided_slice %50 {offsets = [256, 0], sizes = [8, 64], strides = [1, 1]} : vector<288x64xf32> to vector<8x64xf32>
    %211 = arith.truncf %210 : vector<8x64xf32> to vector<8x64xbf16>
    %c2048 = arith.constant 2048 : index
    %c0_98 = arith.constant 0 : index
    %212 = vector.load %arg3[%c2048, %c0_98] : memref<2432x128xbf16, #tpu.memory_space<vmem>>, vector<64x128xbf16>
    %cst_99 = arith.constant dense<0.000000e+00> : vector<8x128xf32>
    %213 = tpu.matmul %211, %212, %cst_99 {dimension_numbers = #tpu.dot_dimension_numbers<[1], [0], [0], [1], [0, 0, 1, 1], [], []>} : vector<8x64xbf16>, vector<64x128xbf16>, vector<8x128xf32> -> vector<8x128xf32>
    %214 = arith.addf %209, %213 : vector<8x128xf32>
    %215 = vector.extract_strided_slice %50 {offsets = [264, 0], sizes = [8, 64], strides = [1, 1]} : vector<288x64xf32> to vector<8x64xf32>
    %216 = arith.truncf %215 : vector<8x64xf32> to vector<8x64xbf16>
    %c2112 = arith.constant 2112 : index
    %c0_100 = arith.constant 0 : index
    %217 = vector.load %arg3[%c2112, %c0_100] : memref<2432x128xbf16, #tpu.memory_space<vmem>>, vector<64x128xbf16>
    %cst_101 = arith.constant dense<0.000000e+00> : vector<8x128xf32>
    %218 = tpu.matmul %216, %217, %cst_101 {dimension_numbers = #tpu.dot_dimension_numbers<[1], [0], [0], [1], [0, 0, 1, 1], [], []>} : vector<8x64xbf16>, vector<64x128xbf16>, vector<8x128xf32> -> vector<8x128xf32>
    %219 = arith.addf %214, %218 : vector<8x128xf32>
    %220 = vector.extract_strided_slice %50 {offsets = [272, 0], sizes = [8, 64], strides = [1, 1]} : vector<288x64xf32> to vector<8x64xf32>
    %221 = arith.truncf %220 : vector<8x64xf32> to vector<8x64xbf16>
    %c2176 = arith.constant 2176 : index
    %c0_102 = arith.constant 0 : index
    %222 = vector.load %arg3[%c2176, %c0_102] : memref<2432x128xbf16, #tpu.memory_space<vmem>>, vector<64x128xbf16>
    %cst_103 = arith.constant dense<0.000000e+00> : vector<8x128xf32>
    %223 = tpu.matmul %221, %222, %cst_103 {dimension_numbers = #tpu.dot_dimension_numbers<[1], [0], [0], [1], [0, 0, 1, 1], [], []>} : vector<8x64xbf16>, vector<64x128xbf16>, vector<8x128xf32> -> vector<8x128xf32>
    %224 = arith.addf %219, %223 : vector<8x128xf32>
    %225 = vector.extract_strided_slice %50 {offsets = [280, 0], sizes = [8, 64], strides = [1, 1]} : vector<288x64xf32> to vector<8x64xf32>
    %226 = arith.truncf %225 : vector<8x64xf32> to vector<8x64xbf16>
    %c2240 = arith.constant 2240 : index
    %c0_104 = arith.constant 0 : index
    %227 = vector.load %arg3[%c2240, %c0_104] : memref<2432x128xbf16, #tpu.memory_space<vmem>>, vector<64x128xbf16>
    %cst_105 = arith.constant dense<0.000000e+00> : vector<8x128xf32>
    %228 = tpu.matmul %226, %227, %cst_105 {dimension_numbers = #tpu.dot_dimension_numbers<[1], [0], [0], [1], [0, 0, 1, 1], [], []>} : vector<8x64xbf16>, vector<64x128xbf16>, vector<8x128xf32> -> vector<8x128xf32>
    %229 = arith.addf %224, %228 : vector<8x128xf32>
    %230 = vector.broadcast %2 : vector<1x128xf32> to vector<8x128xf32>
    %231 = arith.addf %229, %230 : vector<8x128xf32>
    %cst_106 = arith.constant 0.000000e+00 : f32
    %232 = vector.broadcast %cst_106 : f32 to vector<8x128xf32>
    %233 = arith.maximumf %231, %232 : vector<8x128xf32>
    %234 = arith.truncf %233 : vector<8x128xf32> to vector<8x128xbf16>
    %c2304 = arith.constant 2304 : index
    %c0_107 = arith.constant 0 : index
    %235 = vector.load %arg3[%c2304, %c0_107] : memref<2432x128xbf16, #tpu.memory_space<vmem>>, vector<128x128xbf16>
    %cst_108 = arith.constant dense<0.000000e+00> : vector<8x128xf32>
    %236 = tpu.matmul %234, %235, %cst_108 {dimension_numbers = #tpu.dot_dimension_numbers<[1], [0], [0], [1], [0, 0, 1, 1], [], []>} : vector<8x128xbf16>, vector<128x128xbf16>, vector<8x128xf32> -> vector<8x128xf32>
    %237 = vector.broadcast %3 : vector<1x128xf32> to vector<8x128xf32>
    %238 = arith.addf %236, %237 : vector<8x128xf32>
    %c0_109 = arith.constant 0 : index
    %c0_110 = arith.constant 0 : index
    %239 = vector.load %arg5[%c0_109, %c0_110] : memref<8x128xf32, #tpu.memory_space<vmem>>, vector<8x128xf32>
    tpu.vector_store %arg5[%c0_109, %c0_110], %238 {strides = array<i32>} : memref<8x128xf32, #tpu.memory_space<vmem>>, vector<8x128xf32>,
    return
  }
}

</mosaic_0001>

<llo_original>
// kernel: cnn_forward.1
$region0: #{cnn_forward.1}
  #allocation0 [shape = 'u32[]', space=smem, size = 0x4, offset = 0x4, fixed_abs, tag = 'smem constant byte address 0x4 - core index']
  #allocation1 [shape = 'u32[144,128]{1,0:T(1,128)}', space=vmem, size = 0x12000, scoped, tag = 'internal scratch']
  %s0 = inlined_call_operand.vmem [shape: bf16[2592,32], index: 0, kind: input, shape index: {}]
  %s1 = inlined_call_operand.vmem [shape: bf16[32,32], index: 1, kind: input, shape index: {}]
  %s2 = inlined_call_operand.vmem [shape: bf16[288,64], index: 2, kind: input, shape index: {}]
  %s3 = inlined_call_operand.vmem [shape: bf16[2432,128], index: 3, kind: input, shape index: {}]
  %s4 = inlined_call_operand.vmem [shape: f32[4,128], index: 4, kind: input, shape index: {}]
  %s5 = inlined_call_operand.vmem [shape: f32[8,128], index: 5, kind: output, shape index: {}]
  %s6 = sld [smem:[#allocation0]]
  $region30: #{cnn_forward.1} parent=0
    _
  %s8 = ssub.s32 1, %s6
  %s9 = scalar_select 0, %s8, %s6
  // Predicated region
  $region2: #{cnn_forward.1} parent=0 // pred_check
    _
  $region3: #{cnn_forward.1} parent=0 // pred_check_branch
    %11 = sbr.rel (0) target = $region5
  $region4: #{cnn_forward.1} parent=0 // pred_region
    _
  $region5: #{cnn_forward.1} parent=0 // pred_fallthru
    _
  // Predicated region
  $region6: #{cnn_forward.1} parent=0 // pred_check
    _
  $region7: #{cnn_forward.1} parent=0 // pred_check_branch
    %13 = sbr.rel (0) target = $region9
  $region8: #{cnn_forward.1} parent=0 // pred_region
    _
  $region9: #{cnn_forward.1} parent=0 // pred_fallthru
    _
  // Predicated region
  $region10: #{cnn_forward.1} parent=0 // pred_check
    _
  $region11: #{cnn_forward.1} parent=0 // pred_check_branch
    %15 = sbr.rel (0) target = $region13
  $region12: #{cnn_forward.1} parent=0 // pred_region
    _
  $region13: #{cnn_forward.1} parent=0 // pred_fallthru
    _
  // Predicated region
  $region14: #{cnn_forward.1} parent=0 // pred_check
    _
  $region15: #{cnn_forward.1} parent=0 // pred_check_branch
    %17 = sbr.rel (0) target = $region17
  $region16: #{cnn_forward.1} parent=0 // pred_region
    _
  $region17: #{cnn_forward.1} parent=0 // pred_fallthru
    _
  // Predicated region
  $region18: #{cnn_forward.1} parent=0 // pred_check
    _
  $region19: #{cnn_forward.1} parent=0 // pred_check_branch
    %19 = sbr.rel (0) target = $region21
  $region20: #{cnn_forward.1} parent=0 // pred_region
    _
  $region21: #{cnn_forward.1} parent=0 // pred_fallthru
    _
  %v21 = vld [vmem:[%s4] sm:$0x1]
  %v22 = vld [vmem:[%s4 + $0x1] sm:$0x1]
  %v23 = vld [vmem:[%s4 + $0x2] sm:$0x1]
  %v24 = vld [vmem:[%s4 + $0x3] sm:$0x1]
  %v25 = vld [vmem:[%s0] sm:$0xf]
  %v26 = vld [vmem:[%s0 + $0x4] sm:$0xf]
  %v27 = vld [vmem:[%s0 + $0x8] sm:$0xf]
  %v28 = vld [vmem:[%s0 + $0xc] sm:$0xf]
  %v29 = vld [vmem:[%s0 + $0x10] sm:$0xf]
  %v30 = vld [vmem:[%s0 + $0x14] sm:$0xf]
  %v31 = vld [vmem:[%s0 + $0x18] sm:$0xf]
  %v32 = vld [vmem:[%s0 + $0x1c] sm:$0xf]
  %v33 = vld [vmem:[%s0 + $0x20] sm:$0xf]
  %v34 = vld [vmem:[%s0 + $0x24] sm:$0xf]
  %v35 = vld [vmem:[%s0 + $0x28] sm:$0xf]
  %v36 = vld [vmem:[%s0 + $0x2c] sm:$0xf]
  %v37 = vld [vmem:[%s0 + $0x30] sm:$0xf]
  %v38 = vld [vmem:[%s0 + $0x34] sm:$0xf]
  %v39 = vld [vmem:[%s0 + $0x38] sm:$0xf]
  %v40 = vld [vmem:[%s0 + $0x3c] sm:$0xf]
  %v41 = vld [vmem:[%s0 + $0x40] sm:$0xf]
  %v42 = vld [vmem:[%s0 + $0x44] sm:$0xf]
  %v43 = vld [vmem:[%s0 + $0x48] sm:$0xf]
  %v44 = vld [vmem:[%s0 + $0x4c] sm:$0xf]
  %v45 = vld [vmem:[%s0 + $0x50] sm:$0xf]
  %v46 = vld [vmem:[%s0 + $0x54] sm:$0xf]
  %v47 = vld [vmem:[%s0 + $0x58] sm:$0xf]
  %v48 = vld [vmem:[%s0 + $0x5c] sm:$0xf]
  %v49 = vld [vmem:[%s0 + $0x60] sm:$0xf]
  %v50 = vld [vmem:[%s0 + $0x64] sm:$0xf]
  %v51 = vld [vmem:[%s0 + $0x68] sm:$0xf]
  %v52 = vld [vmem:[%s0 + $0x6c] sm:$0xf]
  %v53 = vld [vmem:[%s0 + $0x70] sm:$0xf]
  %v54 = vld [vmem:[%s0 + $0x74] sm:$0xf]
  %v55 = vld [vmem:[%s0 + $0x78] sm:$0xf]
  %v56 = vld [vmem:[%s0 + $0x7c] sm:$0xf]
  %v57 = vld [vmem:[%s0 + $0x80] sm:$0xf]
  %v58 = vld [vmem:[%s0 + $0x84] sm:$0xf]
  %v59 = vld [vmem:[%s0 + $0x88] sm:$0xf]
  %v60 = vld [vmem:[%s0 + $0x8c] sm:$0xf]
  %v61 = vld [vmem:[%s0 + $0x90] sm:$0xf]
  %v62 = vld [vmem:[%s0 + $0x94] sm:$0xf]
  %v63 = vld [vmem:[%s0 + $0x98] sm:$0xf]
  %v64 = vld [vmem:[%s0 + $0x9c] sm:$0xf]
  %v65 = vld [vmem:[%s0 + $0xa0] sm:$0xf]
  %v66 = vld [vmem:[%s0 + $0xa4] sm:$0xf]
  %v67 = vld [vmem:[%s0 + $0xa8] sm:$0xf]
  %v68 = vld [vmem:[%s0 + $0xac] sm:$0xf]
  %v69 = vld [vmem:[%s0 + $0xb0] sm:$0xf]
  %v70 = vld [vmem:[%s0 + $0xb4] sm:$0xf]
  %v71 = vld [vmem:[%s0 + $0xb8] sm:$0xf]
  %v72 = vld [vmem:[%s0 + $0xbc] sm:$0xf]
  %v73 = vld [vmem:[%s0 + $0xc0] sm:$0xf]
  %v74 = vld [vmem:[%s0 + $0xc4] sm:$0xf]
  %v75 = vld [vmem:[%s0 + $0xc8] sm:$0xf]
  %v76 = vld [vmem:[%s0 + $0xcc] sm:$0xf]
  %v77 = vld [vmem:[%s0 + $0xd0] sm:$0xf]
  %v78 = vld [vmem:[%s0 + $0xd4] sm:$0xf]
  %v79 = vld [vmem:[%s0 + $0xd8] sm:$0xf]
  %v80 = vld [vmem:[%s0 + $0xdc] sm:$0xf]
  %v81 = vld [vmem:[%s0 + $0xe0] sm:$0xf]
  %v82 = vld [vmem:[%s0 + $0xe4] sm:$0xf]
  %v83 = vld [vmem:[%s0 + $0xe8] sm:$0xf]
  %v84 = vld [vmem:[%s0 + $0xec] sm:$0xf]
  %v85 = vld [vmem:[%s0 + $0xf0] sm:$0xf]
  %v86 = vld [vmem:[%s0 + $0xf4] sm:$0xf]
  %v87 = vld [vmem:[%s0 + $0xf8] sm:$0xf]
  %v88 = vld [vmem:[%s0 + $0xfc] sm:$0xf]
  %v89 = vld [vmem:[%s0 + $0x100] sm:$0xf]
  %v90 = vld [vmem:[%s0 + $0x104] sm:$0xf]
  %v91 = vld [vmem:[%s0 + $0x108] sm:$0xf]
  %v92 = vld [vmem:[%s0 + $0x10c] sm:$0xf]
  %v93 = vld [vmem:[%s0 + $0x110] sm:$0xf]
  %v94 = vld [vmem:[%s0 + $0x114] sm:$0xf]
  %v95 = vld [vmem:[%s0 + $0x118] sm:$0xf]
  %v96 = vld [vmem:[%s0 + $0x11c] sm:$0xf]
  %v97 = vld [vmem:[%s0 + $0x120] sm:$0xf]
  %v98 = vld [vmem:[%s0 + $0x124] sm:$0xf]
  %v99 = vld [vmem:[%s0 + $0x128] sm:$0xf]
  %v100 = vld [vmem:[%s0 + $0x12c] sm:$0xf]
  %v101 = vld [vmem:[%s0 + $0x130] sm:$0xf]
  %v102 = vld [vmem:[%s0 + $0x134] sm:$0xf]
  %v103 = vld [vmem:[%s0 + $0x138] sm:$0xf]
  %v104 = vld [vmem:[%s0 + $0x13c] sm:$0xf]
  %v105 = vld [vmem:[%s0 + $0x140] sm:$0xf]
  %v106 = vld [vmem:[%s0 + $0x144] sm:$0xf]
  %v107 = vld [vmem:[%s0 + $0x148] sm:$0xf]
  %v108 = vld [vmem:[%s0 + $0x14c] sm:$0xf]
  %v109 = vld [vmem:[%s0 + $0x150] sm:$0xf]
  %v110 = vld [vmem:[%s0 + $0x154] sm:$0xf]
  %v111 = vld [vmem:[%s0 + $0x158] sm:$0xf]
  %v112 = vld [vmem:[%s0 + $0x15c] sm:$0xf]
  %v113 = vld [vmem:[%s0 + $0x160] sm:$0xf]
  %v114 = vld [vmem:[%s0 + $0x164] sm:$0xf]
  %v115 = vld [vmem:[%s0 + $0x168] sm:$0xf]
  %v116 = vld [vmem:[%s0 + $0x16c] sm:$0xf]
  %v117 = vld [vmem:[%s0 + $0x170] sm:$0xf]
  %v118 = vld [vmem:[%s0 + $0x174] sm:$0xf]
  %v119 = vld [vmem:[%s0 + $0x178] sm:$0xf]
  %v120 = vld [vmem:[%s0 + $0x17c] sm:$0xf]
  %v121 = vld [vmem:[%s0 + $0x180] sm:$0xf]
  %v122 = vld [vmem:[%s0 + $0x184] sm:$0xf]
  %v123 = vld [vmem:[%s0 + $0x188] sm:$0xf]
  %v124 = vld [vmem:[%s0 + $0x18c] sm:$0xf]
  %v125 = vld [vmem:[%s0 + $0x190] sm:$0xf]
  %v126 = vld [vmem:[%s0 + $0x194] sm:$0xf]
  %v127 = vld [vmem:[%s0 + $0x198] sm:$0xf]
  %v128 = vld [vmem:[%s0 + $0x19c] sm:$0xf]
  %v129 = vld [vmem:[%s0 + $0x1a0] sm:$0xf]
  %v130 = vld [vmem:[%s0 + $0x1a4] sm:$0xf]
  %v131 = vld [vmem:[%s0 + $0x1a8] sm:$0xf]
  %v132 = vld [vmem:[%s0 + $0x1ac] sm:$0xf]
  %v133 = vld [vmem:[%s0 + $0x1b0] sm:$0xf]
  %v134 = vld [vmem:[%s0 + $0x1b4] sm:$0xf]
  %v135 = vld [vmem:[%s0 + $0x1b8] sm:$0xf]
  %v136 = vld [vmem:[%s0 + $0x1bc] sm:$0xf]
  %v137 = vld [vmem:[%s0 + $0x1c0] sm:$0xf]
  %v138 = vld [vmem:[%s0 + $0x1c4] sm:$0xf]
  %v139 = vld [vmem:[%s0 + $0x1c8] sm:$0xf]
  %v140 = vld [vmem:[%s0 + $0x1cc] sm:$0xf]
  %v141 = vld [vmem:[%s0 + $0x1d0] sm:$0xf]
  %v142 = vld [vmem:[%s0 + $0x1d4] sm:$0xf]
  %v143 = vld [vmem:[%s0 + $0x1d8] sm:$0xf]
  %v144 = vld [vmem:[%s0 + $0x1dc] sm:$0xf]
  %v145 = vld [vmem:[%s0 + $0x1e0] sm:$0xf]
  %v146 = vld [vmem:[%s0 + $0x1e4] sm:$0xf]
  %v147 = vld [vmem:[%s0 + $0x1e8] sm:$0xf]
  %v148 = vld [vmem:[%s0 + $0x1ec] sm:$0xf]
  %v149 = vld [vmem:[%s0 + $0x1f0] sm:$0xf]
  %v150 = vld [vmem:[%s0 + $0x1f4] sm:$0xf]
  %v151 = vld [vmem:[%s0 + $0x1f8] sm:$0xf]
  %v152 = vld [vmem:[%s0 + $0x1fc] sm:$0xf]
  %v153 = vld [vmem:[%s0 + $0x200] sm:$0xf]
  %v154 = vld [vmem:[%s0 + $0x204] sm:$0xf]
  %v155 = vld [vmem:[%s0 + $0x208] sm:$0xf]
  %v156 = vld [vmem:[%s0 + $0x20c] sm:$0xf]
  %v157 = vld [vmem:[%s0 + $0x210] sm:$0xf]
  %v158 = vld [vmem:[%s0 + $0x214] sm:$0xf]
  %v159 = vld [vmem:[%s0 + $0x218] sm:$0xf]
  %v160 = vld [vmem:[%s0 + $0x21c] sm:$0xf]
  %v161 = vld [vmem:[%s0 + $0x220] sm:$0xf]
  %v162 = vld [vmem:[%s0 + $0x224] sm:$0xf]
  %v163 = vld [vmem:[%s0 + $0x228] sm:$0xf]
  %v164 = vld [vmem:[%s0 + $0x22c] sm:$0xf]
  %v165 = vld [vmem:[%s0 + $0x230] sm:$0xf]
  %v166 = vld [vmem:[%s0 + $0x234] sm:$0xf]
  %v167 = vld [vmem:[%s0 + $0x238] sm:$0xf]
  %v168 = vld [vmem:[%s0 + $0x23c] sm:$0xf]
  %v169 = vld [vmem:[%s0 + $0x240] sm:$0xf]
  %v170 = vld [vmem:[%s0 + $0x244] sm:$0xf]
  %v171 = vld [vmem:[%s0 + $0x248] sm:$0xf]
  %v172 = vld [vmem:[%s0 + $0x24c] sm:$0xf]
  %v173 = vld [vmem:[%s0 + $0x250] sm:$0xf]
  %v174 = vld [vmem:[%s0 + $0x254] sm:$0xf]
  %v175 = vld [vmem:[%s0 + $0x258] sm:$0xf]
  %v176 = vld [vmem:[%s0 + $0x25c] sm:$0xf]
  %v177 = vld [vmem:[%s0 + $0x260] sm:$0xf]
  %v178 = vld [vmem:[%s0 + $0x264] sm:$0xf]
  %v179 = vld [vmem:[%s0 + $0x268] sm:$0xf]
  %v180 = vld [vmem:[%s0 + $0x26c] sm:$0xf]
  %v181 = vld [vmem:[%s0 + $0x270] sm:$0xf]
  %v182 = vld [vmem:[%s0 + $0x274] sm:$0xf]
  %v183 = vld [vmem:[%s0 + $0x278] sm:$0xf]
  %v184 = vld [vmem:[%s0 + $0x27c] sm:$0xf]
  %v185 = vld [vmem:[%s0 + $0x280] sm:$0xf]
  %v186 = vld [vmem:[%s0 + $0x284] sm:$0xf]
  %v187 = vld [vmem:[%s0 + $0x288] sm:$0xf]
  %v188 = vld [vmem:[%s0 + $0x28c] sm:$0xf]
  %v189 = vld [vmem:[%s0 + $0x290] sm:$0xf]
  %v190 = vld [vmem:[%s0 + $0x294] sm:$0xf]
  %v191 = vld [vmem:[%s0 + $0x298] sm:$0xf]
  %v192 = vld [vmem:[%s0 + $0x29c] sm:$0xf]
  %v193 = vld [vmem:[%s0 + $0x2a0] sm:$0xf]
  %v194 = vld [vmem:[%s0 + $0x2a4] sm:$0xf]
  %v195 = vld [vmem:[%s0 + $0x2a8] sm:$0xf]
  %v196 = vld [vmem:[%s0 + $0x2ac] sm:$0xf]
  %v197 = vld [vmem:[%s0 + $0x2b0] sm:$0xf]
  %v198 = vld [vmem:[%s0 + $0x2b4] sm:$0xf]
  %v199 = vld [vmem:[%s0 + $0x2b8] sm:$0xf]
  %v200 = vld [vmem:[%s0 + $0x2bc] sm:$0xf]
  %v201 = vld [vmem:[%s0 + $0x2c0] sm:$0xf]
  %v202 = vld [vmem:[%s0 + $0x2c4] sm:$0xf]
  %v203 = vld [vmem:[%s0 + $0x2c8] sm:$0xf]
  %v204 = vld [vmem:[%s0 + $0x2cc] sm:$0xf]
  %v205 = vld [vmem:[%s0 + $0x2d0] sm:$0xf]
  %v206 = vld [vmem:[%s0 + $0x2d4] sm:$0xf]
  %v207 = vld [vmem:[%s0 + $0x2d8] sm:$0xf]
  %v208 = vld [vmem:[%s0 + $0x2dc] sm:$0xf]
  %v209 = vld [vmem:[%s0 + $0x2e0] sm:$0xf]
  %v210 = vld [vmem:[%s0 + $0x2e4] sm:$0xf]
  %v211 = vld [vmem:[%s0 + $0x2e8] sm:$0xf]
  %v212 = vld [vmem:[%s0 + $0x2ec] sm:$0xf]
  %v213 = vld [vmem:[%s0 + $0x2f0] sm:$0xf]
  %v214 = vld [vmem:[%s0 + $0x2f4] sm:$0xf]
  %v215 = vld [vmem:[%s0 + $0x2f8] sm:$0xf]
  %v216 = vld [vmem:[%s0 + $0x2fc] sm:$0xf]
  %v217 = vld [vmem:[%s0 + $0x300] sm:$0xf]
  %v218 = vld [vmem:[%s0 + $0x304] sm:$0xf]
  %v219 = vld [vmem:[%s0 + $0x308] sm:$0xf]
  %v220 = vld [vmem:[%s0 + $0x30c] sm:$0xf]
  %v221 = vld [vmem:[%s0 + $0x310] sm:$0xf]
  %v222 = vld [vmem:[%s0 + $0x314] sm:$0xf]
  %v223 = vld [vmem:[%s0 + $0x318] sm:$0xf]
  %v224 = vld [vmem:[%s0 + $0x31c] sm:$0xf]
  %v225 = vld [vmem:[%s0 + $0x320] sm:$0xf]
  %v226 = vld [vmem:[%s0 + $0x324] sm:$0xf]
  %v227 = vld [vmem:[%s0 + $0x328] sm:$0xf]
  %v228 = vld [vmem:[%s0 + $0x32c] sm:$0xf]
  %v229 = vld [vmem:[%s0 + $0x330] sm:$0xf]
  %v230 = vld [vmem:[%s0 + $0x334] sm:$0xf]
  %v231 = vld [vmem:[%s0 + $0x338] sm:$0xf]
  %v232 = vld [vmem:[%s0 + $0x33c] sm:$0xf]
  %v233 = vld [vmem:[%s0 + $0x340] sm:$0xf]
  %v234 = vld [vmem:[%s0 + $0x344] sm:$0xf]
  %v235 = vld [vmem:[%s0 + $0x348] sm:$0xf]
  %v236 = vld [vmem:[%s0 + $0x34c] sm:$0xf]
  %v237 = vld [vmem:[%s0 + $0x350] sm:$0xf]
  %v238 = vld [vmem:[%s0 + $0x354] sm:$0xf]
  %v239 = vld [vmem:[%s0 + $0x358] sm:$0xf]
  %v240 = vld [vmem:[%s0 + $0x35c] sm:$0xf]
  %v241 = vld [vmem:[%s0 + $0x360] sm:$0xf]
  %v242 = vld [vmem:[%s0 + $0x364] sm:$0xf]
  %v243 = vld [vmem:[%s0 + $0x368] sm:$0xf]
  %v244 = vld [vmem:[%s0 + $0x36c] sm:$0xf]
  %v245 = vld [vmem:[%s0 + $0x370] sm:$0xf]
  %v246 = vld [vmem:[%s0 + $0x374] sm:$0xf]
  %v247 = vld [vmem:[%s0 + $0x378] sm:$0xf]
  %v248 = vld [vmem:[%s0 + $0x37c] sm:$0xf]
  %v249 = vld [vmem:[%s0 + $0x380] sm:$0xf]
  %v250 = vld [vmem:[%s0 + $0x384] sm:$0xf]
  %v251 = vld [vmem:[%s0 + $0x388] sm:$0xf]
  %v252 = vld [vmem:[%s0 + $0x38c] sm:$0xf]
  %v253 = vld [vmem:[%s0 + $0x390] sm:$0xf]
  %v254 = vld [vmem:[%s0 + $0x394] sm:$0xf]
  %v255 = vld [vmem:[%s0 + $0x398] sm:$0xf]
  %v256 = vld [vmem:[%s0 + $0x39c] sm:$0xf]
  %v257 = vld [vmem:[%s0 + $0x3a0] sm:$0xf]
  %v258 = vld [vmem:[%s0 + $0x3a4] sm:$0xf]
  %v259 = vld [vmem:[%s0 + $0x3a8] sm:$0xf]
  %v260 = vld [vmem:[%s0 + $0x3ac] sm:$0xf]
  %v261 = vld [vmem:[%s0 + $0x3b0] sm:$0xf]
  %v262 = vld [vmem:[%s0 + $0x3b4] sm:$0xf]
  %v263 = vld [vmem:[%s0 + $0x3b8] sm:$0xf]
  %v264 = vld [vmem:[%s0 + $0x3bc] sm:$0xf]
  %v265 = vld [vmem:[%s0 + $0x3c0] sm:$0xf]
  %v266 = vld [vmem:[%s0 + $0x3c4] sm:$0xf]
  %v267 = vld [vmem:[%s0 + $0x3c8] sm:$0xf]
  %v268 = vld [vmem:[%s0 + $0x3cc] sm:$0xf]
  %v269 = vld [vmem:[%s0 + $0x3d0] sm:$0xf]
  %v270 = vld [vmem:[%s0 + $0x3d4] sm:$0xf]
  %v271 = vld [vmem:[%s0 + $0x3d8] sm:$0xf]
  %v272 = vld [vmem:[%s0 + $0x3dc] sm:$0xf]
  %v273 = vld [vmem:[%s0 + $0x3e0] sm:$0xf]
  %v274 = vld [vmem:[%s0 + $0x3e4] sm:$0xf]
  %v275 = vld [vmem:[%s0 + $0x3e8] sm:$0xf]
  %v276 = vld [vmem:[%s0 + $0x3ec] sm:$0xf]
  %v277 = vld [vmem:[%s0 + $0x3f0] sm:$0xf]
  %v278 = vld [vmem:[%s0 + $0x3f4] sm:$0xf]
  %v279 = vld [vmem:[%s0 + $0x3f8] sm:$0xf]
  %v280 = vld [vmem:[%s0 + $0x3fc] sm:$0xf]
  %v281 = vld [vmem:[%s0 + $0x400] sm:$0xf]
  %v282 = vld [vmem:[%s0 + $0x404] sm:$0xf]
  %v283 = vld [vmem:[%s0 + $0x408] sm:$0xf]
  %v284 = vld [vmem:[%s0 + $0x40c] sm:$0xf]
  %v285 = vld [vmem:[%s0 + $0x410] sm:$0xf]
  %v286 = vld [vmem:[%s0 + $0x414] sm:$0xf]
  %v287 = vld [vmem:[%s0 + $0x418] sm:$0xf]
  %v288 = vld [vmem:[%s0 + $0x41c] sm:$0xf]
  %v289 = vld [vmem:[%s0 + $0x420] sm:$0xf]
  %v290 = vld [vmem:[%s0 + $0x424] sm:$0xf]
  %v291 = vld [vmem:[%s0 + $0x428] sm:$0xf]
  %v292 = vld [vmem:[%s0 + $0x42c] sm:$0xf]
  %v293 = vld [vmem:[%s0 + $0x430] sm:$0xf]
  %v294 = vld [vmem:[%s0 + $0x434] sm:$0xf]
  %v295 = vld [vmem:[%s0 + $0x438] sm:$0xf]
  %v296 = vld [vmem:[%s0 + $0x43c] sm:$0xf]
  %v297 = vld [vmem:[%s0 + $0x440] sm:$0xf]
  %v298 = vld [vmem:[%s0 + $0x444] sm:$0xf]
  %v299 = vld [vmem:[%s0 + $0x448] sm:$0xf]
  %v300 = vld [vmem:[%s0 + $0x44c] sm:$0xf]
  %v301 = vld [vmem:[%s0 + $0x450] sm:$0xf]
  %v302 = vld [vmem:[%s0 + $0x454] sm:$0xf]
  %v303 = vld [vmem:[%s0 + $0x458] sm:$0xf]
  %v304 = vld [vmem:[%s0 + $0x45c] sm:$0xf]
  %v305 = vld [vmem:[%s0 + $0x460] sm:$0xf]
  %v306 = vld [vmem:[%s0 + $0x464] sm:$0xf]
  %v307 = vld [vmem:[%s0 + $0x468] sm:$0xf]
  %v308 = vld [vmem:[%s0 + $0x46c] sm:$0xf]
  %v309 = vld [vmem:[%s0 + $0x470] sm:$0xf]
  %v310 = vld [vmem:[%s0 + $0x474] sm:$0xf]
  %v311 = vld [vmem:[%s0 + $0x478] sm:$0xf]
  %v312 = vld [vmem:[%s0 + $0x47c] sm:$0xf]
  %v313 = vld [vmem:[%s0 + $0x480] sm:$0xf]
  %v314 = vld [vmem:[%s0 + $0x484] sm:$0xf]
  %v315 = vld [vmem:[%s0 + $0x488] sm:$0xf]
  %v316 = vld [vmem:[%s0 + $0x48c] sm:$0xf]
  %v317 = vld [vmem:[%s0 + $0x490] sm:$0xf]
  %v318 = vld [vmem:[%s0 + $0x494] sm:$0xf]
  %v319 = vld [vmem:[%s0 + $0x498] sm:$0xf]
  %v320 = vld [vmem:[%s0 + $0x49c] sm:$0xf]
  %v321 = vld [vmem:[%s0 + $0x4a0] sm:$0xf]
  %v322 = vld [vmem:[%s0 + $0x4a4] sm:$0xf]
  %v323 = vld [vmem:[%s0 + $0x4a8] sm:$0xf]
  %v324 = vld [vmem:[%s0 + $0x4ac] sm:$0xf]
  %v325 = vld [vmem:[%s0 + $0x4b0] sm:$0xf]
  %v326 = vld [vmem:[%s0 + $0x4b4] sm:$0xf]
  %v327 = vld [vmem:[%s0 + $0x4b8] sm:$0xf]
  %v328 = vld [vmem:[%s0 + $0x4bc] sm:$0xf]
  %v329 = vld [vmem:[%s0 + $0x4c0] sm:$0xf]
  %v330 = vld [vmem:[%s0 + $0x4c4] sm:$0xf]
  %v331 = vld [vmem:[%s0 + $0x4c8] sm:$0xf]
  %v332 = vld [vmem:[%s0 + $0x4cc] sm:$0xf]
  %v333 = vld [vmem:[%s0 + $0x4d0] sm:$0xf]
  %v334 = vld [vmem:[%s0 + $0x4d4] sm:$0xf]
  %v335 = vld [vmem:[%s0 + $0x4d8] sm:$0xf]
  %v336 = vld [vmem:[%s0 + $0x4dc] sm:$0xf]
  %v337 = vld [vmem:[%s0 + $0x4e0] sm:$0xf]
  %v338 = vld [vmem:[%s0 + $0x4e4] sm:$0xf]
  %v339 = vld [vmem:[%s0 + $0x4e8] sm:$0xf]
  %v340 = vld [vmem:[%s0 + $0x4ec] sm:$0xf]
  %v341 = vld [vmem:[%s0 + $0x4f0] sm:$0xf]
  %v342 = vld [vmem:[%s0 + $0x4f4] sm:$0xf]
  %v343 = vld [vmem:[%s0 + $0x4f8] sm:$0xf]
  %v344 = vld [vmem:[%s0 + $0x4fc] sm:$0xf]
  %v345 = vld [vmem:[%s0 + $0x500] sm:$0xf]
  %v346 = vld [vmem:[%s0 + $0x504] sm:$0xf]
  %v347 = vld [vmem:[%s0 + $0x508] sm:$0xf]
  %v348 = vld [vmem:[%s0 + $0x50c] sm:$0xf]
  %v349 = vld [vmem:[%s1] sm:$0xf]
  %v350 = vld [vmem:[%s1 + $0x4] sm:$0xf]
  %v351 = vld [vmem:[%s1 + $0x8] sm:$0xf]
  %v352 = vld [vmem:[%s1 + $0xc] sm:$0xf]
  %v353 = vlaneseq
  %v354 = vshrl.u32 %v353, 7
  %v355 = vsub.s32 0, %v354
  %v356 = vrot.slane %v21, %v355
  %v681 = vunpack.c.l.b16 %v25
  %v682 = vunpack.c.l.b16 %v26
  %v683 = vunpack.c.l.b16 %v27
  %v684 = vunpack.c.l.b16 %v28
  %v685 = vunpack.c.l.b16 %v29
  %v686 = vunpack.c.l.b16 %v30
  %v687 = vunpack.c.l.b16 %v31
  %v688 = vunpack.c.l.b16 %v32
  %v689 = vunpack.c.l.b16 %v33
  %v690 = vunpack.c.l.b16 %v34
  %v691 = vunpack.c.l.b16 %v35
  %v692 = vunpack.c.l.b16 %v36
  %v693 = vunpack.c.l.b16 %v37
  %v694 = vunpack.c.l.b16 %v38
  %v695 = vunpack.c.l.b16 %v39
  %v696 = vunpack.c.l.b16 %v40
  %v697 = vunpack.c.l.b16 %v41
  %v698 = vunpack.c.l.b16 %v42
  %v699 = vunpack.c.l.b16 %v43
  %v700 = vunpack.c.l.b16 %v44
  %v701 = vunpack.c.l.b16 %v45
  %v702 = vunpack.c.l.b16 %v46
  %v703 = vunpack.c.l.b16 %v47
  %v704 = vunpack.c.l.b16 %v48
  %v705 = vunpack.c.l.b16 %v49
  %v706 = vunpack.c.l.b16 %v50
  %v707 = vunpack.c.l.b16 %v51
  %v708 = vunpack.c.l.b16 %v52
  %v709 = vunpack.c.l.b16 %v53
  %v710 = vunpack.c.l.b16 %v54
  %v711 = vunpack.c.l.b16 %v55
  %v712 = vunpack.c.l.b16 %v56
  %v713 = vunpack.c.l.b16 %v57
  %v714 = vunpack.c.l.b16 %v58
  %v715 = vunpack.c.l.b16 %v59
  %v716 = vunpack.c.l.b16 %v60
  %v717 = vunpack.c.l.b16 %v61
  %v718 = vunpack.c.l.b16 %v62
  %v719 = vunpack.c.l.b16 %v63
  %v720 = vunpack.c.l.b16 %v64
  %v721 = vunpack.c.l.b16 %v65
  %v722 = vunpack.c.l.b16 %v66
  %v723 = vunpack.c.l.b16 %v67
  %v724 = vunpack.c.l.b16 %v68
  %v725 = vunpack.c.l.b16 %v69
  %v726 = vunpack.c.l.b16 %v70
  %v727 = vunpack.c.l.b16 %v71
  %v728 = vunpack.c.l.b16 %v72
  %v729 = vunpack.c.l.b16 %v73
  %v730 = vunpack.c.l.b16 %v74
  %v731 = vunpack.c.l.b16 %v75
  %v732 = vunpack.c.l.b16 %v76
  %v733 = vunpack.c.l.b16 %v77
  %v734 = vunpack.c.l.b16 %v78
  %v735 = vunpack.c.l.b16 %v79
  %v736 = vunpack.c.l.b16 %v80
  %v737 = vunpack.c.l.b16 %v81
  %v738 = vunpack.c.l.b16 %v82
  %v739 = vunpack.c.l.b16 %v83
  %v740 = vunpack.c.l.b16 %v84
  %v741 = vunpack.c.l.b16 %v85
  %v742 = vunpack.c.l.b16 %v86
  %v743 = vunpack.c.l.b16 %v87
  %v744 = vunpack.c.l.b16 %v88
  %v745 = vunpack.c.l.b16 %v89
  %v746 = vunpack.c.l.b16 %v90
  %v747 = vunpack.c.l.b16 %v91
  %v748 = vunpack.c.l.b16 %v92
  %v749 = vunpack.c.l.b16 %v93
  %v750 = vunpack.c.l.b16 %v94
  %v751 = vunpack.c.l.b16 %v95
  %v752 = vunpack.c.l.b16 %v96
  %v753 = vunpack.c.l.b16 %v97
  %v754 = vunpack.c.l.b16 %v98
  %v755 = vunpack.c.l.b16 %v99
  %v756 = vunpack.c.l.b16 %v100
  %v757 = vunpack.c.l.b16 %v101
  %v758 = vunpack.c.l.b16 %v102
  %v759 = vunpack.c.l.b16 %v103
  %v760 = vunpack.c.l.b16 %v104
  %v761 = vunpack.c.l.b16 %v105
  %v762 = vunpack.c.l.b16 %v106
  %v763 = vunpack.c.l.b16 %v107
  %v764 = vunpack.c.l.b16 %v108
  %v765 = vunpack.c.l.b16 %v109
  %v766 = vunpack.c.l.b16 %v110
  %v767 = vunpack.c.l.b16 %v111
  %v768 = vunpack.c.l.b16 %v112
  %v769 = vunpack.c.l.b16 %v113
  %v770 = vunpack.c.l.b16 %v114
  %v771 = vunpack.c.l.b16 %v115
  %v772 = vunpack.c.l.b16 %v116
  %v773 = vunpack.c.l.b16 %v117
  %v774 = vunpack.c.l.b16 %v118
  %v775 = vunpack.c.l.b16 %v119
  %v776 = vunpack.c.l.b16 %v120
  %v777 = vunpack.c.l.b16 %v121
  %v778 = vunpack.c.l.b16 %v122
  %v779 = vunpack.c.l.b16 %v123
  %v780 = vunpack.c.l.b16 %v124
  %v781 = vunpack.c.l.b16 %v125
  %v782 = vunpack.c.l.b16 %v126
  %v783 = vunpack.c.l.b16 %v127
  %v784 = vunpack.c.l.b16 %v128
  %v785 = vunpack.c.l.b16 %v129
  %v786 = vunpack.c.l.b16 %v130
  %v787 = vunpack.c.l.b16 %v131
  %v788 = vunpack.c.l.b16 %v132
  %v789 = vunpack.c.l.b16 %v133
  %v790 = vunpack.c.l.b16 %v134
  %v791 = vunpack.c.l.b16 %v135
  %v792 = vunpack.c.l.b16 %v136
  %v793 = vunpack.c.l.b16 %v137
  %v794 = vunpack.c.l.b16 %v138
  %v795 = vunpack.c.l.b16 %v139
  %v796 = vunpack.c.l.b16 %v140
  %v797 = vunpack.c.l.b16 %v141
  %v798 = vunpack.c.l.b16 %v142
  %v799 = vunpack.c.l.b16 %v143
  %v800 = vunpack.c.l.b16 %v144
  %v801 = vunpack.c.l.b16 %v145
  %v802 = vunpack.c.l.b16 %v146
  %v803 = vunpack.c.l.b16 %v147
  %v804 = vunpack.c.l.b16 %v148
  %v805 = vunpack.c.l.b16 %v149
  %v806 = vunpack.c.l.b16 %v150
  %v807 = vunpack.c.l.b16 %v151
  %v808 = vunpack.c.l.b16 %v152
  %v809 = vunpack.c.l.b16 %v153
  %v810 = vunpack.c.l.b16 %v154
  %v811 = vunpack.c.l.b16 %v155
  %v812 = vunpack.c.l.b16 %v156
  %v813 = vunpack.c.l.b16 %v157
  %v814 = vunpack.c.l.b16 %v158
  %v815 = vunpack.c.l.b16 %v159
  %v816 = vunpack.c.l.b16 %v160
  %v817 = vunpack.c.l.b16 %v161
  %v818 = vunpack.c.l.b16 %v162
  %v819 = vunpack.c.l.b16 %v163
  %v820 = vunpack.c.l.b16 %v164
  %v821 = vunpack.c.l.b16 %v165
  %v822 = vunpack.c.l.b16 %v166
  %v823 = vunpack.c.l.b16 %v167
  %v824 = vunpack.c.l.b16 %v168
  %v825 = vunpack.c.l.b16 %v169
  %v826 = vunpack.c.l.b16 %v170
  %v827 = vunpack.c.l.b16 %v171
  %v828 = vunpack.c.l.b16 %v172
  %v829 = vunpack.c.l.b16 %v173
  %v830 = vunpack.c.l.b16 %v174
  %v831 = vunpack.c.l.b16 %v175
  %v832 = vunpack.c.l.b16 %v176
  %v833 = vunpack.c.l.b16 %v177
  %v834 = vunpack.c.l.b16 %v178
  %v835 = vunpack.c.l.b16 %v179
  %v836 = vunpack.c.l.b16 %v180
  %v837 = vunpack.c.l.b16 %v181
  %v838 = vunpack.c.l.b16 %v182
  %v839 = vunpack.c.l.b16 %v183
  %v840 = vunpack.c.l.b16 %v184
  %v841 = vunpack.c.l.b16 %v185
  %v842 = vunpack.c.l.b16 %v186
  %v843 = vunpack.c.l.b16 %v187
  %v844 = vunpack.c.l.b16 %v188
  %v845 = vunpack.c.l.b16 %v189
  %v846 = vunpack.c.l.b16 %v190
  %v847 = vunpack.c.l.b16 %v191
  %v848 = vunpack.c.l.b16 %v192
  %v849 = vunpack.c.l.b16 %v193
  %v850 = vunpack.c.l.b16 %v194
  %v851 = vunpack.c.l.b16 %v195
  %v852 = vunpack.c.l.b16 %v196
  %v853 = vunpack.c.l.b16 %v197
  %v854 = vunpack.c.l.b16 %v198
  %v855 = vunpack.c.l.b16 %v199
  %v856 = vunpack.c.l.b16 %v200
  %v857 = vunpack.c.l.b16 %v201
  %v858 = vunpack.c.l.b16 %v202
  %v859 = vunpack.c.l.b16 %v203
  %v860 = vunpack.c.l.b16 %v204
  %v861 = vunpack.c.l.b16 %v205
  %v862 = vunpack.c.l.b16 %v206
  %v863 = vunpack.c.l.b16 %v207
  %v864 = vunpack.c.l.b16 %v208
  %v865 = vunpack.c.l.b16 %v209
  %v866 = vunpack.c.l.b16 %v210
  %v867 = vunpack.c.l.b16 %v211
  %v868 = vunpack.c.l.b16 %v212
  %v869 = vunpack.c.l.b16 %v213
  %v870 = vunpack.c.l.b16 %v214
  %v871 = vunpack.c.l.b16 %v215
  %v872 = vunpack.c.l.b16 %v216
  %v873 = vunpack.c.l.b16 %v217
  %v874 = vunpack.c.l.b16 %v218
  %v875 = vunpack.c.l.b16 %v219
  %v876 = vunpack.c.l.b16 %v220
  %v877 = vunpack.c.l.b16 %v221
  %v878 = vunpack.c.l.b16 %v222
  %v879 = vunpack.c.l.b16 %v223
  %v880 = vunpack.c.l.b16 %v224
  %v881 = vunpack.c.l.b16 %v225
  %v882 = vunpack.c.l.b16 %v226
  %v883 = vunpack.c.l.b16 %v227
  %v884 = vunpack.c.l.b16 %v228
  %v885 = vunpack.c.l.b16 %v229
  %v886 = vunpack.c.l.b16 %v230
  %v887 = vunpack.c.l.b16 %v231
  %v888 = vunpack.c.l.b16 %v232
  %v889 = vunpack.c.l.b16 %v233
  %v890 = vunpack.c.l.b16 %v234
  %v891 = vunpack.c.l.b16 %v235
  %v892 = vunpack.c.l.b16 %v236
  %v893 = vunpack.c.l.b16 %v237
  %v894 = vunpack.c.l.b16 %v238
  %v895 = vunpack.c.l.b16 %v239
  %v896 = vunpack.c.l.b16 %v240
  %v897 = vunpack.c.l.b16 %v241
  %v898 = vunpack.c.l.b16 %v242
  %v899 = vunpack.c.l.b16 %v243
  %v900 = vunpack.c.l.b16 %v244
  %v901 = vunpack.c.l.b16 %v245
  %v902 = vunpack.c.l.b16 %v246
  %v903 = vunpack.c.l.b16 %v247
  %v904 = vunpack.c.l.b16 %v248
  %v905 = vunpack.c.l.b16 %v249
  %v906 = vunpack.c.l.b16 %v250
  %v907 = vunpack.c.l.b16 %v251
  %v908 = vunpack.c.l.b16 %v252
  %v909 = vunpack.c.l.b16 %v253
  %v910 = vunpack.c.l.b16 %v254
  %v911 = vunpack.c.l.b16 %v255
  %v912 = vunpack.c.l.b16 %v256
  %v913 = vunpack.c.l.b16 %v257
  %v914 = vunpack.c.l.b16 %v258
  %v915 = vunpack.c.l.b16 %v259
  %v916 = vunpack.c.l.b16 %v260
  %v917 = vunpack.c.l.b16 %v261
  %v918 = vunpack.c.l.b16 %v262
  %v919 = vunpack.c.l.b16 %v263
  %v920 = vunpack.c.l.b16 %v264
  %v921 = vunpack.c.l.b16 %v265
  %v922 = vunpack.c.l.b16 %v266
  %v923 = vunpack.c.l.b16 %v267
  %v924 = vunpack.c.l.b16 %v268
  %v925 = vunpack.c.l.b16 %v269
  %v926 = vunpack.c.l.b16 %v270
  %v927 = vunpack.c.l.b16 %v271
  %v928 = vunpack.c.l.b16 %v272
  %v929 = vunpack.c.l.b16 %v273
  %v930 = vunpack.c.l.b16 %v274
  %v931 = vunpack.c.l.b16 %v275
  %v932 = vunpack.c.l.b16 %v276
  %v933 = vunpack.c.l.b16 %v277
  %v934 = vunpack.c.l.b16 %v278
  %v935 = vunpack.c.l.b16 %v279
  %v936 = vunpack.c.l.b16 %v280
  %v937 = vunpack.c.l.b16 %v281
  %v938 = vunpack.c.l.b16 %v282
  %v939 = vunpack.c.l.b16 %v283
  %v940 = vunpack.c.l.b16 %v284
  %v941 = vunpack.c.l.b16 %v285
  %v942 = vunpack.c.l.b16 %v286
  %v943 = vunpack.c.l.b16 %v287
  %v944 = vunpack.c.l.b16 %v288
  %v945 = vunpack.c.l.b16 %v289
  %v946 = vunpack.c.l.b16 %v290
  %v947 = vunpack.c.l.b16 %v291
  %v948 = vunpack.c.l.b16 %v292
  %v949 = vunpack.c.l.b16 %v293
  %v950 = vunpack.c.l.b16 %v294
  %v951 = vunpack.c.l.b16 %v295
  %v952 = vunpack.c.l.b16 %v296
  %v953 = vunpack.c.l.b16 %v297
  %v954 = vunpack.c.l.b16 %v298
  %v955 = vunpack.c.l.b16 %v299
  %v956 = vunpack.c.l.b16 %v300
  %v957 = vunpack.c.l.b16 %v301
  %v958 = vunpack.c.l.b16 %v302
  %v959 = vunpack.c.l.b16 %v303
  %v960 = vunpack.c.l.b16 %v304
  %v961 = vunpack.c.l.b16 %v305
  %v962 = vunpack.c.l.b16 %v306
  %v963 = vunpack.c.l.b16 %v307
  %v964 = vunpack.c.l.b16 %v308
  %v965 = vunpack.c.l.b16 %v309
  %v966 = vunpack.c.l.b16 %v310
  %v967 = vunpack.c.l.b16 %v311
  %v968 = vunpack.c.l.b16 %v312
  %v969 = vunpack.c.l.b16 %v313
  %v970 = vunpack.c.l.b16 %v314
  %v971 = vunpack.c.l.b16 %v315
  %v972 = vunpack.c.l.b16 %v316
  %v973 = vunpack.c.l.b16 %v317
  %v974 = vunpack.c.l.b16 %v318
  %v975 = vunpack.c.l.b16 %v319
  %v976 = vunpack.c.l.b16 %v320
  %v977 = vunpack.c.l.b16 %v321
  %v978 = vunpack.c.l.b16 %v322
  %v979 = vunpack.c.l.b16 %v323
  %v980 = vunpack.c.l.b16 %v324
  %v981 = vunpack.c.l.b16 %v325
  %v982 = vunpack.c.l.b16 %v326
  %v983 = vunpack.c.l.b16 %v327
  %v984 = vunpack.c.l.b16 %v328
  %v985 = vunpack.c.l.b16 %v329
  %v986 = vunpack.c.l.b16 %v330
  %v987 = vunpack.c.l.b16 %v331
  %v988 = vunpack.c.l.b16 %v332
  %v989 = vunpack.c.l.b16 %v333
  %v990 = vunpack.c.l.b16 %v334
  %v991 = vunpack.c.l.b16 %v335
  %v992 = vunpack.c.l.b16 %v336
  %v993 = vunpack.c.l.b16 %v337
  %v994 = vunpack.c.l.b16 %v338
  %v995 = vunpack.c.l.b16 %v339
  %v996 = vunpack.c.l.b16 %v340
  %v997 = vunpack.c.l.b16 %v341
  %v998 = vunpack.c.l.b16 %v342
  %v999 = vunpack.c.l.b16 %v343
  %v1000 = vunpack.c.l.b16 %v344
  %v1001 = vunpack.c.l.b16 %v345
  %v1002 = vunpack.c.l.b16 %v346
  %v1003 = vunpack.c.l.b16 %v347
  %v1004 = vunpack.c.l.b16 %v348
  %v1005 = vpack.c.b16 %v682, %v681
  %v1006 = vpack.c.b16 %v684, %v683
  %v1007 = vpack.c.b16 %v686, %v685
  %v1008 = vpack.c.b16 %v688, %v687
  %v1009 = vpack.c.b16 %v690, %v689
  %v1010 = vpack.c.b16 %v692, %v691
  %v1011 = vpack.c.b16 %v694, %v693
  %v1012 = vpack.c.b16 %v696, %v695
  %v1013 = vpack.c.b16 %v698, %v697
  %v1014 = vpack.c.b16 %v700, %v699
  %v1015 = vpack.c.b16 %v702, %v701
  %v1016 = vpack.c.b16 %v704, %v703
  %v1017 = vpack.c.b16 %v706, %v705
  %v1018 = vpack.c.b16 %v708, %v707
  %v1019 = vpack.c.b16 %v710, %v709
  %v1020 = vpack.c.b16 %v712, %v711
  %v1021 = vpack.c.b16 %v714, %v713
  %v1022 = vpack.c.b16 %v716, %v715
  %v1023 = vpack.c.b16 %v718, %v717
  %v1024 = vpack.c.b16 %v720, %v719
  %v1025 = vpack.c.b16 %v722, %v721
  %v1026 = vpack.c.b16 %v724, %v723
  %v1027 = vpack.c.b16 %v726, %v725
  %v1028 = vpack.c.b16 %v728, %v727
  %v1029 = vpack.c.b16 %v730, %v729
  %v1030 = vpack.c.b16 %v732, %v731
  %v1031 = vpack.c.b16 %v734, %v733
  %v1032 = vpack.c.b16 %v736, %v735
  %v1033 = vpack.c.b16 %v738, %v737
  %v1034 = vpack.c.b16 %v740, %v739
  %v1035 = vpack.c.b16 %v742, %v741
  %v1036 = vpack.c.b16 %v744, %v743
  %v1037 = vpack.c.b16 %v746, %v745
  %v1038 = vpack.c.b16 %v748, %v747
  %v1039 = vpack.c.b16 %v750, %v749
  %v1040 = vpack.c.b16 %v752, %v751
  %v1041 = vpack.c.b16 %v754, %v753
  %v1042 = vpack.c.b16 %v756, %v755
  %v1043 = vpack.c.b16 %v758, %v757
  %v1044 = vpack.c.b16 %v760, %v759
  %v1045 = vpack.c.b16 %v762, %v761
  %v1046 = vpack.c.b16 %v764, %v763
  %v1047 = vpack.c.b16 %v766, %v765
  %v1048 = vpack.c.b16 %v768, %v767
  %v1049 = vpack.c.b16 %v770, %v769
  %v1050 = vpack.c.b16 %v772, %v771
  %v1051 = vpack.c.b16 %v774, %v773
  %v1052 = vpack.c.b16 %v776, %v775
  %v1053 = vpack.c.b16 %v778, %v777
  %v1054 = vpack.c.b16 %v780, %v779
  %v1055 = vpack.c.b16 %v782, %v781
  %v1056 = vpack.c.b16 %v784, %v783
  %v1057 = vpack.c.b16 %v786, %v785
  %v1058 = vpack.c.b16 %v788, %v787
  %v1059 = vpack.c.b16 %v790, %v789
  %v1060 = vpack.c.b16 %v792, %v791
  %v1061 = vpack.c.b16 %v794, %v793
  %v1062 = vpack.c.b16 %v796, %v795
  %v1063 = vpack.c.b16 %v798, %v797
  %v1064 = vpack.c.b16 %v800, %v799
  %v1065 = vpack.c.b16 %v802, %v801
  %v1066 = vpack.c.b16 %v804, %v803
  %v1067 = vpack.c.b16 %v806, %v805
  %v1068 = vpack.c.b16 %v808, %v807
  %v1069 = vpack.c.b16 %v810, %v809
  %v1070 = vpack.c.b16 %v812, %v811
  %v1071 = vpack.c.b16 %v814, %v813
  %v1072 = vpack.c.b16 %v816, %v815
  %v1073 = vpack.c.b16 %v818, %v817
  %v1074 = vpack.c.b16 %v820, %v819
  %v1075 = vpack.c.b16 %v822, %v821
  %v1076 = vpack.c.b16 %v824, %v823
  %v1077 = vpack.c.b16 %v826, %v825
  %v1078 = vpack.c.b16 %v828, %v827
  %v1079 = vpack.c.b16 %v830, %v829
  %v1080 = vpack.c.b16 %v832, %v831
  %v1081 = vpack.c.b16 %v834, %v833
  %v1082 = vpack.c.b16 %v836, %v835
  %v1083 = vpack.c.b16 %v838, %v837
  %v1084 = vpack.c.b16 %v840, %v839
  %v1085 = vpack.c.b16 %v842, %v841
  %v1086 = vpack.c.b16 %v844, %v843
  %v1087 = vpack.c.b16 %v846, %v845
  %v1088 = vpack.c.b16 %v848, %v847
  %v1089 = vpack.c.b16 %v850, %v849
  %v1090 = vpack.c.b16 %v852, %v851
  %v1091 = vpack.c.b16 %v854, %v853
  %v1092 = vpack.c.b16 %v856, %v855
  %v1093 = vpack.c.b16 %v858, %v857
  %v1094 = vpack.c.b16 %v860, %v859
  %v1095 = vpack.c.b16 %v862, %v861
  %v1096 = vpack.c.b16 %v864, %v863
  %v1097 = vpack.c.b16 %v866, %v865
  %v1098 = vpack.c.b16 %v868, %v867
  %v1099 = vpack.c.b16 %v870, %v869
  %v1100 = vpack.c.b16 %v872, %v871
  %v1101 = vpack.c.b16 %v874, %v873
  %v1102 = vpack.c.b16 %v876, %v875
  %v1103 = vpack.c.b16 %v878, %v877
  %v1104 = vpack.c.b16 %v880, %v879
  %v1105 = vpack.c.b16 %v882, %v881
  %v1106 = vpack.c.b16 %v884, %v883
  %v1107 = vpack.c.b16 %v886, %v885
  %v1108 = vpack.c.b16 %v888, %v887
  %v1109 = vpack.c.b16 %v890, %v889
  %v1110 = vpack.c.b16 %v892, %v891
  %v1111 = vpack.c.b16 %v894, %v893
  %v1112 = vpack.c.b16 %v896, %v895
  %v1113 = vpack.c.b16 %v898, %v897
  %v1114 = vpack.c.b16 %v900, %v899
  %v1115 = vpack.c.b16 %v902, %v901
  %v1116 = vpack.c.b16 %v904, %v903
  %v1117 = vpack.c.b16 %v906, %v905
  %v1118 = vpack.c.b16 %v908, %v907
  %v1119 = vpack.c.b16 %v910, %v909
  %v1120 = vpack.c.b16 %v912, %v911
  %v1121 = vpack.c.b16 %v914, %v913
  %v1122 = vpack.c.b16 %v916, %v915
  %v1123 = vpack.c.b16 %v918, %v917
  %v1124 = vpack.c.b16 %v920, %v919
  %v1125 = vpack.c.b16 %v922, %v921
  %v1126 = vpack.c.b16 %v924, %v923
  %v1127 = vpack.c.b16 %v926, %v925
  %v1128 = vpack.c.b16 %v928, %v927
  %v1129 = vpack.c.b16 %v930, %v929
  %v1130 = vpack.c.b16 %v932, %v931
  %v1131 = vpack.c.b16 %v934, %v933
  %v1132 = vpack.c.b16 %v936, %v935
  %v1133 = vpack.c.b16 %v938, %v937
  %v1134 = vpack.c.b16 %v940, %v939
  %v1135 = vpack.c.b16 %v942, %v941
  %v1136 = vpack.c.b16 %v944, %v943
  %v1137 = vpack.c.b16 %v946, %v945
  %v1138 = vpack.c.b16 %v948, %v947
  %v1139 = vpack.c.b16 %v950, %v949
  %v1140 = vpack.c.b16 %v952, %v951
  %v1141 = vpack.c.b16 %v954, %v953
  %v1142 = vpack.c.b16 %v956, %v955
  %v1143 = vpack.c.b16 %v958, %v957
  %v1144 = vpack.c.b16 %v960, %v959
  %v1145 = vpack.c.b16 %v962, %v961
  %v1146 = vpack.c.b16 %v964, %v963
  %v1147 = vpack.c.b16 %v966, %v965
  %v1148 = vpack.c.b16 %v968, %v967
  %v1149 = vpack.c.b16 %v970, %v969
  %v1150 = vpack.c.b16 %v972, %v971
  %v1151 = vpack.c.b16 %v974, %v973
  %v1152 = vpack.c.b16 %v976, %v975
  %v1153 = vpack.c.b16 %v978, %v977
  %v1154 = vpack.c.b16 %v980, %v979
  %v1155 = vpack.c.b16 %v982, %v981
  %v1156 = vpack.c.b16 %v984, %v983
  %v1157 = vpack.c.b16 %v986, %v985
  %v1158 = vpack.c.b16 %v988, %v987
  %v1159 = vpack.c.b16 %v990, %v989
  %v1160 = vpack.c.b16 %v992, %v991
  %v1161 = vpack.c.b16 %v994, %v993
  %v1162 = vpack.c.b16 %v996, %v995
  %v1163 = vpack.c.b16 %v998, %v997
  %v1164 = vpack.c.b16 %v1000, %v999
  %v1165 = vpack.c.b16 %v1002, %v1001
  %v1166 = vpack.c.b16 %v1004, %v1003
  %v1171 = vunpack.c.l.b16 %v349
  %v1172 = vunpack.c.l.b16 %v350
  %v1173 = vunpack.c.l.b16 %v351
  %v1174 = vunpack.c.l.b16 %v352
  %v1175 = vpack.c.b16 %v1172, %v1171
  %v1176 = vpack.c.b16 %v1174, %v1173
  %vm1179 = vcmask 261120
  %v1181 = vsel %vm1179, %v1005, 0
  %v1184 = vsel %vm1179, %v1006, 0
  %v1187 = vsel %vm1179, %v1007, 0
  %v1190 = vsel %vm1179, %v1008, 0
  %v1193 = vsel %vm1179, %v1009, 0
  %v1196 = vsel %vm1179, %v1010, 0
  %v1199 = vsel %vm1179, %v1011, 0
  %v1202 = vsel %vm1179, %v1012, 0
  %v1205 = vsel %vm1179, %v1013, 0
  %v1208 = vsel %vm1179, %v1014, 0
  %v1211 = vsel %vm1179, %v1015, 0
  %v1214 = vsel %vm1179, %v1016, 0
  %v1217 = vsel %vm1179, %v1017, 0
  %v1220 = vsel %vm1179, %v1018, 0
  %v1223 = vsel %vm1179, %v1019, 0
  %v1226 = vsel %vm1179, %v1020, 0
  %v1229 = vsel %vm1179, %v1021, 0
  %v1232 = vsel %vm1179, %v1022, 0
  %v1235 = vsel %vm1179, %v1023, 0
  %v1238 = vsel %vm1179, %v1024, 0
  %v1241 = vsel %vm1179, %v1025, 0
  %v1244 = vsel %vm1179, %v1026, 0
  %v1247 = vsel %vm1179, %v1027, 0
  %v1250 = vsel %vm1179, %v1028, 0
  %v1253 = vsel %vm1179, %v1029, 0
  %v1256 = vsel %vm1179, %v1030, 0
  %v1259 = vsel %vm1179, %v1031, 0
  %v1262 = vsel %vm1179, %v1032, 0
  %v1265 = vsel %vm1179, %v1033, 0
  %v1268 = vsel %vm1179, %v1034, 0
  %v1271 = vsel %vm1179, %v1035, 0
  %v1274 = vsel %vm1179, %v1036, 0
  %v1277 = vsel %vm1179, %v1037, 0
  %v1280 = vsel %vm1179, %v1038, 0
  %v1283 = vsel %vm1179, %v1039, 0
  %v1286 = vsel %vm1179, %v1040, 0
  %v1289 = vsel %vm1179, %v1041, 0
  %v1292 = vsel %vm1179, %v1042, 0
  %v1295 = vsel %vm1179, %v1043, 0
  %v1298 = vsel %vm1179, %v1044, 0
  %v1301 = vsel %vm1179, %v1045, 0
  %v1304 = vsel %vm1179, %v1046, 0
  %v1307 = vsel %vm1179, %v1047, 0
  %v1310 = vsel %vm1179, %v1048, 0
  %v1313 = vsel %vm1179, %v1049, 0
  %v1316 = vsel %vm1179, %v1050, 0
  %v1319 = vsel %vm1179, %v1051, 0
  %v1322 = vsel %vm1179, %v1052, 0
  %v1325 = vsel %vm1179, %v1053, 0
  %v1328 = vsel %vm1179, %v1054, 0
  %v1331 = vsel %vm1179, %v1055, 0
  %v1334 = vsel %vm1179, %v1056, 0
  %v1337 = vsel %vm1179, %v1057, 0
  %v1340 = vsel %vm1179, %v1058, 0
  %v1343 = vsel %vm1179, %v1059, 0
  %v1346 = vsel %vm1179, %v1060, 0
  %v1349 = vsel %vm1179, %v1061, 0
  %v1352 = vsel %vm1179, %v1062, 0
  %v1355 = vsel %vm1179, %v1063, 0
  %v1358 = vsel %vm1179, %v1064, 0
  %v1361 = vsel %vm1179, %v1065, 0
  %v1364 = vsel %vm1179, %v1066, 0
  %v1367 = vsel %vm1179, %v1067, 0
  %v1370 = vsel %vm1179, %v1068, 0
  %v1373 = vsel %vm1179, %v1069, 0
  %v1376 = vsel %vm1179, %v1070, 0
  %v1379 = vsel %vm1179, %v1071, 0
  %v1382 = vsel %vm1179, %v1072, 0
  %v1385 = vsel %vm1179, %v1073, 0
  %v1388 = vsel %vm1179, %v1074, 0
  %v1391 = vsel %vm1179, %v1075, 0
  %v1394 = vsel %vm1179, %v1076, 0
  %v1397 = vsel %vm1179, %v1077, 0
  %v1400 = vsel %vm1179, %v1078, 0
  %v1403 = vsel %vm1179, %v1079, 0
  %v1406 = vsel %vm1179, %v1080, 0
  %v1409 = vsel %vm1179, %v1081, 0
  %v1412 = vsel %vm1179, %v1082, 0
  %v1415 = vsel %vm1179, %v1083, 0
  %v1418 = vsel %vm1179, %v1084, 0
  %v1421 = vsel %vm1179, %v1085, 0
  %v1424 = vsel %vm1179, %v1086, 0
  %v1427 = vsel %vm1179, %v1087, 0
  %v1430 = vsel %vm1179, %v1088, 0
  %v1433 = vsel %vm1179, %v1089, 0
  %v1436 = vsel %vm1179, %v1090, 0
  %v1439 = vsel %vm1179, %v1091, 0
  %v1442 = vsel %vm1179, %v1092, 0
  %v1445 = vsel %vm1179, %v1093, 0
  %v1448 = vsel %vm1179, %v1094, 0
  %v1451 = vsel %vm1179, %v1095, 0
  %v1454 = vsel %vm1179, %v1096, 0
  %v1457 = vsel %vm1179, %v1097, 0
  %v1460 = vsel %vm1179, %v1098, 0
  %v1463 = vsel %vm1179, %v1099, 0
  %v1466 = vsel %vm1179, %v1100, 0
  %v1469 = vsel %vm1179, %v1101, 0
  %v1472 = vsel %vm1179, %v1102, 0
  %v1475 = vsel %vm1179, %v1103, 0
  %v1478 = vsel %vm1179, %v1104, 0
  %v1481 = vsel %vm1179, %v1105, 0
  %v1484 = vsel %vm1179, %v1106, 0
  %v1487 = vsel %vm1179, %v1107, 0
  %v1490 = vsel %vm1179, %v1108, 0
  %v1493 = vsel %vm1179, %v1109, 0
  %v1496 = vsel %vm1179, %v1110, 0
  %v1499 = vsel %vm1179, %v1111, 0
  %v1502 = vsel %vm1179, %v1112, 0
  %v1505 = vsel %vm1179, %v1113, 0
  %v1508 = vsel %vm1179, %v1114, 0
  %v1511 = vsel %vm1179, %v1115, 0
  %v1514 = vsel %vm1179, %v1116, 0
  %v1517 = vsel %vm1179, %v1117, 0
  %v1520 = vsel %vm1179, %v1118, 0
  %v1523 = vsel %vm1179, %v1119, 0
  %v1526 = vsel %vm1179, %v1120, 0
  %v1529 = vsel %vm1179, %v1121, 0
  %v1532 = vsel %vm1179, %v1122, 0
  %v1535 = vsel %vm1179, %v1123, 0
  %v1538 = vsel %vm1179, %v1124, 0
  %v1541 = vsel %vm1179, %v1125, 0
  %v1544 = vsel %vm1179, %v1126, 0
  %v1547 = vsel %vm1179, %v1127, 0
  %v1550 = vsel %vm1179, %v1128, 0
  %v1553 = vsel %vm1179, %v1129, 0
  %v1556 = vsel %vm1179, %v1130, 0
  %v1559 = vsel %vm1179, %v1131, 0
  %v1562 = vsel %vm1179, %v1132, 0
  %v1565 = vsel %vm1179, %v1133, 0
  %v1568 = vsel %vm1179, %v1134, 0
  %v1571 = vsel %vm1179, %v1135, 0
  %v1574 = vsel %vm1179, %v1136, 0
  %v1577 = vsel %vm1179, %v1137, 0
  %v1580 = vsel %vm1179, %v1138, 0
  %v1583 = vsel %vm1179, %v1139, 0
  %v1586 = vsel %vm1179, %v1140, 0
  %v1589 = vsel %vm1179, %v1141, 0
  %v1592 = vsel %vm1179, %v1142, 0
  %v1595 = vsel %vm1179, %v1143, 0
  %v1598 = vsel %vm1179, %v1144, 0
  %v1601 = vsel %vm1179, %v1145, 0
  %v1604 = vsel %vm1179, %v1146, 0
  %v1607 = vsel %vm1179, %v1147, 0
  %v1610 = vsel %vm1179, %v1148, 0
  %v1613 = vsel %vm1179, %v1149, 0
  %v1616 = vsel %vm1179, %v1150, 0
  %v1619 = vsel %vm1179, %v1151, 0
  %v1622 = vsel %vm1179, %v1152, 0
  %v1625 = vsel %vm1179, %v1153, 0
  %v1628 = vsel %vm1179, %v1154, 0
  %v1631 = vsel %vm1179, %v1155, 0
  %v1634 = vsel %vm1179, %v1156, 0
  %v1637 = vsel %vm1179, %v1157, 0
  %v1640 = vsel %vm1179, %v1158, 0
  %v1643 = vsel %vm1179, %v1159, 0
  %v1646 = vsel %vm1179, %v1160, 0
  %v1649 = vsel %vm1179, %v1161, 0
  %v1652 = vsel %vm1179, %v1162, 0
  %v1655 = vsel %vm1179, %v1163, 0
  %v1658 = vsel %vm1179, %v1164, 0
  %v1661 = vsel %vm1179, %v1165, 0
  %v1664 = vsel %vm1179, %v1166, 0
  %1666 = vmatprep.subr.bf16.mxu0 0
  %1667 = vmatpush1.bf16.msra.mxu0 %v1175
  %1668 = vmatprep.subr.bf16.mxu0 0
  %1669 = vmatpush1.bf16.msra.mxu0 %v1176
  %1670 = vmatprep.subr.bf16.mxu0 0
  %1671 = vmatpush1.bf16.msra.mxu0 0
  %1672 = vmatprep.subr.bf16.mxu0 0
  %1673 = vmatpush1.bf16.msra.mxu0 0
  %1674 = vmatprep.subr.bf16.mxu0 0
  %1675 = vmatpush1.bf16.msra.mxu0 0
  %1676 = vmatprep.subr.bf16.mxu0 0
  %1677 = vmatpush1.bf16.msra.mxu0 0
  %1678 = vmatprep.subr.bf16.mxu0 0
  %1679 = vmatpush1.bf16.msra.mxu0 0
  %1680 = vmatprep.subr.bf16.mxu0 0
  %1681 = vmatpush1.bf16.msra.mxu0 0
  %1682 = vmatprep.subr.bf16.mxu0 0
  %1683 = vmatpush1.bf16.msra.mxu0 0
  %1684 = vmatprep.subr.bf16.mxu0 0
  %1685 = vmatpush1.bf16.msra.mxu0 0
  %1686 = vmatprep.subr.bf16.mxu0 0
  %1687 = vmatpush1.bf16.msra.mxu0 0
  %1688 = vmatprep.subr.bf16.mxu0 0
  %1689 = vmatpush1.bf16.msra.mxu0 0
  %1690 = vmatprep.subr.bf16.mxu0 0
  %1691 = vmatpush1.bf16.msra.mxu0 0
  %1692 = vmatprep.subr.bf16.mxu0 0
  %1693 = vmatpush1.bf16.msra.mxu0 0
  %1694 = vmatprep.subr.bf16.mxu0 0
  %1695 = vmatpush1.bf16.msra.mxu0 0
  %1696 = vmatprep.subr.bf16.mxu0 0
  %1697 = vmatpush1.bf16.msra.mxu0 0
  %1698 = vmatprep.mubr.bf16.mxu0 0
  %1699 = vmatmul.mubr.bf16.gmra.mrb[0].mxu0 %v1181
  %v1700 = vpop.f32.mrb[0].mxu0
  %v1701 = vadd.f32 %v356, %v1700
  %v1702 = vpop.f32.mrb[0].mxu0
  %v1703 = vpop.f32.mrb[0].mxu0
  %v1704 = vadd.f32 %v356, %v1703
  %v1705 = vpop.f32.mrb[0].mxu0
  %1706 = vmatprep.mubr.bf16.mxu0 0
  %1707 = vmatmul.mubr.bf16.gmra.mrb[0].mxu0 %v1184
  %v1708 = vpop.f32.mrb[0].mxu0
  %v1709 = vadd.f32 %v356, %v1708
  %v1710 = vpop.f32.mrb[0].mxu0
  %v1711 = vpop.f32.mrb[0].mxu0
  %v1712 = vadd.f32 %v356, %v1711
  %v1713 = vpop.f32.mrb[0].mxu0
  %1714 = vmatprep.mubr.bf16.mxu0 0
  %1715 = vmatmul.mubr.bf16.gmra.mrb[0].mxu0 %v1187
  %v1716 = vpop.f32.mrb[0].mxu0
  %v1717 = vadd.f32 %v356, %v1716
  %v1718 = vpop.f32.mrb[0].mxu0
  %v1719 = vpop.f32.mrb[0].mxu0
  %v1720 = vadd.f32 %v356, %v1719
  %v1721 = vpop.f32.mrb[0].mxu0
  %1722 = vmatprep.mubr.bf16.mxu0 0
  %1723 = vmatmul.mubr.bf16.gmra.mrb[0].mxu0 %v1190
  %v1724 = vpop.f32.mrb[0].mxu0
  %v1725 = vadd.f32 %v356, %v1724
  %v1726 = vpop.f32.mrb[0].mxu0
  %v1727 = vpop.f32.mrb[0].mxu0
  %v1728 = vadd.f32 %v356, %v1727
  %v1729 = vpop.f32.mrb[0].mxu0
  %1730 = vmatprep.mubr.bf16.mxu0 0
  %1731 = vmatmul.mubr.bf16.gmra.mrb[0].mxu0 %v1193
  %v1732 = vpop.f32.mrb[0].mxu0
  %v1733 = vadd.f32 %v356, %v1732
  %v1734 = vpop.f32.mrb[0].mxu0
  %v1735 = vpop.f32.mrb[0].mxu0
  %v1736 = vadd.f32 %v356, %v1735
  %v1737 = vpop.f32.mrb[0].mxu0
  %1738 = vmatprep.mubr.bf16.mxu0 0
  %1739 = vmatmul.mubr.bf16.gmra.mrb[0].mxu0 %v1196
  %v1740 = vpop.f32.mrb[0].mxu0
  %v1741 = vadd.f32 %v356, %v1740
  %v1742 = vpop.f32.mrb[0].mxu0
  %v1743 = vpop.f32.mrb[0].mxu0
  %v1744 = vadd.f32 %v356, %v1743
  %v1745 = vpop.f32.mrb[0].mxu0
  %1746 = vmatprep.mubr.bf16.mxu0 0
  %1747 = vmatmul.mubr.bf16.gmra.mrb[0].mxu0 %v1199
  %v1748 = vpop.f32.mrb[0].mxu0
  %v1749 = vadd.f32 %v356, %v1748
  %v1750 = vpop.f32.mrb[0].mxu0
  %v1751 = vpop.f32.mrb[0].mxu0
  %v1752 = vadd.f32 %v356, %v1751
  %v1753 = vpop.f32.mrb[0].mxu0
  %1754 = vmatprep.mubr.bf16.mxu0 0
  %1755 = vmatmul.mubr.bf16.gmra.mrb[0].mxu0 %v1202
  %v1756 = vpop.f32.mrb[0].mxu0
  %v1757 = vadd.f32 %v356, %v1756
  %v1758 = vpop.f32.mrb[0].mxu0
  %v1759 = vpop.f32.mrb[0].mxu0
  %v1760 = vadd.f32 %v356, %v1759
  %v1761 = vpop.f32.mrb[0].mxu0
  %1762 = vmatprep.mubr.bf16.mxu0 0
  %1763 = vmatmul.mubr.bf16.gmra.mrb[0].mxu0 %v1205
  %v1764 = vpop.f32.mrb[0].mxu0
  %v1765 = vadd.f32 %v356, %v1764
  %v1766 = vpop.f32.mrb[0].mxu0
  %v1767 = vpop.f32.mrb[0].mxu0
  %v1768 = vadd.f32 %v356, %v1767
  %v1769 = vpop.f32.mrb[0].mxu0
  %1770 = vmatprep.mubr.bf16.mxu0 0
  %1771 = vmatmul.mubr.bf16.gmra.mrb[0].mxu0 %v1208
  %v1772 = vpop.f32.mrb[0].mxu0
  %v1773 = vadd.f32 %v356, %v1772
  %v1774 = vpop.f32.mrb[0].mxu0
  %v1775 = vpop.f32.mrb[0].mxu0
  %v1776 = vadd.f32 %v356, %v1775
  %v1777 = vpop.f32.mrb[0].mxu0
  %1778 = vmatprep.mubr.bf16.mxu0 0
  %1779 = vmatmul.mubr.bf16.gmra.mrb[0].mxu0 %v1211
  %v1780 = vpop.f32.mrb[0].mxu0
  %v1781 = vadd.f32 %v356, %v1780
  %v1782 = vpop.f32.mrb[0].mxu0
  %v1783 = vpop.f32.mrb[0].mxu0
  %v1784 = vadd.f32 %v356, %v1783
  %v1785 = vpop.f32.mrb[0].mxu0
  %1786 = vmatprep.mubr.bf16.mxu0 0
  %1787 = vmatmul.mubr.bf16.gmra.mrb[0].mxu0 %v1214
  %v1788 = vpop.f32.mrb[0].mxu0
  %v1789 = vadd.f32 %v356, %v1788
  %v1790 = vpop.f32.mrb[0].mxu0
  %v1791 = vpop.f32.mrb[0].mxu0
  %v1792 = vadd.f32 %v356, %v1791
  %v1793 = vpop.f32.mrb[0].mxu0
  %1794 = vmatprep.mubr.bf16.mxu0 0
  %1795 = vmatmul.mubr.bf16.gmra.mrb[0].mxu0 %v1217
  %v1796 = vpop.f32.mrb[0].mxu0
  %v1797 = vadd.f32 %v356, %v1796
  %v1798 = vpop.f32.mrb[0].mxu0
  %v1799 = vpop.f32.mrb[0].mxu0
  %v1800 = vadd.f32 %v356, %v1799
  %v1801 = vpop.f32.mrb[0].mxu0
  %1802 = vmatprep.mubr.bf16.mxu0 0
  %1803 = vmatmul.mubr.bf16.gmra.mrb[0].mxu0 %v1220
  %v1804 = vpop.f32.mrb[0].mxu0
  %v1805 = vadd.f32 %v356, %v1804
  %v1806 = vpop.f32.mrb[0].mxu0
  %v1807 = vpop.f32.mrb[0].mxu0
  %v1808 = vadd.f32 %v356, %v1807
  %v1809 = vpop.f32.mrb[0].mxu0
  %1810 = vmatprep.mubr.bf16.mxu0 0
  %1811 = vmatmul.mubr.bf16.gmra.mrb[0].mxu0 %v1223
  %v1812 = vpop.f32.mrb[0].mxu0
  %v1813 = vadd.f32 %v356, %v1812
  %v1814 = vpop.f32.mrb[0].mxu0
  %v1815 = vpop.f32.mrb[0].mxu0
  %v1816 = vadd.f32 %v356, %v1815
  %v1817 = vpop.f32.mrb[0].mxu0
  %1818 = vmatprep.mubr.bf16.mxu0 0
  %1819 = vmatmul.mubr.bf16.gmra.mrb[0].mxu0 %v1226
  %v1820 = vpop.f32.mrb[0].mxu0
  %v1821 = vadd.f32 %v356, %v1820
  %v1822 = vpop.f32.mrb[0].mxu0
  %v1823 = vpop.f32.mrb[0].mxu0
  %v1824 = vadd.f32 %v356, %v1823
  %v1825 = vpop.f32.mrb[0].mxu0
  %1826 = vmatprep.mubr.bf16.mxu0 0
  %1827 = vmatmul.mubr.bf16.gmra.mrb[0].mxu0 %v1229
  %v1828 = vpop.f32.mrb[0].mxu0
  %v1829 = vadd.f32 %v356, %v1828
  %v1830 = vpop.f32.mrb[0].mxu0
  %v1831 = vpop.f32.mrb[0].mxu0
  %v1832 = vadd.f32 %v356, %v1831
  %v1833 = vpop.f32.mrb[0].mxu0
  %1834 = vmatprep.mubr.bf16.mxu0 0
  %1835 = vmatmul.mubr.bf16.gmra.mrb[0].mxu0 %v1232
  %v1836 = vpop.f32.mrb[0].mxu0
  %v1837 = vadd.f32 %v356, %v1836
  %v1838 = vpop.f32.mrb[0].mxu0
  %v1839 = vpop.f32.mrb[0].mxu0
  %v1840 = vadd.f32 %v356, %v1839
  %v1841 = vpop.f32.mrb[0].mxu0
  %1842 = vmatprep.mubr.bf16.mxu0 0
  %1843 = vmatmul.mubr.bf16.gmra.mrb[0].mxu0 %v1235
  %v1844 = vpop.f32.mrb[0].mxu0
  %v1845 = vadd.f32 %v356, %v1844
  %v1846 = vpop.f32.mrb[0].mxu0
  %v1847 = vpop.f32.mrb[0].mxu0
  %v1848 = vadd.f32 %v356, %v1847
  %v1849 = vpop.f32.mrb[0].mxu0
  %1850 = vmatprep.mubr.bf16.mxu0 0
  %1851 = vmatmul.mubr.bf16.gmra.mrb[0].mxu0 %v1238
  %v1852 = vpop.f32.mrb[0].mxu0
  %v1853 = vadd.f32 %v356, %v1852
  %v1854 = vpop.f32.mrb[0].mxu0
  %v1855 = vpop.f32.mrb[0].mxu0
  %v1856 = vadd.f32 %v356, %v1855
  %v1857 = vpop.f32.mrb[0].mxu0
  %1858 = vmatprep.mubr.bf16.mxu0 0
  %1859 = vmatmul.mubr.bf16.gmra.mrb[0].mxu0 %v1241
  %v1860 = vpop.f32.mrb[0].mxu0
  %v1861 = vadd.f32 %v356, %v1860
  %v1862 = vpop.f32.mrb[0].mxu0
  %v1863 = vpop.f32.mrb[0].mxu0
  %v1864 = vadd.f32 %v356, %v1863
  %v1865 = vpop.f32.mrb[0].mxu0
  %1866 = vmatprep.mubr.bf16.mxu0 0
  %1867 = vmatmul.mubr.bf16.gmra.mrb[0].mxu0 %v1244
  %v1868 = vpop.f32.mrb[0].mxu0
  %v1869 = vadd.f32 %v356, %v1868
  %v1870 = vpop.f32.mrb[0].mxu0
  %v1871 = vpop.f32.mrb[0].mxu0
  %v1872 = vadd.f32 %v356, %v1871
  %v1873 = vpop.f32.mrb[0].mxu0
  %1874 = vmatprep.mubr.bf16.mxu0 0
  %1875 = vmatmul.mubr.bf16.gmra.mrb[0].mxu0 %v1247
  %v1876 = vpop.f32.mrb[0].mxu0
  %v1877 = vadd.f32 %v356, %v1876
  %v1878 = vpop.f32.mrb[0].mxu0
  %v1879 = vpop.f32.mrb[0].mxu0
  %v1880 = vadd.f32 %v356, %v1879
  %v1881 = vpop.f32.mrb[0].mxu0
  %1882 = vmatprep.mubr.bf16.mxu0 0
  %1883 = vmatmul.mubr.bf16.gmra.mrb[0].mxu0 %v1250
  %v1884 = vpop.f32.mrb[0].mxu0
  %v1885 = vadd.f32 %v356, %v1884
  %v1886 = vpop.f32.mrb[0].mxu0
  %v1887 = vpop.f32.mrb[0].mxu0
  %v1888 = vadd.f32 %v356, %v1887
  %v1889 = vpop.f32.mrb[0].mxu0
  %1890 = vmatprep.mubr.bf16.mxu0 0
  %1891 = vmatmul.mubr.bf16.gmra.mrb[0].mxu0 %v1253
  %v1892 = vpop.f32.mrb[0].mxu0
  %v1893 = vadd.f32 %v356, %v1892
  %v1894 = vpop.f32.mrb[0].mxu0
  %v1895 = vpop.f32.mrb[0].mxu0
  %v1896 = vadd.f32 %v356, %v1895
  %v1897 = vpop.f32.mrb[0].mxu0
  %1898 = vmatprep.mubr.bf16.mxu0 0
  %1899 = vmatmul.mubr.bf16.gmra.mrb[0].mxu0 %v1256
  %v1900 = vpop.f32.mrb[0].mxu0
  %v1901 = vadd.f32 %v356, %v1900
  %v1902 = vpop.f32.mrb[0].mxu0
  %v1903 = vpop.f32.mrb[0].mxu0
  %v1904 = vadd.f32 %v356, %v1903
  %v1905 = vpop.f32.mrb[0].mxu0
  %1906 = vmatprep.mubr.bf16.mxu0 0
  %1907 = vmatmul.mubr.bf16.gmra.mrb[0].mxu0 %v1259
  %v1908 = vpop.f32.mrb[0].mxu0
  %v1909 = vadd.f32 %v356, %v1908
  %v1910 = vpop.f32.mrb[0].mxu0
  %v1911 = vpop.f32.mrb[0].mxu0
  %v1912 = vadd.f32 %v356, %v1911
  %v1913 = vpop.f32.mrb[0].mxu0
  %1914 = vmatprep.mubr.bf16.mxu0 0
  %1915 = vmatmul.mubr.bf16.gmra.mrb[0].mxu0 %v1262
  %v1916 = vpop.f32.mrb[0].mxu0
  %v1917 = vadd.f32 %v356, %v1916
  %v1918 = vpop.f32.mrb[0].mxu0
  %v1919 = vpop.f32.mrb[0].mxu0
  %v1920 = vadd.f32 %v356, %v1919
  %v1921 = vpop.f32.mrb[0].mxu0
  %1922 = vmatprep.mubr.bf16.mxu0 0
  %1923 = vmatmul.mubr.bf16.gmra.mrb[0].mxu0 %v1265
  %v1924 = vpop.f32.mrb[0].mxu0
  %v1925 = vadd.f32 %v356, %v1924
  %v1926 = vpop.f32.mrb[0].mxu0
  %v1927 = vpop.f32.mrb[0].mxu0
  %v1928 = vadd.f32 %v356, %v1927
  %v1929 = vpop.f32.mrb[0].mxu0
  %1930 = vmatprep.mubr.bf16.mxu0 0
  %1931 = vmatmul.mubr.bf16.gmra.mrb[0].mxu0 %v1268
  %v1932 = vpop.f32.mrb[0].mxu0
  %v1933 = vadd.f32 %v356, %v1932
  %v1934 = vpop.f32.mrb[0].mxu0
  %v1935 = vpop.f32.mrb[0].mxu0
  %v1936 = vadd.f32 %v356, %v1935
  %v1937 = vpop.f32.mrb[0].mxu0
  %1938 = vmatprep.mubr.bf16.mxu0 0
  %1939 = vmatmul.mubr.bf16.gmra.mrb[0].mxu0 %v1271
  %v1940 = vpop.f32.mrb[0].mxu0
  %v1941 = vadd.f32 %v356, %v1940
  %v1942 = vpop.f32.mrb[0].mxu0
  %v1943 = vpop.f32.mrb[0].mxu0
  %v1944 = vadd.f32 %v356, %v1943
  %v1945 = vpop.f32.mrb[0].mxu0
  %1946 = vmatprep.mubr.bf16.mxu0 0
  %1947 = vmatmul.mubr.bf16.gmra.mrb[0].mxu0 %v1274
  %v1948 = vpop.f32.mrb[0].mxu0
  %v1949 = vadd.f32 %v356, %v1948
  %v1950 = vpop.f32.mrb[0].mxu0
  %v1951 = vpop.f32.mrb[0].mxu0
  %v1952 = vadd.f32 %v356, %v1951
  %v1953 = vpop.f32.mrb[0].mxu0
  %1954 = vmatprep.mubr.bf16.mxu0 0
  %1955 = vmatmul.mubr.bf16.gmra.mrb[0].mxu0 %v1277
  %v1956 = vpop.f32.mrb[0].mxu0
  %v1957 = vadd.f32 %v356, %v1956
  %v1958 = vpop.f32.mrb[0].mxu0
  %v1959 = vpop.f32.mrb[0].mxu0
  %v1960 = vadd.f32 %v356, %v1959
  %v1961 = vpop.f32.mrb[0].mxu0
  %1962 = vmatprep.mubr.bf16.mxu0 0
  %1963 = vmatmul.mubr.bf16.gmra.mrb[0].mxu0 %v1280
  %v1964 = vpop.f32.mrb[0].mxu0
  %v1965 = vadd.f32 %v356, %v1964
  %v1966 = vpop.f32.mrb[0].mxu0
  %v1967 = vpop.f32.mrb[0].mxu0
  %v1968 = vadd.f32 %v356, %v1967
  %v1969 = vpop.f32.mrb[0].mxu0
  %1970 = vmatprep.mubr.bf16.mxu0 0
  %1971 = vmatmul.mubr.bf16.gmra.mrb[0].mxu0 %v1283
  %v1972 = vpop.f32.mrb[0].mxu0
  %v1973 = vadd.f32 %v356, %v1972
  %v1974 = vpop.f32.mrb[0].mxu0
  %v1975 = vpop.f32.mrb[0].mxu0
  %v1976 = vadd.f32 %v356, %v1975
  %v1977 = vpop.f32.mrb[0].mxu0
  %1978 = vmatprep.mubr.bf16.mxu0 0
  %1979 = vmatmul.mubr.bf16.gmra.mrb[0].mxu0 %v1286
  %v1980 = vpop.f32.mrb[0].mxu0
  %v1981 = vadd.f32 %v356, %v1980
  %v1982 = vpop.f32.mrb[0].mxu0
  %v1983 = vpop.f32.mrb[0].mxu0
  %v1984 = vadd.f32 %v356, %v1983
  %v1985 = vpop.f32.mrb[0].mxu0
  %1986 = vmatprep.mubr.bf16.mxu0 0
  %1987 = vmatmul.mubr.bf16.gmra.mrb[0].mxu0 %v1289
  %v1988 = vpop.f32.mrb[0].mxu0
  %v1989 = vadd.f32 %v356, %v1988
  %v1990 = vpop.f32.mrb[0].mxu0
  %v1991 = vpop.f32.mrb[0].mxu0
  %v1992 = vadd.f32 %v356, %v1991
  %v1993 = vpop.f32.mrb[0].mxu0
  %1994 = vmatprep.mubr.bf16.mxu0 0
  %1995 = vmatmul.mubr.bf16.gmra.mrb[0].mxu0 %v1292
  %v1996 = vpop.f32.mrb[0].mxu0
  %v1997 = vadd.f32 %v356, %v1996
  %v1998 = vpop.f32.mrb[0].mxu0
  %v1999 = vpop.f32.mrb[0].mxu0
  %v2000 = vadd.f32 %v356, %v1999
  %v2001 = vpop.f32.mrb[0].mxu0
  %2002 = vmatprep.mubr.bf16.mxu0 0
  %2003 = vmatmul.mubr.bf16.gmra.mrb[0].mxu0 %v1295
  %v2004 = vpop.f32.mrb[0].mxu0
  %v2005 = vadd.f32 %v356, %v2004
  %v2006 = vpop.f32.mrb[0].mxu0
  %v2007 = vpop.f32.mrb[0].mxu0
  %v2008 = vadd.f32 %v356, %v2007
  %v2009 = vpop.f32.mrb[0].mxu0
  %2010 = vmatprep.mubr.bf16.mxu0 0
  %2011 = vmatmul.mubr.bf16.gmra.mrb[0].mxu0 %v1298
  %v2012 = vpop.f32.mrb[0].mxu0
  %v2013 = vadd.f32 %v356, %v2012
  %v2014 = vpop.f32.mrb[0].mxu0
  %v2015 = vpop.f32.mrb[0].mxu0
  %v2016 = vadd.f32 %v356, %v2015
  %v2017 = vpop.f32.mrb[0].mxu0
  %2018 = vmatprep.mubr.bf16.mxu0 0
  %2019 = vmatmul.mubr.bf16.gmra.mrb[0].mxu0 %v1301
  %v2020 = vpop.f32.mrb[0].mxu0
  %v2021 = vadd.f32 %v356, %v2020
  %v2022 = vpop.f32.mrb[0].mxu0
  %v2023 = vpop.f32.mrb[0].mxu0
  %v2024 = vadd.f32 %v356, %v2023
  %v2025 = vpop.f32.mrb[0].mxu0
  %2026 = vmatprep.mubr.bf16.mxu0 0
  %2027 = vmatmul.mubr.bf16.gmra.mrb[0].mxu0 %v1304
  %v2028 = vpop.f32.mrb[0].mxu0
  %v2029 = vadd.f32 %v356, %v2028
  %v2030 = vpop.f32.mrb[0].mxu0
  %v2031 = vpop.f32.mrb[0].mxu0
  %v2032 = vadd.f32 %v356, %v2031
  %v2033 = vpop.f32.mrb[0].mxu0
  %2034 = vmatprep.mubr.bf16.mxu0 0
  %2035 = vmatmul.mubr.bf16.gmra.mrb[0].mxu0 %v1307
  %v2036 = vpop.f32.mrb[0].mxu0
  %v2037 = vadd.f32 %v356, %v2036
  %v2038 = vpop.f32.mrb[0].mxu0
  %v2039 = vpop.f32.mrb[0].mxu0
  %v2040 = vadd.f32 %v356, %v2039
  %v2041 = vpop.f32.mrb[0].mxu0
  %2042 = vmatprep.mubr.bf16.mxu0 0
  %2043 = vmatmul.mubr.bf16.gmra.mrb[0].mxu0 %v1310
  %v2044 = vpop.f32.mrb[0].mxu0
  %v2045 = vadd.f32 %v356, %v2044
  %v2046 = vpop.f32.mrb[0].mxu0
  %v2047 = vpop.f32.mrb[0].mxu0
  %v2048 = vadd.f32 %v356, %v2047
  %v2049 = vpop.f32.mrb[0].mxu0
  %2050 = vmatprep.mubr.bf16.mxu0 0
  %2051 = vmatmul.mubr.bf16.gmra.mrb[0].mxu0 %v1313
  %v2052 = vpop.f32.mrb[0].mxu0
  %v2053 = vadd.f32 %v356, %v2052
  %v2054 = vpop.f32.mrb[0].mxu0
  %v2055 = vpop.f32.mrb[0].mxu0
  %v2056 = vadd.f32 %v356, %v2055
  %v2057 = vpop.f32.mrb[0].mxu0
  %2058 = vmatprep.mubr.bf16.mxu0 0
  %2059 = vmatmul.mubr.bf16.gmra.mrb[0].mxu0 %v1316
  %v2060 = vpop.f32.mrb[0].mxu0
  %v2061 = vadd.f32 %v356, %v2060
  %v2062 = vpop.f32.mrb[0].mxu0
  %v2063 = vpop.f32.mrb[0].mxu0
  %v2064 = vadd.f32 %v356, %v2063
  %v2065 = vpop.f32.mrb[0].mxu0
  %2066 = vmatprep.mubr.bf16.mxu0 0
  %2067 = vmatmul.mubr.bf16.gmra.mrb[0].mxu0 %v1319
  %v2068 = vpop.f32.mrb[0].mxu0
  %v2069 = vadd.f32 %v356, %v2068
  %v2070 = vpop.f32.mrb[0].mxu0
  %v2071 = vpop.f32.mrb[0].mxu0
  %v2072 = vadd.f32 %v356, %v2071
  %v2073 = vpop.f32.mrb[0].mxu0
  %2074 = vmatprep.mubr.bf16.mxu0 0
  %2075 = vmatmul.mubr.bf16.gmra.mrb[0].mxu0 %v1322
  %v2076 = vpop.f32.mrb[0].mxu0
  %v2077 = vadd.f32 %v356, %v2076
  %v2078 = vpop.f32.mrb[0].mxu0
  %v2079 = vpop.f32.mrb[0].mxu0
  %v2080 = vadd.f32 %v356, %v2079
  %v2081 = vpop.f32.mrb[0].mxu0
  %2082 = vmatprep.mubr.bf16.mxu0 0
  %2083 = vmatmul.mubr.bf16.gmra.mrb[0].mxu0 %v1325
  %v2084 = vpop.f32.mrb[0].mxu0
  %v2085 = vadd.f32 %v356, %v2084
  %v2086 = vpop.f32.mrb[0].mxu0
  %v2087 = vpop.f32.mrb[0].mxu0
  %v2088 = vadd.f32 %v356, %v2087
  %v2089 = vpop.f32.mrb[0].mxu0
  %2090 = vmatprep.mubr.bf16.mxu0 0
  %2091 = vmatmul.mubr.bf16.gmra.mrb[0].mxu0 %v1328
  %v2092 = vpop.f32.mrb[0].mxu0
  %v2093 = vadd.f32 %v356, %v2092
  %v2094 = vpop.f32.mrb[0].mxu0
  %v2095 = vpop.f32.mrb[0].mxu0
  %v2096 = vadd.f32 %v356, %v2095
  %v2097 = vpop.f32.mrb[0].mxu0
  %2098 = vmatprep.mubr.bf16.mxu0 0
  %2099 = vmatmul.mubr.bf16.gmra.mrb[0].mxu0 %v1331
  %v2100 = vpop.f32.mrb[0].mxu0
  %v2101 = vadd.f32 %v356, %v2100
  %v2102 = vpop.f32.mrb[0].mxu0
  %v2103 = vpop.f32.mrb[0].mxu0
  %v2104 = vadd.f32 %v356, %v2103
  %v2105 = vpop.f32.mrb[0].mxu0
  %2106 = vmatprep.mubr.bf16.mxu0 0
  %2107 = vmatmul.mubr.bf16.gmra.mrb[0].mxu0 %v1334
  %v2108 = vpop.f32.mrb[0].mxu0
  %v2109 = vadd.f32 %v356, %v2108
  %v2110 = vpop.f32.mrb[0].mxu0
  %v2111 = vpop.f32.mrb[0].mxu0
  %v2112 = vadd.f32 %v356, %v2111
  %v2113 = vpop.f32.mrb[0].mxu0
  %2114 = vmatprep.mubr.bf16.mxu0 0
  %2115 = vmatmul.mubr.bf16.gmra.mrb[0].mxu0 %v1337
  %v2116 = vpop.f32.mrb[0].mxu0
  %v2117 = vadd.f32 %v356, %v2116
  %v2118 = vpop.f32.mrb[0].mxu0
  %v2119 = vpop.f32.mrb[0].mxu0
  %v2120 = vadd.f32 %v356, %v2119
  %v2121 = vpop.f32.mrb[0].mxu0
  %2122 = vmatprep.mubr.bf16.mxu0 0
  %2123 = vmatmul.mubr.bf16.gmra.mrb[0].mxu0 %v1340
  %v2124 = vpop.f32.mrb[0].mxu0
  %v2125 = vadd.f32 %v356, %v2124
  %v2126 = vpop.f32.mrb[0].mxu0
  %v2127 = vpop.f32.mrb[0].mxu0
  %v2128 = vadd.f32 %v356, %v2127
  %v2129 = vpop.f32.mrb[0].mxu0
  %2130 = vmatprep.mubr.bf16.mxu0 0
  %2131 = vmatmul.mubr.bf16.gmra.mrb[0].mxu0 %v1343
  %v2132 = vpop.f32.mrb[0].mxu0
  %v2133 = vadd.f32 %v356, %v2132
  %v2134 = vpop.f32.mrb[0].mxu0
  %v2135 = vpop.f32.mrb[0].mxu0
  %v2136 = vadd.f32 %v356, %v2135
  %v2137 = vpop.f32.mrb[0].mxu0
  %2138 = vmatprep.mubr.bf16.mxu0 0
  %2139 = vmatmul.mubr.bf16.gmra.mrb[0].mxu0 %v1346
  %v2140 = vpop.f32.mrb[0].mxu0
  %v2141 = vadd.f32 %v356, %v2140
  %v2142 = vpop.f32.mrb[0].mxu0
  %v2143 = vpop.f32.mrb[0].mxu0
  %v2144 = vadd.f32 %v356, %v2143
  %v2145 = vpop.f32.mrb[0].mxu0
  %2146 = vmatprep.mubr.bf16.mxu0 0
  %2147 = vmatmul.mubr.bf16.gmra.mrb[0].mxu0 %v1349
  %v2148 = vpop.f32.mrb[0].mxu0
  %v2149 = vadd.f32 %v356, %v2148
  %v2150 = vpop.f32.mrb[0].mxu0
  %v2151 = vpop.f32.mrb[0].mxu0
  %v2152 = vadd.f32 %v356, %v2151
  %v2153 = vpop.f32.mrb[0].mxu0
  %2154 = vmatprep.mubr.bf16.mxu0 0
  %2155 = vmatmul.mubr.bf16.gmra.mrb[0].mxu0 %v1352
  %v2156 = vpop.f32.mrb[0].mxu0
  %v2157 = vadd.f32 %v356, %v2156
  %v2158 = vpop.f32.mrb[0].mxu0
  %v2159 = vpop.f32.mrb[0].mxu0
  %v2160 = vadd.f32 %v356, %v2159
  %v2161 = vpop.f32.mrb[0].mxu0
  %2162 = vmatprep.mubr.bf16.mxu0 0
  %2163 = vmatmul.mubr.bf16.gmra.mrb[0].mxu0 %v1355
  %v2164 = vpop.f32.mrb[0].mxu0
  %v2165 = vadd.f32 %v356, %v2164
  %v2166 = vpop.f32.mrb[0].mxu0
  %v2167 = vpop.f32.mrb[0].mxu0
  %v2168 = vadd.f32 %v356, %v2167
  %v2169 = vpop.f32.mrb[0].mxu0
  %2170 = vmatprep.mubr.bf16.mxu0 0
  %2171 = vmatmul.mubr.bf16.gmra.mrb[0].mxu0 %v1358
  %v2172 = vpop.f32.mrb[0].mxu0
  %v2173 = vadd.f32 %v356, %v2172
  %v2174 = vpop.f32.mrb[0].mxu0
  %v2175 = vpop.f32.mrb[0].mxu0
  %v2176 = vadd.f32 %v356, %v2175
  %v2177 = vpop.f32.mrb[0].mxu0
  %2178 = vmatprep.mubr.bf16.mxu0 0
  %2179 = vmatmul.mubr.bf16.gmra.mrb[0].mxu0 %v1361
  %v2180 = vpop.f32.mrb[0].mxu0
  %v2181 = vadd.f32 %v356, %v2180
  %v2182 = vpop.f32.mrb[0].mxu0
  %v2183 = vpop.f32.mrb[0].mxu0
  %v2184 = vadd.f32 %v356, %v2183
  %v2185 = vpop.f32.mrb[0].mxu0
  %2186 = vmatprep.mubr.bf16.mxu0 0
  %2187 = vmatmul.mubr.bf16.gmra.mrb[0].mxu0 %v1364
  %v2188 = vpop.f32.mrb[0].mxu0
  %v2189 = vadd.f32 %v356, %v2188
  %v2190 = vpop.f32.mrb[0].mxu0
  %v2191 = vpop.f32.mrb[0].mxu0
  %v2192 = vadd.f32 %v356, %v2191
  %v2193 = vpop.f32.mrb[0].mxu0
  %2194 = vmatprep.mubr.bf16.mxu0 0
  %2195 = vmatmul.mubr.bf16.gmra.mrb[0].mxu0 %v1367
  %v2196 = vpop.f32.mrb[0].mxu0
  %v2197 = vadd.f32 %v356, %v2196
  %v2198 = vpop.f32.mrb[0].mxu0
  %v2199 = vpop.f32.mrb[0].mxu0
  %v2200 = vadd.f32 %v356, %v2199
  %v2201 = vpop.f32.mrb[0].mxu0
  %2202 = vmatprep.mubr.bf16.mxu0 0
  %2203 = vmatmul.mubr.bf16.gmra.mrb[0].mxu0 %v1370
  %v2204 = vpop.f32.mrb[0].mxu0
  %v2205 = vadd.f32 %v356, %v2204
  %v2206 = vpop.f32.mrb[0].mxu0
  %v2207 = vpop.f32.mrb[0].mxu0
  %v2208 = vadd.f32 %v356, %v2207
  %v2209 = vpop.f32.mrb[0].mxu0
  %2210 = vmatprep.mubr.bf16.mxu0 0
  %2211 = vmatmul.mubr.bf16.gmra.mrb[0].mxu0 %v1373
  %v2212 = vpop.f32.mrb[0].mxu0
  %v2213 = vadd.f32 %v356, %v2212
  %v2214 = vpop.f32.mrb[0].mxu0
  %v2215 = vpop.f32.mrb[0].mxu0
  %v2216 = vadd.f32 %v356, %v2215
  %v2217 = vpop.f32.mrb[0].mxu0
  %2218 = vmatprep.mubr.bf16.mxu0 0
  %2219 = vmatmul.mubr.bf16.gmra.mrb[0].mxu0 %v1376
  %v2220 = vpop.f32.mrb[0].mxu0
  %v2221 = vadd.f32 %v356, %v2220
  %v2222 = vpop.f32.mrb[0].mxu0
  %v2223 = vpop.f32.mrb[0].mxu0
  %v2224 = vadd.f32 %v356, %v2223
  %v2225 = vpop.f32.mrb[0].mxu0
  %2226 = vmatprep.mubr.bf16.mxu0 0
  %2227 = vmatmul.mubr.bf16.gmra.mrb[0].mxu0 %v1379
  %v2228 = vpop.f32.mrb[0].mxu0
  %v2229 = vadd.f32 %v356, %v2228
  %v2230 = vpop.f32.mrb[0].mxu0
  %v2231 = vpop.f32.mrb[0].mxu0
  %v2232 = vadd.f32 %v356, %v2231
  %v2233 = vpop.f32.mrb[0].mxu0
  %2234 = vmatprep.mubr.bf16.mxu0 0
  %2235 = vmatmul.mubr.bf16.gmra.mrb[0].mxu0 %v1382
  %v2236 = vpop.f32.mrb[0].mxu0
  %v2237 = vadd.f32 %v356, %v2236
  %v2238 = vpop.f32.mrb[0].mxu0
  %v2239 = vpop.f32.mrb[0].mxu0
  %v2240 = vadd.f32 %v356, %v2239
  %v2241 = vpop.f32.mrb[0].mxu0
  %2242 = vmatprep.mubr.bf16.mxu0 0
  %2243 = vmatmul.mubr.bf16.gmra.mrb[0].mxu0 %v1385
  %v2244 = vpop.f32.mrb[0].mxu0
  %v2245 = vadd.f32 %v356, %v2244
  %v2246 = vpop.f32.mrb[0].mxu0
  %v2247 = vpop.f32.mrb[0].mxu0
  %v2248 = vadd.f32 %v356, %v2247
  %v2249 = vpop.f32.mrb[0].mxu0
  %2250 = vmatprep.mubr.bf16.mxu0 0
  %2251 = vmatmul.mubr.bf16.gmra.mrb[0].mxu0 %v1388
  %v2252 = vpop.f32.mrb[0].mxu0
  %v2253 = vadd.f32 %v356, %v2252
  %v2254 = vpop.f32.mrb[0].mxu0
  %v2255 = vpop.f32.mrb[0].mxu0
  %v2256 = vadd.f32 %v356, %v2255
  %v2257 = vpop.f32.mrb[0].mxu0
  %2258 = vmatprep.mubr.bf16.mxu0 0
  %2259 = vmatmul.mubr.bf16.gmra.mrb[0].mxu0 %v1391
  %v2260 = vpop.f32.mrb[0].mxu0
  %v2261 = vadd.f32 %v356, %v2260
  %v2262 = vpop.f32.mrb[0].mxu0
  %v2263 = vpop.f32.mrb[0].mxu0
  %v2264 = vadd.f32 %v356, %v2263
  %v2265 = vpop.f32.mrb[0].mxu0
  %2266 = vmatprep.mubr.bf16.mxu0 0
  %2267 = vmatmul.mubr.bf16.gmra.mrb[0].mxu0 %v1394
  %v2268 = vpop.f32.mrb[0].mxu0
  %v2269 = vadd.f32 %v356, %v2268
  %v2270 = vpop.f32.mrb[0].mxu0
  %v2271 = vpop.f32.mrb[0].mxu0
  %v2272 = vadd.f32 %v356, %v2271
  %v2273 = vpop.f32.mrb[0].mxu0
  %2274 = vmatprep.mubr.bf16.mxu0 0
  %2275 = vmatmul.mubr.bf16.gmra.mrb[0].mxu0 %v1397
  %v2276 = vpop.f32.mrb[0].mxu0
  %v2277 = vadd.f32 %v356, %v2276
  %v2278 = vpop.f32.mrb[0].mxu0
  %v2279 = vpop.f32.mrb[0].mxu0
  %v2280 = vadd.f32 %v356, %v2279
  %v2281 = vpop.f32.mrb[0].mxu0
  %2282 = vmatprep.mubr.bf16.mxu0 0
  %2283 = vmatmul.mubr.bf16.gmra.mrb[0].mxu0 %v1400
  %v2284 = vpop.f32.mrb[0].mxu0
  %v2285 = vadd.f32 %v356, %v2284
  %v2286 = vpop.f32.mrb[0].mxu0
  %v2287 = vpop.f32.mrb[0].mxu0
  %v2288 = vadd.f32 %v356, %v2287
  %v2289 = vpop.f32.mrb[0].mxu0
  %2290 = vmatprep.mubr.bf16.mxu0 0
  %2291 = vmatmul.mubr.bf16.gmra.mrb[0].mxu0 %v1403
  %v2292 = vpop.f32.mrb[0].mxu0
  %v2293 = vadd.f32 %v356, %v2292
  %v2294 = vpop.f32.mrb[0].mxu0
  %v2295 = vpop.f32.mrb[0].mxu0
  %v2296 = vadd.f32 %v356, %v2295
  %v2297 = vpop.f32.mrb[0].mxu0
  %2298 = vmatprep.mubr.bf16.mxu0 0
  %2299 = vmatmul.mubr.bf16.gmra.mrb[0].mxu0 %v1406
  %v2300 = vpop.f32.mrb[0].mxu0
  %v2301 = vadd.f32 %v356, %v2300
  %v2302 = vpop.f32.mrb[0].mxu0
  %v2303 = vpop.f32.mrb[0].mxu0
  %v2304 = vadd.f32 %v356, %v2303
  %v2305 = vpop.f32.mrb[0].mxu0
  %2306 = vmatprep.mubr.bf16.mxu0 0
  %2307 = vmatmul.mubr.bf16.gmra.mrb[0].mxu0 %v1409
  %v2308 = vpop.f32.mrb[0].mxu0
  %v2309 = vadd.f32 %v356, %v2308
  %v2310 = vpop.f32.mrb[0].mxu0
  %v2311 = vpop.f32.mrb[0].mxu0
  %v2312 = vadd.f32 %v356, %v2311
  %v2313 = vpop.f32.mrb[0].mxu0
  %2314 = vmatprep.mubr.bf16.mxu0 0
  %2315 = vmatmul.mubr.bf16.gmra.mrb[0].mxu0 %v1412
  %v2316 = vpop.f32.mrb[0].mxu0
  %v2317 = vadd.f32 %v356, %v2316
  %v2318 = vpop.f32.mrb[0].mxu0
  %v2319 = vpop.f32.mrb[0].mxu0
  %v2320 = vadd.f32 %v356, %v2319
  %v2321 = vpop.f32.mrb[0].mxu0
  %2322 = vmatprep.mubr.bf16.mxu0 0
  %2323 = vmatmul.mubr.bf16.gmra.mrb[0].mxu0 %v1415
  %v2324 = vpop.f32.mrb[0].mxu0
  %v2325 = vadd.f32 %v356, %v2324
  %v2326 = vpop.f32.mrb[0].mxu0
  %v2327 = vpop.f32.mrb[0].mxu0
  %v2328 = vadd.f32 %v356, %v2327
  %v2329 = vpop.f32.mrb[0].mxu0
  %2330 = vmatprep.mubr.bf16.mxu0 0
  %2331 = vmatmul.mubr.bf16.gmra.mrb[0].mxu0 %v1418
  %v2332 = vpop.f32.mrb[0].mxu0
  %v2333 = vadd.f32 %v356, %v2332
  %v2334 = vpop.f32.mrb[0].mxu0
  %v2335 = vpop.f32.mrb[0].mxu0
  %v2336 = vadd.f32 %v356, %v2335
  %v2337 = vpop.f32.mrb[0].mxu0
  %2338 = vmatprep.mubr.bf16.mxu0 0
  %2339 = vmatmul.mubr.bf16.gmra.mrb[0].mxu0 %v1421
  %v2340 = vpop.f32.mrb[0].mxu0
  %v2341 = vadd.f32 %v356, %v2340
  %v2342 = vpop.f32.mrb[0].mxu0
  %v2343 = vpop.f32.mrb[0].mxu0
  %v2344 = vadd.f32 %v356, %v2343
  %v2345 = vpop.f32.mrb[0].mxu0
  %2346 = vmatprep.mubr.bf16.mxu0 0
  %2347 = vmatmul.mubr.bf16.gmra.mrb[0].mxu0 %v1424
  %v2348 = vpop.f32.mrb[0].mxu0
  %v2349 = vadd.f32 %v356, %v2348
  %v2350 = vpop.f32.mrb[0].mxu0
  %v2351 = vpop.f32.mrb[0].mxu0
  %v2352 = vadd.f32 %v356, %v2351
  %v2353 = vpop.f32.mrb[0].mxu0
  %2354 = vmatprep.mubr.bf16.mxu0 0
  %2355 = vmatmul.mubr.bf16.gmra.mrb[0].mxu0 %v1427
  %v2356 = vpop.f32.mrb[0].mxu0
  %v2357 = vadd.f32 %v356, %v2356
  %v2358 = vpop.f32.mrb[0].mxu0
  %v2359 = vpop.f32.mrb[0].mxu0
  %v2360 = vadd.f32 %v356, %v2359
  %v2361 = vpop.f32.mrb[0].mxu0
  %2362 = vmatprep.mubr.bf16.mxu0 0
  %2363 = vmatmul.mubr.bf16.gmra.mrb[0].mxu0 %v1430
  %v2364 = vpop.f32.mrb[0].mxu0
  %v2365 = vadd.f32 %v356, %v2364
  %v2366 = vpop.f32.mrb[0].mxu0
  %v2367 = vpop.f32.mrb[0].mxu0
  %v2368 = vadd.f32 %v356, %v2367
  %v2369 = vpop.f32.mrb[0].mxu0
  %2370 = vmatprep.mubr.bf16.mxu0 0
  %2371 = vmatmul.mubr.bf16.gmra.mrb[0].mxu0 %v1433
  %v2372 = vpop.f32.mrb[0].mxu0
  %v2373 = vadd.f32 %v356, %v2372
  %v2374 = vpop.f32.mrb[0].mxu0
  %v2375 = vpop.f32.mrb[0].mxu0
  %v2376 = vadd.f32 %v356, %v2375
  %v2377 = vpop.f32.mrb[0].mxu0
  %2378 = vmatprep.mubr.bf16.mxu0 0
  %2379 = vmatmul.mubr.bf16.gmra.mrb[0].mxu0 %v1436
  %v2380 = vpop.f32.mrb[0].mxu0
  %v2381 = vadd.f32 %v356, %v2380
  %v2382 = vpop.f32.mrb[0].mxu0
  %v2383 = vpop.f32.mrb[0].mxu0
  %v2384 = vadd.f32 %v356, %v2383
  %v2385 = vpop.f32.mrb[0].mxu0
  %2386 = vmatprep.mubr.bf16.mxu0 0
  %2387 = vmatmul.mubr.bf16.gmra.mrb[0].mxu0 %v1439
  %v2388 = vpop.f32.mrb[0].mxu0
  %v2389 = vadd.f32 %v356, %v2388
  %v2390 = vpop.f32.mrb[0].mxu0
  %v2391 = vpop.f32.mrb[0].mxu0
  %v2392 = vadd.f32 %v356, %v2391
  %v2393 = vpop.f32.mrb[0].mxu0
  %2394 = vmatprep.mubr.bf16.mxu0 0
  %2395 = vmatmul.mubr.bf16.gmra.mrb[0].mxu0 %v1442
  %v2396 = vpop.f32.mrb[0].mxu0
  %v2397 = vadd.f32 %v356, %v2396
  %v2398 = vpop.f32.mrb[0].mxu0
  %v2399 = vpop.f32.mrb[0].mxu0
  %v2400 = vadd.f32 %v356, %v2399
  %v2401 = vpop.f32.mrb[0].mxu0
  %2402 = vmatprep.mubr.bf16.mxu0 0
  %2403 = vmatmul.mubr.bf16.gmra.mrb[0].mxu0 %v1445
  %v2404 = vpop.f32.mrb[0].mxu0
  %v2405 = vadd.f32 %v356, %v2404
  %v2406 = vpop.f32.mrb[0].mxu0
  %v2407 = vpop.f32.mrb[0].mxu0
  %v2408 = vadd.f32 %v356, %v2407
  %v2409 = vpop.f32.mrb[0].mxu0
  %2410 = vmatprep.mubr.bf16.mxu0 0
  %2411 = vmatmul.mubr.bf16.gmra.mrb[0].mxu0 %v1448
  %v2412 = vpop.f32.mrb[0].mxu0
  %v2413 = vadd.f32 %v356, %v2412
  %v2414 = vpop.f32.mrb[0].mxu0
  %v2415 = vpop.f32.mrb[0].mxu0
  %v2416 = vadd.f32 %v356, %v2415
  %v2417 = vpop.f32.mrb[0].mxu0
  %2418 = vmatprep.mubr.bf16.mxu0 0
  %2419 = vmatmul.mubr.bf16.gmra.mrb[0].mxu0 %v1451
  %v2420 = vpop.f32.mrb[0].mxu0
  %v2421 = vadd.f32 %v356, %v2420
  %v2422 = vpop.f32.mrb[0].mxu0
  %v2423 = vpop.f32.mrb[0].mxu0
  %v2424 = vadd.f32 %v356, %v2423
  %v2425 = vpop.f32.mrb[0].mxu0
  %2426 = vmatprep.mubr.bf16.mxu0 0
  %2427 = vmatmul.mubr.bf16.gmra.mrb[0].mxu0 %v1454
  %v2428 = vpop.f32.mrb[0].mxu0
  %v2429 = vadd.f32 %v356, %v2428
  %v2430 = vpop.f32.mrb[0].mxu0
  %v2431 = vpop.f32.mrb[0].mxu0
  %v2432 = vadd.f32 %v356, %v2431
  %v2433 = vpop.f32.mrb[0].mxu0
  %2434 = vmatprep.mubr.bf16.mxu0 0
  %2435 = vmatmul.mubr.bf16.gmra.mrb[0].mxu0 %v1457
  %v2436 = vpop.f32.mrb[0].mxu0
  %v2437 = vadd.f32 %v356, %v2436
  %v2438 = vpop.f32.mrb[0].mxu0
  %v2439 = vpop.f32.mrb[0].mxu0
  %v2440 = vadd.f32 %v356, %v2439
  %v2441 = vpop.f32.mrb[0].mxu0
  %2442 = vmatprep.mubr.bf16.mxu0 0
  %2443 = vmatmul.mubr.bf16.gmra.mrb[0].mxu0 %v1460
  %v2444 = vpop.f32.mrb[0].mxu0
  %v2445 = vadd.f32 %v356, %v2444
  %v2446 = vpop.f32.mrb[0].mxu0
  %v2447 = vpop.f32.mrb[0].mxu0
  %v2448 = vadd.f32 %v356, %v2447
  %v2449 = vpop.f32.mrb[0].mxu0
  %2450 = vmatprep.mubr.bf16.mxu0 0
  %2451 = vmatmul.mubr.bf16.gmra.mrb[0].mxu0 %v1463
  %v2452 = vpop.f32.mrb[0].mxu0
  %v2453 = vadd.f32 %v356, %v2452
  %v2454 = vpop.f32.mrb[0].mxu0
  %v2455 = vpop.f32.mrb[0].mxu0
  %v2456 = vadd.f32 %v356, %v2455
  %v2457 = vpop.f32.mrb[0].mxu0
  %2458 = vmatprep.mubr.bf16.mxu0 0
  %2459 = vmatmul.mubr.bf16.gmra.mrb[0].mxu0 %v1466
  %v2460 = vpop.f32.mrb[0].mxu0
  %v2461 = vadd.f32 %v356, %v2460
  %v2462 = vpop.f32.mrb[0].mxu0
  %v2463 = vpop.f32.mrb[0].mxu0
  %v2464 = vadd.f32 %v356, %v2463
  %v2465 = vpop.f32.mrb[0].mxu0
  %2466 = vmatprep.mubr.bf16.mxu0 0
  %2467 = vmatmul.mubr.bf16.gmra.mrb[0].mxu0 %v1469
  %v2468 = vpop.f32.mrb[0].mxu0
  %v2469 = vadd.f32 %v356, %v2468
  %v2470 = vpop.f32.mrb[0].mxu0
  %v2471 = vpop.f32.mrb[0].mxu0
  %v2472 = vadd.f32 %v356, %v2471
  %v2473 = vpop.f32.mrb[0].mxu0
  %2474 = vmatprep.mubr.bf16.mxu0 0
  %2475 = vmatmul.mubr.bf16.gmra.mrb[0].mxu0 %v1472
  %v2476 = vpop.f32.mrb[0].mxu0
  %v2477 = vadd.f32 %v356, %v2476
  %v2478 = vpop.f32.mrb[0].mxu0
  %v2479 = vpop.f32.mrb[0].mxu0
  %v2480 = vadd.f32 %v356, %v2479
  %v2481 = vpop.f32.mrb[0].mxu0
  %2482 = vmatprep.mubr.bf16.mxu0 0
  %2483 = vmatmul.mubr.bf16.gmra.mrb[0].mxu0 %v1475
  %v2484 = vpop.f32.mrb[0].mxu0
  %v2485 = vadd.f32 %v356, %v2484
  %v2486 = vpop.f32.mrb[0].mxu0
  %v2487 = vpop.f32.mrb[0].mxu0
  %v2488 = vadd.f32 %v356, %v2487
  %v2489 = vpop.f32.mrb[0].mxu0
  %2490 = vmatprep.mubr.bf16.mxu0 0
  %2491 = vmatmul.mubr.bf16.gmra.mrb[0].mxu0 %v1478
  %v2492 = vpop.f32.mrb[0].mxu0
  %v2493 = vadd.f32 %v356, %v2492
  %v2494 = vpop.f32.mrb[0].mxu0
  %v2495 = vpop.f32.mrb[0].mxu0
  %v2496 = vadd.f32 %v356, %v2495
  %v2497 = vpop.f32.mrb[0].mxu0
  %2498 = vmatprep.mubr.bf16.mxu0 0
  %2499 = vmatmul.mubr.bf16.gmra.mrb[0].mxu0 %v1481
  %v2500 = vpop.f32.mrb[0].mxu0
  %v2501 = vadd.f32 %v356, %v2500
  %v2502 = vpop.f32.mrb[0].mxu0
  %v2503 = vpop.f32.mrb[0].mxu0
  %v2504 = vadd.f32 %v356, %v2503
  %v2505 = vpop.f32.mrb[0].mxu0
  %2506 = vmatprep.mubr.bf16.mxu0 0
  %2507 = vmatmul.mubr.bf16.gmra.mrb[0].mxu0 %v1484
  %v2508 = vpop.f32.mrb[0].mxu0
  %v2509 = vadd.f32 %v356, %v2508
  %v2510 = vpop.f32.mrb[0].mxu0
  %v2511 = vpop.f32.mrb[0].mxu0
  %v2512 = vadd.f32 %v356, %v2511
  %v2513 = vpop.f32.mrb[0].mxu0
  %2514 = vmatprep.mubr.bf16.mxu0 0
  %2515 = vmatmul.mubr.bf16.gmra.mrb[0].mxu0 %v1487
  %v2516 = vpop.f32.mrb[0].mxu0
  %v2517 = vadd.f32 %v356, %v2516
  %v2518 = vpop.f32.mrb[0].mxu0
  %v2519 = vpop.f32.mrb[0].mxu0
  %v2520 = vadd.f32 %v356, %v2519
  %v2521 = vpop.f32.mrb[0].mxu0
  %2522 = vmatprep.mubr.bf16.mxu0 0
  %2523 = vmatmul.mubr.bf16.gmra.mrb[0].mxu0 %v1490
  %v2524 = vpop.f32.mrb[0].mxu0
  %v2525 = vadd.f32 %v356, %v2524
  %v2526 = vpop.f32.mrb[0].mxu0
  %v2527 = vpop.f32.mrb[0].mxu0
  %v2528 = vadd.f32 %v356, %v2527
  %v2529 = vpop.f32.mrb[0].mxu0
  %2530 = vmatprep.mubr.bf16.mxu0 0
  %2531 = vmatmul.mubr.bf16.gmra.mrb[0].mxu0 %v1493
  %v2532 = vpop.f32.mrb[0].mxu0
  %v2533 = vadd.f32 %v356, %v2532
  %v2534 = vpop.f32.mrb[0].mxu0
  %v2535 = vpop.f32.mrb[0].mxu0
  %v2536 = vadd.f32 %v356, %v2535
  %v2537 = vpop.f32.mrb[0].mxu0
  %2538 = vmatprep.mubr.bf16.mxu0 0
  %2539 = vmatmul.mubr.bf16.gmra.mrb[0].mxu0 %v1496
  %v2540 = vpop.f32.mrb[0].mxu0
  %v2541 = vadd.f32 %v356, %v2540
  %v2542 = vpop.f32.mrb[0].mxu0
  %v2543 = vpop.f32.mrb[0].mxu0
  %v2544 = vadd.f32 %v356, %v2543
  %v2545 = vpop.f32.mrb[0].mxu0
  %2546 = vmatprep.mubr.bf16.mxu0 0
  %2547 = vmatmul.mubr.bf16.gmra.mrb[0].mxu0 %v1499
  %v2548 = vpop.f32.mrb[0].mxu0
  %v2549 = vadd.f32 %v356, %v2548
  %v2550 = vpop.f32.mrb[0].mxu0
  %v2551 = vpop.f32.mrb[0].mxu0
  %v2552 = vadd.f32 %v356, %v2551
  %v2553 = vpop.f32.mrb[0].mxu0
  %2554 = vmatprep.mubr.bf16.mxu0 0
  %2555 = vmatmul.mubr.bf16.gmra.mrb[0].mxu0 %v1502
  %v2556 = vpop.f32.mrb[0].mxu0
  %v2557 = vadd.f32 %v356, %v2556
  %v2558 = vpop.f32.mrb[0].mxu0
  %v2559 = vpop.f32.mrb[0].mxu0
  %v2560 = vadd.f32 %v356, %v2559
  %v2561 = vpop.f32.mrb[0].mxu0
  %2562 = vmatprep.mubr.bf16.mxu0 0
  %2563 = vmatmul.mubr.bf16.gmra.mrb[0].mxu0 %v1505
  %v2564 = vpop.f32.mrb[0].mxu0
  %v2565 = vadd.f32 %v356, %v2564
  %v2566 = vpop.f32.mrb[0].mxu0
  %v2567 = vpop.f32.mrb[0].mxu0
  %v2568 = vadd.f32 %v356, %v2567
  %v2569 = vpop.f32.mrb[0].mxu0
  %2570 = vmatprep.mubr.bf16.mxu0 0
  %2571 = vmatmul.mubr.bf16.gmra.mrb[0].mxu0 %v1508
  %v2572 = vpop.f32.mrb[0].mxu0
  %v2573 = vadd.f32 %v356, %v2572
  %v2574 = vpop.f32.mrb[0].mxu0
  %v2575 = vpop.f32.mrb[0].mxu0
  %v2576 = vadd.f32 %v356, %v2575
  %v2577 = vpop.f32.mrb[0].mxu0
  %2578 = vmatprep.mubr.bf16.mxu0 0
  %2579 = vmatmul.mubr.bf16.gmra.mrb[0].mxu0 %v1511
  %v2580 = vpop.f32.mrb[0].mxu0
  %v2581 = vadd.f32 %v356, %v2580
  %v2582 = vpop.f32.mrb[0].mxu0
  %v2583 = vpop.f32.mrb[0].mxu0
  %v2584 = vadd.f32 %v356, %v2583
  %v2585 = vpop.f32.mrb[0].mxu0
  %2586 = vmatprep.mubr.bf16.mxu0 0
  %2587 = vmatmul.mubr.bf16.gmra.mrb[0].mxu0 %v1514
  %v2588 = vpop.f32.mrb[0].mxu0
  %v2589 = vadd.f32 %v356, %v2588
  %v2590 = vpop.f32.mrb[0].mxu0
  %v2591 = vpop.f32.mrb[0].mxu0
  %v2592 = vadd.f32 %v356, %v2591
  %v2593 = vpop.f32.mrb[0].mxu0
  %2594 = vmatprep.mubr.bf16.mxu0 0
  %2595 = vmatmul.mubr.bf16.gmra.mrb[0].mxu0 %v1517
  %v2596 = vpop.f32.mrb[0].mxu0
  %v2597 = vadd.f32 %v356, %v2596
  %v2598 = vpop.f32.mrb[0].mxu0
  %v2599 = vpop.f32.mrb[0].mxu0
  %v2600 = vadd.f32 %v356, %v2599
  %v2601 = vpop.f32.mrb[0].mxu0
  %2602 = vmatprep.mubr.bf16.mxu0 0
  %2603 = vmatmul.mubr.bf16.gmra.mrb[0].mxu0 %v1520
  %v2604 = vpop.f32.mrb[0].mxu0
  %v2605 = vadd.f32 %v356, %v2604
  %v2606 = vpop.f32.mrb[0].mxu0
  %v2607 = vpop.f32.mrb[0].mxu0
  %v2608 = vadd.f32 %v356, %v2607
  %v2609 = vpop.f32.mrb[0].mxu0
  %2610 = vmatprep.mubr.bf16.mxu0 0
  %2611 = vmatmul.mubr.bf16.gmra.mrb[0].mxu0 %v1523
  %v2612 = vpop.f32.mrb[0].mxu0
  %v2613 = vadd.f32 %v356, %v2612
  %v2614 = vpop.f32.mrb[0].mxu0
  %v2615 = vpop.f32.mrb[0].mxu0
  %v2616 = vadd.f32 %v356, %v2615
  %v2617 = vpop.f32.mrb[0].mxu0
  %2618 = vmatprep.mubr.bf16.mxu0 0
  %2619 = vmatmul.mubr.bf16.gmra.mrb[0].mxu0 %v1526
  %v2620 = vpop.f32.mrb[0].mxu0
  %v2621 = vadd.f32 %v356, %v2620
  %v2622 = vpop.f32.mrb[0].mxu0
  %v2623 = vpop.f32.mrb[0].mxu0
  %v2624 = vadd.f32 %v356, %v2623
  %v2625 = vpop.f32.mrb[0].mxu0
  %2626 = vmatprep.mubr.bf16.mxu0 0
  %2627 = vmatmul.mubr.bf16.gmra.mrb[0].mxu0 %v1529
  %v2628 = vpop.f32.mrb[0].mxu0
  %v2629 = vadd.f32 %v356, %v2628
  %v2630 = vpop.f32.mrb[0].mxu0
  %v2631 = vpop.f32.mrb[0].mxu0
  %v2632 = vadd.f32 %v356, %v2631
  %v2633 = vpop.f32.mrb[0].mxu0
  %2634 = vmatprep.mubr.bf16.mxu0 0
  %2635 = vmatmul.mubr.bf16.gmra.mrb[0].mxu0 %v1532
  %v2636 = vpop.f32.mrb[0].mxu0
  %v2637 = vadd.f32 %v356, %v2636
  %v2638 = vpop.f32.mrb[0].mxu0
  %v2639 = vpop.f32.mrb[0].mxu0
  %v2640 = vadd.f32 %v356, %v2639
  %v2641 = vpop.f32.mrb[0].mxu0
  %2642 = vmatprep.mubr.bf16.mxu0 0
  %2643 = vmatmul.mubr.bf16.gmra.mrb[0].mxu0 %v1535
  %v2644 = vpop.f32.mrb[0].mxu0
  %v2645 = vadd.f32 %v356, %v2644
  %v2646 = vpop.f32.mrb[0].mxu0
  %v2647 = vpop.f32.mrb[0].mxu0
  %v2648 = vadd.f32 %v356, %v2647
  %v2649 = vpop.f32.mrb[0].mxu0
  %2650 = vmatprep.mubr.bf16.mxu0 0
  %2651 = vmatmul.mubr.bf16.gmra.mrb[0].mxu0 %v1538
  %v2652 = vpop.f32.mrb[0].mxu0
  %v2653 = vadd.f32 %v356, %v2652
  %v2654 = vpop.f32.mrb[0].mxu0
  %v2655 = vpop.f32.mrb[0].mxu0
  %v2656 = vadd.f32 %v356, %v2655
  %v2657 = vpop.f32.mrb[0].mxu0
  %2658 = vmatprep.mubr.bf16.mxu0 0
  %2659 = vmatmul.mubr.bf16.gmra.mrb[0].mxu0 %v1541
  %v2660 = vpop.f32.mrb[0].mxu0
  %v2661 = vadd.f32 %v356, %v2660
  %v2662 = vpop.f32.mrb[0].mxu0
  %v2663 = vpop.f32.mrb[0].mxu0
  %v2664 = vadd.f32 %v356, %v2663
  %v2665 = vpop.f32.mrb[0].mxu0
  %2666 = vmatprep.mubr.bf16.mxu0 0
  %2667 = vmatmul.mubr.bf16.gmra.mrb[0].mxu0 %v1544
  %v2668 = vpop.f32.mrb[0].mxu0
  %v2669 = vadd.f32 %v356, %v2668
  %v2670 = vpop.f32.mrb[0].mxu0
  %v2671 = vpop.f32.mrb[0].mxu0
  %v2672 = vadd.f32 %v356, %v2671
  %v2673 = vpop.f32.mrb[0].mxu0
  %2674 = vmatprep.mubr.bf16.mxu0 0
  %2675 = vmatmul.mubr.bf16.gmra.mrb[0].mxu0 %v1547
  %v2676 = vpop.f32.mrb[0].mxu0
  %v2677 = vadd.f32 %v356, %v2676
  %v2678 = vpop.f32.mrb[0].mxu0
  %v2679 = vpop.f32.mrb[0].mxu0
  %v2680 = vadd.f32 %v356, %v2679
  %v2681 = vpop.f32.mrb[0].mxu0
  %2682 = vmatprep.mubr.bf16.mxu0 0
  %2683 = vmatmul.mubr.bf16.gmra.mrb[0].mxu0 %v1550
  %v2684 = vpop.f32.mrb[0].mxu0
  %v2685 = vadd.f32 %v356, %v2684
  %v2686 = vpop.f32.mrb[0].mxu0
  %v2687 = vpop.f32.mrb[0].mxu0
  %v2688 = vadd.f32 %v356, %v2687
  %v2689 = vpop.f32.mrb[0].mxu0
  %2690 = vmatprep.mubr.bf16.mxu0 0
  %2691 = vmatmul.mubr.bf16.gmra.mrb[0].mxu0 %v1553
  %v2692 = vpop.f32.mrb[0].mxu0
  %v2693 = vadd.f32 %v356, %v2692
  %v2694 = vpop.f32.mrb[0].mxu0
  %v2695 = vpop.f32.mrb[0].mxu0
  %v2696 = vadd.f32 %v356, %v2695
  %v2697 = vpop.f32.mrb[0].mxu0
  %2698 = vmatprep.mubr.bf16.mxu0 0
  %2699 = vmatmul.mubr.bf16.gmra.mrb[0].mxu0 %v1556
  %v2700 = vpop.f32.mrb[0].mxu0
  %v2701 = vadd.f32 %v356, %v2700
  %v2702 = vpop.f32.mrb[0].mxu0
  %v2703 = vpop.f32.mrb[0].mxu0
  %v2704 = vadd.f32 %v356, %v2703
  %v2705 = vpop.f32.mrb[0].mxu0
  %2706 = vmatprep.mubr.bf16.mxu0 0
  %2707 = vmatmul.mubr.bf16.gmra.mrb[0].mxu0 %v1559
  %v2708 = vpop.f32.mrb[0].mxu0
  %v2709 = vadd.f32 %v356, %v2708
  %v2710 = vpop.f32.mrb[0].mxu0
  %v2711 = vpop.f32.mrb[0].mxu0
  %v2712 = vadd.f32 %v356, %v2711
  %v2713 = vpop.f32.mrb[0].mxu0
  %2714 = vmatprep.mubr.bf16.mxu0 0
  %2715 = vmatmul.mubr.bf16.gmra.mrb[0].mxu0 %v1562
  %v2716 = vpop.f32.mrb[0].mxu0
  %v2717 = vadd.f32 %v356, %v2716
  %v2718 = vpop.f32.mrb[0].mxu0
  %v2719 = vpop.f32.mrb[0].mxu0
  %v2720 = vadd.f32 %v356, %v2719
  %v2721 = vpop.f32.mrb[0].mxu0
  %2722 = vmatprep.mubr.bf16.mxu0 0
  %2723 = vmatmul.mubr.bf16.gmra.mrb[0].mxu0 %v1565
  %v2724 = vpop.f32.mrb[0].mxu0
  %v2725 = vadd.f32 %v356, %v2724
  %v2726 = vpop.f32.mrb[0].mxu0
  %v2727 = vpop.f32.mrb[0].mxu0
  %v2728 = vadd.f32 %v356, %v2727
  %v2729 = vpop.f32.mrb[0].mxu0
  %2730 = vmatprep.mubr.bf16.mxu0 0
  %2731 = vmatmul.mubr.bf16.gmra.mrb[0].mxu0 %v1568
  %v2732 = vpop.f32.mrb[0].mxu0
  %v2733 = vadd.f32 %v356, %v2732
  %v2734 = vpop.f32.mrb[0].mxu0
  %v2735 = vpop.f32.mrb[0].mxu0
  %v2736 = vadd.f32 %v356, %v2735
  %v2737 = vpop.f32.mrb[0].mxu0
  %2738 = vmatprep.mubr.bf16.mxu0 0
  %2739 = vmatmul.mubr.bf16.gmra.mrb[0].mxu0 %v1571
  %v2740 = vpop.f32.mrb[0].mxu0
  %v2741 = vadd.f32 %v356, %v2740
  %v2742 = vpop.f32.mrb[0].mxu0
  %v2743 = vpop.f32.mrb[0].mxu0
  %v2744 = vadd.f32 %v356, %v2743
  %v2745 = vpop.f32.mrb[0].mxu0
  %2746 = vmatprep.mubr.bf16.mxu0 0
  %2747 = vmatmul.mubr.bf16.gmra.mrb[0].mxu0 %v1574
  %v2748 = vpop.f32.mrb[0].mxu0
  %v2749 = vadd.f32 %v356, %v2748
  %v2750 = vpop.f32.mrb[0].mxu0
  %v2751 = vpop.f32.mrb[0].mxu0
  %v2752 = vadd.f32 %v356, %v2751
  %v2753 = vpop.f32.mrb[0].mxu0
  %2754 = vmatprep.mubr.bf16.mxu0 0
  %2755 = vmatmul.mubr.bf16.gmra.mrb[0].mxu0 %v1577
  %v2756 = vpop.f32.mrb[0].mxu0
  %v2757 = vadd.f32 %v356, %v2756
  %v2758 = vpop.f32.mrb[0].mxu0
  %v2759 = vpop.f32.mrb[0].mxu0
  %v2760 = vadd.f32 %v356, %v2759
  %v2761 = vpop.f32.mrb[0].mxu0
  %2762 = vmatprep.mubr.bf16.mxu0 0
  %2763 = vmatmul.mubr.bf16.gmra.mrb[0].mxu0 %v1580
  %v2764 = vpop.f32.mrb[0].mxu0
  %v2765 = vadd.f32 %v356, %v2764
  %v2766 = vpop.f32.mrb[0].mxu0
  %v2767 = vpop.f32.mrb[0].mxu0
  %v2768 = vadd.f32 %v356, %v2767
  %v2769 = vpop.f32.mrb[0].mxu0
  %2770 = vmatprep.mubr.bf16.mxu0 0
  %2771 = vmatmul.mubr.bf16.gmra.mrb[0].mxu0 %v1583
  %v2772 = vpop.f32.mrb[0].mxu0
  %v2773 = vadd.f32 %v356, %v2772
  %v2774 = vpop.f32.mrb[0].mxu0
  %v2775 = vpop.f32.mrb[0].mxu0
  %v2776 = vadd.f32 %v356, %v2775
  %v2777 = vpop.f32.mrb[0].mxu0
  %2778 = vmatprep.mubr.bf16.mxu0 0
  %2779 = vmatmul.mubr.bf16.gmra.mrb[0].mxu0 %v1586
  %v2780 = vpop.f32.mrb[0].mxu0
  %v2781 = vadd.f32 %v356, %v2780
  %v2782 = vpop.f32.mrb[0].mxu0
  %v2783 = vpop.f32.mrb[0].mxu0
  %v2784 = vadd.f32 %v356, %v2783
  %v2785 = vpop.f32.mrb[0].mxu0
  %2786 = vmatprep.mubr.bf16.mxu0 0
  %2787 = vmatmul.mubr.bf16.gmra.mrb[0].mxu0 %v1589
  %v2788 = vpop.f32.mrb[0].mxu0
  %v2789 = vadd.f32 %v356, %v2788
  %v2790 = vpop.f32.mrb[0].mxu0
  %v2791 = vpop.f32.mrb[0].mxu0
  %v2792 = vadd.f32 %v356, %v2791
  %v2793 = vpop.f32.mrb[0].mxu0
  %2794 = vmatprep.mubr.bf16.mxu0 0
  %2795 = vmatmul.mubr.bf16.gmra.mrb[0].mxu0 %v1592
  %v2796 = vpop.f32.mrb[0].mxu0
  %v2797 = vadd.f32 %v356, %v2796
  %v2798 = vpop.f32.mrb[0].mxu0
  %v2799 = vpop.f32.mrb[0].mxu0
  %v2800 = vadd.f32 %v356, %v2799
  %v2801 = vpop.f32.mrb[0].mxu0
  %2802 = vmatprep.mubr.bf16.mxu0 0
  %2803 = vmatmul.mubr.bf16.gmra.mrb[0].mxu0 %v1595
  %v2804 = vpop.f32.mrb[0].mxu0
  %v2805 = vadd.f32 %v356, %v2804
  %v2806 = vpop.f32.mrb[0].mxu0
  %v2807 = vpop.f32.mrb[0].mxu0
  %v2808 = vadd.f32 %v356, %v2807
  %v2809 = vpop.f32.mrb[0].mxu0
  %2810 = vmatprep.mubr.bf16.mxu0 0
  %2811 = vmatmul.mubr.bf16.gmra.mrb[0].mxu0 %v1598
  %v2812 = vpop.f32.mrb[0].mxu0
  %v2813 = vadd.f32 %v356, %v2812
  %v2814 = vpop.f32.mrb[0].mxu0
  %v2815 = vpop.f32.mrb[0].mxu0
  %v2816 = vadd.f32 %v356, %v2815
  %v2817 = vpop.f32.mrb[0].mxu0
  %2818 = vmatprep.mubr.bf16.mxu0 0
  %2819 = vmatmul.mubr.bf16.gmra.mrb[0].mxu0 %v1601
  %v2820 = vpop.f32.mrb[0].mxu0
  %v2821 = vadd.f32 %v356, %v2820
  %v2822 = vpop.f32.mrb[0].mxu0
  %v2823 = vpop.f32.mrb[0].mxu0
  %v2824 = vadd.f32 %v356, %v2823
  %v2825 = vpop.f32.mrb[0].mxu0
  %2826 = vmatprep.mubr.bf16.mxu0 0
  %2827 = vmatmul.mubr.bf16.gmra.mrb[0].mxu0 %v1604
  %v2828 = vpop.f32.mrb[0].mxu0
  %v2829 = vadd.f32 %v356, %v2828
  %v2830 = vpop.f32.mrb[0].mxu0
  %v2831 = vpop.f32.mrb[0].mxu0
  %v2832 = vadd.f32 %v356, %v2831
  %v2833 = vpop.f32.mrb[0].mxu0
  %2834 = vmatprep.mubr.bf16.mxu0 0
  %2835 = vmatmul.mubr.bf16.gmra.mrb[0].mxu0 %v1607
  %v2836 = vpop.f32.mrb[0].mxu0
  %v2837 = vadd.f32 %v356, %v2836
  %v2838 = vpop.f32.mrb[0].mxu0
  %v2839 = vpop.f32.mrb[0].mxu0
  %v2840 = vadd.f32 %v356, %v2839
  %v2841 = vpop.f32.mrb[0].mxu0
  %2842 = vmatprep.mubr.bf16.mxu0 0
  %2843 = vmatmul.mubr.bf16.gmra.mrb[0].mxu0 %v1610
  %v2844 = vpop.f32.mrb[0].mxu0
  %v2845 = vadd.f32 %v356, %v2844
  %v2846 = vpop.f32.mrb[0].mxu0
  %v2847 = vpop.f32.mrb[0].mxu0
  %v2848 = vadd.f32 %v356, %v2847
  %v2849 = vpop.f32.mrb[0].mxu0
  %2850 = vmatprep.mubr.bf16.mxu0 0
  %2851 = vmatmul.mubr.bf16.gmra.mrb[0].mxu0 %v1613
  %v2852 = vpop.f32.mrb[0].mxu0
  %v2853 = vadd.f32 %v356, %v2852
  %v2854 = vpop.f32.mrb[0].mxu0
  %v2855 = vpop.f32.mrb[0].mxu0
  %v2856 = vadd.f32 %v356, %v2855
  %v2857 = vpop.f32.mrb[0].mxu0
  %2858 = vmatprep.mubr.bf16.mxu0 0
  %2859 = vmatmul.mubr.bf16.gmra.mrb[0].mxu0 %v1616
  %v2860 = vpop.f32.mrb[0].mxu0
  %v2861 = vadd.f32 %v356, %v2860
  %v2862 = vpop.f32.mrb[0].mxu0
  %v2863 = vpop.f32.mrb[0].mxu0
  %v2864 = vadd.f32 %v356, %v2863
  %v2865 = vpop.f32.mrb[0].mxu0
  %2866 = vmatprep.mubr.bf16.mxu0 0
  %2867 = vmatmul.mubr.bf16.gmra.mrb[0].mxu0 %v1619
  %v2868 = vpop.f32.mrb[0].mxu0
  %v2869 = vadd.f32 %v356, %v2868
  %v2870 = vpop.f32.mrb[0].mxu0
  %v2871 = vpop.f32.mrb[0].mxu0
  %v2872 = vadd.f32 %v356, %v2871
  %v2873 = vpop.f32.mrb[0].mxu0
  %2874 = vmatprep.mubr.bf16.mxu0 0
  %2875 = vmatmul.mubr.bf16.gmra.mrb[0].mxu0 %v1622
  %v2876 = vpop.f32.mrb[0].mxu0
  %v2877 = vadd.f32 %v356, %v2876
  %v2878 = vpop.f32.mrb[0].mxu0
  %v2879 = vpop.f32.mrb[0].mxu0
  %v2880 = vadd.f32 %v356, %v2879
  %v2881 = vpop.f32.mrb[0].mxu0
  %2882 = vmatprep.mubr.bf16.mxu0 0
  %2883 = vmatmul.mubr.bf16.gmra.mrb[0].mxu0 %v1625
  %v2884 = vpop.f32.mrb[0].mxu0
  %v2885 = vadd.f32 %v356, %v2884
  %v2886 = vpop.f32.mrb[0].mxu0
  %v2887 = vpop.f32.mrb[0].mxu0
  %v2888 = vadd.f32 %v356, %v2887
  %v2889 = vpop.f32.mrb[0].mxu0
  %2890 = vmatprep.mubr.bf16.mxu0 0
  %2891 = vmatmul.mubr.bf16.gmra.mrb[0].mxu0 %v1628
  %v2892 = vpop.f32.mrb[0].mxu0
  %v2893 = vadd.f32 %v356, %v2892
  %v2894 = vpop.f32.mrb[0].mxu0
  %v2895 = vpop.f32.mrb[0].mxu0
  %v2896 = vadd.f32 %v356, %v2895
  %v2897 = vpop.f32.mrb[0].mxu0
  %2898 = vmatprep.mubr.bf16.mxu0 0
  %2899 = vmatmul.mubr.bf16.gmra.mrb[0].mxu0 %v1631
  %v2900 = vpop.f32.mrb[0].mxu0
  %v2901 = vadd.f32 %v356, %v2900
  %v2902 = vpop.f32.mrb[0].mxu0
  %v2903 = vpop.f32.mrb[0].mxu0
  %v2904 = vadd.f32 %v356, %v2903
  %v2905 = vpop.f32.mrb[0].mxu0
  %2906 = vmatprep.mubr.bf16.mxu0 0
  %2907 = vmatmul.mubr.bf16.gmra.mrb[0].mxu0 %v1634
  %v2908 = vpop.f32.mrb[0].mxu0
  %v2909 = vadd.f32 %v356, %v2908
  %v2910 = vpop.f32.mrb[0].mxu0
  %v2911 = vpop.f32.mrb[0].mxu0
  %v2912 = vadd.f32 %v356, %v2911
  %v2913 = vpop.f32.mrb[0].mxu0
  %2914 = vmatprep.mubr.bf16.mxu0 0
  %2915 = vmatmul.mubr.bf16.gmra.mrb[0].mxu0 %v1637
  %v2916 = vpop.f32.mrb[0].mxu0
  %v2917 = vadd.f32 %v356, %v2916
  %v2918 = vpop.f32.mrb[0].mxu0
  %v2919 = vpop.f32.mrb[0].mxu0
  %v2920 = vadd.f32 %v356, %v2919
  %v2921 = vpop.f32.mrb[0].mxu0
  %2922 = vmatprep.mubr.bf16.mxu0 0
  %2923 = vmatmul.mubr.bf16.gmra.mrb[0].mxu0 %v1640
  %v2924 = vpop.f32.mrb[0].mxu0
  %v2925 = vadd.f32 %v356, %v2924
  %v2926 = vpop.f32.mrb[0].mxu0
  %v2927 = vpop.f32.mrb[0].mxu0
  %v2928 = vadd.f32 %v356, %v2927
  %v2929 = vpop.f32.mrb[0].mxu0
  %2930 = vmatprep.mubr.bf16.mxu0 0
  %2931 = vmatmul.mubr.bf16.gmra.mrb[0].mxu0 %v1643
  %v2932 = vpop.f32.mrb[0].mxu0
  %v2933 = vadd.f32 %v356, %v2932
  %v2934 = vpop.f32.mrb[0].mxu0
  %v2935 = vpop.f32.mrb[0].mxu0
  %v2936 = vadd.f32 %v356, %v2935
  %v2937 = vpop.f32.mrb[0].mxu0
  %2938 = vmatprep.mubr.bf16.mxu0 0
  %2939 = vmatmul.mubr.bf16.gmra.mrb[0].mxu0 %v1646
  %v2940 = vpop.f32.mrb[0].mxu0
  %v2941 = vadd.f32 %v356, %v2940
  %v2942 = vpop.f32.mrb[0].mxu0
  %v2943 = vpop.f32.mrb[0].mxu0
  %v2944 = vadd.f32 %v356, %v2943
  %v2945 = vpop.f32.mrb[0].mxu0
  %2946 = vmatprep.mubr.bf16.mxu0 0
  %2947 = vmatmul.mubr.bf16.gmra.mrb[0].mxu0 %v1649
  %v2948 = vpop.f32.mrb[0].mxu0
  %v2949 = vadd.f32 %v356, %v2948
  %v2950 = vpop.f32.mrb[0].mxu0
  %v2951 = vpop.f32.mrb[0].mxu0
  %v2952 = vadd.f32 %v356, %v2951
  %v2953 = vpop.f32.mrb[0].mxu0
  %2954 = vmatprep.mubr.bf16.mxu0 0
  %2955 = vmatmul.mubr.bf16.gmra.mrb[0].mxu0 %v1652
  %v2956 = vpop.f32.mrb[0].mxu0
  %v2957 = vadd.f32 %v356, %v2956
  %v2958 = vpop.f32.mrb[0].mxu0
  %v2959 = vpop.f32.mrb[0].mxu0
  %v2960 = vadd.f32 %v356, %v2959
  %v2961 = vpop.f32.mrb[0].mxu0
  %2962 = vmatprep.mubr.bf16.mxu0 0
  %2963 = vmatmul.mubr.bf16.gmra.mrb[0].mxu0 %v1655
  %v2964 = vpop.f32.mrb[0].mxu0
  %v2965 = vadd.f32 %v356, %v2964
  %v2966 = vpop.f32.mrb[0].mxu0
  %v2967 = vpop.f32.mrb[0].mxu0
  %v2968 = vadd.f32 %v356, %v2967
  %v2969 = vpop.f32.mrb[0].mxu0
  %2970 = vmatprep.mubr.bf16.mxu0 0
  %2971 = vmatmul.mubr.bf16.gmra.mrb[0].mxu0 %v1658
  %v2972 = vpop.f32.mrb[0].mxu0
  %v2973 = vadd.f32 %v356, %v2972
  %v2974 = vpop.f32.mrb[0].mxu0
  %v2975 = vpop.f32.mrb[0].mxu0
  %v2976 = vadd.f32 %v356, %v2975
  %v2977 = vpop.f32.mrb[0].mxu0
  %2978 = vmatprep.mubr.bf16.mxu0 0
  %2979 = vmatmul.mubr.bf16.gmra.mrb[0].mxu0 %v1661
  %v2980 = vpop.f32.mrb[0].mxu0
  %v2981 = vadd.f32 %v356, %v2980
  %v2982 = vpop.f32.mrb[0].mxu0
  %v2983 = vpop.f32.mrb[0].mxu0
  %v2984 = vadd.f32 %v356, %v2983
  %v2985 = vpop.f32.mrb[0].mxu0
  %2986 = vmatprep.mubr.bf16.mxu0 0
  %2987 = vmatmul.mubr.bf16.gmra.mrb[0].mxu0 %v1664
  %v2988 = vpop.f32.mrb[0].mxu0
  %v2989 = vadd.f32 %v356, %v2988
  %v2990 = vpop.f32.mrb[0].mxu0
  %v2991 = vpop.f32.mrb[0].mxu0
  %v2992 = vadd.f32 %v356, %v2991
  %v2993 = vpop.f32.mrb[0].mxu0
  %2994 = vdwg.mxu0
  %v2995 = vmax.f32 %v1701, 0.0
  %v2996 = vmax.f32 %v1704, 0.0
  %v2997 = vmax.f32 %v1709, 0.0
  %v2998 = vmax.f32 %v1712, 0.0
  %v2999 = vmax.f32 %v1717, 0.0
  %v3000 = vmax.f32 %v1720, 0.0
  %v3001 = vmax.f32 %v1725, 0.0
  %v3002 = vmax.f32 %v1728, 0.0
  %v3003 = vmax.f32 %v1733, 0.0
  %v3004 = vmax.f32 %v1736, 0.0
  %v3005 = vmax.f32 %v1741, 0.0
  %v3006 = vmax.f32 %v1744, 0.0
  %v3007 = vmax.f32 %v1749, 0.0
  %v3008 = vmax.f32 %v1752, 0.0
  %v3009 = vmax.f32 %v1757, 0.0
  %v3010 = vmax.f32 %v1760, 0.0
  %v3011 = vmax.f32 %v1765, 0.0
  %v3012 = vmax.f32 %v1768, 0.0
  %v3013 = vmax.f32 %v1773, 0.0
  %v3014 = vmax.f32 %v1776, 0.0
  %v3015 = vmax.f32 %v1781, 0.0
  %v3016 = vmax.f32 %v1784, 0.0
  %v3017 = vmax.f32 %v1789, 0.0
  %v3018 = vmax.f32 %v1792, 0.0
  %v3019 = vmax.f32 %v1797, 0.0
  %v3020 = vmax.f32 %v1800, 0.0
  %v3021 = vmax.f32 %v1805, 0.0
  %v3022 = vmax.f32 %v1808, 0.0
  %v3023 = vmax.f32 %v1813, 0.0
  %v3024 = vmax.f32 %v1816, 0.0
  %v3025 = vmax.f32 %v1821, 0.0
  %v3026 = vmax.f32 %v1824, 0.0
  %v3027 = vmax.f32 %v1829, 0.0
  %v3028 = vmax.f32 %v1832, 0.0
  %v3029 = vmax.f32 %v1837, 0.0
  %v3030 = vmax.f32 %v1840, 0.0
  %v3031 = vmax.f32 %v1845, 0.0
  %v3032 = vmax.f32 %v1848, 0.0
  %v3033 = vmax.f32 %v1853, 0.0
  %v3034 = vmax.f32 %v1856, 0.0
  %v3035 = vmax.f32 %v1861, 0.0
  %v3036 = vmax.f32 %v1864, 0.0
  %v3037 = vmax.f32 %v1869, 0.0
  %v3038 = vmax.f32 %v1872, 0.0
  %v3039 = vmax.f32 %v1877, 0.0
  %v3040 = vmax.f32 %v1880, 0.0
  %v3041 = vmax.f32 %v1885, 0.0
  %v3042 = vmax.f32 %v1888, 0.0
  %v3043 = vmax.f32 %v1893, 0.0
  %v3044 = vmax.f32 %v1896, 0.0
  %v3045 = vmax.f32 %v1901, 0.0
  %v3046 = vmax.f32 %v1904, 0.0
  %v3047 = vmax.f32 %v1909, 0.0
  %v3048 = vmax.f32 %v1912, 0.0
  %v3049 = vmax.f32 %v1917, 0.0
  %v3050 = vmax.f32 %v1920, 0.0
  %v3051 = vmax.f32 %v1925, 0.0
  %v3052 = vmax.f32 %v1928, 0.0
  %v3053 = vmax.f32 %v1933, 0.0
  %v3054 = vmax.f32 %v1936, 0.0
  %v3055 = vmax.f32 %v1941, 0.0
  %v3056 = vmax.f32 %v1944, 0.0
  %v3057 = vmax.f32 %v1949, 0.0
  %v3058 = vmax.f32 %v1952, 0.0
  %v3059 = vmax.f32 %v1957, 0.0
  %v3060 = vmax.f32 %v1960, 0.0
  %v3061 = vmax.f32 %v1965, 0.0
  %v3062 = vmax.f32 %v1968, 0.0
  %v3063 = vmax.f32 %v1973, 0.0
  %v3064 = vmax.f32 %v1976, 0.0
  %v3065 = vmax.f32 %v1981, 0.0
  %v3066 = vmax.f32 %v1984, 0.0
  %v3067 = vmax.f32 %v1989, 0.0
  %v3068 = vmax.f32 %v1992, 0.0
  %v3069 = vmax.f32 %v1997, 0.0
  %v3070 = vmax.f32 %v2000, 0.0
  %v3071 = vmax.f32 %v2005, 0.0
  %v3072 = vmax.f32 %v2008, 0.0
  %v3073 = vmax.f32 %v2013, 0.0
  %v3074 = vmax.f32 %v2016, 0.0
  %v3075 = vmax.f32 %v2021, 0.0
  %v3076 = vmax.f32 %v2024, 0.0
  %v3077 = vmax.f32 %v2029, 0.0
  %v3078 = vmax.f32 %v2032, 0.0
  %v3079 = vmax.f32 %v2037, 0.0
  %v3080 = vmax.f32 %v2040, 0.0
  %v3081 = vmax.f32 %v2045, 0.0
  %v3082 = vmax.f32 %v2048, 0.0
  %v3083 = vmax.f32 %v2053, 0.0
  %v3084 = vmax.f32 %v2056, 0.0
  %v3085 = vmax.f32 %v2061, 0.0
  %v3086 = vmax.f32 %v2064, 0.0
  %v3087 = vmax.f32 %v2069, 0.0
  %v3088 = vmax.f32 %v2072, 0.0
  %v3089 = vmax.f32 %v2077, 0.0
  %v3090 = vmax.f32 %v2080, 0.0
  %v3091 = vmax.f32 %v2085, 0.0
  %v3092 = vmax.f32 %v2088, 0.0
  %v3093 = vmax.f32 %v2093, 0.0
  %v3094 = vmax.f32 %v2096, 0.0
  %v3095 = vmax.f32 %v2101, 0.0
  %v3096 = vmax.f32 %v2104, 0.0
  %v3097 = vmax.f32 %v2109, 0.0
  %v3098 = vmax.f32 %v2112, 0.0
  %v3099 = vmax.f32 %v2117, 0.0
  %v3100 = vmax.f32 %v2120, 0.0
  %v3101 = vmax.f32 %v2125, 0.0
  %v3102 = vmax.f32 %v2128, 0.0
  %v3103 = vmax.f32 %v2133, 0.0
  %v3104 = vmax.f32 %v2136, 0.0
  %v3105 = vmax.f32 %v2141, 0.0
  %v3106 = vmax.f32 %v2144, 0.0
  %v3107 = vmax.f32 %v2149, 0.0
  %v3108 = vmax.f32 %v2152, 0.0
  %v3109 = vmax.f32 %v2157, 0.0
  %v3110 = vmax.f32 %v2160, 0.0
  %v3111 = vmax.f32 %v2165, 0.0
  %v3112 = vmax.f32 %v2168, 0.0
  %v3113 = vmax.f32 %v2173, 0.0
  %v3114 = vmax.f32 %v2176, 0.0
  %v3115 = vmax.f32 %v2181, 0.0
  %v3116 = vmax.f32 %v2184, 0.0
  %v3117 = vmax.f32 %v2189, 0.0
  %v3118 = vmax.f32 %v2192, 0.0
  %v3119 = vmax.f32 %v2197, 0.0
  %v3120 = vmax.f32 %v2200, 0.0
  %v3121 = vmax.f32 %v2205, 0.0
  %v3122 = vmax.f32 %v2208, 0.0
  %v3123 = vmax.f32 %v2213, 0.0
  %v3124 = vmax.f32 %v2216, 0.0
  %v3125 = vmax.f32 %v2221, 0.0
  %v3126 = vmax.f32 %v2224, 0.0
  %v3127 = vmax.f32 %v2229, 0.0
  %v3128 = vmax.f32 %v2232, 0.0
  %v3129 = vmax.f32 %v2237, 0.0
  %v3130 = vmax.f32 %v2240, 0.0
  %v3131 = vmax.f32 %v2245, 0.0
  %v3132 = vmax.f32 %v2248, 0.0
  %v3133 = vmax.f32 %v2253, 0.0
  %v3134 = vmax.f32 %v2256, 0.0
  %v3135 = vmax.f32 %v2261, 0.0
  %v3136 = vmax.f32 %v2264, 0.0
  %v3137 = vmax.f32 %v2269, 0.0
  %v3138 = vmax.f32 %v2272, 0.0
  %v3139 = vmax.f32 %v2277, 0.0
  %v3140 = vmax.f32 %v2280, 0.0
  %v3141 = vmax.f32 %v2285, 0.0
  %v3142 = vmax.f32 %v2288, 0.0
  %v3143 = vmax.f32 %v2293, 0.0
  %v3144 = vmax.f32 %v2296, 0.0
  %v3145 = vmax.f32 %v2301, 0.0
  %v3146 = vmax.f32 %v2304, 0.0
  %v3147 = vmax.f32 %v2309, 0.0
  %v3148 = vmax.f32 %v2312, 0.0
  %v3149 = vmax.f32 %v2317, 0.0
  %v3150 = vmax.f32 %v2320, 0.0
  %v3151 = vmax.f32 %v2325, 0.0
  %v3152 = vmax.f32 %v2328, 0.0
  %v3153 = vmax.f32 %v2333, 0.0
  %v3154 = vmax.f32 %v2336, 0.0
  %v3155 = vmax.f32 %v2341, 0.0
  %v3156 = vmax.f32 %v2344, 0.0
  %v3157 = vmax.f32 %v2349, 0.0
  %v3158 = vmax.f32 %v2352, 0.0
  %v3159 = vmax.f32 %v2357, 0.0
  %v3160 = vmax.f32 %v2360, 0.0
  %v3161 = vmax.f32 %v2365, 0.0
  %v3162 = vmax.f32 %v2368, 0.0
  %v3163 = vmax.f32 %v2373, 0.0
  %v3164 = vmax.f32 %v2376, 0.0
  %v3165 = vmax.f32 %v2381, 0.0
  %v3166 = vmax.f32 %v2384, 0.0
  %v3167 = vmax.f32 %v2389, 0.0
  %v3168 = vmax.f32 %v2392, 0.0
  %v3169 = vmax.f32 %v2397, 0.0
  %v3170 = vmax.f32 %v2400, 0.0
  %v3171 = vmax.f32 %v2405, 0.0
  %v3172 = vmax.f32 %v2408, 0.0
  %v3173 = vmax.f32 %v2413, 0.0
  %v3174 = vmax.f32 %v2416, 0.0
  %v3175 = vmax.f32 %v2421, 0.0
  %v3176 = vmax.f32 %v2424, 0.0
  %v3177 = vmax.f32 %v2429, 0.0
  %v3178 = vmax.f32 %v2432, 0.0
  %v3179 = vmax.f32 %v2437, 0.0
  %v3180 = vmax.f32 %v2440, 0.0
  %v3181 = vmax.f32 %v2445, 0.0
  %v3182 = vmax.f32 %v2448, 0.0
  %v3183 = vmax.f32 %v2453, 0.0
  %v3184 = vmax.f32 %v2456, 0.0
  %v3185 = vmax.f32 %v2461, 0.0
  %v3186 = vmax.f32 %v2464, 0.0
  %v3187 = vmax.f32 %v2469, 0.0
  %v3188 = vmax.f32 %v2472, 0.0
  %v3189 = vmax.f32 %v2477, 0.0
  %v3190 = vmax.f32 %v2480, 0.0
  %v3191 = vmax.f32 %v2485, 0.0
  %v3192 = vmax.f32 %v2488, 0.0
  %v3193 = vmax.f32 %v2493, 0.0
  %v3194 = vmax.f32 %v2496, 0.0
  %v3195 = vmax.f32 %v2501, 0.0
  %v3196 = vmax.f32 %v2504, 0.0
  %v3197 = vmax.f32 %v2509, 0.0
  %v3198 = vmax.f32 %v2512, 0.0
  %v3199 = vmax.f32 %v2517, 0.0
  %v3200 = vmax.f32 %v2520, 0.0
  %v3201 = vmax.f32 %v2525, 0.0
  %v3202 = vmax.f32 %v2528, 0.0
  %v3203 = vmax.f32 %v2533, 0.0
  %v3204 = vmax.f32 %v2536, 0.0
  %v3205 = vmax.f32 %v2541, 0.0
  %v3206 = vmax.f32 %v2544, 0.0
  %v3207 = vmax.f32 %v2549, 0.0
  %v3208 = vmax.f32 %v2552, 0.0
  %v3209 = vmax.f32 %v2557, 0.0
  %v3210 = vmax.f32 %v2560, 0.0
  %v3211 = vmax.f32 %v2565, 0.0
  %v3212 = vmax.f32 %v2568, 0.0
  %v3213 = vmax.f32 %v2573, 0.0
  %v3214 = vmax.f32 %v2576, 0.0
  %v3215 = vmax.f32 %v2581, 0.0
  %v3216 = vmax.f32 %v2584, 0.0
  %v3217 = vmax.f32 %v2589, 0.0
  %v3218 = vmax.f32 %v2592, 0.0
  %v3219 = vmax.f32 %v2597, 0.0
  %v3220 = vmax.f32 %v2600, 0.0
  %v3221 = vmax.f32 %v2605, 0.0
  %v3222 = vmax.f32 %v2608, 0.0
  %v3223 = vmax.f32 %v2613, 0.0
  %v3224 = vmax.f32 %v2616, 0.0
  %v3225 = vmax.f32 %v2621, 0.0
  %v3226 = vmax.f32 %v2624, 0.0
  %v3227 = vmax.f32 %v2629, 0.0
  %v3228 = vmax.f32 %v2632, 0.0
  %v3229 = vmax.f32 %v2637, 0.0
  %v3230 = vmax.f32 %v2640, 0.0
  %v3231 = vmax.f32 %v2645, 0.0
  %v3232 = vmax.f32 %v2648, 0.0
  %v3233 = vmax.f32 %v2653, 0.0
  %v3234 = vmax.f32 %v2656, 0.0
  %v3235 = vmax.f32 %v2661, 0.0
  %v3236 = vmax.f32 %v2664, 0.0
  %v3237 = vmax.f32 %v2669, 0.0
  %v3238 = vmax.f32 %v2672, 0.0
  %v3239 = vmax.f32 %v2677, 0.0
  %v3240 = vmax.f32 %v2680, 0.0
  %v3241 = vmax.f32 %v2685, 0.0
  %v3242 = vmax.f32 %v2688, 0.0
  %v3243 = vmax.f32 %v2693, 0.0
  %v3244 = vmax.f32 %v2696, 0.0
  %v3245 = vmax.f32 %v2701, 0.0
  %v3246 = vmax.f32 %v2704, 0.0
  %v3247 = vmax.f32 %v2709, 0.0
  %v3248 = vmax.f32 %v2712, 0.0
  %v3249 = vmax.f32 %v2717, 0.0
  %v3250 = vmax.f32 %v2720, 0.0
  %v3251 = vmax.f32 %v2725, 0.0
  %v3252 = vmax.f32 %v2728, 0.0
  %v3253 = vmax.f32 %v2733, 0.0
  %v3254 = vmax.f32 %v2736, 0.0
  %v3255 = vmax.f32 %v2741, 0.0
  %v3256 = vmax.f32 %v2744, 0.0
  %v3257 = vmax.f32 %v2749, 0.0
  %v3258 = vmax.f32 %v2752, 0.0
  %v3259 = vmax.f32 %v2757, 0.0
  %v3260 = vmax.f32 %v2760, 0.0
  %v3261 = vmax.f32 %v2765, 0.0
  %v3262 = vmax.f32 %v2768, 0.0
  %v3263 = vmax.f32 %v2773, 0.0
  %v3264 = vmax.f32 %v2776, 0.0
  %v3265 = vmax.f32 %v2781, 0.0
  %v3266 = vmax.f32 %v2784, 0.0
  %v3267 = vmax.f32 %v2789, 0.0
  %v3268 = vmax.f32 %v2792, 0.0
  %v3269 = vmax.f32 %v2797, 0.0
  %v3270 = vmax.f32 %v2800, 0.0
  %v3271 = vmax.f32 %v2805, 0.0
  %v3272 = vmax.f32 %v2808, 0.0
  %v3273 = vmax.f32 %v2813, 0.0
  %v3274 = vmax.f32 %v2816, 0.0
  %v3275 = vmax.f32 %v2821, 0.0
  %v3276 = vmax.f32 %v2824, 0.0
  %v3277 = vmax.f32 %v2829, 0.0
  %v3278 = vmax.f32 %v2832, 0.0
  %v3279 = vmax.f32 %v2837, 0.0
  %v3280 = vmax.f32 %v2840, 0.0
  %v3281 = vmax.f32 %v2845, 0.0
  %v3282 = vmax.f32 %v2848, 0.0
  %v3283 = vmax.f32 %v2853, 0.0
  %v3284 = vmax.f32 %v2856, 0.0
  %v3285 = vmax.f32 %v2861, 0.0
  %v3286 = vmax.f32 %v2864, 0.0
  %v3287 = vmax.f32 %v2869, 0.0
  %v3288 = vmax.f32 %v2872, 0.0
  %v3289 = vmax.f32 %v2877, 0.0
  %v3290 = vmax.f32 %v2880, 0.0
  %v3291 = vmax.f32 %v2885, 0.0
  %v3292 = vmax.f32 %v2888, 0.0
  %v3293 = vmax.f32 %v2893, 0.0
  %v3294 = vmax.f32 %v2896, 0.0
  %v3295 = vmax.f32 %v2901, 0.0
  %v3296 = vmax.f32 %v2904, 0.0
  %v3297 = vmax.f32 %v2909, 0.0
  %v3298 = vmax.f32 %v2912, 0.0
  %v3299 = vmax.f32 %v2917, 0.0
  %v3300 = vmax.f32 %v2920, 0.0
  %v3301 = vmax.f32 %v2925, 0.0
  %v3302 = vmax.f32 %v2928, 0.0
  %v3303 = vmax.f32 %v2933, 0.0
  %v3304 = vmax.f32 %v2936, 0.0
  %v3305 = vmax.f32 %v2941, 0.0
  %v3306 = vmax.f32 %v2944, 0.0
  %v3307 = vmax.f32 %v2949, 0.0
  %v3308 = vmax.f32 %v2952, 0.0
  %v3309 = vmax.f32 %v2957, 0.0
  %v3310 = vmax.f32 %v2960, 0.0
  %v3311 = vmax.f32 %v2965, 0.0
  %v3312 = vmax.f32 %v2968, 0.0
  %v3313 = vmax.f32 %v2973, 0.0
  %v3314 = vmax.f32 %v2976, 0.0
  %v3315 = vmax.f32 %v2981, 0.0
  %v3316 = vmax.f32 %v2984, 0.0
  %v3317 = vmax.f32 %v2989, 0.0
  %v3318 = vmax.f32 %v2992, 0.0
  %v3319 = vpack.c.bf16 %v2996, %v2995
  %v3320 = vpack.c.bf16 %v2998, %v2997
  %v3321 = vpack.c.bf16 %v3000, %v2999
  %v3322 = vpack.c.bf16 %v3002, %v3001
  %v3323 = vpack.c.bf16 %v3004, %v3003
  %v3324 = vpack.c.bf16 %v3006, %v3005
  %v3325 = vpack.c.bf16 %v3008, %v3007
  %v3326 = vpack.c.bf16 %v3010, %v3009
  %v3327 = vpack.c.bf16 %v3012, %v3011
  %v3328 = vpack.c.bf16 %v3014, %v3013
  %v3329 = vpack.c.bf16 %v3016, %v3015
  %v3330 = vpack.c.bf16 %v3018, %v3017
  %v3331 = vpack.c.bf16 %v3020, %v3019
  %v3332 = vpack.c.bf16 %v3022, %v3021
  %v3333 = vpack.c.bf16 %v3024, %v3023
  %v3334 = vpack.c.bf16 %v3026, %v3025
  %v3335 = vpack.c.bf16 %v3028, %v3027
  %v3336 = vpack.c.bf16 %v3030, %v3029
  %v3337 = vpack.c.bf16 %v3032, %v3031
  %v3338 = vpack.c.bf16 %v3034, %v3033
  %v3339 = vpack.c.bf16 %v3036, %v3035
  %v3340 = vpack.c.bf16 %v3038, %v3037
  %v3341 = vpack.c.bf16 %v3040, %v3039
  %v3342 = vpack.c.bf16 %v3042, %v3041
  %v3343 = vpack.c.bf16 %v3044, %v3043
  %v3344 = vpack.c.bf16 %v3046, %v3045
  %v3345 = vpack.c.bf16 %v3048, %v3047
  %v3346 = vpack.c.bf16 %v3050, %v3049
  %v3347 = vpack.c.bf16 %v3052, %v3051
  %v3348 = vpack.c.bf16 %v3054, %v3053
  %v3349 = vpack.c.bf16 %v3056, %v3055
  %v3350 = vpack.c.bf16 %v3058, %v3057
  %v3351 = vpack.c.bf16 %v3060, %v3059
  %v3352 = vpack.c.bf16 %v3062, %v3061
  %v3353 = vpack.c.bf16 %v3064, %v3063
  %v3354 = vpack.c.bf16 %v3066, %v3065
  %v3355 = vpack.c.bf16 %v3068, %v3067
  %v3356 = vpack.c.bf16 %v3070, %v3069
  %v3357 = vpack.c.bf16 %v3072, %v3071
  %v3358 = vpack.c.bf16 %v3074, %v3073
  %v3359 = vpack.c.bf16 %v3076, %v3075
  %v3360 = vpack.c.bf16 %v3078, %v3077
  %v3361 = vpack.c.bf16 %v3080, %v3079
  %v3362 = vpack.c.bf16 %v3082, %v3081
  %v3363 = vpack.c.bf16 %v3084, %v3083
  %v3364 = vpack.c.bf16 %v3086, %v3085
  %v3365 = vpack.c.bf16 %v3088, %v3087
  %v3366 = vpack.c.bf16 %v3090, %v3089
  %v3367 = vpack.c.bf16 %v3092, %v3091
  %v3368 = vpack.c.bf16 %v3094, %v3093
  %v3369 = vpack.c.bf16 %v3096, %v3095
  %v3370 = vpack.c.bf16 %v3098, %v3097
  %v3371 = vpack.c.bf16 %v3100, %v3099
  %v3372 = vpack.c.bf16 %v3102, %v3101
  %v3373 = vpack.c.bf16 %v3104, %v3103
  %v3374 = vpack.c.bf16 %v3106, %v3105
  %v3375 = vpack.c.bf16 %v3108, %v3107
  %v3376 = vpack.c.bf16 %v3110, %v3109
  %v3377 = vpack.c.bf16 %v3112, %v3111
  %v3378 = vpack.c.bf16 %v3114, %v3113
  %v3379 = vpack.c.bf16 %v3116, %v3115
  %v3380 = vpack.c.bf16 %v3118, %v3117
  %v3381 = vpack.c.bf16 %v3120, %v3119
  %v3382 = vpack.c.bf16 %v3122, %v3121
  %v3383 = vpack.c.bf16 %v3124, %v3123
  %v3384 = vpack.c.bf16 %v3126, %v3125
  %v3385 = vpack.c.bf16 %v3128, %v3127
  %v3386 = vpack.c.bf16 %v3130, %v3129
  %v3387 = vpack.c.bf16 %v3132, %v3131
  %v3388 = vpack.c.bf16 %v3134, %v3133
  %v3389 = vpack.c.bf16 %v3136, %v3135
  %v3390 = vpack.c.bf16 %v3138, %v3137
  %v3391 = vpack.c.bf16 %v3140, %v3139
  %v3392 = vpack.c.bf16 %v3142, %v3141
  %v3393 = vpack.c.bf16 %v3144, %v3143
  %v3394 = vpack.c.bf16 %v3146, %v3145
  %v3395 = vpack.c.bf16 %v3148, %v3147
  %v3396 = vpack.c.bf16 %v3150, %v3149
  %v3397 = vpack.c.bf16 %v3152, %v3151
  %v3398 = vpack.c.bf16 %v3154, %v3153
  %v3399 = vpack.c.bf16 %v3156, %v3155
  %v3400 = vpack.c.bf16 %v3158, %v3157
  %v3401 = vpack.c.bf16 %v3160, %v3159
  %v3402 = vpack.c.bf16 %v3162, %v3161
  %v3403 = vpack.c.bf16 %v3164, %v3163
  %v3404 = vpack.c.bf16 %v3166, %v3165
  %v3405 = vpack.c.bf16 %v3168, %v3167
  %v3406 = vpack.c.bf16 %v3170, %v3169
  %v3407 = vpack.c.bf16 %v3172, %v3171
  %v3408 = vpack.c.bf16 %v3174, %v3173
  %v3409 = vpack.c.bf16 %v3176, %v3175
  %v3410 = vpack.c.bf16 %v3178, %v3177
  %v3411 = vpack.c.bf16 %v3180, %v3179
  %v3412 = vpack.c.bf16 %v3182, %v3181
  %v3413 = vpack.c.bf16 %v3184, %v3183
  %v3414 = vpack.c.bf16 %v3186, %v3185
  %v3415 = vpack.c.bf16 %v3188, %v3187
  %v3416 = vpack.c.bf16 %v3190, %v3189
  %v3417 = vpack.c.bf16 %v3192, %v3191
  %v3418 = vpack.c.bf16 %v3194, %v3193
  %v3419 = vpack.c.bf16 %v3196, %v3195
  %v3420 = vpack.c.bf16 %v3198, %v3197
  %v3421 = vpack.c.bf16 %v3200, %v3199
  %v3422 = vpack.c.bf16 %v3202, %v3201
  %v3423 = vpack.c.bf16 %v3204, %v3203
  %v3424 = vpack.c.bf16 %v3206, %v3205
  %v3425 = vpack.c.bf16 %v3208, %v3207
  %v3426 = vpack.c.bf16 %v3210, %v3209
  %v3427 = vpack.c.bf16 %v3212, %v3211
  %v3428 = vpack.c.bf16 %v3214, %v3213
  %v3429 = vpack.c.bf16 %v3216, %v3215
  %v3430 = vpack.c.bf16 %v3218, %v3217
  %v3431 = vpack.c.bf16 %v3220, %v3219
  %v3432 = vpack.c.bf16 %v3222, %v3221
  %v3433 = vpack.c.bf16 %v3224, %v3223
  %v3434 = vpack.c.bf16 %v3226, %v3225
  %v3435 = vpack.c.bf16 %v3228, %v3227
  %v3436 = vpack.c.bf16 %v3230, %v3229
  %v3437 = vpack.c.bf16 %v3232, %v3231
  %v3438 = vpack.c.bf16 %v3234, %v3233
  %v3439 = vpack.c.bf16 %v3236, %v3235
  %v3440 = vpack.c.bf16 %v3238, %v3237
  %v3441 = vpack.c.bf16 %v3240, %v3239
  %v3442 = vpack.c.bf16 %v3242, %v3241
  %v3443 = vpack.c.bf16 %v3244, %v3243
  %v3444 = vpack.c.bf16 %v3246, %v3245
  %v3445 = vpack.c.bf16 %v3248, %v3247
  %v3446 = vpack.c.bf16 %v3250, %v3249
  %v3447 = vpack.c.bf16 %v3252, %v3251
  %v3448 = vpack.c.bf16 %v3254, %v3253
  %v3449 = vpack.c.bf16 %v3256, %v3255
  %v3450 = vpack.c.bf16 %v3258, %v3257
  %v3451 = vpack.c.bf16 %v3260, %v3259
  %v3452 = vpack.c.bf16 %v3262, %v3261
  %v3453 = vpack.c.bf16 %v3264, %v3263
  %v3454 = vpack.c.bf16 %v3266, %v3265
  %v3455 = vpack.c.bf16 %v3268, %v3267
  %v3456 = vpack.c.bf16 %v3270, %v3269
  %v3457 = vpack.c.bf16 %v3272, %v3271
  %v3458 = vpack.c.bf16 %v3274, %v3273
  %v3459 = vpack.c.bf16 %v3276, %v3275
  %v3460 = vpack.c.bf16 %v3278, %v3277
  %v3461 = vpack.c.bf16 %v3280, %v3279
  %v3462 = vpack.c.bf16 %v3282, %v3281
  %v3463 = vpack.c.bf16 %v3284, %v3283
  %v3464 = vpack.c.bf16 %v3286, %v3285
  %v3465 = vpack.c.bf16 %v3288, %v3287
  %v3466 = vpack.c.bf16 %v3290, %v3289
  %v3467 = vpack.c.bf16 %v3292, %v3291
  %v3468 = vpack.c.bf16 %v3294, %v3293
  %v3469 = vpack.c.bf16 %v3296, %v3295
  %v3470 = vpack.c.bf16 %v3298, %v3297
  %v3471 = vpack.c.bf16 %v3300, %v3299
  %v3472 = vpack.c.bf16 %v3302, %v3301
  %v3473 = vpack.c.bf16 %v3304, %v3303
  %v3474 = vpack.c.bf16 %v3306, %v3305
  %v3475 = vpack.c.bf16 %v3308, %v3307
  %v3476 = vpack.c.bf16 %v3310, %v3309
  %v3477 = vpack.c.bf16 %v3312, %v3311
  %v3478 = vpack.c.bf16 %v3314, %v3313
  %v3479 = vpack.c.bf16 %v3316, %v3315
  %v3480 = vpack.c.bf16 %v3318, %v3317
  %v3481 = vld [vmem:[%s2] sm:$0xf]
  %v3482 = vld [vmem:[%s2 + $0x4] sm:$0xf]
  %v3483 = vld [vmem:[%s2 + $0x8] sm:$0xf]
  %v3484 = vld [vmem:[%s2 + $0xc] sm:$0xf]
  %v3485 = vld [vmem:[%s2 + $0x10] sm:$0xf]
  %v3486 = vld [vmem:[%s2 + $0x14] sm:$0xf]
  %v3487 = vld [vmem:[%s2 + $0x18] sm:$0xf]
  %v3488 = vld [vmem:[%s2 + $0x1c] sm:$0xf]
  %v3493 = vunpack.c.l.b16 %v3485
  %v3494 = vunpack.c.l.b16 %v3486
  %v3495 = vunpack.c.l.b16 %v3487
  %v3496 = vunpack.c.l.b16 %v3488
  %v3497 = vpack.c.b16 %v3494, %v3493
  %v3498 = vpack.c.b16 %v3496, %v3495
  %v3502 = vsel %vm1179, %v3337, 0
  %v3505 = vsel %vm1179, %v3338, 0
  %v3508 = vsel %vm1179, %v3339, 0
  %v3511 = vsel %vm1179, %v3340, 0
  %v3514 = vsel %vm1179, %v3341, 0
  %v3517 = vsel %vm1179, %v3342, 0
  %v3520 = vsel %vm1179, %v3343, 0
  %v3523 = vsel %vm1179, %v3344, 0
  %v3526 = vsel %vm1179, %v3345, 0
  %v3529 = vsel %vm1179, %v3346, 0
  %v3532 = vsel %vm1179, %v3347, 0
  %v3535 = vsel %vm1179, %v3348, 0
  %v3538 = vsel %vm1179, %v3349, 0
  %v3541 = vsel %vm1179, %v3350, 0
  %v3544 = vsel %vm1179, %v3351, 0
  %v3547 = vsel %vm1179, %v3352, 0
  %v3550 = vsel %vm1179, %v3353, 0
  %v3553 = vsel %vm1179, %v3354, 0
  %3555 = vmatprep.subr.bf16.mxu0 0
  %3556 = vmatpush1.bf16.msra.mxu0 %v3497
  %3557 = vmatprep.subr.bf16.mxu0 0
  %3558 = vmatpush1.bf16.msra.mxu0 %v3498
  %3559 = vmatprep.subr.bf16.mxu0 0
  %3560 = vmatpush1.bf16.msra.mxu0 0
  %3561 = vmatprep.subr.bf16.mxu0 0
  %3562 = vmatpush1.bf16.msra.mxu0 0
  %3563 = vmatprep.subr.bf16.mxu0 0
  %3564 = vmatpush1.bf16.msra.mxu0 0
  %3565 = vmatprep.subr.bf16.mxu0 0
  %3566 = vmatpush1.bf16.msra.mxu0 0
  %3567 = vmatprep.subr.bf16.mxu0 0
  %3568 = vmatpush1.bf16.msra.mxu0 0
  %3569 = vmatprep.subr.bf16.mxu0 0
  %3570 = vmatpush1.bf16.msra.mxu0 0
  %3571 = vmatprep.subr.bf16.mxu0 0
  %3572 = vmatpush1.bf16.msra.mxu0 0
  %3573 = vmatprep.subr.bf16.mxu0 0
  %3574 = vmatpush1.bf16.msra.mxu0 0
  %3575 = vmatprep.subr.bf16.mxu0 0
  %3576 = vmatpush1.bf16.msra.mxu0 0
  %3577 = vmatprep.subr.bf16.mxu0 0
  %3578 = vmatpush1.bf16.msra.mxu0 0
  %3579 = vmatprep.subr.bf16.mxu0 0
  %3580 = vmatpush1.bf16.msra.mxu0 0
  %3581 = vmatprep.subr.bf16.mxu0 0
  %3582 = vmatpush1.bf16.msra.mxu0 0
  %3583 = vmatprep.subr.bf16.mxu0 0
  %3584 = vmatpush1.bf16.msra.mxu0 0
  %3585 = vmatprep.subr.bf16.mxu0 0
  %3586 = vmatpush1.bf16.msra.mxu0 0
  %3587 = vmatprep.mubr.bf16.mxu0 0
  %3588 = vmatmul.mubr.bf16.gmra.mrb[0].mxu0 %v3502
  %v3589 = vpop.f32.mrb[0].mxu0
  %v3590 = vadd.f32 0.0, %v3589
  %v3591 = vpop.f32.mrb[0].mxu0
  %v3592 = vpop.f32.mrb[0].mxu0
  %v3593 = vadd.f32 0.0, %v3592
  %v3594 = vpop.f32.mrb[0].mxu0
  %3595 = vmatprep.mubr.bf16.mxu0 0
  %3596 = vmatmul.mubr.bf16.gmra.mrb[0].mxu0 %v3505
  %v3597 = vpop.f32.mrb[0].mxu0
  %v3598 = vadd.f32 0.0, %v3597
  %v3599 = vpop.f32.mrb[0].mxu0
  %v3600 = vpop.f32.mrb[0].mxu0
  %v3601 = vadd.f32 0.0, %v3600
  %v3602 = vpop.f32.mrb[0].mxu0
  %3603 = vmatprep.mubr.bf16.mxu0 0
  %3604 = vmatmul.mubr.bf16.gmra.mrb[0].mxu0 %v3508
  %v3605 = vpop.f32.mrb[0].mxu0
  %v3606 = vadd.f32 0.0, %v3605
  %v3607 = vpop.f32.mrb[0].mxu0
  %v3608 = vpop.f32.mrb[0].mxu0
  %v3609 = vadd.f32 0.0, %v3608
  %v3610 = vpop.f32.mrb[0].mxu0
  %3611 = vmatprep.mubr.bf16.mxu0 0
  %3612 = vmatmul.mubr.bf16.gmra.mrb[0].mxu0 %v3511
  %v3613 = vpop.f32.mrb[0].mxu0
  %v3614 = vadd.f32 0.0, %v3613
  %v3615 = vpop.f32.mrb[0].mxu0
  %v3616 = vpop.f32.mrb[0].mxu0
  %v3617 = vadd.f32 0.0, %v3616
  %v3618 = vpop.f32.mrb[0].mxu0
  %3619 = vmatprep.mubr.bf16.mxu0 0
  %3620 = vmatmul.mubr.bf16.gmra.mrb[0].mxu0 %v3514
  %v3621 = vpop.f32.mrb[0].mxu0
  %v3622 = vadd.f32 0.0, %v3621
  %v3623 = vpop.f32.mrb[0].mxu0
  %v3624 = vpop.f32.mrb[0].mxu0
  %v3625 = vadd.f32 0.0, %v3624
  %v3626 = vpop.f32.mrb[0].mxu0
  %3627 = vmatprep.mubr.bf16.mxu0 0
  %3628 = vmatmul.mubr.bf16.gmra.mrb[0].mxu0 %v3517
  %v3629 = vpop.f32.mrb[0].mxu0
  %v3630 = vadd.f32 0.0, %v3629
  %v3631 = vpop.f32.mrb[0].mxu0
  %v3632 = vpop.f32.mrb[0].mxu0
  %v3633 = vadd.f32 0.0, %v3632
  %v3634 = vpop.f32.mrb[0].mxu0
  %3635 = vmatprep.mubr.bf16.mxu0 0
  %3636 = vmatmul.mubr.bf16.gmra.mrb[0].mxu0 %v3520
  %v3637 = vpop.f32.mrb[0].mxu0
  %v3638 = vadd.f32 0.0, %v3637
  %v3639 = vpop.f32.mrb[0].mxu0
  %v3640 = vpop.f32.mrb[0].mxu0
  %v3641 = vadd.f32 0.0, %v3640
  %v3642 = vpop.f32.mrb[0].mxu0
  %3643 = vmatprep.mubr.bf16.mxu0 0
  %3644 = vmatmul.mubr.bf16.gmra.mrb[0].mxu0 %v3523
  %v3645 = vpop.f32.mrb[0].mxu0
  %v3646 = vadd.f32 0.0, %v3645
  %v3647 = vpop.f32.mrb[0].mxu0
  %v3648 = vpop.f32.mrb[0].mxu0
  %v3649 = vadd.f32 0.0, %v3648
  %v3650 = vpop.f32.mrb[0].mxu0
  %3651 = vmatprep.mubr.bf16.mxu0 0
  %3652 = vmatmul.mubr.bf16.gmra.mrb[0].mxu0 %v3526
  %v3653 = vpop.f32.mrb[0].mxu0
  %v3654 = vadd.f32 0.0, %v3653
  %v3655 = vpop.f32.mrb[0].mxu0
  %v3656 = vpop.f32.mrb[0].mxu0
  %v3657 = vadd.f32 0.0, %v3656
  %v3658 = vpop.f32.mrb[0].mxu0
  %3659 = vmatprep.mubr.bf16.mxu0 0
  %3660 = vmatmul.mubr.bf16.gmra.mrb[0].mxu0 %v3529
  %v3661 = vpop.f32.mrb[0].mxu0
  %v3662 = vadd.f32 0.0, %v3661
  %v3663 = vpop.f32.mrb[0].mxu0
  %v3664 = vpop.f32.mrb[0].mxu0
  %v3665 = vadd.f32 0.0, %v3664
  %v3666 = vpop.f32.mrb[0].mxu0
  %3667 = vmatprep.mubr.bf16.mxu0 0
  %3668 = vmatmul.mubr.bf16.gmra.mrb[0].mxu0 %v3532
  %v3669 = vpop.f32.mrb[0].mxu0
  %v3670 = vadd.f32 0.0, %v3669
  %v3671 = vpop.f32.mrb[0].mxu0
  %v3672 = vpop.f32.mrb[0].mxu0
  %v3673 = vadd.f32 0.0, %v3672
  %v3674 = vpop.f32.mrb[0].mxu0
  %3675 = vmatprep.mubr.bf16.mxu0 0
  %3676 = vmatmul.mubr.bf16.gmra.mrb[0].mxu0 %v3535
  %v3677 = vpop.f32.mrb[0].mxu0
  %v3678 = vadd.f32 0.0, %v3677
  %v3679 = vpop.f32.mrb[0].mxu0
  %v3680 = vpop.f32.mrb[0].mxu0
  %v3681 = vadd.f32 0.0, %v3680
  %v3682 = vpop.f32.mrb[0].mxu0
  %3683 = vmatprep.mubr.bf16.mxu0 0
  %3684 = vmatmul.mubr.bf16.gmra.mrb[0].mxu0 %v3538
  %v3685 = vpop.f32.mrb[0].mxu0
  %v3686 = vadd.f32 0.0, %v3685
  %v3687 = vpop.f32.mrb[0].mxu0
  %v3688 = vpop.f32.mrb[0].mxu0
  %v3689 = vadd.f32 0.0, %v3688
  %v3690 = vpop.f32.mrb[0].mxu0
  %3691 = vmatprep.mubr.bf16.mxu0 0
  %3692 = vmatmul.mubr.bf16.gmra.mrb[0].mxu0 %v3541
  %v3693 = vpop.f32.mrb[0].mxu0
  %v3694 = vadd.f32 0.0, %v3693
  %v3695 = vpop.f32.mrb[0].mxu0
  %v3696 = vpop.f32.mrb[0].mxu0
  %v3697 = vadd.f32 0.0, %v3696
  %v3698 = vpop.f32.mrb[0].mxu0
  %3699 = vmatprep.mubr.bf16.mxu0 0
  %3700 = vmatmul.mubr.bf16.gmra.mrb[0].mxu0 %v3544
  %v3701 = vpop.f32.mrb[0].mxu0
  %v3702 = vadd.f32 0.0, %v3701
  %v3703 = vpop.f32.mrb[0].mxu0
  %v3704 = vpop.f32.mrb[0].mxu0
  %v3705 = vadd.f32 0.0, %v3704
  %v3706 = vpop.f32.mrb[0].mxu0
  %3707 = vmatprep.mubr.bf16.mxu0 0
  %3708 = vmatmul.mubr.bf16.gmra.mrb[0].mxu0 %v3547
  %v3709 = vpop.f32.mrb[0].mxu0
  %v3710 = vadd.f32 0.0, %v3709
  %v3711 = vpop.f32.mrb[0].mxu0
  %v3712 = vpop.f32.mrb[0].mxu0
  %v3713 = vadd.f32 0.0, %v3712
  %v3714 = vpop.f32.mrb[0].mxu0
  %3715 = vmatprep.mubr.bf16.mxu0 0
  %3716 = vmatmul.mubr.bf16.gmra.mrb[0].mxu0 %v3550
  %v3717 = vpop.f32.mrb[0].mxu0
  %v3718 = vadd.f32 0.0, %v3717
  %v3719 = vpop.f32.mrb[0].mxu0
  %v3720 = vpop.f32.mrb[0].mxu0
  %v3721 = vadd.f32 0.0, %v3720
  %v3722 = vpop.f32.mrb[0].mxu0
  %3723 = vmatprep.mubr.bf16.mxu0 0
  %3724 = vmatmul.mubr.bf16.gmra.mrb[0].mxu0 %v3553
  %v3725 = vpop.f32.mrb[0].mxu0
  %v3726 = vadd.f32 0.0, %v3725
  %v3727 = vpop.f32.mrb[0].mxu0
  %v3728 = vpop.f32.mrb[0].mxu0
  %v3729 = vadd.f32 0.0, %v3728
  %v3730 = vpop.f32.mrb[0].mxu0
  %3731 = vdwg.mxu0
  %v3736 = vunpack.c.l.b16 %v3481
  %v3737 = vunpack.c.l.b16 %v3482
  %v3738 = vunpack.c.l.b16 %v3483
  %v3739 = vunpack.c.l.b16 %v3484
  %v3740 = vpack.c.b16 %v3737, %v3736
  %v3741 = vpack.c.b16 %v3739, %v3738
  %v3745 = vsel %vm1179, %v3319, 0
  %v3748 = vsel %vm1179, %v3320, 0
  %v3751 = vsel %vm1179, %v3321, 0
  %v3754 = vsel %vm1179, %v3322, 0
  %v3757 = vsel %vm1179, %v3323, 0
  %v3760 = vsel %vm1179, %v3324, 0
  %v3763 = vsel %vm1179, %v3325, 0
  %v3766 = vsel %vm1179, %v3326, 0
  %v3769 = vsel %vm1179, %v3327, 0
  %v3772 = vsel %vm1179, %v3328, 0
  %v3775 = vsel %vm1179, %v3329, 0
  %v3778 = vsel %vm1179, %v3330, 0
  %v3781 = vsel %vm1179, %v3331, 0
  %v3784 = vsel %vm1179, %v3332, 0
  %v3787 = vsel %vm1179, %v3333, 0
  %v3790 = vsel %vm1179, %v3334, 0
  %v3793 = vsel %vm1179, %v3335, 0
  %v3796 = vsel %vm1179, %v3336, 0
  %3798 = vmatprep.subr.bf16.mxu0 0
  %3799 = vmatpush1.bf16.msra.mxu0 %v3740
  %3800 = vmatprep.subr.bf16.mxu0 0
  %3801 = vmatpush1.bf16.msra.mxu0 %v3741
  %3802 = vmatprep.subr.bf16.mxu0 0
  %3803 = vmatpush1.bf16.msra.mxu0 0
  %3804 = vmatprep.subr.bf16.mxu0 0
  %3805 = vmatpush1.bf16.msra.mxu0 0
  %3806 = vmatprep.subr.bf16.mxu0 0
  %3807 = vmatpush1.bf16.msra.mxu0 0
  %3808 = vmatprep.subr.bf16.mxu0 0
  %3809 = vmatpush1.bf16.msra.mxu0 0
  %3810 = vmatprep.subr.bf16.mxu0 0
  %3811 = vmatpush1.bf16.msra.mxu0 0
  %3812 = vmatprep.subr.bf16.mxu0 0
  %3813 = vmatpush1.bf16.msra.mxu0 0
  %3814 = vmatprep.subr.bf16.mxu0 0
  %3815 = vmatpush1.bf16.msra.mxu0 0
  %3816 = vmatprep.subr.bf16.mxu0 0
  %3817 = vmatpush1.bf16.msra.mxu0 0
  %3818 = vmatprep.subr.bf16.mxu0 0
  %3819 = vmatpush1.bf16.msra.mxu0 0
  %3820 = vmatprep.subr.bf16.mxu0 0
  %3821 = vmatpush1.bf16.msra.mxu0 0
  %3822 = vmatprep.subr.bf16.mxu0 0
  %3823 = vmatpush1.bf16.msra.mxu0 0
  %3824 = vmatprep.subr.bf16.mxu0 0
  %3825 = vmatpush1.bf16.msra.mxu0 0
  %3826 = vmatprep.subr.bf16.mxu0 0
  %3827 = vmatpush1.bf16.msra.mxu0 0
  %3828 = vmatprep.subr.bf16.mxu0 0
  %3829 = vmatpush1.bf16.msra.mxu0 0
  %3830 = vmatprep.mubr.bf16.mxu0 0
  %3831 = vmatmul.mubr.bf16.gmra.mrb[0].mxu0 %v3745
  %v3832 = vpop.f32.mrb[0].mxu0
  %v3833 = vadd.f32 %v3590, %v3832
  %v3834 = vpop.f32.mrb[0].mxu0
  %v3835 = vpop.f32.mrb[0].mxu0
  %v3836 = vadd.f32 %v3593, %v3835
  %v3837 = vpop.f32.mrb[0].mxu0
  %3838 = vmatprep.mubr.bf16.mxu0 0
  %3839 = vmatmul.mubr.bf16.gmra.mrb[0].mxu0 %v3748
  %v3840 = vpop.f32.mrb[0].mxu0
  %v3841 = vadd.f32 %v3598, %v3840
  %v3842 = vpop.f32.mrb[0].mxu0
  %v3843 = vpop.f32.mrb[0].mxu0
  %v3844 = vadd.f32 %v3601, %v3843
  %v3845 = vpop.f32.mrb[0].mxu0
  %3846 = vmatprep.mubr.bf16.mxu0 0
  %3847 = vmatmul.mubr.bf16.gmra.mrb[0].mxu0 %v3751
  %v3848 = vpop.f32.mrb[0].mxu0
  %v3849 = vadd.f32 %v3606, %v3848
  %v3850 = vpop.f32.mrb[0].mxu0
  %v3851 = vpop.f32.mrb[0].mxu0
  %v3852 = vadd.f32 %v3609, %v3851
  %v3853 = vpop.f32.mrb[0].mxu0
  %3854 = vmatprep.mubr.bf16.mxu0 0
  %3855 = vmatmul.mubr.bf16.gmra.mrb[0].mxu0 %v3754
  %v3856 = vpop.f32.mrb[0].mxu0
  %v3857 = vadd.f32 %v3614, %v3856
  %v3858 = vpop.f32.mrb[0].mxu0
  %v3859 = vpop.f32.mrb[0].mxu0
  %v3860 = vadd.f32 %v3617, %v3859
  %v3861 = vpop.f32.mrb[0].mxu0
  %3862 = vmatprep.mubr.bf16.mxu0 0
  %3863 = vmatmul.mubr.bf16.gmra.mrb[0].mxu0 %v3757
  %v3864 = vpop.f32.mrb[0].mxu0
  %v3865 = vadd.f32 %v3622, %v3864
  %v3866 = vpop.f32.mrb[0].mxu0
  %v3867 = vpop.f32.mrb[0].mxu0
  %v3868 = vadd.f32 %v3625, %v3867
  %v3869 = vpop.f32.mrb[0].mxu0
  %3870 = vmatprep.mubr.bf16.mxu0 0
  %3871 = vmatmul.mubr.bf16.gmra.mrb[0].mxu0 %v3760
  %v3872 = vpop.f32.mrb[0].mxu0
  %v3873 = vadd.f32 %v3630, %v3872
  %v3874 = vpop.f32.mrb[0].mxu0
  %v3875 = vpop.f32.mrb[0].mxu0
  %v3876 = vadd.f32 %v3633, %v3875
  %v3877 = vpop.f32.mrb[0].mxu0
  %3878 = vmatprep.mubr.bf16.mxu0 0
  %3879 = vmatmul.mubr.bf16.gmra.mrb[0].mxu0 %v3763
  %v3880 = vpop.f32.mrb[0].mxu0
  %v3881 = vadd.f32 %v3638, %v3880
  %v3882 = vpop.f32.mrb[0].mxu0
  %v3883 = vpop.f32.mrb[0].mxu0
  %v3884 = vadd.f32 %v3641, %v3883
  %v3885 = vpop.f32.mrb[0].mxu0
  %3886 = vmatprep.mubr.bf16.mxu0 0
  %3887 = vmatmul.mubr.bf16.gmra.mrb[0].mxu0 %v3766
  %v3888 = vpop.f32.mrb[0].mxu0
  %v3889 = vadd.f32 %v3646, %v3888
  %v3890 = vpop.f32.mrb[0].mxu0
  %v3891 = vpop.f32.mrb[0].mxu0
  %v3892 = vadd.f32 %v3649, %v3891
  %v3893 = vpop.f32.mrb[0].mxu0
  %3894 = vmatprep.mubr.bf16.mxu0 0
  %3895 = vmatmul.mubr.bf16.gmra.mrb[0].mxu0 %v3769
  %v3896 = vpop.f32.mrb[0].mxu0
  %v3897 = vadd.f32 %v3654, %v3896
  %v3898 = vpop.f32.mrb[0].mxu0
  %v3899 = vpop.f32.mrb[0].mxu0
  %v3900 = vadd.f32 %v3657, %v3899
  %v3901 = vpop.f32.mrb[0].mxu0
  %3902 = vmatprep.mubr.bf16.mxu0 0
  %3903 = vmatmul.mubr.bf16.gmra.mrb[0].mxu0 %v3772
  %v3904 = vpop.f32.mrb[0].mxu0
  %v3905 = vadd.f32 %v3662, %v3904
  %v3906 = vpop.f32.mrb[0].mxu0
  %v3907 = vpop.f32.mrb[0].mxu0
  %v3908 = vadd.f32 %v3665, %v3907
  %v3909 = vpop.f32.mrb[0].mxu0
  %3910 = vmatprep.mubr.bf16.mxu0 0
  %3911 = vmatmul.mubr.bf16.gmra.mrb[0].mxu0 %v3775
  %v3912 = vpop.f32.mrb[0].mxu0
  %v3913 = vadd.f32 %v3670, %v3912
  %v3914 = vpop.f32.mrb[0].mxu0
  %v3915 = vpop.f32.mrb[0].mxu0
  %v3916 = vadd.f32 %v3673, %v3915
  %v3917 = vpop.f32.mrb[0].mxu0
  %3918 = vmatprep.mubr.bf16.mxu0 0
  %3919 = vmatmul.mubr.bf16.gmra.mrb[0].mxu0 %v3778
  %v3920 = vpop.f32.mrb[0].mxu0
  %v3921 = vadd.f32 %v3678, %v3920
  %v3922 = vpop.f32.mrb[0].mxu0
  %v3923 = vpop.f32.mrb[0].mxu0
  %v3924 = vadd.f32 %v3681, %v3923
  %v3925 = vpop.f32.mrb[0].mxu0
  %3926 = vmatprep.mubr.bf16.mxu0 0
  %3927 = vmatmul.mubr.bf16.gmra.mrb[0].mxu0 %v3781
  %v3928 = vpop.f32.mrb[0].mxu0
  %v3929 = vadd.f32 %v3686, %v3928
  %v3930 = vpop.f32.mrb[0].mxu0
  %v3931 = vpop.f32.mrb[0].mxu0
  %v3932 = vadd.f32 %v3689, %v3931
  %v3933 = vpop.f32.mrb[0].mxu0
  %3934 = vmatprep.mubr.bf16.mxu0 0
  %3935 = vmatmul.mubr.bf16.gmra.mrb[0].mxu0 %v3784
  %v3936 = vpop.f32.mrb[0].mxu0
  %v3937 = vadd.f32 %v3694, %v3936
  %v3938 = vpop.f32.mrb[0].mxu0
  %v3939 = vpop.f32.mrb[0].mxu0
  %v3940 = vadd.f32 %v3697, %v3939
  %v3941 = vpop.f32.mrb[0].mxu0
  %3942 = vmatprep.mubr.bf16.mxu0 0
  %3943 = vmatmul.mubr.bf16.gmra.mrb[0].mxu0 %v3787
  %v3944 = vpop.f32.mrb[0].mxu0
  %v3945 = vadd.f32 %v3702, %v3944
  %v3946 = vpop.f32.mrb[0].mxu0
  %v3947 = vpop.f32.mrb[0].mxu0
  %v3948 = vadd.f32 %v3705, %v3947
  %v3949 = vpop.f32.mrb[0].mxu0
  %3950 = vmatprep.mubr.bf16.mxu0 0
  %3951 = vmatmul.mubr.bf16.gmra.mrb[0].mxu0 %v3790
  %v3952 = vpop.f32.mrb[0].mxu0
  %v3953 = vadd.f32 %v3710, %v3952
  %v3954 = vpop.f32.mrb[0].mxu0
  %v3955 = vpop.f32.mrb[0].mxu0
  %v3956 = vadd.f32 %v3713, %v3955
  %v3957 = vpop.f32.mrb[0].mxu0
  %3958 = vmatprep.mubr.bf16.mxu0 0
  %3959 = vmatmul.mubr.bf16.gmra.mrb[0].mxu0 %v3793
  %v3960 = vpop.f32.mrb[0].mxu0
  %v3961 = vadd.f32 %v3718, %v3960
  %v3962 = vpop.f32.mrb[0].mxu0
  %v3963 = vpop.f32.mrb[0].mxu0
  %v3964 = vadd.f32 %v3721, %v3963
  %v3965 = vpop.f32.mrb[0].mxu0
  %3966 = vmatprep.mubr.bf16.mxu0 0
  %3967 = vmatmul.mubr.bf16.gmra.mrb[0].mxu0 %v3796
  %v3968 = vpop.f32.mrb[0].mxu0
  %v3969 = vadd.f32 %v3726, %v3968
  %v3970 = vpop.f32.mrb[0].mxu0
  %v3971 = vpop.f32.mrb[0].mxu0
  %v3972 = vadd.f32 %v3729, %v3971
  %v3973 = vpop.f32.mrb[0].mxu0
  %3974 = vdwg.mxu0
  %v3975 = vld [vmem:[%s2 + $0x20] sm:$0xf]
  %v3976 = vld [vmem:[%s2 + $0x24] sm:$0xf]
  %v3977 = vld [vmem:[%s2 + $0x28] sm:$0xf]
  %v3978 = vld [vmem:[%s2 + $0x2c] sm:$0xf]
  %v3983 = vunpack.c.l.b16 %v3975
  %v3984 = vunpack.c.l.b16 %v3976
  %v3985 = vunpack.c.l.b16 %v3977
  %v3986 = vunpack.c.l.b16 %v3978
  %v3987 = vpack.c.b16 %v3984, %v3983
  %v3988 = vpack.c.b16 %v3986, %v3985
  %v3992 = vsel %vm1179, %v3355, 0
  %v3995 = vsel %vm1179, %v3356, 0
  %v3998 = vsel %vm1179, %v3357, 0
  %v4001 = vsel %vm1179, %v3358, 0
  %v4004 = vsel %vm1179, %v3359, 0
  %v4007 = vsel %vm1179, %v3360, 0
  %v4010 = vsel %vm1179, %v3361, 0
  %v4013 = vsel %vm1179, %v3362, 0
  %v4016 = vsel %vm1179, %v3363, 0
  %v4019 = vsel %vm1179, %v3364, 0
  %v4022 = vsel %vm1179, %v3365, 0
  %v4025 = vsel %vm1179, %v3366, 0
  %v4028 = vsel %vm1179, %v3367, 0
  %v4031 = vsel %vm1179, %v3368, 0
  %v4034 = vsel %vm1179, %v3369, 0
  %v4037 = vsel %vm1179, %v3370, 0
  %v4040 = vsel %vm1179, %v3371, 0
  %v4043 = vsel %vm1179, %v3372, 0
  %4045 = vmatprep.subr.bf16.mxu0 0
  %4046 = vmatpush1.bf16.msra.mxu0 %v3987
  %4047 = vmatprep.subr.bf16.mxu0 0
  %4048 = vmatpush1.bf16.msra.mxu0 %v3988
  %4049 = vmatprep.subr.bf16.mxu0 0
  %4050 = vmatpush1.bf16.msra.mxu0 0
  %4051 = vmatprep.subr.bf16.mxu0 0
  %4052 = vmatpush1.bf16.msra.mxu0 0
  %4053 = vmatprep.subr.bf16.mxu0 0
  %4054 = vmatpush1.bf16.msra.mxu0 0
  %4055 = vmatprep.subr.bf16.mxu0 0
  %4056 = vmatpush1.bf16.msra.mxu0 0
  %4057 = vmatprep.subr.bf16.mxu0 0
  %4058 = vmatpush1.bf16.msra.mxu0 0
  %4059 = vmatprep.subr.bf16.mxu0 0
  %4060 = vmatpush1.bf16.msra.mxu0 0
  %4061 = vmatprep.subr.bf16.mxu0 0
  %4062 = vmatpush1.bf16.msra.mxu0 0
  %4063 = vmatprep.subr.bf16.mxu0 0
  %4064 = vmatpush1.bf16.msra.mxu0 0
  %4065 = vmatprep.subr.bf16.mxu0 0
  %4066 = vmatpush1.bf16.msra.mxu0 0
  %4067 = vmatprep.subr.bf16.mxu0 0
  %4068 = vmatpush1.bf16.msra.mxu0 0
  %4069 = vmatprep.subr.bf16.mxu0 0
  %4070 = vmatpush1.bf16.msra.mxu0 0
  %4071 = vmatprep.subr.bf16.mxu0 0
  %4072 = vmatpush1.bf16.msra.mxu0 0
  %4073 = vmatprep.subr.bf16.mxu0 0
  %4074 = vmatpush1.bf16.msra.mxu0 0
  %4075 = vmatprep.subr.bf16.mxu0 0
  %4076 = vmatpush1.bf16.msra.mxu0 0
  %4077 = vmatprep.mubr.bf16.mxu0 0
  %4078 = vmatmul.mubr.bf16.gmra.mrb[0].mxu0 %v3992
  %v4079 = vpop.f32.mrb[0].mxu0
  %v4080 = vadd.f32 0.0, %v4079
  %v4081 = vpop.f32.mrb[0].mxu0
  %v4082 = vpop.f32.mrb[0].mxu0
  %v4083 = vadd.f32 0.0, %v4082
  %v4084 = vpop.f32.mrb[0].mxu0
  %4085 = vmatprep.mubr.bf16.mxu0 0
  %4086 = vmatmul.mubr.bf16.gmra.mrb[0].mxu0 %v3995
  %v4087 = vpop.f32.mrb[0].mxu0
  %v4088 = vadd.f32 0.0, %v4087
  %v4089 = vpop.f32.mrb[0].mxu0
  %v4090 = vpop.f32.mrb[0].mxu0
  %v4091 = vadd.f32 0.0, %v4090
  %v4092 = vpop.f32.mrb[0].mxu0
  %4093 = vmatprep.mubr.bf16.mxu0 0
  %4094 = vmatmul.mubr.bf16.gmra.mrb[0].mxu0 %v3998
  %v4095 = vpop.f32.mrb[0].mxu0
  %v4096 = vadd.f32 0.0, %v4095
  %v4097 = vpop.f32.mrb[0].mxu0
  %v4098 = vpop.f32.mrb[0].mxu0
  %v4099 = vadd.f32 0.0, %v4098
  %v4100 = vpop.f32.mrb[0].mxu0
  %4101 = vmatprep.mubr.bf16.mxu0 0
  %4102 = vmatmul.mubr.bf16.gmra.mrb[0].mxu0 %v4001
  %v4103 = vpop.f32.mrb[0].mxu0
  %v4104 = vadd.f32 0.0, %v4103
  %v4105 = vpop.f32.mrb[0].mxu0
  %v4106 = vpop.f32.mrb[0].mxu0
  %v4107 = vadd.f32 0.0, %v4106
  %v4108 = vpop.f32.mrb[0].mxu0
  %4109 = vmatprep.mubr.bf16.mxu0 0
  %4110 = vmatmul.mubr.bf16.gmra.mrb[0].mxu0 %v4004
  %v4111 = vpop.f32.mrb[0].mxu0
  %v4112 = vadd.f32 0.0, %v4111
  %v4113 = vpop.f32.mrb[0].mxu0
  %v4114 = vpop.f32.mrb[0].mxu0
  %v4115 = vadd.f32 0.0, %v4114
  %v4116 = vpop.f32.mrb[0].mxu0
  %4117 = vmatprep.mubr.bf16.mxu0 0
  %4118 = vmatmul.mubr.bf16.gmra.mrb[0].mxu0 %v4007
  %v4119 = vpop.f32.mrb[0].mxu0
  %v4120 = vadd.f32 0.0, %v4119
  %v4121 = vpop.f32.mrb[0].mxu0
  %v4122 = vpop.f32.mrb[0].mxu0
  %v4123 = vadd.f32 0.0, %v4122
  %v4124 = vpop.f32.mrb[0].mxu0
  %4125 = vmatprep.mubr.bf16.mxu0 0
  %4126 = vmatmul.mubr.bf16.gmra.mrb[0].mxu0 %v4010
  %v4127 = vpop.f32.mrb[0].mxu0
  %v4128 = vadd.f32 0.0, %v4127
  %v4129 = vpop.f32.mrb[0].mxu0
  %v4130 = vpop.f32.mrb[0].mxu0
  %v4131 = vadd.f32 0.0, %v4130
  %v4132 = vpop.f32.mrb[0].mxu0
  %4133 = vmatprep.mubr.bf16.mxu0 0
  %4134 = vmatmul.mubr.bf16.gmra.mrb[0].mxu0 %v4013
  %v4135 = vpop.f32.mrb[0].mxu0
  %v4136 = vadd.f32 0.0, %v4135
  %v4137 = vpop.f32.mrb[0].mxu0
  %v4138 = vpop.f32.mrb[0].mxu0
  %v4139 = vadd.f32 0.0, %v4138
  %v4140 = vpop.f32.mrb[0].mxu0
  %4141 = vmatprep.mubr.bf16.mxu0 0
  %4142 = vmatmul.mubr.bf16.gmra.mrb[0].mxu0 %v4016
  %v4143 = vpop.f32.mrb[0].mxu0
  %v4144 = vadd.f32 0.0, %v4143
  %v4145 = vpop.f32.mrb[0].mxu0
  %v4146 = vpop.f32.mrb[0].mxu0
  %v4147 = vadd.f32 0.0, %v4146
  %v4148 = vpop.f32.mrb[0].mxu0
  %4149 = vmatprep.mubr.bf16.mxu0 0
  %4150 = vmatmul.mubr.bf16.gmra.mrb[0].mxu0 %v4019
  %v4151 = vpop.f32.mrb[0].mxu0
  %v4152 = vadd.f32 0.0, %v4151
  %v4153 = vpop.f32.mrb[0].mxu0
  %v4154 = vpop.f32.mrb[0].mxu0
  %v4155 = vadd.f32 0.0, %v4154
  %v4156 = vpop.f32.mrb[0].mxu0
  %4157 = vmatprep.mubr.bf16.mxu0 0
  %4158 = vmatmul.mubr.bf16.gmra.mrb[0].mxu0 %v4022
  %v4159 = vpop.f32.mrb[0].mxu0
  %v4160 = vadd.f32 0.0, %v4159
  %v4161 = vpop.f32.mrb[0].mxu0
  %v4162 = vpop.f32.mrb[0].mxu0
  %v4163 = vadd.f32 0.0, %v4162
  %v4164 = vpop.f32.mrb[0].mxu0
  %4165 = vmatprep.mubr.bf16.mxu0 0
  %4166 = vmatmul.mubr.bf16.gmra.mrb[0].mxu0 %v4025
  %v4167 = vpop.f32.mrb[0].mxu0
  %v4168 = vadd.f32 0.0, %v4167
  %v4169 = vpop.f32.mrb[0].mxu0
  %v4170 = vpop.f32.mrb[0].mxu0
  %v4171 = vadd.f32 0.0, %v4170
  %v4172 = vpop.f32.mrb[0].mxu0
  %4173 = vmatprep.mubr.bf16.mxu0 0
  %4174 = vmatmul.mubr.bf16.gmra.mrb[0].mxu0 %v4028
  %v4175 = vpop.f32.mrb[0].mxu0
  %v4176 = vadd.f32 0.0, %v4175
  %v4177 = vpop.f32.mrb[0].mxu0
  %v4178 = vpop.f32.mrb[0].mxu0
  %v4179 = vadd.f32 0.0, %v4178
  %v4180 = vpop.f32.mrb[0].mxu0
  %4181 = vmatprep.mubr.bf16.mxu0 0
  %4182 = vmatmul.mubr.bf16.gmra.mrb[0].mxu0 %v4031
  %v4183 = vpop.f32.mrb[0].mxu0
  %v4184 = vadd.f32 0.0, %v4183
  %v4185 = vpop.f32.mrb[0].mxu0
  %v4186 = vpop.f32.mrb[0].mxu0
  %v4187 = vadd.f32 0.0, %v4186
  %v4188 = vpop.f32.mrb[0].mxu0
  %4189 = vmatprep.mubr.bf16.mxu0 0
  %4190 = vmatmul.mubr.bf16.gmra.mrb[0].mxu0 %v4034
  %v4191 = vpop.f32.mrb[0].mxu0
  %v4192 = vadd.f32 0.0, %v4191
  %v4193 = vpop.f32.mrb[0].mxu0
  %v4194 = vpop.f32.mrb[0].mxu0
  %v4195 = vadd.f32 0.0, %v4194
  %v4196 = vpop.f32.mrb[0].mxu0
  %4197 = vmatprep.mubr.bf16.mxu0 0
  %4198 = vmatmul.mubr.bf16.gmra.mrb[0].mxu0 %v4037
  %v4199 = vpop.f32.mrb[0].mxu0
  %v4200 = vadd.f32 0.0, %v4199
  %v4201 = vpop.f32.mrb[0].mxu0
  %v4202 = vpop.f32.mrb[0].mxu0
  %v4203 = vadd.f32 0.0, %v4202
  %v4204 = vpop.f32.mrb[0].mxu0
  %4205 = vmatprep.mubr.bf16.mxu0 0
  %4206 = vmatmul.mubr.bf16.gmra.mrb[0].mxu0 %v4040
  %v4207 = vpop.f32.mrb[0].mxu0
  %v4208 = vadd.f32 0.0, %v4207
  %v4209 = vpop.f32.mrb[0].mxu0
  %v4210 = vpop.f32.mrb[0].mxu0
  %v4211 = vadd.f32 0.0, %v4210
  %v4212 = vpop.f32.mrb[0].mxu0
  %4213 = vmatprep.mubr.bf16.mxu0 0
  %4214 = vmatmul.mubr.bf16.gmra.mrb[0].mxu0 %v4043
  %v4215 = vpop.f32.mrb[0].mxu0
  %v4216 = vadd.f32 0.0, %v4215
  %v4217 = vpop.f32.mrb[0].mxu0
  %v4218 = vpop.f32.mrb[0].mxu0
  %v4219 = vadd.f32 0.0, %v4218
  %v4220 = vpop.f32.mrb[0].mxu0
  %4221 = vdwg.mxu0
  %v4222 = vadd.f32 %v3833, %v4080
  %v4223 = vadd.f32 %v3836, %v4083
  %v4224 = vadd.f32 %v3841, %v4088
  %v4225 = vadd.f32 %v3844, %v4091
  %v4226 = vadd.f32 %v3849, %v4096
  %v4227 = vadd.f32 %v3852, %v4099
  %v4228 = vadd.f32 %v3857, %v4104
  %v4229 = vadd.f32 %v3860, %v4107
  %v4230 = vadd.f32 %v3865, %v4112
  %v4231 = vadd.f32 %v3868, %v4115
  %v4232 = vadd.f32 %v3873, %v4120
  %v4233 = vadd.f32 %v3876, %v4123
  %v4234 = vadd.f32 %v3881, %v4128
  %v4235 = vadd.f32 %v3884, %v4131
  %v4236 = vadd.f32 %v3889, %v4136
  %v4237 = vadd.f32 %v3892, %v4139
  %v4238 = vadd.f32 %v3897, %v4144
  %v4239 = vadd.f32 %v3900, %v4147
  %v4240 = vadd.f32 %v3905, %v4152
  %v4241 = vadd.f32 %v3908, %v4155
  %v4242 = vadd.f32 %v3913, %v4160
  %v4243 = vadd.f32 %v3916, %v4163
  %v4244 = vadd.f32 %v3921, %v4168
  %v4245 = vadd.f32 %v3924, %v4171
  %v4246 = vadd.f32 %v3929, %v4176
  %v4247 = vadd.f32 %v3932, %v4179
  %v4248 = vadd.f32 %v3937, %v4184
  %v4249 = vadd.f32 %v3940, %v4187
  %v4250 = vadd.f32 %v3945, %v4192
  %v4251 = vadd.f32 %v3948, %v4195
  %v4252 = vadd.f32 %v3953, %v4200
  %v4253 = vadd.f32 %v3956, %v4203
  %v4254 = vadd.f32 %v3961, %v4208
  %v4255 = vadd.f32 %v3964, %v4211
  %v4256 = vadd.f32 %v3969, %v4216
  %v4257 = vadd.f32 %v3972, %v4219
  %v4258 = vld [vmem:[%s2 + $0x30] sm:$0xf]
  %v4259 = vld [vmem:[%s2 + $0x34] sm:$0xf]
  %v4260 = vld [vmem:[%s2 + $0x38] sm:$0xf]
  %v4261 = vld [vmem:[%s2 + $0x3c] sm:$0xf]
  %v4266 = vunpack.c.l.b16 %v4258
  %v4267 = vunpack.c.l.b16 %v4259
  %v4268 = vunpack.c.l.b16 %v4260
  %v4269 = vunpack.c.l.b16 %v4261
  %v4270 = vpack.c.b16 %v4267, %v4266
  %v4271 = vpack.c.b16 %v4269, %v4268
  %v4275 = vsel %vm1179, %v3373, 0
  %v4278 = vsel %vm1179, %v3374, 0
  %v4281 = vsel %vm1179, %v3375, 0
  %v4284 = vsel %vm1179, %v3376, 0
  %v4287 = vsel %vm1179, %v3377, 0
  %v4290 = vsel %vm1179, %v3378, 0
  %v4293 = vsel %vm1179, %v3379, 0
  %v4296 = vsel %vm1179, %v3380, 0
  %v4299 = vsel %vm1179, %v3381, 0
  %v4302 = vsel %vm1179, %v3382, 0
  %v4305 = vsel %vm1179, %v3383, 0
  %v4308 = vsel %vm1179, %v3384, 0
  %v4311 = vsel %vm1179, %v3385, 0
  %v4314 = vsel %vm1179, %v3386, 0
  %v4317 = vsel %vm1179, %v3387, 0
  %v4320 = vsel %vm1179, %v3388, 0
  %v4323 = vsel %vm1179, %v3389, 0
  %v4326 = vsel %vm1179, %v3390, 0
  %4328 = vmatprep.subr.bf16.mxu0 0
  %4329 = vmatpush1.bf16.msra.mxu0 %v4270
  %4330 = vmatprep.subr.bf16.mxu0 0
  %4331 = vmatpush1.bf16.msra.mxu0 %v4271
  %4332 = vmatprep.subr.bf16.mxu0 0
  %4333 = vmatpush1.bf16.msra.mxu0 0
  %4334 = vmatprep.subr.bf16.mxu0 0
  %4335 = vmatpush1.bf16.msra.mxu0 0
  %4336 = vmatprep.subr.bf16.mxu0 0
  %4337 = vmatpush1.bf16.msra.mxu0 0
  %4338 = vmatprep.subr.bf16.mxu0 0
  %4339 = vmatpush1.bf16.msra.mxu0 0
  %4340 = vmatprep.subr.bf16.mxu0 0
  %4341 = vmatpush1.bf16.msra.mxu0 0
  %4342 = vmatprep.subr.bf16.mxu0 0
  %4343 = vmatpush1.bf16.msra.mxu0 0
  %4344 = vmatprep.subr.bf16.mxu0 0
  %4345 = vmatpush1.bf16.msra.mxu0 0
  %4346 = vmatprep.subr.bf16.mxu0 0
  %4347 = vmatpush1.bf16.msra.mxu0 0
  %4348 = vmatprep.subr.bf16.mxu0 0
  %4349 = vmatpush1.bf16.msra.mxu0 0
  %4350 = vmatprep.subr.bf16.mxu0 0
  %4351 = vmatpush1.bf16.msra.mxu0 0
  %4352 = vmatprep.subr.bf16.mxu0 0
  %4353 = vmatpush1.bf16.msra.mxu0 0
  %4354 = vmatprep.subr.bf16.mxu0 0
  %4355 = vmatpush1.bf16.msra.mxu0 0
  %4356 = vmatprep.subr.bf16.mxu0 0
  %4357 = vmatpush1.bf16.msra.mxu0 0
  %4358 = vmatprep.subr.bf16.mxu0 0
  %4359 = vmatpush1.bf16.msra.mxu0 0
  %4360 = vmatprep.mubr.bf16.mxu0 0
  %4361 = vmatmul.mubr.bf16.gmra.mrb[0].mxu0 %v4275
  %v4362 = vpop.f32.mrb[0].mxu0
  %v4363 = vadd.f32 0.0, %v4362
  %v4364 = vpop.f32.mrb[0].mxu0
  %v4365 = vpop.f32.mrb[0].mxu0
  %v4366 = vadd.f32 0.0, %v4365
  %v4367 = vpop.f32.mrb[0].mxu0
  %4368 = vmatprep.mubr.bf16.mxu0 0
  %4369 = vmatmul.mubr.bf16.gmra.mrb[0].mxu0 %v4278
  %v4370 = vpop.f32.mrb[0].mxu0
  %v4371 = vadd.f32 0.0, %v4370
  %v4372 = vpop.f32.mrb[0].mxu0
  %v4373 = vpop.f32.mrb[0].mxu0
  %v4374 = vadd.f32 0.0, %v4373
  %v4375 = vpop.f32.mrb[0].mxu0
  %4376 = vmatprep.mubr.bf16.mxu0 0
  %4377 = vmatmul.mubr.bf16.gmra.mrb[0].mxu0 %v4281
  %v4378 = vpop.f32.mrb[0].mxu0
  %v4379 = vadd.f32 0.0, %v4378
  %v4380 = vpop.f32.mrb[0].mxu0
  %v4381 = vpop.f32.mrb[0].mxu0
  %v4382 = vadd.f32 0.0, %v4381
  %v4383 = vpop.f32.mrb[0].mxu0
  %4384 = vmatprep.mubr.bf16.mxu0 0
  %4385 = vmatmul.mubr.bf16.gmra.mrb[0].mxu0 %v4284
  %v4386 = vpop.f32.mrb[0].mxu0
  %v4387 = vadd.f32 0.0, %v4386
  %v4388 = vpop.f32.mrb[0].mxu0
  %v4389 = vpop.f32.mrb[0].mxu0
  %v4390 = vadd.f32 0.0, %v4389
  %v4391 = vpop.f32.mrb[0].mxu0
  %4392 = vmatprep.mubr.bf16.mxu0 0
  %4393 = vmatmul.mubr.bf16.gmra.mrb[0].mxu0 %v4287
  %v4394 = vpop.f32.mrb[0].mxu0
  %v4395 = vadd.f32 0.0, %v4394
  %v4396 = vpop.f32.mrb[0].mxu0
  %v4397 = vpop.f32.mrb[0].mxu0
  %v4398 = vadd.f32 0.0, %v4397
  %v4399 = vpop.f32.mrb[0].mxu0
  %4400 = vmatprep.mubr.bf16.mxu0 0
  %4401 = vmatmul.mubr.bf16.gmra.mrb[0].mxu0 %v4290
  %v4402 = vpop.f32.mrb[0].mxu0
  %v4403 = vadd.f32 0.0, %v4402
  %v4404 = vpop.f32.mrb[0].mxu0
  %v4405 = vpop.f32.mrb[0].mxu0
  %v4406 = vadd.f32 0.0, %v4405
  %v4407 = vpop.f32.mrb[0].mxu0
  %4408 = vmatprep.mubr.bf16.mxu0 0
  %4409 = vmatmul.mubr.bf16.gmra.mrb[0].mxu0 %v4293
  %v4410 = vpop.f32.mrb[0].mxu0
  %v4411 = vadd.f32 0.0, %v4410
  %v4412 = vpop.f32.mrb[0].mxu0
  %v4413 = vpop.f32.mrb[0].mxu0
  %v4414 = vadd.f32 0.0, %v4413
  %v4415 = vpop.f32.mrb[0].mxu0
  %4416 = vmatprep.mubr.bf16.mxu0 0
  %4417 = vmatmul.mubr.bf16.gmra.mrb[0].mxu0 %v4296
  %v4418 = vpop.f32.mrb[0].mxu0
  %v4419 = vadd.f32 0.0, %v4418
  %v4420 = vpop.f32.mrb[0].mxu0
  %v4421 = vpop.f32.mrb[0].mxu0
  %v4422 = vadd.f32 0.0, %v4421
  %v4423 = vpop.f32.mrb[0].mxu0
  %4424 = vmatprep.mubr.bf16.mxu0 0
  %4425 = vmatmul.mubr.bf16.gmra.mrb[0].mxu0 %v4299
  %v4426 = vpop.f32.mrb[0].mxu0
  %v4427 = vadd.f32 0.0, %v4426
  %v4428 = vpop.f32.mrb[0].mxu0
  %v4429 = vpop.f32.mrb[0].mxu0
  %v4430 = vadd.f32 0.0, %v4429
  %v4431 = vpop.f32.mrb[0].mxu0
  %4432 = vmatprep.mubr.bf16.mxu0 0
  %4433 = vmatmul.mubr.bf16.gmra.mrb[0].mxu0 %v4302
  %v4434 = vpop.f32.mrb[0].mxu0
  %v4435 = vadd.f32 0.0, %v4434
  %v4436 = vpop.f32.mrb[0].mxu0
  %v4437 = vpop.f32.mrb[0].mxu0
  %v4438 = vadd.f32 0.0, %v4437
  %v4439 = vpop.f32.mrb[0].mxu0
  %4440 = vmatprep.mubr.bf16.mxu0 0
  %4441 = vmatmul.mubr.bf16.gmra.mrb[0].mxu0 %v4305
  %v4442 = vpop.f32.mrb[0].mxu0
  %v4443 = vadd.f32 0.0, %v4442
  %v4444 = vpop.f32.mrb[0].mxu0
  %v4445 = vpop.f32.mrb[0].mxu0
  %v4446 = vadd.f32 0.0, %v4445
  %v4447 = vpop.f32.mrb[0].mxu0
  %4448 = vmatprep.mubr.bf16.mxu0 0
  %4449 = vmatmul.mubr.bf16.gmra.mrb[0].mxu0 %v4308
  %v4450 = vpop.f32.mrb[0].mxu0
  %v4451 = vadd.f32 0.0, %v4450
  %v4452 = vpop.f32.mrb[0].mxu0
  %v4453 = vpop.f32.mrb[0].mxu0
  %v4454 = vadd.f32 0.0, %v4453
  %v4455 = vpop.f32.mrb[0].mxu0
  %4456 = vmatprep.mubr.bf16.mxu0 0
  %4457 = vmatmul.mubr.bf16.gmra.mrb[0].mxu0 %v4311
  %v4458 = vpop.f32.mrb[0].mxu0
  %v4459 = vadd.f32 0.0, %v4458
  %v4460 = vpop.f32.mrb[0].mxu0
  %v4461 = vpop.f32.mrb[0].mxu0
  %v4462 = vadd.f32 0.0, %v4461
  %v4463 = vpop.f32.mrb[0].mxu0
  %4464 = vmatprep.mubr.bf16.mxu0 0
  %4465 = vmatmul.mubr.bf16.gmra.mrb[0].mxu0 %v4314
  %v4466 = vpop.f32.mrb[0].mxu0
  %v4467 = vadd.f32 0.0, %v4466
  %v4468 = vpop.f32.mrb[0].mxu0
  %v4469 = vpop.f32.mrb[0].mxu0
  %v4470 = vadd.f32 0.0, %v4469
  %v4471 = vpop.f32.mrb[0].mxu0
  %4472 = vmatprep.mubr.bf16.mxu0 0
  %4473 = vmatmul.mubr.bf16.gmra.mrb[0].mxu0 %v4317
  %v4474 = vpop.f32.mrb[0].mxu0
  %v4475 = vadd.f32 0.0, %v4474
  %v4476 = vpop.f32.mrb[0].mxu0
  %v4477 = vpop.f32.mrb[0].mxu0
  %v4478 = vadd.f32 0.0, %v4477
  %v4479 = vpop.f32.mrb[0].mxu0
  %4480 = vmatprep.mubr.bf16.mxu0 0
  %4481 = vmatmul.mubr.bf16.gmra.mrb[0].mxu0 %v4320
  %v4482 = vpop.f32.mrb[0].mxu0
  %v4483 = vadd.f32 0.0, %v4482
  %v4484 = vpop.f32.mrb[0].mxu0
  %v4485 = vpop.f32.mrb[0].mxu0
  %v4486 = vadd.f32 0.0, %v4485
  %v4487 = vpop.f32.mrb[0].mxu0
  %4488 = vmatprep.mubr.bf16.mxu0 0
  %4489 = vmatmul.mubr.bf16.gmra.mrb[0].mxu0 %v4323
  %v4490 = vpop.f32.mrb[0].mxu0
  %v4491 = vadd.f32 0.0, %v4490
  %v4492 = vpop.f32.mrb[0].mxu0
  %v4493 = vpop.f32.mrb[0].mxu0
  %v4494 = vadd.f32 0.0, %v4493
  %v4495 = vpop.f32.mrb[0].mxu0
  %4496 = vmatprep.mubr.bf16.mxu0 0
  %4497 = vmatmul.mubr.bf16.gmra.mrb[0].mxu0 %v4326
  %v4498 = vpop.f32.mrb[0].mxu0
  %v4499 = vadd.f32 0.0, %v4498
  %v4500 = vpop.f32.mrb[0].mxu0
  %v4501 = vpop.f32.mrb[0].mxu0
  %v4502 = vadd.f32 0.0, %v4501
  %v4503 = vpop.f32.mrb[0].mxu0
  %4504 = vdwg.mxu0
  %v4505 = vadd.f32 %v4222, %v4363
  %v4506 = vadd.f32 %v4223, %v4366
  %v4507 = vadd.f32 %v4224, %v4371
  %v4508 = vadd.f32 %v4225, %v4374
  %v4509 = vadd.f32 %v4226, %v4379
  %v4510 = vadd.f32 %v4227, %v4382
  %v4511 = vadd.f32 %v4228, %v4387
  %v4512 = vadd.f32 %v4229, %v4390
  %v4513 = vadd.f32 %v4230, %v4395
  %v4514 = vadd.f32 %v4231, %v4398
  %v4515 = vadd.f32 %v4232, %v4403
  %v4516 = vadd.f32 %v4233, %v4406
  %v4517 = vadd.f32 %v4234, %v4411
  %v4518 = vadd.f32 %v4235, %v4414
  %v4519 = vadd.f32 %v4236, %v4419
  %v4520 = vadd.f32 %v4237, %v4422
  %v4521 = vadd.f32 %v4238, %v4427
  %v4522 = vadd.f32 %v4239, %v4430
  %v4523 = vadd.f32 %v4240, %v4435
  %v4524 = vadd.f32 %v4241, %v4438
  %v4525 = vadd.f32 %v4242, %v4443
  %v4526 = vadd.f32 %v4243, %v4446
  %v4527 = vadd.f32 %v4244, %v4451
  %v4528 = vadd.f32 %v4245, %v4454
  %v4529 = vadd.f32 %v4246, %v4459
  %v4530 = vadd.f32 %v4247, %v4462
  %v4531 = vadd.f32 %v4248, %v4467
  %v4532 = vadd.f32 %v4249, %v4470
  %v4533 = vadd.f32 %v4250, %v4475
  %v4534 = vadd.f32 %v4251, %v4478
  %v4535 = vadd.f32 %v4252, %v4483
  %v4536 = vadd.f32 %v4253, %v4486
  %v4537 = vadd.f32 %v4254, %v4491
  %v4538 = vadd.f32 %v4255, %v4494
  %v4539 = vadd.f32 %v4256, %v4499
  %v4540 = vadd.f32 %v4257, %v4502
  %v4541 = vld [vmem:[%s2 + $0x40] sm:$0xf]
  %v4542 = vld [vmem:[%s2 + $0x44] sm:$0xf]
  %v4543 = vld [vmem:[%s2 + $0x48] sm:$0xf]
  %v4544 = vld [vmem:[%s2 + $0x4c] sm:$0xf]
  %v4549 = vunpack.c.l.b16 %v4541
  %v4550 = vunpack.c.l.b16 %v4542
  %v4551 = vunpack.c.l.b16 %v4543
  %v4552 = vunpack.c.l.b16 %v4544
  %v4553 = vpack.c.b16 %v4550, %v4549
  %v4554 = vpack.c.b16 %v4552, %v4551
  %v4558 = vsel %vm1179, %v3391, 0
  %v4561 = vsel %vm1179, %v3392, 0
  %v4564 = vsel %vm1179, %v3393, 0
  %v4567 = vsel %vm1179, %v3394, 0
  %v4570 = vsel %vm1179, %v3395, 0
  %v4573 = vsel %vm1179, %v3396, 0
  %v4576 = vsel %vm1179, %v3397, 0
  %v4579 = vsel %vm1179, %v3398, 0
  %v4582 = vsel %vm1179, %v3399, 0
  %v4585 = vsel %vm1179, %v3400, 0
  %v4588 = vsel %vm1179, %v3401, 0
  %v4591 = vsel %vm1179, %v3402, 0
  %v4594 = vsel %vm1179, %v3403, 0
  %v4597 = vsel %vm1179, %v3404, 0
  %v4600 = vsel %vm1179, %v3405, 0
  %v4603 = vsel %vm1179, %v3406, 0
  %v4606 = vsel %vm1179, %v3407, 0
  %v4609 = vsel %vm1179, %v3408, 0
  %4611 = vmatprep.subr.bf16.mxu0 0
  %4612 = vmatpush1.bf16.msra.mxu0 %v4553
  %4613 = vmatprep.subr.bf16.mxu0 0
  %4614 = vmatpush1.bf16.msra.mxu0 %v4554
  %4615 = vmatprep.subr.bf16.mxu0 0
  %4616 = vmatpush1.bf16.msra.mxu0 0
  %4617 = vmatprep.subr.bf16.mxu0 0
  %4618 = vmatpush1.bf16.msra.mxu0 0
  %4619 = vmatprep.subr.bf16.mxu0 0
  %4620 = vmatpush1.bf16.msra.mxu0 0
  %4621 = vmatprep.subr.bf16.mxu0 0
  %4622 = vmatpush1.bf16.msra.mxu0 0
  %4623 = vmatprep.subr.bf16.mxu0 0
  %4624 = vmatpush1.bf16.msra.mxu0 0
  %4625 = vmatprep.subr.bf16.mxu0 0
  %4626 = vmatpush1.bf16.msra.mxu0 0
  %4627 = vmatprep.subr.bf16.mxu0 0
  %4628 = vmatpush1.bf16.msra.mxu0 0
  %4629 = vmatprep.subr.bf16.mxu0 0
  %4630 = vmatpush1.bf16.msra.mxu0 0
  %4631 = vmatprep.subr.bf16.mxu0 0
  %4632 = vmatpush1.bf16.msra.mxu0 0
  %4633 = vmatprep.subr.bf16.mxu0 0
  %4634 = vmatpush1.bf16.msra.mxu0 0
  %4635 = vmatprep.subr.bf16.mxu0 0
  %4636 = vmatpush1.bf16.msra.mxu0 0
  %4637 = vmatprep.subr.bf16.mxu0 0
  %4638 = vmatpush1.bf16.msra.mxu0 0
  %4639 = vmatprep.subr.bf16.mxu0 0
  %4640 = vmatpush1.bf16.msra.mxu0 0
  %4641 = vmatprep.subr.bf16.mxu0 0
  %4642 = vmatpush1.bf16.msra.mxu0 0
  %4643 = vmatprep.mubr.bf16.mxu0 0
  %4644 = vmatmul.mubr.bf16.gmra.mrb[0].mxu0 %v4558
  %v4645 = vpop.f32.mrb[0].mxu0
  %v4646 = vadd.f32 0.0, %v4645
  %v4647 = vpop.f32.mrb[0].mxu0
  %v4648 = vpop.f32.mrb[0].mxu0
  %v4649 = vadd.f32 0.0, %v4648
  %v4650 = vpop.f32.mrb[0].mxu0
  %4651 = vmatprep.mubr.bf16.mxu0 0
  %4652 = vmatmul.mubr.bf16.gmra.mrb[0].mxu0 %v4561
  %v4653 = vpop.f32.mrb[0].mxu0
  %v4654 = vadd.f32 0.0, %v4653
  %v4655 = vpop.f32.mrb[0].mxu0
  %v4656 = vpop.f32.mrb[0].mxu0
  %v4657 = vadd.f32 0.0, %v4656
  %v4658 = vpop.f32.mrb[0].mxu0
  %4659 = vmatprep.mubr.bf16.mxu0 0
  %4660 = vmatmul.mubr.bf16.gmra.mrb[0].mxu0 %v4564
  %v4661 = vpop.f32.mrb[0].mxu0
  %v4662 = vadd.f32 0.0, %v4661
  %v4663 = vpop.f32.mrb[0].mxu0
  %v4664 = vpop.f32.mrb[0].mxu0
  %v4665 = vadd.f32 0.0, %v4664
  %v4666 = vpop.f32.mrb[0].mxu0
  %4667 = vmatprep.mubr.bf16.mxu0 0
  %4668 = vmatmul.mubr.bf16.gmra.mrb[0].mxu0 %v4567
  %v4669 = vpop.f32.mrb[0].mxu0
  %v4670 = vadd.f32 0.0, %v4669
  %v4671 = vpop.f32.mrb[0].mxu0
  %v4672 = vpop.f32.mrb[0].mxu0
  %v4673 = vadd.f32 0.0, %v4672
  %v4674 = vpop.f32.mrb[0].mxu0
  %4675 = vmatprep.mubr.bf16.mxu0 0
  %4676 = vmatmul.mubr.bf16.gmra.mrb[0].mxu0 %v4570
  %v4677 = vpop.f32.mrb[0].mxu0
  %v4678 = vadd.f32 0.0, %v4677
  %v4679 = vpop.f32.mrb[0].mxu0
  %v4680 = vpop.f32.mrb[0].mxu0
  %v4681 = vadd.f32 0.0, %v4680
  %v4682 = vpop.f32.mrb[0].mxu0
  %4683 = vmatprep.mubr.bf16.mxu0 0
  %4684 = vmatmul.mubr.bf16.gmra.mrb[0].mxu0 %v4573
  %v4685 = vpop.f32.mrb[0].mxu0
  %v4686 = vadd.f32 0.0, %v4685
  %v4687 = vpop.f32.mrb[0].mxu0
  %v4688 = vpop.f32.mrb[0].mxu0
  %v4689 = vadd.f32 0.0, %v4688
  %v4690 = vpop.f32.mrb[0].mxu0
  %4691 = vmatprep.mubr.bf16.mxu0 0
  %4692 = vmatmul.mubr.bf16.gmra.mrb[0].mxu0 %v4576
  %v4693 = vpop.f32.mrb[0].mxu0
  %v4694 = vadd.f32 0.0, %v4693
  %v4695 = vpop.f32.mrb[0].mxu0
  %v4696 = vpop.f32.mrb[0].mxu0
  %v4697 = vadd.f32 0.0, %v4696
  %v4698 = vpop.f32.mrb[0].mxu0
  %4699 = vmatprep.mubr.bf16.mxu0 0
  %4700 = vmatmul.mubr.bf16.gmra.mrb[0].mxu0 %v4579
  %v4701 = vpop.f32.mrb[0].mxu0
  %v4702 = vadd.f32 0.0, %v4701
  %v4703 = vpop.f32.mrb[0].mxu0
  %v4704 = vpop.f32.mrb[0].mxu0
  %v4705 = vadd.f32 0.0, %v4704
  %v4706 = vpop.f32.mrb[0].mxu0
  %4707 = vmatprep.mubr.bf16.mxu0 0
  %4708 = vmatmul.mubr.bf16.gmra.mrb[0].mxu0 %v4582
  %v4709 = vpop.f32.mrb[0].mxu0
  %v4710 = vadd.f32 0.0, %v4709
  %v4711 = vpop.f32.mrb[0].mxu0
  %v4712 = vpop.f32.mrb[0].mxu0
  %v4713 = vadd.f32 0.0, %v4712
  %v4714 = vpop.f32.mrb[0].mxu0
  %4715 = vmatprep.mubr.bf16.mxu0 0
  %4716 = vmatmul.mubr.bf16.gmra.mrb[0].mxu0 %v4585
  %v4717 = vpop.f32.mrb[0].mxu0
  %v4718 = vadd.f32 0.0, %v4717
  %v4719 = vpop.f32.mrb[0].mxu0
  %v4720 = vpop.f32.mrb[0].mxu0
  %v4721 = vadd.f32 0.0, %v4720
  %v4722 = vpop.f32.mrb[0].mxu0
  %4723 = vmatprep.mubr.bf16.mxu0 0
  %4724 = vmatmul.mubr.bf16.gmra.mrb[0].mxu0 %v4588
  %v4725 = vpop.f32.mrb[0].mxu0
  %v4726 = vadd.f32 0.0, %v4725
  %v4727 = vpop.f32.mrb[0].mxu0
  %v4728 = vpop.f32.mrb[0].mxu0
  %v4729 = vadd.f32 0.0, %v4728
  %v4730 = vpop.f32.mrb[0].mxu0
  %4731 = vmatprep.mubr.bf16.mxu0 0
  %4732 = vmatmul.mubr.bf16.gmra.mrb[0].mxu0 %v4591
  %v4733 = vpop.f32.mrb[0].mxu0
  %v4734 = vadd.f32 0.0, %v4733
  %v4735 = vpop.f32.mrb[0].mxu0
  %v4736 = vpop.f32.mrb[0].mxu0
  %v4737 = vadd.f32 0.0, %v4736
  %v4738 = vpop.f32.mrb[0].mxu0
  %4739 = vmatprep.mubr.bf16.mxu0 0
  %4740 = vmatmul.mubr.bf16.gmra.mrb[0].mxu0 %v4594
  %v4741 = vpop.f32.mrb[0].mxu0
  %v4742 = vadd.f32 0.0, %v4741
  %v4743 = vpop.f32.mrb[0].mxu0
  %v4744 = vpop.f32.mrb[0].mxu0
  %v4745 = vadd.f32 0.0, %v4744
  %v4746 = vpop.f32.mrb[0].mxu0
  %4747 = vmatprep.mubr.bf16.mxu0 0
  %4748 = vmatmul.mubr.bf16.gmra.mrb[0].mxu0 %v4597
  %v4749 = vpop.f32.mrb[0].mxu0
  %v4750 = vadd.f32 0.0, %v4749
  %v4751 = vpop.f32.mrb[0].mxu0
  %v4752 = vpop.f32.mrb[0].mxu0
  %v4753 = vadd.f32 0.0, %v4752
  %v4754 = vpop.f32.mrb[0].mxu0
  %4755 = vmatprep.mubr.bf16.mxu0 0
  %4756 = vmatmul.mubr.bf16.gmra.mrb[0].mxu0 %v4600
  %v4757 = vpop.f32.mrb[0].mxu0
  %v4758 = vadd.f32 0.0, %v4757
  %v4759 = vpop.f32.mrb[0].mxu0
  %v4760 = vpop.f32.mrb[0].mxu0
  %v4761 = vadd.f32 0.0, %v4760
  %v4762 = vpop.f32.mrb[0].mxu0
  %4763 = vmatprep.mubr.bf16.mxu0 0
  %4764 = vmatmul.mubr.bf16.gmra.mrb[0].mxu0 %v4603
  %v4765 = vpop.f32.mrb[0].mxu0
  %v4766 = vadd.f32 0.0, %v4765
  %v4767 = vpop.f32.mrb[0].mxu0
  %v4768 = vpop.f32.mrb[0].mxu0
  %v4769 = vadd.f32 0.0, %v4768
  %v4770 = vpop.f32.mrb[0].mxu0
  %4771 = vmatprep.mubr.bf16.mxu0 0
  %4772 = vmatmul.mubr.bf16.gmra.mrb[0].mxu0 %v4606
  %v4773 = vpop.f32.mrb[0].mxu0
  %v4774 = vadd.f32 0.0, %v4773
  %v4775 = vpop.f32.mrb[0].mxu0
  %v4776 = vpop.f32.mrb[0].mxu0
  %v4777 = vadd.f32 0.0, %v4776
  %v4778 = vpop.f32.mrb[0].mxu0
  %4779 = vmatprep.mubr.bf16.mxu0 0
  %4780 = vmatmul.mubr.bf16.gmra.mrb[0].mxu0 %v4609
  %v4781 = vpop.f32.mrb[0].mxu0
  %v4782 = vadd.f32 0.0, %v4781
  %v4783 = vpop.f32.mrb[0].mxu0
  %v4784 = vpop.f32.mrb[0].mxu0
  %v4785 = vadd.f32 0.0, %v4784
  %v4786 = vpop.f32.mrb[0].mxu0
  %4787 = vdwg.mxu0
  %v4788 = vadd.f32 %v4505, %v4646
  %v4789 = vadd.f32 %v4506, %v4649
  %v4790 = vadd.f32 %v4507, %v4654
  %v4791 = vadd.f32 %v4508, %v4657
  %v4792 = vadd.f32 %v4509, %v4662
  %v4793 = vadd.f32 %v4510, %v4665
  %v4794 = vadd.f32 %v4511, %v4670
  %v4795 = vadd.f32 %v4512, %v4673
  %v4796 = vadd.f32 %v4513, %v4678
  %v4797 = vadd.f32 %v4514, %v4681
  %v4798 = vadd.f32 %v4515, %v4686
  %v4799 = vadd.f32 %v4516, %v4689
  %v4800 = vadd.f32 %v4517, %v4694
  %v4801 = vadd.f32 %v4518, %v4697
  %v4802 = vadd.f32 %v4519, %v4702
  %v4803 = vadd.f32 %v4520, %v4705
  %v4804 = vadd.f32 %v4521, %v4710
  %v4805 = vadd.f32 %v4522, %v4713
  %v4806 = vadd.f32 %v4523, %v4718
  %v4807 = vadd.f32 %v4524, %v4721
  %v4808 = vadd.f32 %v4525, %v4726
  %v4809 = vadd.f32 %v4526, %v4729
  %v4810 = vadd.f32 %v4527, %v4734
  %v4811 = vadd.f32 %v4528, %v4737
  %v4812 = vadd.f32 %v4529, %v4742
  %v4813 = vadd.f32 %v4530, %v4745
  %v4814 = vadd.f32 %v4531, %v4750
  %v4815 = vadd.f32 %v4532, %v4753
  %v4816 = vadd.f32 %v4533, %v4758
  %v4817 = vadd.f32 %v4534, %v4761
  %v4818 = vadd.f32 %v4535, %v4766
  %v4819 = vadd.f32 %v4536, %v4769
  %v4820 = vadd.f32 %v4537, %v4774
  %v4821 = vadd.f32 %v4538, %v4777
  %v4822 = vadd.f32 %v4539, %v4782
  %v4823 = vadd.f32 %v4540, %v4785
  %v4824 = vld [vmem:[%s2 + $0x50] sm:$0xf]
  %v4825 = vld [vmem:[%s2 + $0x54] sm:$0xf]
  %v4826 = vld [vmem:[%s2 + $0x58] sm:$0xf]
  %v4827 = vld [vmem:[%s2 + $0x5c] sm:$0xf]
  %v4832 = vunpack.c.l.b16 %v4824
  %v4833 = vunpack.c.l.b16 %v4825
  %v4834 = vunpack.c.l.b16 %v4826
  %v4835 = vunpack.c.l.b16 %v4827
  %v4836 = vpack.c.b16 %v4833, %v4832
  %v4837 = vpack.c.b16 %v4835, %v4834
  %v4841 = vsel %vm1179, %v3409, 0
  %v4844 = vsel %vm1179, %v3410, 0
  %v4847 = vsel %vm1179, %v3411, 0
  %v4850 = vsel %vm1179, %v3412, 0
  %v4853 = vsel %vm1179, %v3413, 0
  %v4856 = vsel %vm1179, %v3414, 0
  %v4859 = vsel %vm1179, %v3415, 0
  %v4862 = vsel %vm1179, %v3416, 0
  %v4865 = vsel %vm1179, %v3417, 0
  %v4868 = vsel %vm1179, %v3418, 0
  %v4871 = vsel %vm1179, %v3419, 0
  %v4874 = vsel %vm1179, %v3420, 0
  %v4877 = vsel %vm1179, %v3421, 0
  %v4880 = vsel %vm1179, %v3422, 0
  %v4883 = vsel %vm1179, %v3423, 0
  %v4886 = vsel %vm1179, %v3424, 0
  %v4889 = vsel %vm1179, %v3425, 0
  %v4892 = vsel %vm1179, %v3426, 0
  %4894 = vmatprep.subr.bf16.mxu0 0
  %4895 = vmatpush1.bf16.msra.mxu0 %v4836
  %4896 = vmatprep.subr.bf16.mxu0 0
  %4897 = vmatpush1.bf16.msra.mxu0 %v4837
  %4898 = vmatprep.subr.bf16.mxu0 0
  %4899 = vmatpush1.bf16.msra.mxu0 0
  %4900 = vmatprep.subr.bf16.mxu0 0
  %4901 = vmatpush1.bf16.msra.mxu0 0
  %4902 = vmatprep.subr.bf16.mxu0 0
  %4903 = vmatpush1.bf16.msra.mxu0 0
  %4904 = vmatprep.subr.bf16.mxu0 0
  %4905 = vmatpush1.bf16.msra.mxu0 0
  %4906 = vmatprep.subr.bf16.mxu0 0
  %4907 = vmatpush1.bf16.msra.mxu0 0
  %4908 = vmatprep.subr.bf16.mxu0 0
  %4909 = vmatpush1.bf16.msra.mxu0 0
  %4910 = vmatprep.subr.bf16.mxu0 0
  %4911 = vmatpush1.bf16.msra.mxu0 0
  %4912 = vmatprep.subr.bf16.mxu0 0
  %4913 = vmatpush1.bf16.msra.mxu0 0
  %4914 = vmatprep.subr.bf16.mxu0 0
  %4915 = vmatpush1.bf16.msra.mxu0 0
  %4916 = vmatprep.subr.bf16.mxu0 0
  %4917 = vmatpush1.bf16.msra.mxu0 0
  %4918 = vmatprep.subr.bf16.mxu0 0
  %4919 = vmatpush1.bf16.msra.mxu0 0
  %4920 = vmatprep.subr.bf16.mxu0 0
  %4921 = vmatpush1.bf16.msra.mxu0 0
  %4922 = vmatprep.subr.bf16.mxu0 0
  %4923 = vmatpush1.bf16.msra.mxu0 0
  %4924 = vmatprep.subr.bf16.mxu0 0
  %4925 = vmatpush1.bf16.msra.mxu0 0
  %4926 = vmatprep.mubr.bf16.mxu0 0
  %4927 = vmatmul.mubr.bf16.gmra.mrb[0].mxu0 %v4841
  %v4928 = vpop.f32.mrb[0].mxu0
  %v4929 = vadd.f32 0.0, %v4928
  %v4930 = vpop.f32.mrb[0].mxu0
  %v4931 = vpop.f32.mrb[0].mxu0
  %v4932 = vadd.f32 0.0, %v4931
  %v4933 = vpop.f32.mrb[0].mxu0
  %4934 = vmatprep.mubr.bf16.mxu0 0
  %4935 = vmatmul.mubr.bf16.gmra.mrb[0].mxu0 %v4844
  %v4936 = vpop.f32.mrb[0].mxu0
  %v4937 = vadd.f32 0.0, %v4936
  %v4938 = vpop.f32.mrb[0].mxu0
  %v4939 = vpop.f32.mrb[0].mxu0
  %v4940 = vadd.f32 0.0, %v4939
  %v4941 = vpop.f32.mrb[0].mxu0
  %4942 = vmatprep.mubr.bf16.mxu0 0
  %4943 = vmatmul.mubr.bf16.gmra.mrb[0].mxu0 %v4847
  %v4944 = vpop.f32.mrb[0].mxu0
  %v4945 = vadd.f32 0.0, %v4944
  %v4946 = vpop.f32.mrb[0].mxu0
  %v4947 = vpop.f32.mrb[0].mxu0
  %v4948 = vadd.f32 0.0, %v4947
  %v4949 = vpop.f32.mrb[0].mxu0
  %4950 = vmatprep.mubr.bf16.mxu0 0
  %4951 = vmatmul.mubr.bf16.gmra.mrb[0].mxu0 %v4850
  %v4952 = vpop.f32.mrb[0].mxu0
  %v4953 = vadd.f32 0.0, %v4952
  %v4954 = vpop.f32.mrb[0].mxu0
  %v4955 = vpop.f32.mrb[0].mxu0
  %v4956 = vadd.f32 0.0, %v4955
  %v4957 = vpop.f32.mrb[0].mxu0
  %4958 = vmatprep.mubr.bf16.mxu0 0
  %4959 = vmatmul.mubr.bf16.gmra.mrb[0].mxu0 %v4853
  %v4960 = vpop.f32.mrb[0].mxu0
  %v4961 = vadd.f32 0.0, %v4960
  %v4962 = vpop.f32.mrb[0].mxu0
  %v4963 = vpop.f32.mrb[0].mxu0
  %v4964 = vadd.f32 0.0, %v4963
  %v4965 = vpop.f32.mrb[0].mxu0
  %4966 = vmatprep.mubr.bf16.mxu0 0
  %4967 = vmatmul.mubr.bf16.gmra.mrb[0].mxu0 %v4856
  %v4968 = vpop.f32.mrb[0].mxu0
  %v4969 = vadd.f32 0.0, %v4968
  %v4970 = vpop.f32.mrb[0].mxu0
  %v4971 = vpop.f32.mrb[0].mxu0
  %v4972 = vadd.f32 0.0, %v4971
  %v4973 = vpop.f32.mrb[0].mxu0
  %4974 = vmatprep.mubr.bf16.mxu0 0
  %4975 = vmatmul.mubr.bf16.gmra.mrb[0].mxu0 %v4859
  %v4976 = vpop.f32.mrb[0].mxu0
  %v4977 = vadd.f32 0.0, %v4976
  %v4978 = vpop.f32.mrb[0].mxu0
  %v4979 = vpop.f32.mrb[0].mxu0
  %v4980 = vadd.f32 0.0, %v4979
  %v4981 = vpop.f32.mrb[0].mxu0
  %4982 = vmatprep.mubr.bf16.mxu0 0
  %4983 = vmatmul.mubr.bf16.gmra.mrb[0].mxu0 %v4862
  %v4984 = vpop.f32.mrb[0].mxu0
  %v4985 = vadd.f32 0.0, %v4984
  %v4986 = vpop.f32.mrb[0].mxu0
  %v4987 = vpop.f32.mrb[0].mxu0
  %v4988 = vadd.f32 0.0, %v4987
  %v4989 = vpop.f32.mrb[0].mxu0
  %4990 = vmatprep.mubr.bf16.mxu0 0
  %4991 = vmatmul.mubr.bf16.gmra.mrb[0].mxu0 %v4865
  %v4992 = vpop.f32.mrb[0].mxu0
  %v4993 = vadd.f32 0.0, %v4992
  %v4994 = vpop.f32.mrb[0].mxu0
  %v4995 = vpop.f32.mrb[0].mxu0
  %v4996 = vadd.f32 0.0, %v4995
  %v4997 = vpop.f32.mrb[0].mxu0
  %4998 = vmatprep.mubr.bf16.mxu0 0
  %4999 = vmatmul.mubr.bf16.gmra.mrb[0].mxu0 %v4868
  %v5000 = vpop.f32.mrb[0].mxu0
  %v5001 = vadd.f32 0.0, %v5000
  %v5002 = vpop.f32.mrb[0].mxu0
  %v5003 = vpop.f32.mrb[0].mxu0
  %v5004 = vadd.f32 0.0, %v5003
  %v5005 = vpop.f32.mrb[0].mxu0
  %5006 = vmatprep.mubr.bf16.mxu0 0
  %5007 = vmatmul.mubr.bf16.gmra.mrb[0].mxu0 %v4871
  %v5008 = vpop.f32.mrb[0].mxu0
  %v5009 = vadd.f32 0.0, %v5008
  %v5010 = vpop.f32.mrb[0].mxu0
  %v5011 = vpop.f32.mrb[0].mxu0
  %v5012 = vadd.f32 0.0, %v5011
  %v5013 = vpop.f32.mrb[0].mxu0
  %5014 = vmatprep.mubr.bf16.mxu0 0
  %5015 = vmatmul.mubr.bf16.gmra.mrb[0].mxu0 %v4874
  %v5016 = vpop.f32.mrb[0].mxu0
  %v5017 = vadd.f32 0.0, %v5016
  %v5018 = vpop.f32.mrb[0].mxu0
  %v5019 = vpop.f32.mrb[0].mxu0
  %v5020 = vadd.f32 0.0, %v5019
  %v5021 = vpop.f32.mrb[0].mxu0
  %5022 = vmatprep.mubr.bf16.mxu0 0
  %5023 = vmatmul.mubr.bf16.gmra.mrb[0].mxu0 %v4877
  %v5024 = vpop.f32.mrb[0].mxu0
  %v5025 = vadd.f32 0.0, %v5024
  %v5026 = vpop.f32.mrb[0].mxu0
  %v5027 = vpop.f32.mrb[0].mxu0
  %v5028 = vadd.f32 0.0, %v5027
  %v5029 = vpop.f32.mrb[0].mxu0
  %5030 = vmatprep.mubr.bf16.mxu0 0
  %5031 = vmatmul.mubr.bf16.gmra.mrb[0].mxu0 %v4880
  %v5032 = vpop.f32.mrb[0].mxu0
  %v5033 = vadd.f32 0.0, %v5032
  %v5034 = vpop.f32.mrb[0].mxu0
  %v5035 = vpop.f32.mrb[0].mxu0
  %v5036 = vadd.f32 0.0, %v5035
  %v5037 = vpop.f32.mrb[0].mxu0
  %5038 = vmatprep.mubr.bf16.mxu0 0
  %5039 = vmatmul.mubr.bf16.gmra.mrb[0].mxu0 %v4883
  %v5040 = vpop.f32.mrb[0].mxu0
  %v5041 = vadd.f32 0.0, %v5040
  %v5042 = vpop.f32.mrb[0].mxu0
  %v5043 = vpop.f32.mrb[0].mxu0
  %v5044 = vadd.f32 0.0, %v5043
  %v5045 = vpop.f32.mrb[0].mxu0
  %5046 = vmatprep.mubr.bf16.mxu0 0
  %5047 = vmatmul.mubr.bf16.gmra.mrb[0].mxu0 %v4886
  %v5048 = vpop.f32.mrb[0].mxu0
  %v5049 = vadd.f32 0.0, %v5048
  %v5050 = vpop.f32.mrb[0].mxu0
  %v5051 = vpop.f32.mrb[0].mxu0
  %v5052 = vadd.f32 0.0, %v5051
  %v5053 = vpop.f32.mrb[0].mxu0
  %5054 = vmatprep.mubr.bf16.mxu0 0
  %5055 = vmatmul.mubr.bf16.gmra.mrb[0].mxu0 %v4889
  %v5056 = vpop.f32.mrb[0].mxu0
  %v5057 = vadd.f32 0.0, %v5056
  %v5058 = vpop.f32.mrb[0].mxu0
  %v5059 = vpop.f32.mrb[0].mxu0
  %v5060 = vadd.f32 0.0, %v5059
  %v5061 = vpop.f32.mrb[0].mxu0
  %5062 = vmatprep.mubr.bf16.mxu0 0
  %5063 = vmatmul.mubr.bf16.gmra.mrb[0].mxu0 %v4892
  %v5064 = vpop.f32.mrb[0].mxu0
  %v5065 = vadd.f32 0.0, %v5064
  %v5066 = vpop.f32.mrb[0].mxu0
  %v5067 = vpop.f32.mrb[0].mxu0
  %v5068 = vadd.f32 0.0, %v5067
  %v5069 = vpop.f32.mrb[0].mxu0
  %5070 = vdwg.mxu0
  %v5071 = vadd.f32 %v4788, %v4929
  %v5072 = vadd.f32 %v4789, %v4932
  %v5073 = vadd.f32 %v4790, %v4937
  %v5074 = vadd.f32 %v4791, %v4940
  %v5075 = vadd.f32 %v4792, %v4945
  %v5076 = vadd.f32 %v4793, %v4948
  %v5077 = vadd.f32 %v4794, %v4953
  %v5078 = vadd.f32 %v4795, %v4956
  %v5079 = vadd.f32 %v4796, %v4961
  %v5080 = vadd.f32 %v4797, %v4964
  %v5081 = vadd.f32 %v4798, %v4969
  %v5082 = vadd.f32 %v4799, %v4972
  %v5083 = vadd.f32 %v4800, %v4977
  %v5084 = vadd.f32 %v4801, %v4980
  %v5085 = vadd.f32 %v4802, %v4985
  %v5086 = vadd.f32 %v4803, %v4988
  %v5087 = vadd.f32 %v4804, %v4993
  %v5088 = vadd.f32 %v4805, %v4996
  %v5089 = vadd.f32 %v4806, %v5001
  %v5090 = vadd.f32 %v4807, %v5004
  %v5091 = vadd.f32 %v4808, %v5009
  %v5092 = vadd.f32 %v4809, %v5012
  %v5093 = vadd.f32 %v4810, %v5017
  %v5094 = vadd.f32 %v4811, %v5020
  %v5095 = vadd.f32 %v4812, %v5025
  %v5096 = vadd.f32 %v4813, %v5028
  %v5097 = vadd.f32 %v4814, %v5033
  %v5098 = vadd.f32 %v4815, %v5036
  %v5099 = vadd.f32 %v4816, %v5041
  %v5100 = vadd.f32 %v4817, %v5044
  %v5101 = vadd.f32 %v4818, %v5049
  %v5102 = vadd.f32 %v4819, %v5052
  %v5103 = vadd.f32 %v4820, %v5057
  %v5104 = vadd.f32 %v4821, %v5060
  %v5105 = vadd.f32 %v4822, %v5065
  %v5106 = vadd.f32 %v4823, %v5068
  %v5107 = vld [vmem:[%s2 + $0x60] sm:$0xf]
  %v5108 = vld [vmem:[%s2 + $0x64] sm:$0xf]
  %v5109 = vld [vmem:[%s2 + $0x68] sm:$0xf]
  %v5110 = vld [vmem:[%s2 + $0x6c] sm:$0xf]
  %v5115 = vunpack.c.l.b16 %v5107
  %v5116 = vunpack.c.l.b16 %v5108
  %v5117 = vunpack.c.l.b16 %v5109
  %v5118 = vunpack.c.l.b16 %v5110
  %v5119 = vpack.c.b16 %v5116, %v5115
  %v5120 = vpack.c.b16 %v5118, %v5117
  %v5124 = vsel %vm1179, %v3427, 0
  %v5127 = vsel %vm1179, %v3428, 0
  %v5130 = vsel %vm1179, %v3429, 0
  %v5133 = vsel %vm1179, %v3430, 0
  %v5136 = vsel %vm1179, %v3431, 0
  %v5139 = vsel %vm1179, %v3432, 0
  %v5142 = vsel %vm1179, %v3433, 0
  %v5145 = vsel %vm1179, %v3434, 0
  %v5148 = vsel %vm1179, %v3435, 0
  %v5151 = vsel %vm1179, %v3436, 0
  %v5154 = vsel %vm1179, %v3437, 0
  %v5157 = vsel %vm1179, %v3438, 0
  %v5160 = vsel %vm1179, %v3439, 0
  %v5163 = vsel %vm1179, %v3440, 0
  %v5166 = vsel %vm1179, %v3441, 0
  %v5169 = vsel %vm1179, %v3442, 0
  %v5172 = vsel %vm1179, %v3443, 0
  %v5175 = vsel %vm1179, %v3444, 0
  %5177 = vmatprep.subr.bf16.mxu0 0
  %5178 = vmatpush1.bf16.msra.mxu0 %v5119
  %5179 = vmatprep.subr.bf16.mxu0 0
  %5180 = vmatpush1.bf16.msra.mxu0 %v5120
  %5181 = vmatprep.subr.bf16.mxu0 0
  %5182 = vmatpush1.bf16.msra.mxu0 0
  %5183 = vmatprep.subr.bf16.mxu0 0
  %5184 = vmatpush1.bf16.msra.mxu0 0
  %5185 = vmatprep.subr.bf16.mxu0 0
  %5186 = vmatpush1.bf16.msra.mxu0 0
  %5187 = vmatprep.subr.bf16.mxu0 0
  %5188 = vmatpush1.bf16.msra.mxu0 0
  %5189 = vmatprep.subr.bf16.mxu0 0
  %5190 = vmatpush1.bf16.msra.mxu0 0
  %5191 = vmatprep.subr.bf16.mxu0 0
  %5192 = vmatpush1.bf16.msra.mxu0 0
  %5193 = vmatprep.subr.bf16.mxu0 0
  %5194 = vmatpush1.bf16.msra.mxu0 0
  %5195 = vmatprep.subr.bf16.mxu0 0
  %5196 = vmatpush1.bf16.msra.mxu0 0
  %5197 = vmatprep.subr.bf16.mxu0 0
  %5198 = vmatpush1.bf16.msra.mxu0 0
  %5199 = vmatprep.subr.bf16.mxu0 0
  %5200 = vmatpush1.bf16.msra.mxu0 0
  %5201 = vmatprep.subr.bf16.mxu0 0
  %5202 = vmatpush1.bf16.msra.mxu0 0
  %5203 = vmatprep.subr.bf16.mxu0 0
  %5204 = vmatpush1.bf16.msra.mxu0 0
  %5205 = vmatprep.subr.bf16.mxu0 0
  %5206 = vmatpush1.bf16.msra.mxu0 0
  %5207 = vmatprep.subr.bf16.mxu0 0
  %5208 = vmatpush1.bf16.msra.mxu0 0
  %5209 = vmatprep.mubr.bf16.mxu0 0
  %5210 = vmatmul.mubr.bf16.gmra.mrb[0].mxu0 %v5124
  %v5211 = vpop.f32.mrb[0].mxu0
  %v5212 = vadd.f32 0.0, %v5211
  %v5213 = vpop.f32.mrb[0].mxu0
  %v5214 = vpop.f32.mrb[0].mxu0
  %v5215 = vadd.f32 0.0, %v5214
  %v5216 = vpop.f32.mrb[0].mxu0
  %5217 = vmatprep.mubr.bf16.mxu0 0
  %5218 = vmatmul.mubr.bf16.gmra.mrb[0].mxu0 %v5127
  %v5219 = vpop.f32.mrb[0].mxu0
  %v5220 = vadd.f32 0.0, %v5219
  %v5221 = vpop.f32.mrb[0].mxu0
  %v5222 = vpop.f32.mrb[0].mxu0
  %v5223 = vadd.f32 0.0, %v5222
  %v5224 = vpop.f32.mrb[0].mxu0
  %5225 = vmatprep.mubr.bf16.mxu0 0
  %5226 = vmatmul.mubr.bf16.gmra.mrb[0].mxu0 %v5130
  %v5227 = vpop.f32.mrb[0].mxu0
  %v5228 = vadd.f32 0.0, %v5227
  %v5229 = vpop.f32.mrb[0].mxu0
  %v5230 = vpop.f32.mrb[0].mxu0
  %v5231 = vadd.f32 0.0, %v5230
  %v5232 = vpop.f32.mrb[0].mxu0
  %5233 = vmatprep.mubr.bf16.mxu0 0
  %5234 = vmatmul.mubr.bf16.gmra.mrb[0].mxu0 %v5133
  %v5235 = vpop.f32.mrb[0].mxu0
  %v5236 = vadd.f32 0.0, %v5235
  %v5237 = vpop.f32.mrb[0].mxu0
  %v5238 = vpop.f32.mrb[0].mxu0
  %v5239 = vadd.f32 0.0, %v5238
  %v5240 = vpop.f32.mrb[0].mxu0
  %5241 = vmatprep.mubr.bf16.mxu0 0
  %5242 = vmatmul.mubr.bf16.gmra.mrb[0].mxu0 %v5136
  %v5243 = vpop.f32.mrb[0].mxu0
  %v5244 = vadd.f32 0.0, %v5243
  %v5245 = vpop.f32.mrb[0].mxu0
  %v5246 = vpop.f32.mrb[0].mxu0
  %v5247 = vadd.f32 0.0, %v5246
  %v5248 = vpop.f32.mrb[0].mxu0
  %5249 = vmatprep.mubr.bf16.mxu0 0
  %5250 = vmatmul.mubr.bf16.gmra.mrb[0].mxu0 %v5139
  %v5251 = vpop.f32.mrb[0].mxu0
  %v5252 = vadd.f32 0.0, %v5251
  %v5253 = vpop.f32.mrb[0].mxu0
  %v5254 = vpop.f32.mrb[0].mxu0
  %v5255 = vadd.f32 0.0, %v5254
  %v5256 = vpop.f32.mrb[0].mxu0
  %5257 = vmatprep.mubr.bf16.mxu0 0
  %5258 = vmatmul.mubr.bf16.gmra.mrb[0].mxu0 %v5142
  %v5259 = vpop.f32.mrb[0].mxu0
  %v5260 = vadd.f32 0.0, %v5259
  %v5261 = vpop.f32.mrb[0].mxu0
  %v5262 = vpop.f32.mrb[0].mxu0
  %v5263 = vadd.f32 0.0, %v5262
  %v5264 = vpop.f32.mrb[0].mxu0
  %5265 = vmatprep.mubr.bf16.mxu0 0
  %5266 = vmatmul.mubr.bf16.gmra.mrb[0].mxu0 %v5145
  %v5267 = vpop.f32.mrb[0].mxu0
  %v5268 = vadd.f32 0.0, %v5267
  %v5269 = vpop.f32.mrb[0].mxu0
  %v5270 = vpop.f32.mrb[0].mxu0
  %v5271 = vadd.f32 0.0, %v5270
  %v5272 = vpop.f32.mrb[0].mxu0
  %5273 = vmatprep.mubr.bf16.mxu0 0
  %5274 = vmatmul.mubr.bf16.gmra.mrb[0].mxu0 %v5148
  %v5275 = vpop.f32.mrb[0].mxu0
  %v5276 = vadd.f32 0.0, %v5275
  %v5277 = vpop.f32.mrb[0].mxu0
  %v5278 = vpop.f32.mrb[0].mxu0
  %v5279 = vadd.f32 0.0, %v5278
  %v5280 = vpop.f32.mrb[0].mxu0
  %5281 = vmatprep.mubr.bf16.mxu0 0
  %5282 = vmatmul.mubr.bf16.gmra.mrb[0].mxu0 %v5151
  %v5283 = vpop.f32.mrb[0].mxu0
  %v5284 = vadd.f32 0.0, %v5283
  %v5285 = vpop.f32.mrb[0].mxu0
  %v5286 = vpop.f32.mrb[0].mxu0
  %v5287 = vadd.f32 0.0, %v5286
  %v5288 = vpop.f32.mrb[0].mxu0
  %5289 = vmatprep.mubr.bf16.mxu0 0
  %5290 = vmatmul.mubr.bf16.gmra.mrb[0].mxu0 %v5154
  %v5291 = vpop.f32.mrb[0].mxu0
  %v5292 = vadd.f32 0.0, %v5291
  %v5293 = vpop.f32.mrb[0].mxu0
  %v5294 = vpop.f32.mrb[0].mxu0
  %v5295 = vadd.f32 0.0, %v5294
  %v5296 = vpop.f32.mrb[0].mxu0
  %5297 = vmatprep.mubr.bf16.mxu0 0
  %5298 = vmatmul.mubr.bf16.gmra.mrb[0].mxu0 %v5157
  %v5299 = vpop.f32.mrb[0].mxu0
  %v5300 = vadd.f32 0.0, %v5299
  %v5301 = vpop.f32.mrb[0].mxu0
  %v5302 = vpop.f32.mrb[0].mxu0
  %v5303 = vadd.f32 0.0, %v5302
  %v5304 = vpop.f32.mrb[0].mxu0
  %5305 = vmatprep.mubr.bf16.mxu0 0
  %5306 = vmatmul.mubr.bf16.gmra.mrb[0].mxu0 %v5160
  %v5307 = vpop.f32.mrb[0].mxu0
  %v5308 = vadd.f32 0.0, %v5307
  %v5309 = vpop.f32.mrb[0].mxu0
  %v5310 = vpop.f32.mrb[0].mxu0
  %v5311 = vadd.f32 0.0, %v5310
  %v5312 = vpop.f32.mrb[0].mxu0
  %5313 = vmatprep.mubr.bf16.mxu0 0
  %5314 = vmatmul.mubr.bf16.gmra.mrb[0].mxu0 %v5163
  %v5315 = vpop.f32.mrb[0].mxu0
  %v5316 = vadd.f32 0.0, %v5315
  %v5317 = vpop.f32.mrb[0].mxu0
  %v5318 = vpop.f32.mrb[0].mxu0
  %v5319 = vadd.f32 0.0, %v5318
  %v5320 = vpop.f32.mrb[0].mxu0
  %5321 = vmatprep.mubr.bf16.mxu0 0
  %5322 = vmatmul.mubr.bf16.gmra.mrb[0].mxu0 %v5166
  %v5323 = vpop.f32.mrb[0].mxu0
  %v5324 = vadd.f32 0.0, %v5323
  %v5325 = vpop.f32.mrb[0].mxu0
  %v5326 = vpop.f32.mrb[0].mxu0
  %v5327 = vadd.f32 0.0, %v5326
  %v5328 = vpop.f32.mrb[0].mxu0
  %5329 = vmatprep.mubr.bf16.mxu0 0
  %5330 = vmatmul.mubr.bf16.gmra.mrb[0].mxu0 %v5169
  %v5331 = vpop.f32.mrb[0].mxu0
  %v5332 = vadd.f32 0.0, %v5331
  %v5333 = vpop.f32.mrb[0].mxu0
  %v5334 = vpop.f32.mrb[0].mxu0
  %v5335 = vadd.f32 0.0, %v5334
  %v5336 = vpop.f32.mrb[0].mxu0
  %5337 = vmatprep.mubr.bf16.mxu0 0
  %5338 = vmatmul.mubr.bf16.gmra.mrb[0].mxu0 %v5172
  %v5339 = vpop.f32.mrb[0].mxu0
  %v5340 = vadd.f32 0.0, %v5339
  %v5341 = vpop.f32.mrb[0].mxu0
  %v5342 = vpop.f32.mrb[0].mxu0
  %v5343 = vadd.f32 0.0, %v5342
  %v5344 = vpop.f32.mrb[0].mxu0
  %5345 = vmatprep.mubr.bf16.mxu0 0
  %5346 = vmatmul.mubr.bf16.gmra.mrb[0].mxu0 %v5175
  %v5347 = vpop.f32.mrb[0].mxu0
  %v5348 = vadd.f32 0.0, %v5347
  %v5349 = vpop.f32.mrb[0].mxu0
  %v5350 = vpop.f32.mrb[0].mxu0
  %v5351 = vadd.f32 0.0, %v5350
  %v5352 = vpop.f32.mrb[0].mxu0
  %5353 = vdwg.mxu0
  %v5354 = vadd.f32 %v5071, %v5212
  %v5355 = vadd.f32 %v5072, %v5215
  %v5356 = vadd.f32 %v5073, %v5220
  %v5357 = vadd.f32 %v5074, %v5223
  %v5358 = vadd.f32 %v5075, %v5228
  %v5359 = vadd.f32 %v5076, %v5231
  %v5360 = vadd.f32 %v5077, %v5236
  %v5361 = vadd.f32 %v5078, %v5239
  %v5362 = vadd.f32 %v5079, %v5244
  %v5363 = vadd.f32 %v5080, %v5247
  %v5364 = vadd.f32 %v5081, %v5252
  %v5365 = vadd.f32 %v5082, %v5255
  %v5366 = vadd.f32 %v5083, %v5260
  %v5367 = vadd.f32 %v5084, %v5263
  %v5368 = vadd.f32 %v5085, %v5268
  %v5369 = vadd.f32 %v5086, %v5271
  %v5370 = vadd.f32 %v5087, %v5276
  %v5371 = vadd.f32 %v5088, %v5279
  %v5372 = vadd.f32 %v5089, %v5284
  %v5373 = vadd.f32 %v5090, %v5287
  %v5374 = vadd.f32 %v5091, %v5292
  %v5375 = vadd.f32 %v5092, %v5295
  %v5376 = vadd.f32 %v5093, %v5300
  %v5377 = vadd.f32 %v5094, %v5303
  %v5378 = vadd.f32 %v5095, %v5308
  %v5379 = vadd.f32 %v5096, %v5311
  %v5380 = vadd.f32 %v5097, %v5316
  %v5381 = vadd.f32 %v5098, %v5319
  %v5382 = vadd.f32 %v5099, %v5324
  %v5383 = vadd.f32 %v5100, %v5327
  %v5384 = vadd.f32 %v5101, %v5332
  %v5385 = vadd.f32 %v5102, %v5335
  %v5386 = vadd.f32 %v5103, %v5340
  %v5387 = vadd.f32 %v5104, %v5343
  %v5388 = vadd.f32 %v5105, %v5348
  %v5389 = vadd.f32 %v5106, %v5351
  %v5390 = vld [vmem:[%s2 + $0x70] sm:$0xf]
  %v5391 = vld [vmem:[%s2 + $0x74] sm:$0xf]
  %v5392 = vld [vmem:[%s2 + $0x78] sm:$0xf]
  %v5393 = vld [vmem:[%s2 + $0x7c] sm:$0xf]
  %v5398 = vunpack.c.l.b16 %v5390
  %v5399 = vunpack.c.l.b16 %v5391
  %v5400 = vunpack.c.l.b16 %v5392
  %v5401 = vunpack.c.l.b16 %v5393
  %v5402 = vpack.c.b16 %v5399, %v5398
  %v5403 = vpack.c.b16 %v5401, %v5400
  %v5407 = vsel %vm1179, %v3445, 0
  %v5410 = vsel %vm1179, %v3446, 0
  %v5413 = vsel %vm1179, %v3447, 0
  %v5416 = vsel %vm1179, %v3448, 0
  %v5419 = vsel %vm1179, %v3449, 0
  %v5422 = vsel %vm1179, %v3450, 0
  %v5425 = vsel %vm1179, %v3451, 0
  %v5428 = vsel %vm1179, %v3452, 0
  %v5431 = vsel %vm1179, %v3453, 0
  %v5434 = vsel %vm1179, %v3454, 0
  %v5437 = vsel %vm1179, %v3455, 0
  %v5440 = vsel %vm1179, %v3456, 0
  %v5443 = vsel %vm1179, %v3457, 0
  %v5446 = vsel %vm1179, %v3458, 0
  %v5449 = vsel %vm1179, %v3459, 0
  %v5452 = vsel %vm1179, %v3460, 0
  %v5455 = vsel %vm1179, %v3461, 0
  %v5458 = vsel %vm1179, %v3462, 0
  %5460 = vmatprep.subr.bf16.mxu0 0
  %5461 = vmatpush1.bf16.msra.mxu0 %v5402
  %5462 = vmatprep.subr.bf16.mxu0 0
  %5463 = vmatpush1.bf16.msra.mxu0 %v5403
  %5464 = vmatprep.subr.bf16.mxu0 0
  %5465 = vmatpush1.bf16.msra.mxu0 0
  %5466 = vmatprep.subr.bf16.mxu0 0
  %5467 = vmatpush1.bf16.msra.mxu0 0
  %5468 = vmatprep.subr.bf16.mxu0 0
  %5469 = vmatpush1.bf16.msra.mxu0 0
  %5470 = vmatprep.subr.bf16.mxu0 0
  %5471 = vmatpush1.bf16.msra.mxu0 0
  %5472 = vmatprep.subr.bf16.mxu0 0
  %5473 = vmatpush1.bf16.msra.mxu0 0
  %5474 = vmatprep.subr.bf16.mxu0 0
  %5475 = vmatpush1.bf16.msra.mxu0 0
  %5476 = vmatprep.subr.bf16.mxu0 0
  %5477 = vmatpush1.bf16.msra.mxu0 0
  %5478 = vmatprep.subr.bf16.mxu0 0
  %5479 = vmatpush1.bf16.msra.mxu0 0
  %5480 = vmatprep.subr.bf16.mxu0 0
  %5481 = vmatpush1.bf16.msra.mxu0 0
  %5482 = vmatprep.subr.bf16.mxu0 0
  %5483 = vmatpush1.bf16.msra.mxu0 0
  %5484 = vmatprep.subr.bf16.mxu0 0
  %5485 = vmatpush1.bf16.msra.mxu0 0
  %5486 = vmatprep.subr.bf16.mxu0 0
  %5487 = vmatpush1.bf16.msra.mxu0 0
  %5488 = vmatprep.subr.bf16.mxu0 0
  %5489 = vmatpush1.bf16.msra.mxu0 0
  %5490 = vmatprep.subr.bf16.mxu0 0
  %5491 = vmatpush1.bf16.msra.mxu0 0
  %5492 = vmatprep.mubr.bf16.mxu0 0
  %5493 = vmatmul.mubr.bf16.gmra.mrb[0].mxu0 %v5407
  %v5494 = vpop.f32.mrb[0].mxu0
  %v5495 = vadd.f32 0.0, %v5494
  %v5496 = vpop.f32.mrb[0].mxu0
  %v5497 = vpop.f32.mrb[0].mxu0
  %v5498 = vadd.f32 0.0, %v5497
  %v5499 = vpop.f32.mrb[0].mxu0
  %5500 = vmatprep.mubr.bf16.mxu0 0
  %5501 = vmatmul.mubr.bf16.gmra.mrb[0].mxu0 %v5410
  %v5502 = vpop.f32.mrb[0].mxu0
  %v5503 = vadd.f32 0.0, %v5502
  %v5504 = vpop.f32.mrb[0].mxu0
  %v5505 = vpop.f32.mrb[0].mxu0
  %v5506 = vadd.f32 0.0, %v5505
  %v5507 = vpop.f32.mrb[0].mxu0
  %5508 = vmatprep.mubr.bf16.mxu0 0
  %5509 = vmatmul.mubr.bf16.gmra.mrb[0].mxu0 %v5413
  %v5510 = vpop.f32.mrb[0].mxu0
  %v5511 = vadd.f32 0.0, %v5510
  %v5512 = vpop.f32.mrb[0].mxu0
  %v5513 = vpop.f32.mrb[0].mxu0
  %v5514 = vadd.f32 0.0, %v5513
  %v5515 = vpop.f32.mrb[0].mxu0
  %5516 = vmatprep.mubr.bf16.mxu0 0
  %5517 = vmatmul.mubr.bf16.gmra.mrb[0].mxu0 %v5416
  %v5518 = vpop.f32.mrb[0].mxu0
  %v5519 = vadd.f32 0.0, %v5518
  %v5520 = vpop.f32.mrb[0].mxu0
  %v5521 = vpop.f32.mrb[0].mxu0
  %v5522 = vadd.f32 0.0, %v5521
  %v5523 = vpop.f32.mrb[0].mxu0
  %5524 = vmatprep.mubr.bf16.mxu0 0
  %5525 = vmatmul.mubr.bf16.gmra.mrb[0].mxu0 %v5419
  %v5526 = vpop.f32.mrb[0].mxu0
  %v5527 = vadd.f32 0.0, %v5526
  %v5528 = vpop.f32.mrb[0].mxu0
  %v5529 = vpop.f32.mrb[0].mxu0
  %v5530 = vadd.f32 0.0, %v5529
  %v5531 = vpop.f32.mrb[0].mxu0
  %5532 = vmatprep.mubr.bf16.mxu0 0
  %5533 = vmatmul.mubr.bf16.gmra.mrb[0].mxu0 %v5422
  %v5534 = vpop.f32.mrb[0].mxu0
  %v5535 = vadd.f32 0.0, %v5534
  %v5536 = vpop.f32.mrb[0].mxu0
  %v5537 = vpop.f32.mrb[0].mxu0
  %v5538 = vadd.f32 0.0, %v5537
  %v5539 = vpop.f32.mrb[0].mxu0
  %5540 = vmatprep.mubr.bf16.mxu0 0
  %5541 = vmatmul.mubr.bf16.gmra.mrb[0].mxu0 %v5425
  %v5542 = vpop.f32.mrb[0].mxu0
  %v5543 = vadd.f32 0.0, %v5542
  %v5544 = vpop.f32.mrb[0].mxu0
  %v5545 = vpop.f32.mrb[0].mxu0
  %v5546 = vadd.f32 0.0, %v5545
  %v5547 = vpop.f32.mrb[0].mxu0
  %5548 = vmatprep.mubr.bf16.mxu0 0
  %5549 = vmatmul.mubr.bf16.gmra.mrb[0].mxu0 %v5428
  %v5550 = vpop.f32.mrb[0].mxu0
  %v5551 = vadd.f32 0.0, %v5550
  %v5552 = vpop.f32.mrb[0].mxu0
  %v5553 = vpop.f32.mrb[0].mxu0
  %v5554 = vadd.f32 0.0, %v5553
  %v5555 = vpop.f32.mrb[0].mxu0
  %5556 = vmatprep.mubr.bf16.mxu0 0
  %5557 = vmatmul.mubr.bf16.gmra.mrb[0].mxu0 %v5431
  %v5558 = vpop.f32.mrb[0].mxu0
  %v5559 = vadd.f32 0.0, %v5558
  %v5560 = vpop.f32.mrb[0].mxu0
  %v5561 = vpop.f32.mrb[0].mxu0
  %v5562 = vadd.f32 0.0, %v5561
  %v5563 = vpop.f32.mrb[0].mxu0
  %5564 = vmatprep.mubr.bf16.mxu0 0
  %5565 = vmatmul.mubr.bf16.gmra.mrb[0].mxu0 %v5434
  %v5566 = vpop.f32.mrb[0].mxu0
  %v5567 = vadd.f32 0.0, %v5566
  %v5568 = vpop.f32.mrb[0].mxu0
  %v5569 = vpop.f32.mrb[0].mxu0
  %v5570 = vadd.f32 0.0, %v5569
  %v5571 = vpop.f32.mrb[0].mxu0
  %5572 = vmatprep.mubr.bf16.mxu0 0
  %5573 = vmatmul.mubr.bf16.gmra.mrb[0].mxu0 %v5437
  %v5574 = vpop.f32.mrb[0].mxu0
  %v5575 = vadd.f32 0.0, %v5574
  %v5576 = vpop.f32.mrb[0].mxu0
  %v5577 = vpop.f32.mrb[0].mxu0
  %v5578 = vadd.f32 0.0, %v5577
  %v5579 = vpop.f32.mrb[0].mxu0
  %5580 = vmatprep.mubr.bf16.mxu0 0
  %5581 = vmatmul.mubr.bf16.gmra.mrb[0].mxu0 %v5440
  %v5582 = vpop.f32.mrb[0].mxu0
  %v5583 = vadd.f32 0.0, %v5582
  %v5584 = vpop.f32.mrb[0].mxu0
  %v5585 = vpop.f32.mrb[0].mxu0
  %v5586 = vadd.f32 0.0, %v5585
  %v5587 = vpop.f32.mrb[0].mxu0
  %5588 = vmatprep.mubr.bf16.mxu0 0
  %5589 = vmatmul.mubr.bf16.gmra.mrb[0].mxu0 %v5443
  %v5590 = vpop.f32.mrb[0].mxu0
  %v5591 = vadd.f32 0.0, %v5590
  %v5592 = vpop.f32.mrb[0].mxu0
  %v5593 = vpop.f32.mrb[0].mxu0
  %v5594 = vadd.f32 0.0, %v5593
  %v5595 = vpop.f32.mrb[0].mxu0
  %5596 = vmatprep.mubr.bf16.mxu0 0
  %5597 = vmatmul.mubr.bf16.gmra.mrb[0].mxu0 %v5446
  %v5598 = vpop.f32.mrb[0].mxu0
  %v5599 = vadd.f32 0.0, %v5598
  %v5600 = vpop.f32.mrb[0].mxu0
  %v5601 = vpop.f32.mrb[0].mxu0
  %v5602 = vadd.f32 0.0, %v5601
  %v5603 = vpop.f32.mrb[0].mxu0
  %5604 = vmatprep.mubr.bf16.mxu0 0
  %5605 = vmatmul.mubr.bf16.gmra.mrb[0].mxu0 %v5449
  %v5606 = vpop.f32.mrb[0].mxu0
  %v5607 = vadd.f32 0.0, %v5606
  %v5608 = vpop.f32.mrb[0].mxu0
  %v5609 = vpop.f32.mrb[0].mxu0
  %v5610 = vadd.f32 0.0, %v5609
  %v5611 = vpop.f32.mrb[0].mxu0
  %5612 = vmatprep.mubr.bf16.mxu0 0
  %5613 = vmatmul.mubr.bf16.gmra.mrb[0].mxu0 %v5452
  %v5614 = vpop.f32.mrb[0].mxu0
  %v5615 = vadd.f32 0.0, %v5614
  %v5616 = vpop.f32.mrb[0].mxu0
  %v5617 = vpop.f32.mrb[0].mxu0
  %v5618 = vadd.f32 0.0, %v5617
  %v5619 = vpop.f32.mrb[0].mxu0
  %5620 = vmatprep.mubr.bf16.mxu0 0
  %5621 = vmatmul.mubr.bf16.gmra.mrb[0].mxu0 %v5455
  %v5622 = vpop.f32.mrb[0].mxu0
  %v5623 = vadd.f32 0.0, %v5622
  %v5624 = vpop.f32.mrb[0].mxu0
  %v5625 = vpop.f32.mrb[0].mxu0
  %v5626 = vadd.f32 0.0, %v5625
  %v5627 = vpop.f32.mrb[0].mxu0
  %5628 = vmatprep.mubr.bf16.mxu0 0
  %5629 = vmatmul.mubr.bf16.gmra.mrb[0].mxu0 %v5458
  %v5630 = vpop.f32.mrb[0].mxu0
  %v5631 = vadd.f32 0.0, %v5630
  %v5632 = vpop.f32.mrb[0].mxu0
  %v5633 = vpop.f32.mrb[0].mxu0
  %v5634 = vadd.f32 0.0, %v5633
  %v5635 = vpop.f32.mrb[0].mxu0
  %5636 = vdwg.mxu0
  %v5637 = vadd.f32 %v5354, %v5495
  %v5638 = vadd.f32 %v5355, %v5498
  %v5639 = vadd.f32 %v5356, %v5503
  %v5640 = vadd.f32 %v5357, %v5506
  %v5641 = vadd.f32 %v5358, %v5511
  %v5642 = vadd.f32 %v5359, %v5514
  %v5643 = vadd.f32 %v5360, %v5519
  %v5644 = vadd.f32 %v5361, %v5522
  %v5645 = vadd.f32 %v5362, %v5527
  %v5646 = vadd.f32 %v5363, %v5530
  %v5647 = vadd.f32 %v5364, %v5535
  %v5648 = vadd.f32 %v5365, %v5538
  %v5649 = vadd.f32 %v5366, %v5543
  %v5650 = vadd.f32 %v5367, %v5546
  %v5651 = vadd.f32 %v5368, %v5551
  %v5652 = vadd.f32 %v5369, %v5554
  %v5653 = vadd.f32 %v5370, %v5559
  %v5654 = vadd.f32 %v5371, %v5562
  %v5655 = vadd.f32 %v5372, %v5567
  %v5656 = vadd.f32 %v5373, %v5570
  %v5657 = vadd.f32 %v5374, %v5575
  %v5658 = vadd.f32 %v5375, %v5578
  %v5659 = vadd.f32 %v5376, %v5583
  %v5660 = vadd.f32 %v5377, %v5586
  %v5661 = vadd.f32 %v5378, %v5591
  %v5662 = vadd.f32 %v5379, %v5594
  %v5663 = vadd.f32 %v5380, %v5599
  %v5664 = vadd.f32 %v5381, %v5602
  %v5665 = vadd.f32 %v5382, %v5607
  %v5666 = vadd.f32 %v5383, %v5610
  %v5667 = vadd.f32 %v5384, %v5615
  %v5668 = vadd.f32 %v5385, %v5618
  %v5669 = vadd.f32 %v5386, %v5623
  %v5670 = vadd.f32 %v5387, %v5626
  %v5671 = vadd.f32 %v5388, %v5631
  %v5672 = vadd.f32 %v5389, %v5634
  %v5673 = vld [vmem:[%s2 + $0x80] sm:$0xf]
  %v5674 = vld [vmem:[%s2 + $0x84] sm:$0xf]
  %v5675 = vld [vmem:[%s2 + $0x88] sm:$0xf]
  %v5676 = vld [vmem:[%s2 + $0x8c] sm:$0xf]
  %v5681 = vunpack.c.l.b16 %v5673
  %v5682 = vunpack.c.l.b16 %v5674
  %v5683 = vunpack.c.l.b16 %v5675
  %v5684 = vunpack.c.l.b16 %v5676
  %v5685 = vpack.c.b16 %v5682, %v5681
  %v5686 = vpack.c.b16 %v5684, %v5683
  %v5690 = vsel %vm1179, %v3463, 0
  %v5693 = vsel %vm1179, %v3464, 0
  %v5696 = vsel %vm1179, %v3465, 0
  %v5699 = vsel %vm1179, %v3466, 0
  %v5702 = vsel %vm1179, %v3467, 0
  %v5705 = vsel %vm1179, %v3468, 0
  %v5708 = vsel %vm1179, %v3469, 0
  %v5711 = vsel %vm1179, %v3470, 0
  %v5714 = vsel %vm1179, %v3471, 0
  %v5717 = vsel %vm1179, %v3472, 0
  %v5720 = vsel %vm1179, %v3473, 0
  %v5723 = vsel %vm1179, %v3474, 0
  %v5726 = vsel %vm1179, %v3475, 0
  %v5729 = vsel %vm1179, %v3476, 0
  %v5732 = vsel %vm1179, %v3477, 0
  %v5735 = vsel %vm1179, %v3478, 0
  %v5738 = vsel %vm1179, %v3479, 0
  %v5741 = vsel %vm1179, %v3480, 0
  %5743 = vmatprep.subr.bf16.mxu0 0
  %5744 = vmatpush1.bf16.msra.mxu0 %v5685
  %5745 = vmatprep.subr.bf16.mxu0 0
  %5746 = vmatpush1.bf16.msra.mxu0 %v5686
  %5747 = vmatprep.subr.bf16.mxu0 0
  %5748 = vmatpush1.bf16.msra.mxu0 0
  %5749 = vmatprep.subr.bf16.mxu0 0
  %5750 = vmatpush1.bf16.msra.mxu0 0
  %5751 = vmatprep.subr.bf16.mxu0 0
  %5752 = vmatpush1.bf16.msra.mxu0 0
  %5753 = vmatprep.subr.bf16.mxu0 0
  %5754 = vmatpush1.bf16.msra.mxu0 0
  %5755 = vmatprep.subr.bf16.mxu0 0
  %5756 = vmatpush1.bf16.msra.mxu0 0
  %5757 = vmatprep.subr.bf16.mxu0 0
  %5758 = vmatpush1.bf16.msra.mxu0 0
  %5759 = vmatprep.subr.bf16.mxu0 0
  %5760 = vmatpush1.bf16.msra.mxu0 0
  %5761 = vmatprep.subr.bf16.mxu0 0
  %5762 = vmatpush1.bf16.msra.mxu0 0
  %5763 = vmatprep.subr.bf16.mxu0 0
  %5764 = vmatpush1.bf16.msra.mxu0 0
  %5765 = vmatprep.subr.bf16.mxu0 0
  %5766 = vmatpush1.bf16.msra.mxu0 0
  %5767 = vmatprep.subr.bf16.mxu0 0
  %5768 = vmatpush1.bf16.msra.mxu0 0
  %5769 = vmatprep.subr.bf16.mxu0 0
  %5770 = vmatpush1.bf16.msra.mxu0 0
  %5771 = vmatprep.subr.bf16.mxu0 0
  %5772 = vmatpush1.bf16.msra.mxu0 0
  %5773 = vmatprep.subr.bf16.mxu0 0
  %5774 = vmatpush1.bf16.msra.mxu0 0
  %5775 = vmatprep.mubr.bf16.mxu0 0
  %5776 = vmatmul.mubr.bf16.gmra.mrb[0].mxu0 %v5690
  %v5777 = vpop.f32.mrb[0].mxu0
  %v5778 = vadd.f32 0.0, %v5777
  %v5779 = vpop.f32.mrb[0].mxu0
  %v5780 = vpop.f32.mrb[0].mxu0
  %v5781 = vadd.f32 0.0, %v5780
  %v5782 = vpop.f32.mrb[0].mxu0
  %5783 = vmatprep.mubr.bf16.mxu0 0
  %5784 = vmatmul.mubr.bf16.gmra.mrb[0].mxu0 %v5693
  %v5785 = vpop.f32.mrb[0].mxu0
  %v5786 = vadd.f32 0.0, %v5785
  %v5787 = vpop.f32.mrb[0].mxu0
  %v5788 = vpop.f32.mrb[0].mxu0
  %v5789 = vadd.f32 0.0, %v5788
  %v5790 = vpop.f32.mrb[0].mxu0
  %5791 = vmatprep.mubr.bf16.mxu0 0
  %5792 = vmatmul.mubr.bf16.gmra.mrb[0].mxu0 %v5696
  %v5793 = vpop.f32.mrb[0].mxu0
  %v5794 = vadd.f32 0.0, %v5793
  %v5795 = vpop.f32.mrb[0].mxu0
  %v5796 = vpop.f32.mrb[0].mxu0
  %v5797 = vadd.f32 0.0, %v5796
  %v5798 = vpop.f32.mrb[0].mxu0
  %5799 = vmatprep.mubr.bf16.mxu0 0
  %5800 = vmatmul.mubr.bf16.gmra.mrb[0].mxu0 %v5699
  %v5801 = vpop.f32.mrb[0].mxu0
  %v5802 = vadd.f32 0.0, %v5801
  %v5803 = vpop.f32.mrb[0].mxu0
  %v5804 = vpop.f32.mrb[0].mxu0
  %v5805 = vadd.f32 0.0, %v5804
  %v5806 = vpop.f32.mrb[0].mxu0
  %5807 = vmatprep.mubr.bf16.mxu0 0
  %5808 = vmatmul.mubr.bf16.gmra.mrb[0].mxu0 %v5702
  %v5809 = vpop.f32.mrb[0].mxu0
  %v5810 = vadd.f32 0.0, %v5809
  %v5811 = vpop.f32.mrb[0].mxu0
  %v5812 = vpop.f32.mrb[0].mxu0
  %v5813 = vadd.f32 0.0, %v5812
  %v5814 = vpop.f32.mrb[0].mxu0
  %5815 = vmatprep.mubr.bf16.mxu0 0
  %5816 = vmatmul.mubr.bf16.gmra.mrb[0].mxu0 %v5705
  %v5817 = vpop.f32.mrb[0].mxu0
  %v5818 = vadd.f32 0.0, %v5817
  %v5819 = vpop.f32.mrb[0].mxu0
  %v5820 = vpop.f32.mrb[0].mxu0
  %v5821 = vadd.f32 0.0, %v5820
  %v5822 = vpop.f32.mrb[0].mxu0
  %5823 = vmatprep.mubr.bf16.mxu0 0
  %5824 = vmatmul.mubr.bf16.gmra.mrb[0].mxu0 %v5708
  %v5825 = vpop.f32.mrb[0].mxu0
  %v5826 = vadd.f32 0.0, %v5825
  %v5827 = vpop.f32.mrb[0].mxu0
  %v5828 = vpop.f32.mrb[0].mxu0
  %v5829 = vadd.f32 0.0, %v5828
  %v5830 = vpop.f32.mrb[0].mxu0
  %5831 = vmatprep.mubr.bf16.mxu0 0
  %5832 = vmatmul.mubr.bf16.gmra.mrb[0].mxu0 %v5711
  %v5833 = vpop.f32.mrb[0].mxu0
  %v5834 = vadd.f32 0.0, %v5833
  %v5835 = vpop.f32.mrb[0].mxu0
  %v5836 = vpop.f32.mrb[0].mxu0
  %v5837 = vadd.f32 0.0, %v5836
  %v5838 = vpop.f32.mrb[0].mxu0
  %5839 = vmatprep.mubr.bf16.mxu0 0
  %5840 = vmatmul.mubr.bf16.gmra.mrb[0].mxu0 %v5714
  %v5841 = vpop.f32.mrb[0].mxu0
  %v5842 = vadd.f32 0.0, %v5841
  %v5843 = vpop.f32.mrb[0].mxu0
  %v5844 = vpop.f32.mrb[0].mxu0
  %v5845 = vadd.f32 0.0, %v5844
  %v5846 = vpop.f32.mrb[0].mxu0
  %5847 = vmatprep.mubr.bf16.mxu0 0
  %5848 = vmatmul.mubr.bf16.gmra.mrb[0].mxu0 %v5717
  %v5849 = vpop.f32.mrb[0].mxu0
  %v5850 = vadd.f32 0.0, %v5849
  %v5851 = vpop.f32.mrb[0].mxu0
  %v5852 = vpop.f32.mrb[0].mxu0
  %v5853 = vadd.f32 0.0, %v5852
  %v5854 = vpop.f32.mrb[0].mxu0
  %5855 = vmatprep.mubr.bf16.mxu0 0
  %5856 = vmatmul.mubr.bf16.gmra.mrb[0].mxu0 %v5720
  %v5857 = vpop.f32.mrb[0].mxu0
  %v5858 = vadd.f32 0.0, %v5857
  %v5859 = vpop.f32.mrb[0].mxu0
  %v5860 = vpop.f32.mrb[0].mxu0
  %v5861 = vadd.f32 0.0, %v5860
  %v5862 = vpop.f32.mrb[0].mxu0
  %5863 = vmatprep.mubr.bf16.mxu0 0
  %5864 = vmatmul.mubr.bf16.gmra.mrb[0].mxu0 %v5723
  %v5865 = vpop.f32.mrb[0].mxu0
  %v5866 = vadd.f32 0.0, %v5865
  %v5867 = vpop.f32.mrb[0].mxu0
  %v5868 = vpop.f32.mrb[0].mxu0
  %v5869 = vadd.f32 0.0, %v5868
  %v5870 = vpop.f32.mrb[0].mxu0
  %5871 = vmatprep.mubr.bf16.mxu0 0
  %5872 = vmatmul.mubr.bf16.gmra.mrb[0].mxu0 %v5726
  %v5873 = vpop.f32.mrb[0].mxu0
  %v5874 = vadd.f32 0.0, %v5873
  %v5875 = vpop.f32.mrb[0].mxu0
  %v5876 = vpop.f32.mrb[0].mxu0
  %v5877 = vadd.f32 0.0, %v5876
  %v5878 = vpop.f32.mrb[0].mxu0
  %5879 = vmatprep.mubr.bf16.mxu0 0
  %5880 = vmatmul.mubr.bf16.gmra.mrb[0].mxu0 %v5729
  %v5881 = vpop.f32.mrb[0].mxu0
  %v5882 = vadd.f32 0.0, %v5881
  %v5883 = vpop.f32.mrb[0].mxu0
  %v5884 = vpop.f32.mrb[0].mxu0
  %v5885 = vadd.f32 0.0, %v5884
  %v5886 = vpop.f32.mrb[0].mxu0
  %5887 = vmatprep.mubr.bf16.mxu0 0
  %5888 = vmatmul.mubr.bf16.gmra.mrb[0].mxu0 %v5732
  %v5889 = vpop.f32.mrb[0].mxu0
  %v5890 = vadd.f32 0.0, %v5889
  %v5891 = vpop.f32.mrb[0].mxu0
  %v5892 = vpop.f32.mrb[0].mxu0
  %v5893 = vadd.f32 0.0, %v5892
  %v5894 = vpop.f32.mrb[0].mxu0
  %5895 = vmatprep.mubr.bf16.mxu0 0
  %5896 = vmatmul.mubr.bf16.gmra.mrb[0].mxu0 %v5735
  %v5897 = vpop.f32.mrb[0].mxu0
  %v5898 = vadd.f32 0.0, %v5897
  %v5899 = vpop.f32.mrb[0].mxu0
  %v5900 = vpop.f32.mrb[0].mxu0
  %v5901 = vadd.f32 0.0, %v5900
  %v5902 = vpop.f32.mrb[0].mxu0
  %5903 = vmatprep.mubr.bf16.mxu0 0
  %5904 = vmatmul.mubr.bf16.gmra.mrb[0].mxu0 %v5738
  %v5905 = vpop.f32.mrb[0].mxu0
  %v5906 = vadd.f32 0.0, %v5905
  %v5907 = vpop.f32.mrb[0].mxu0
  %v5908 = vpop.f32.mrb[0].mxu0
  %v5909 = vadd.f32 0.0, %v5908
  %v5910 = vpop.f32.mrb[0].mxu0
  %5911 = vmatprep.mubr.bf16.mxu0 0
  %5912 = vmatmul.mubr.bf16.gmra.mrb[0].mxu0 %v5741
  %v5913 = vpop.f32.mrb[0].mxu0
  %v5914 = vadd.f32 0.0, %v5913
  %v5915 = vpop.f32.mrb[0].mxu0
  %v5916 = vpop.f32.mrb[0].mxu0
  %v5917 = vadd.f32 0.0, %v5916
  %v5918 = vpop.f32.mrb[0].mxu0
  %5919 = vdwg.mxu0
  %v5920 = vadd.f32 %v5637, %v5778
  %v5921 = vadd.f32 %v5638, %v5781
  %v5922 = vadd.f32 %v5639, %v5786
  %v5923 = vadd.f32 %v5640, %v5789
  %v5924 = vadd.f32 %v5641, %v5794
  %v5925 = vadd.f32 %v5642, %v5797
  %v5926 = vadd.f32 %v5643, %v5802
  %v5927 = vadd.f32 %v5644, %v5805
  %v5928 = vadd.f32 %v5645, %v5810
  %v5929 = vadd.f32 %v5646, %v5813
  %v5930 = vadd.f32 %v5647, %v5818
  %v5931 = vadd.f32 %v5648, %v5821
  %v5932 = vadd.f32 %v5649, %v5826
  %v5933 = vadd.f32 %v5650, %v5829
  %v5934 = vadd.f32 %v5651, %v5834
  %v5935 = vadd.f32 %v5652, %v5837
  %v5936 = vadd.f32 %v5653, %v5842
  %v5937 = vadd.f32 %v5654, %v5845
  %v5938 = vadd.f32 %v5655, %v5850
  %v5939 = vadd.f32 %v5656, %v5853
  %v5940 = vadd.f32 %v5657, %v5858
  %v5941 = vadd.f32 %v5658, %v5861
  %v5942 = vadd.f32 %v5659, %v5866
  %v5943 = vadd.f32 %v5660, %v5869
  %v5944 = vadd.f32 %v5661, %v5874
  %v5945 = vadd.f32 %v5662, %v5877
  %v5946 = vadd.f32 %v5663, %v5882
  %v5947 = vadd.f32 %v5664, %v5885
  %v5948 = vadd.f32 %v5665, %v5890
  %v5949 = vadd.f32 %v5666, %v5893
  %v5950 = vadd.f32 %v5667, %v5898
  %v5951 = vadd.f32 %v5668, %v5901
  %v5952 = vadd.f32 %v5669, %v5906
  %v5953 = vadd.f32 %v5670, %v5909
  %v5954 = vadd.f32 %v5671, %v5914
  %v5955 = vadd.f32 %v5672, %v5917
  %v5956 = vlaneseq
  %v5957 = vshrl.u32 %v5956, 7
  %v5958 = vsub.s32 0, %v5957
  %v5959 = vrot.slane %v22, %v5958
  %v5960 = vadd.f32 %v5920, %v5959
  %v5961 = vadd.f32 %v5921, %v5959
  %v5962 = vadd.f32 %v5922, %v5959
  %v5963 = vadd.f32 %v5923, %v5959
  %v5964 = vadd.f32 %v5924, %v5959
  %v5965 = vadd.f32 %v5925, %v5959
  %v5966 = vadd.f32 %v5926, %v5959
  %v5967 = vadd.f32 %v5927, %v5959
  %v5968 = vadd.f32 %v5928, %v5959
  %v5969 = vadd.f32 %v5929, %v5959
  %v5970 = vadd.f32 %v5930, %v5959
  %v5971 = vadd.f32 %v5931, %v5959
  %v5972 = vadd.f32 %v5932, %v5959
  %v5973 = vadd.f32 %v5933, %v5959
  %v5974 = vadd.f32 %v5934, %v5959
  %v5975 = vadd.f32 %v5935, %v5959
  %v5976 = vadd.f32 %v5936, %v5959
  %v5977 = vadd.f32 %v5937, %v5959
  %v5978 = vadd.f32 %v5938, %v5959
  %v5979 = vadd.f32 %v5939, %v5959
  %v5980 = vadd.f32 %v5940, %v5959
  %v5981 = vadd.f32 %v5941, %v5959
  %v5982 = vadd.f32 %v5942, %v5959
  %v5983 = vadd.f32 %v5943, %v5959
  %v5984 = vadd.f32 %v5944, %v5959
  %v5985 = vadd.f32 %v5945, %v5959
  %v5986 = vadd.f32 %v5946, %v5959
  %v5987 = vadd.f32 %v5947, %v5959
  %v5988 = vadd.f32 %v5948, %v5959
  %v5989 = vadd.f32 %v5949, %v5959
  %v5990 = vadd.f32 %v5950, %v5959
  %v5991 = vadd.f32 %v5951, %v5959
  %v5992 = vadd.f32 %v5952, %v5959
  %v5993 = vadd.f32 %v5953, %v5959
  %v5994 = vadd.f32 %v5954, %v5959
  %v5995 = vadd.f32 %v5955, %v5959
  %v5996 = vmax.f32 %v5960, 0.0
  %v5997 = vmax.f32 %v5961, 0.0
  %v5998 = vmax.f32 %v5962, 0.0
  %v5999 = vmax.f32 %v5963, 0.0
  %v6000 = vmax.f32 %v5964, 0.0
  %v6001 = vmax.f32 %v5965, 0.0
  %v6002 = vmax.f32 %v5966, 0.0
  %v6003 = vmax.f32 %v5967, 0.0
  %v6004 = vmax.f32 %v5968, 0.0
  %v6005 = vmax.f32 %v5969, 0.0
  %v6006 = vmax.f32 %v5970, 0.0
  %v6007 = vmax.f32 %v5971, 0.0
  %v6008 = vmax.f32 %v5972, 0.0
  %v6009 = vmax.f32 %v5973, 0.0
  %v6010 = vmax.f32 %v5974, 0.0
  %v6011 = vmax.f32 %v5975, 0.0
  %v6012 = vmax.f32 %v5976, 0.0
  %v6013 = vmax.f32 %v5977, 0.0
  %v6014 = vmax.f32 %v5978, 0.0
  %v6015 = vmax.f32 %v5979, 0.0
  %v6016 = vmax.f32 %v5980, 0.0
  %v6017 = vmax.f32 %v5981, 0.0
  %v6018 = vmax.f32 %v5982, 0.0
  %v6019 = vmax.f32 %v5983, 0.0
  %v6020 = vmax.f32 %v5984, 0.0
  %v6021 = vmax.f32 %v5985, 0.0
  %v6022 = vmax.f32 %v5986, 0.0
  %v6023 = vmax.f32 %v5987, 0.0
  %v6024 = vmax.f32 %v5988, 0.0
  %v6025 = vmax.f32 %v5989, 0.0
  %v6026 = vmax.f32 %v5990, 0.0
  %v6027 = vmax.f32 %v5991, 0.0
  %v6028 = vmax.f32 %v5992, 0.0
  %v6029 = vmax.f32 %v5993, 0.0
  %v6030 = vmax.f32 %v5994, 0.0
  %v6031 = vmax.f32 %v5995, 0.0
  %v6032 = vpack.c.bf16 %v5996, %v5996
  %v6033 = vld [vmem:[%s3] sm:$0xf]
  %v6034 = vld [vmem:[%s3 + $0x4] sm:$0xf]
  %v6035 = vld [vmem:[%s3 + $0x8] sm:$0xf]
  %v6036 = vld [vmem:[%s3 + $0xc] sm:$0xf]
  %v6037 = vld [vmem:[%s3 + $0x10] sm:$0xf]
  %v6038 = vld [vmem:[%s3 + $0x14] sm:$0xf]
  %v6039 = vld [vmem:[%s3 + $0x18] sm:$0xf]
  %v6040 = vld [vmem:[%s3 + $0x1c] sm:$0xf]
  %v6041 = vpack.c.bf16 %v5997, %v5997
  %v6042 = vld [vmem:[%s3 + $0x20] sm:$0xf]
  %v6043 = vld [vmem:[%s3 + $0x24] sm:$0xf]
  %v6044 = vld [vmem:[%s3 + $0x28] sm:$0xf]
  %v6045 = vld [vmem:[%s3 + $0x2c] sm:$0xf]
  %v6046 = vld [vmem:[%s3 + $0x30] sm:$0xf]
  %v6047 = vld [vmem:[%s3 + $0x34] sm:$0xf]
  %v6048 = vld [vmem:[%s3 + $0x38] sm:$0xf]
  %v6049 = vld [vmem:[%s3 + $0x3c] sm:$0xf]
  %v6058 = vunpack.c.l.b16 %v6042
  %v6059 = vunpack.c.l.b16 %v6043
  %v6060 = vunpack.c.l.b16 %v6044
  %v6061 = vunpack.c.l.b16 %v6045
  %v6062 = vunpack.c.l.b16 %v6046
  %v6063 = vunpack.c.l.b16 %v6047
  %v6064 = vunpack.c.l.b16 %v6048
  %v6065 = vunpack.c.l.b16 %v6049
  %v6066 = vpack.c.b16 %v6059, %v6058
  %v6067 = vpack.c.b16 %v6061, %v6060
  %v6068 = vpack.c.b16 %v6063, %v6062
  %v6069 = vpack.c.b16 %v6065, %v6064
  %vm6074 = vcmask 523264
  %v6076 = vsel %vm6074, %v6041, 0
  %6078 = vmatprep.subr.bf16.mxu0 0
  %6079 = vmatpush1.bf16.msra.mxu0 %v6066
  %6080 = vmatprep.subr.bf16.mxu0 0
  %6081 = vmatpush1.bf16.msra.mxu0 %v6067
  %6082 = vmatprep.subr.bf16.mxu0 0
  %6083 = vmatpush1.bf16.msra.mxu0 %v6068
  %6084 = vmatprep.subr.bf16.mxu0 0
  %6085 = vmatpush1.bf16.msra.mxu0 %v6069
  %6086 = vmatprep.subr.bf16.mxu0 0
  %6087 = vmatpush1.bf16.msra.mxu0 0
  %6088 = vmatprep.subr.bf16.mxu0 0
  %6089 = vmatpush1.bf16.msra.mxu0 0
  %6090 = vmatprep.subr.bf16.mxu0 0
  %6091 = vmatpush1.bf16.msra.mxu0 0
  %6092 = vmatprep.subr.bf16.mxu0 0
  %6093 = vmatpush1.bf16.msra.mxu0 0
  %6094 = vmatprep.subr.bf16.mxu0 0
  %6095 = vmatpush1.bf16.msra.mxu0 0
  %6096 = vmatprep.subr.bf16.mxu0 0
  %6097 = vmatpush1.bf16.msra.mxu0 0
  %6098 = vmatprep.subr.bf16.mxu0 0
  %6099 = vmatpush1.bf16.msra.mxu0 0
  %6100 = vmatprep.subr.bf16.mxu0 0
  %6101 = vmatpush1.bf16.msra.mxu0 0
  %6102 = vmatprep.subr.bf16.mxu0 0
  %6103 = vmatpush1.bf16.msra.mxu0 0
  %6104 = vmatprep.subr.bf16.mxu0 0
  %6105 = vmatpush1.bf16.msra.mxu0 0
  %6106 = vmatprep.subr.bf16.mxu0 0
  %6107 = vmatpush1.bf16.msra.mxu0 0
  %6108 = vmatprep.subr.bf16.mxu0 0
  %6109 = vmatpush1.bf16.msra.mxu0 0
  %6110 = vmatprep.mubr.bf16.mxu0 0
  %6111 = vmatmul.mubr.bf16.gmra.mrb[0].mxu0 %v6076
  %v6112 = vpop.f32.mrb[0].mxu0
  %v6113 = vadd.f32 0.0, %v6112
  %v6114 = vpop.f32.mrb[0].mxu0
  %v6115 = vpop.f32.mrb[0].mxu0
  %v6116 = vpop.f32.mrb[0].mxu0
  %6117 = vdwg.mxu0
  %v6126 = vunpack.c.l.b16 %v6033
  %v6127 = vunpack.c.l.b16 %v6034
  %v6128 = vunpack.c.l.b16 %v6035
  %v6129 = vunpack.c.l.b16 %v6036
  %v6130 = vunpack.c.l.b16 %v6037
  %v6131 = vunpack.c.l.b16 %v6038
  %v6132 = vunpack.c.l.b16 %v6039
  %v6133 = vunpack.c.l.b16 %v6040
  %v6134 = vpack.c.b16 %v6127, %v6126
  %v6135 = vpack.c.b16 %v6129, %v6128
  %v6136 = vpack.c.b16 %v6131, %v6130
  %v6137 = vpack.c.b16 %v6133, %v6132
  %v6143 = vsel %vm6074, %v6032, 0
  %6145 = vmatprep.subr.bf16.mxu0 0
  %6146 = vmatpush1.bf16.msra.mxu0 %v6134
  %6147 = vmatprep.subr.bf16.mxu0 0
  %6148 = vmatpush1.bf16.msra.mxu0 %v6135
  %6149 = vmatprep.subr.bf16.mxu0 0
  %6150 = vmatpush1.bf16.msra.mxu0 %v6136
  %6151 = vmatprep.subr.bf16.mxu0 0
  %6152 = vmatpush1.bf16.msra.mxu0 %v6137
  %6153 = vmatprep.subr.bf16.mxu0 0
  %6154 = vmatpush1.bf16.msra.mxu0 0
  %6155 = vmatprep.subr.bf16.mxu0 0
  %6156 = vmatpush1.bf16.msra.mxu0 0
  %6157 = vmatprep.subr.bf16.mxu0 0
  %6158 = vmatpush1.bf16.msra.mxu0 0
  %6159 = vmatprep.subr.bf16.mxu0 0
  %6160 = vmatpush1.bf16.msra.mxu0 0
  %6161 = vmatprep.subr.bf16.mxu0 0
  %6162 = vmatpush1.bf16.msra.mxu0 0
  %6163 = vmatprep.subr.bf16.mxu0 0
  %6164 = vmatpush1.bf16.msra.mxu0 0
  %6165 = vmatprep.subr.bf16.mxu0 0
  %6166 = vmatpush1.bf16.msra.mxu0 0
  %6167 = vmatprep.subr.bf16.mxu0 0
  %6168 = vmatpush1.bf16.msra.mxu0 0
  %6169 = vmatprep.subr.bf16.mxu0 0
  %6170 = vmatpush1.bf16.msra.mxu0 0
  %6171 = vmatprep.subr.bf16.mxu0 0
  %6172 = vmatpush1.bf16.msra.mxu0 0
  %6173 = vmatprep.subr.bf16.mxu0 0
  %6174 = vmatpush1.bf16.msra.mxu0 0
  %6175 = vmatprep.subr.bf16.mxu0 0
  %6176 = vmatpush1.bf16.msra.mxu0 0
  %6177 = vmatprep.mubr.bf16.mxu0 0
  %6178 = vmatmul.mubr.bf16.gmra.mrb[0].mxu0 %v6143
  %v6179 = vpop.f32.mrb[0].mxu0
  %v6180 = vadd.f32 %v6113, %v6179
  %v6181 = vpop.f32.mrb[0].mxu0
  %v6182 = vpop.f32.mrb[0].mxu0
  %v6183 = vpop.f32.mrb[0].mxu0
  %6184 = vdwg.mxu0
  %v6185 = vpack.c.bf16 %v5998, %v5998
  %v6186 = vld [vmem:[%s3 + $0x40] sm:$0xf]
  %v6187 = vld [vmem:[%s3 + $0x44] sm:$0xf]
  %v6188 = vld [vmem:[%s3 + $0x48] sm:$0xf]
  %v6189 = vld [vmem:[%s3 + $0x4c] sm:$0xf]
  %v6190 = vld [vmem:[%s3 + $0x50] sm:$0xf]
  %v6191 = vld [vmem:[%s3 + $0x54] sm:$0xf]
  %v6192 = vld [vmem:[%s3 + $0x58] sm:$0xf]
  %v6193 = vld [vmem:[%s3 + $0x5c] sm:$0xf]
  %v6202 = vunpack.c.l.b16 %v6186
  %v6203 = vunpack.c.l.b16 %v6187
  %v6204 = vunpack.c.l.b16 %v6188
  %v6205 = vunpack.c.l.b16 %v6189
  %v6206 = vunpack.c.l.b16 %v6190
  %v6207 = vunpack.c.l.b16 %v6191
  %v6208 = vunpack.c.l.b16 %v6192
  %v6209 = vunpack.c.l.b16 %v6193
  %v6210 = vpack.c.b16 %v6203, %v6202
  %v6211 = vpack.c.b16 %v6205, %v6204
  %v6212 = vpack.c.b16 %v6207, %v6206
  %v6213 = vpack.c.b16 %v6209, %v6208
  %v6219 = vsel %vm6074, %v6185, 0
  %6221 = vmatprep.subr.bf16.mxu0 0
  %6222 = vmatpush1.bf16.msra.mxu0 %v6210
  %6223 = vmatprep.subr.bf16.mxu0 0
  %6224 = vmatpush1.bf16.msra.mxu0 %v6211
  %6225 = vmatprep.subr.bf16.mxu0 0
  %6226 = vmatpush1.bf16.msra.mxu0 %v6212
  %6227 = vmatprep.subr.bf16.mxu0 0
  %6228 = vmatpush1.bf16.msra.mxu0 %v6213
  %6229 = vmatprep.subr.bf16.mxu0 0
  %6230 = vmatpush1.bf16.msra.mxu0 0
  %6231 = vmatprep.subr.bf16.mxu0 0
  %6232 = vmatpush1.bf16.msra.mxu0 0
  %6233 = vmatprep.subr.bf16.mxu0 0
  %6234 = vmatpush1.bf16.msra.mxu0 0
  %6235 = vmatprep.subr.bf16.mxu0 0
  %6236 = vmatpush1.bf16.msra.mxu0 0
  %6237 = vmatprep.subr.bf16.mxu0 0
  %6238 = vmatpush1.bf16.msra.mxu0 0
  %6239 = vmatprep.subr.bf16.mxu0 0
  %6240 = vmatpush1.bf16.msra.mxu0 0
  %6241 = vmatprep.subr.bf16.mxu0 0
  %6242 = vmatpush1.bf16.msra.mxu0 0
  %6243 = vmatprep.subr.bf16.mxu0 0
  %6244 = vmatpush1.bf16.msra.mxu0 0
  %6245 = vmatprep.subr.bf16.mxu0 0
  %6246 = vmatpush1.bf16.msra.mxu0 0
  %6247 = vmatprep.subr.bf16.mxu0 0
  %6248 = vmatpush1.bf16.msra.mxu0 0
  %6249 = vmatprep.subr.bf16.mxu0 0
  %6250 = vmatpush1.bf16.msra.mxu0 0
  %6251 = vmatprep.subr.bf16.mxu0 0
  %6252 = vmatpush1.bf16.msra.mxu0 0
  %6253 = vmatprep.mubr.bf16.mxu0 0
  %6254 = vmatmul.mubr.bf16.gmra.mrb[0].mxu0 %v6219
  %v6255 = vpop.f32.mrb[0].mxu0
  %v6256 = vadd.f32 0.0, %v6255
  %v6257 = vpop.f32.mrb[0].mxu0
  %v6258 = vpop.f32.mrb[0].mxu0
  %v6259 = vpop.f32.mrb[0].mxu0
  %6260 = vdwg.mxu0
  %v6261 = vadd.f32 %v6180, %v6256
  %v6262 = vpack.c.bf16 %v5999, %v5999
  %v6263 = vld [vmem:[%s3 + $0x60] sm:$0xf]
  %v6264 = vld [vmem:[%s3 + $0x64] sm:$0xf]
  %v6265 = vld [vmem:[%s3 + $0x68] sm:$0xf]
  %v6266 = vld [vmem:[%s3 + $0x6c] sm:$0xf]
  %v6267 = vld [vmem:[%s3 + $0x70] sm:$0xf]
  %v6268 = vld [vmem:[%s3 + $0x74] sm:$0xf]
  %v6269 = vld [vmem:[%s3 + $0x78] sm:$0xf]
  %v6270 = vld [vmem:[%s3 + $0x7c] sm:$0xf]
  %v6279 = vunpack.c.l.b16 %v6263
  %v6280 = vunpack.c.l.b16 %v6264
  %v6281 = vunpack.c.l.b16 %v6265
  %v6282 = vunpack.c.l.b16 %v6266
  %v6283 = vunpack.c.l.b16 %v6267
  %v6284 = vunpack.c.l.b16 %v6268
  %v6285 = vunpack.c.l.b16 %v6269
  %v6286 = vunpack.c.l.b16 %v6270
  %v6287 = vpack.c.b16 %v6280, %v6279
  %v6288 = vpack.c.b16 %v6282, %v6281
  %v6289 = vpack.c.b16 %v6284, %v6283
  %v6290 = vpack.c.b16 %v6286, %v6285
  %v6296 = vsel %vm6074, %v6262, 0
  %6298 = vmatprep.subr.bf16.mxu0 0
  %6299 = vmatpush1.bf16.msra.mxu0 %v6287
  %6300 = vmatprep.subr.bf16.mxu0 0
  %6301 = vmatpush1.bf16.msra.mxu0 %v6288
  %6302 = vmatprep.subr.bf16.mxu0 0
  %6303 = vmatpush1.bf16.msra.mxu0 %v6289
  %6304 = vmatprep.subr.bf16.mxu0 0
  %6305 = vmatpush1.bf16.msra.mxu0 %v6290
  %6306 = vmatprep.subr.bf16.mxu0 0
  %6307 = vmatpush1.bf16.msra.mxu0 0
  %6308 = vmatprep.subr.bf16.mxu0 0
  %6309 = vmatpush1.bf16.msra.mxu0 0
  %6310 = vmatprep.subr.bf16.mxu0 0
  %6311 = vmatpush1.bf16.msra.mxu0 0
  %6312 = vmatprep.subr.bf16.mxu0 0
  %6313 = vmatpush1.bf16.msra.mxu0 0
  %6314 = vmatprep.subr.bf16.mxu0 0
  %6315 = vmatpush1.bf16.msra.mxu0 0
  %6316 = vmatprep.subr.bf16.mxu0 0
  %6317 = vmatpush1.bf16.msra.mxu0 0
  %6318 = vmatprep.subr.bf16.mxu0 0
  %6319 = vmatpush1.bf16.msra.mxu0 0
  %6320 = vmatprep.subr.bf16.mxu0 0
  %6321 = vmatpush1.bf16.msra.mxu0 0
  %6322 = vmatprep.subr.bf16.mxu0 0
  %6323 = vmatpush1.bf16.msra.mxu0 0
  %6324 = vmatprep.subr.bf16.mxu0 0
  %6325 = vmatpush1.bf16.msra.mxu0 0
  %6326 = vmatprep.subr.bf16.mxu0 0
  %6327 = vmatpush1.bf16.msra.mxu0 0
  %6328 = vmatprep.subr.bf16.mxu0 0
  %6329 = vmatpush1.bf16.msra.mxu0 0
  %6330 = vmatprep.mubr.bf16.mxu0 0
  %6331 = vmatmul.mubr.bf16.gmra.mrb[0].mxu0 %v6296
  %v6332 = vpop.f32.mrb[0].mxu0
  %v6333 = vadd.f32 0.0, %v6332
  %v6334 = vpop.f32.mrb[0].mxu0
  %v6335 = vpop.f32.mrb[0].mxu0
  %v6336 = vpop.f32.mrb[0].mxu0
  %6337 = vdwg.mxu0
  %v6338 = vadd.f32 %v6261, %v6333
  %v6339 = vpack.c.bf16 %v6000, %v6000
  %v6340 = vld [vmem:[%s3 + $0x80] sm:$0xf]
  %v6341 = vld [vmem:[%s3 + $0x84] sm:$0xf]
  %v6342 = vld [vmem:[%s3 + $0x88] sm:$0xf]
  %v6343 = vld [vmem:[%s3 + $0x8c] sm:$0xf]
  %v6344 = vld [vmem:[%s3 + $0x90] sm:$0xf]
  %v6345 = vld [vmem:[%s3 + $0x94] sm:$0xf]
  %v6346 = vld [vmem:[%s3 + $0x98] sm:$0xf]
  %v6347 = vld [vmem:[%s3 + $0x9c] sm:$0xf]
  %v6356 = vunpack.c.l.b16 %v6340
  %v6357 = vunpack.c.l.b16 %v6341
  %v6358 = vunpack.c.l.b16 %v6342
  %v6359 = vunpack.c.l.b16 %v6343
  %v6360 = vunpack.c.l.b16 %v6344
  %v6361 = vunpack.c.l.b16 %v6345
  %v6362 = vunpack.c.l.b16 %v6346
  %v6363 = vunpack.c.l.b16 %v6347
  %v6364 = vpack.c.b16 %v6357, %v6356
  %v6365 = vpack.c.b16 %v6359, %v6358
  %v6366 = vpack.c.b16 %v6361, %v6360
  %v6367 = vpack.c.b16 %v6363, %v6362
  %v6373 = vsel %vm6074, %v6339, 0
  %6375 = vmatprep.subr.bf16.mxu0 0
  %6376 = vmatpush1.bf16.msra.mxu0 %v6364
  %6377 = vmatprep.subr.bf16.mxu0 0
  %6378 = vmatpush1.bf16.msra.mxu0 %v6365
  %6379 = vmatprep.subr.bf16.mxu0 0
  %6380 = vmatpush1.bf16.msra.mxu0 %v6366
  %6381 = vmatprep.subr.bf16.mxu0 0
  %6382 = vmatpush1.bf16.msra.mxu0 %v6367
  %6383 = vmatprep.subr.bf16.mxu0 0
  %6384 = vmatpush1.bf16.msra.mxu0 0
  %6385 = vmatprep.subr.bf16.mxu0 0
  %6386 = vmatpush1.bf16.msra.mxu0 0
  %6387 = vmatprep.subr.bf16.mxu0 0
  %6388 = vmatpush1.bf16.msra.mxu0 0
  %6389 = vmatprep.subr.bf16.mxu0 0
  %6390 = vmatpush1.bf16.msra.mxu0 0
  %6391 = vmatprep.subr.bf16.mxu0 0
  %6392 = vmatpush1.bf16.msra.mxu0 0
  %6393 = vmatprep.subr.bf16.mxu0 0
  %6394 = vmatpush1.bf16.msra.mxu0 0
  %6395 = vmatprep.subr.bf16.mxu0 0
  %6396 = vmatpush1.bf16.msra.mxu0 0
  %6397 = vmatprep.subr.bf16.mxu0 0
  %6398 = vmatpush1.bf16.msra.mxu0 0
  %6399 = vmatprep.subr.bf16.mxu0 0
  %6400 = vmatpush1.bf16.msra.mxu0 0
  %6401 = vmatprep.subr.bf16.mxu0 0
  %6402 = vmatpush1.bf16.msra.mxu0 0
  %6403 = vmatprep.subr.bf16.mxu0 0
  %6404 = vmatpush1.bf16.msra.mxu0 0
  %6405 = vmatprep.subr.bf16.mxu0 0
  %6406 = vmatpush1.bf16.msra.mxu0 0
  %6407 = vmatprep.mubr.bf16.mxu0 0
  %6408 = vmatmul.mubr.bf16.gmra.mrb[0].mxu0 %v6373
  %v6409 = vpop.f32.mrb[0].mxu0
  %v6410 = vadd.f32 0.0, %v6409
  %v6411 = vpop.f32.mrb[0].mxu0
  %v6412 = vpop.f32.mrb[0].mxu0
  %v6413 = vpop.f32.mrb[0].mxu0
  %6414 = vdwg.mxu0
  %v6415 = vadd.f32 %v6338, %v6410
  %v6416 = vpack.c.bf16 %v6001, %v6001
  %v6417 = vld [vmem:[%s3 + $0xa0] sm:$0xf]
  %v6418 = vld [vmem:[%s3 + $0xa4] sm:$0xf]
  %v6419 = vld [vmem:[%s3 + $0xa8] sm:$0xf]
  %v6420 = vld [vmem:[%s3 + $0xac] sm:$0xf]
  %v6421 = vld [vmem:[%s3 + $0xb0] sm:$0xf]
  %v6422 = vld [vmem:[%s3 + $0xb4] sm:$0xf]
  %v6423 = vld [vmem:[%s3 + $0xb8] sm:$0xf]
  %v6424 = vld [vmem:[%s3 + $0xbc] sm:$0xf]
  %v6433 = vunpack.c.l.b16 %v6417
  %v6434 = vunpack.c.l.b16 %v6418
  %v6435 = vunpack.c.l.b16 %v6419
  %v6436 = vunpack.c.l.b16 %v6420
  %v6437 = vunpack.c.l.b16 %v6421
  %v6438 = vunpack.c.l.b16 %v6422
  %v6439 = vunpack.c.l.b16 %v6423
  %v6440 = vunpack.c.l.b16 %v6424
  %v6441 = vpack.c.b16 %v6434, %v6433
  %v6442 = vpack.c.b16 %v6436, %v6435
  %v6443 = vpack.c.b16 %v6438, %v6437
  %v6444 = vpack.c.b16 %v6440, %v6439
  %v6450 = vsel %vm6074, %v6416, 0
  %6452 = vmatprep.subr.bf16.mxu0 0
  %6453 = vmatpush1.bf16.msra.mxu0 %v6441
  %6454 = vmatprep.subr.bf16.mxu0 0
  %6455 = vmatpush1.bf16.msra.mxu0 %v6442
  %6456 = vmatprep.subr.bf16.mxu0 0
  %6457 = vmatpush1.bf16.msra.mxu0 %v6443
  %6458 = vmatprep.subr.bf16.mxu0 0
  %6459 = vmatpush1.bf16.msra.mxu0 %v6444
  %6460 = vmatprep.subr.bf16.mxu0 0
  %6461 = vmatpush1.bf16.msra.mxu0 0
  %6462 = vmatprep.subr.bf16.mxu0 0
  %6463 = vmatpush1.bf16.msra.mxu0 0
  %6464 = vmatprep.subr.bf16.mxu0 0
  %6465 = vmatpush1.bf16.msra.mxu0 0
  %6466 = vmatprep.subr.bf16.mxu0 0
  %6467 = vmatpush1.bf16.msra.mxu0 0
  %6468 = vmatprep.subr.bf16.mxu0 0
  %6469 = vmatpush1.bf16.msra.mxu0 0
  %6470 = vmatprep.subr.bf16.mxu0 0
  %6471 = vmatpush1.bf16.msra.mxu0 0
  %6472 = vmatprep.subr.bf16.mxu0 0
  %6473 = vmatpush1.bf16.msra.mxu0 0
  %6474 = vmatprep.subr.bf16.mxu0 0
  %6475 = vmatpush1.bf16.msra.mxu0 0
  %6476 = vmatprep.subr.bf16.mxu0 0
  %6477 = vmatpush1.bf16.msra.mxu0 0
  %6478 = vmatprep.subr.bf16.mxu0 0
  %6479 = vmatpush1.bf16.msra.mxu0 0
  %6480 = vmatprep.subr.bf16.mxu0 0
  %6481 = vmatpush1.bf16.msra.mxu0 0
  %6482 = vmatprep.subr.bf16.mxu0 0
  %6483 = vmatpush1.bf16.msra.mxu0 0
  %6484 = vmatprep.mubr.bf16.mxu0 0
  %6485 = vmatmul.mubr.bf16.gmra.mrb[0].mxu0 %v6450
  %v6486 = vpop.f32.mrb[0].mxu0
  %v6487 = vadd.f32 0.0, %v6486
  %v6488 = vpop.f32.mrb[0].mxu0
  %v6489 = vpop.f32.mrb[0].mxu0
  %v6490 = vpop.f32.mrb[0].mxu0
  %6491 = vdwg.mxu0
  %v6492 = vadd.f32 %v6415, %v6487
  %v6493 = vpack.c.bf16 %v6002, %v6002
  %v6494 = vld [vmem:[%s3 + $0xc0] sm:$0xf]
  %v6495 = vld [vmem:[%s3 + $0xc4] sm:$0xf]
  %v6496 = vld [vmem:[%s3 + $0xc8] sm:$0xf]
  %v6497 = vld [vmem:[%s3 + $0xcc] sm:$0xf]
  %v6498 = vld [vmem:[%s3 + $0xd0] sm:$0xf]
  %v6499 = vld [vmem:[%s3 + $0xd4] sm:$0xf]
  %v6500 = vld [vmem:[%s3 + $0xd8] sm:$0xf]
  %v6501 = vld [vmem:[%s3 + $0xdc] sm:$0xf]
  %v6510 = vunpack.c.l.b16 %v6494
  %v6511 = vunpack.c.l.b16 %v6495
  %v6512 = vunpack.c.l.b16 %v6496
  %v6513 = vunpack.c.l.b16 %v6497
  %v6514 = vunpack.c.l.b16 %v6498
  %v6515 = vunpack.c.l.b16 %v6499
  %v6516 = vunpack.c.l.b16 %v6500
  %v6517 = vunpack.c.l.b16 %v6501
  %v6518 = vpack.c.b16 %v6511, %v6510
  %v6519 = vpack.c.b16 %v6513, %v6512
  %v6520 = vpack.c.b16 %v6515, %v6514
  %v6521 = vpack.c.b16 %v6517, %v6516
  %v6527 = vsel %vm6074, %v6493, 0
  %6529 = vmatprep.subr.bf16.mxu0 0
  %6530 = vmatpush1.bf16.msra.mxu0 %v6518
  %6531 = vmatprep.subr.bf16.mxu0 0
  %6532 = vmatpush1.bf16.msra.mxu0 %v6519
  %6533 = vmatprep.subr.bf16.mxu0 0
  %6534 = vmatpush1.bf16.msra.mxu0 %v6520
  %6535 = vmatprep.subr.bf16.mxu0 0
  %6536 = vmatpush1.bf16.msra.mxu0 %v6521
  %6537 = vmatprep.subr.bf16.mxu0 0
  %6538 = vmatpush1.bf16.msra.mxu0 0
  %6539 = vmatprep.subr.bf16.mxu0 0
  %6540 = vmatpush1.bf16.msra.mxu0 0
  %6541 = vmatprep.subr.bf16.mxu0 0
  %6542 = vmatpush1.bf16.msra.mxu0 0
  %6543 = vmatprep.subr.bf16.mxu0 0
  %6544 = vmatpush1.bf16.msra.mxu0 0
  %6545 = vmatprep.subr.bf16.mxu0 0
  %6546 = vmatpush1.bf16.msra.mxu0 0
  %6547 = vmatprep.subr.bf16.mxu0 0
  %6548 = vmatpush1.bf16.msra.mxu0 0
  %6549 = vmatprep.subr.bf16.mxu0 0
  %6550 = vmatpush1.bf16.msra.mxu0 0
  %6551 = vmatprep.subr.bf16.mxu0 0
  %6552 = vmatpush1.bf16.msra.mxu0 0
  %6553 = vmatprep.subr.bf16.mxu0 0
  %6554 = vmatpush1.bf16.msra.mxu0 0
  %6555 = vmatprep.subr.bf16.mxu0 0
  %6556 = vmatpush1.bf16.msra.mxu0 0
  %6557 = vmatprep.subr.bf16.mxu0 0
  %6558 = vmatpush1.bf16.msra.mxu0 0
  %6559 = vmatprep.subr.bf16.mxu0 0
  %6560 = vmatpush1.bf16.msra.mxu0 0
  %6561 = vmatprep.mubr.bf16.mxu0 0
  %6562 = vmatmul.mubr.bf16.gmra.mrb[0].mxu0 %v6527
  %v6563 = vpop.f32.mrb[0].mxu0
  %v6564 = vadd.f32 0.0, %v6563
  %v6565 = vpop.f32.mrb[0].mxu0
  %v6566 = vpop.f32.mrb[0].mxu0
  %v6567 = vpop.f32.mrb[0].mxu0
  %6568 = vdwg.mxu0
  %v6569 = vadd.f32 %v6492, %v6564
  %v6570 = vpack.c.bf16 %v6003, %v6003
  %v6571 = vld [vmem:[%s3 + $0xe0] sm:$0xf]
  %v6572 = vld [vmem:[%s3 + $0xe4] sm:$0xf]
  %v6573 = vld [vmem:[%s3 + $0xe8] sm:$0xf]
  %v6574 = vld [vmem:[%s3 + $0xec] sm:$0xf]
  %v6575 = vld [vmem:[%s3 + $0xf0] sm:$0xf]
  %v6576 = vld [vmem:[%s3 + $0xf4] sm:$0xf]
  %v6577 = vld [vmem:[%s3 + $0xf8] sm:$0xf]
  %v6578 = vld [vmem:[%s3 + $0xfc] sm:$0xf]
  %v6587 = vunpack.c.l.b16 %v6571
  %v6588 = vunpack.c.l.b16 %v6572
  %v6589 = vunpack.c.l.b16 %v6573
  %v6590 = vunpack.c.l.b16 %v6574
  %v6591 = vunpack.c.l.b16 %v6575
  %v6592 = vunpack.c.l.b16 %v6576
  %v6593 = vunpack.c.l.b16 %v6577
  %v6594 = vunpack.c.l.b16 %v6578
  %v6595 = vpack.c.b16 %v6588, %v6587
  %v6596 = vpack.c.b16 %v6590, %v6589
  %v6597 = vpack.c.b16 %v6592, %v6591
  %v6598 = vpack.c.b16 %v6594, %v6593
  %v6604 = vsel %vm6074, %v6570, 0
  %6606 = vmatprep.subr.bf16.mxu0 0
  %6607 = vmatpush1.bf16.msra.mxu0 %v6595
  %6608 = vmatprep.subr.bf16.mxu0 0
  %6609 = vmatpush1.bf16.msra.mxu0 %v6596
  %6610 = vmatprep.subr.bf16.mxu0 0
  %6611 = vmatpush1.bf16.msra.mxu0 %v6597
  %6612 = vmatprep.subr.bf16.mxu0 0
  %6613 = vmatpush1.bf16.msra.mxu0 %v6598
  %6614 = vmatprep.subr.bf16.mxu0 0
  %6615 = vmatpush1.bf16.msra.mxu0 0
  %6616 = vmatprep.subr.bf16.mxu0 0
  %6617 = vmatpush1.bf16.msra.mxu0 0
  %6618 = vmatprep.subr.bf16.mxu0 0
  %6619 = vmatpush1.bf16.msra.mxu0 0
  %6620 = vmatprep.subr.bf16.mxu0 0
  %6621 = vmatpush1.bf16.msra.mxu0 0
  %6622 = vmatprep.subr.bf16.mxu0 0
  %6623 = vmatpush1.bf16.msra.mxu0 0
  %6624 = vmatprep.subr.bf16.mxu0 0
  %6625 = vmatpush1.bf16.msra.mxu0 0
  %6626 = vmatprep.subr.bf16.mxu0 0
  %6627 = vmatpush1.bf16.msra.mxu0 0
  %6628 = vmatprep.subr.bf16.mxu0 0
  %6629 = vmatpush1.bf16.msra.mxu0 0
  %6630 = vmatprep.subr.bf16.mxu0 0
  %6631 = vmatpush1.bf16.msra.mxu0 0
  %6632 = vmatprep.subr.bf16.mxu0 0
  %6633 = vmatpush1.bf16.msra.mxu0 0
  %6634 = vmatprep.subr.bf16.mxu0 0
  %6635 = vmatpush1.bf16.msra.mxu0 0
  %6636 = vmatprep.subr.bf16.mxu0 0
  %6637 = vmatpush1.bf16.msra.mxu0 0
  %6638 = vmatprep.mubr.bf16.mxu0 0
  %6639 = vmatmul.mubr.bf16.gmra.mrb[0].mxu0 %v6604
  %v6640 = vpop.f32.mrb[0].mxu0
  %v6641 = vadd.f32 0.0, %v6640
  %v6642 = vpop.f32.mrb[0].mxu0
  %v6643 = vpop.f32.mrb[0].mxu0
  %v6644 = vpop.f32.mrb[0].mxu0
  %6645 = vdwg.mxu0
  %v6646 = vadd.f32 %v6569, %v6641
  %v6647 = vpack.c.bf16 %v6004, %v6004
  %v6648 = vld [vmem:[%s3 + $0x100] sm:$0xf]
  %v6649 = vld [vmem:[%s3 + $0x104] sm:$0xf]
  %v6650 = vld [vmem:[%s3 + $0x108] sm:$0xf]
  %v6651 = vld [vmem:[%s3 + $0x10c] sm:$0xf]
  %v6652 = vld [vmem:[%s3 + $0x110] sm:$0xf]
  %v6653 = vld [vmem:[%s3 + $0x114] sm:$0xf]
  %v6654 = vld [vmem:[%s3 + $0x118] sm:$0xf]
  %v6655 = vld [vmem:[%s3 + $0x11c] sm:$0xf]
  %v6664 = vunpack.c.l.b16 %v6648
  %v6665 = vunpack.c.l.b16 %v6649
  %v6666 = vunpack.c.l.b16 %v6650
  %v6667 = vunpack.c.l.b16 %v6651
  %v6668 = vunpack.c.l.b16 %v6652
  %v6669 = vunpack.c.l.b16 %v6653
  %v6670 = vunpack.c.l.b16 %v6654
  %v6671 = vunpack.c.l.b16 %v6655
  %v6672 = vpack.c.b16 %v6665, %v6664
  %v6673 = vpack.c.b16 %v6667, %v6666
  %v6674 = vpack.c.b16 %v6669, %v6668
  %v6675 = vpack.c.b16 %v6671, %v6670
  %v6681 = vsel %vm6074, %v6647, 0
  %6683 = vmatprep.subr.bf16.mxu0 0
  %6684 = vmatpush1.bf16.msra.mxu0 %v6672
  %6685 = vmatprep.subr.bf16.mxu0 0
  %6686 = vmatpush1.bf16.msra.mxu0 %v6673
  %6687 = vmatprep.subr.bf16.mxu0 0
  %6688 = vmatpush1.bf16.msra.mxu0 %v6674
  %6689 = vmatprep.subr.bf16.mxu0 0
  %6690 = vmatpush1.bf16.msra.mxu0 %v6675
  %6691 = vmatprep.subr.bf16.mxu0 0
  %6692 = vmatpush1.bf16.msra.mxu0 0
  %6693 = vmatprep.subr.bf16.mxu0 0
  %6694 = vmatpush1.bf16.msra.mxu0 0
  %6695 = vmatprep.subr.bf16.mxu0 0
  %6696 = vmatpush1.bf16.msra.mxu0 0
  %6697 = vmatprep.subr.bf16.mxu0 0
  %6698 = vmatpush1.bf16.msra.mxu0 0
  %6699 = vmatprep.subr.bf16.mxu0 0
  %6700 = vmatpush1.bf16.msra.mxu0 0
  %6701 = vmatprep.subr.bf16.mxu0 0
  %6702 = vmatpush1.bf16.msra.mxu0 0
  %6703 = vmatprep.subr.bf16.mxu0 0
  %6704 = vmatpush1.bf16.msra.mxu0 0
  %6705 = vmatprep.subr.bf16.mxu0 0
  %6706 = vmatpush1.bf16.msra.mxu0 0
  %6707 = vmatprep.subr.bf16.mxu0 0
  %6708 = vmatpush1.bf16.msra.mxu0 0
  %6709 = vmatprep.subr.bf16.mxu0 0
  %6710 = vmatpush1.bf16.msra.mxu0 0
  %6711 = vmatprep.subr.bf16.mxu0 0
  %6712 = vmatpush1.bf16.msra.mxu0 0
  %6713 = vmatprep.subr.bf16.mxu0 0
  %6714 = vmatpush1.bf16.msra.mxu0 0
  %6715 = vmatprep.mubr.bf16.mxu0 0
  %6716 = vmatmul.mubr.bf16.gmra.mrb[0].mxu0 %v6681
  %v6717 = vpop.f32.mrb[0].mxu0
  %v6718 = vadd.f32 0.0, %v6717
  %v6719 = vpop.f32.mrb[0].mxu0
  %v6720 = vpop.f32.mrb[0].mxu0
  %v6721 = vpop.f32.mrb[0].mxu0
  %6722 = vdwg.mxu0
  %v6723 = vadd.f32 %v6646, %v6718
  %v6724 = vpack.c.bf16 %v6005, %v6005
  %v6725 = vld [vmem:[%s3 + $0x120] sm:$0xf]
  %v6726 = vld [vmem:[%s3 + $0x124] sm:$0xf]
  %v6727 = vld [vmem:[%s3 + $0x128] sm:$0xf]
  %v6728 = vld [vmem:[%s3 + $0x12c] sm:$0xf]
  %v6729 = vld [vmem:[%s3 + $0x130] sm:$0xf]
  %v6730 = vld [vmem:[%s3 + $0x134] sm:$0xf]
  %v6731 = vld [vmem:[%s3 + $0x138] sm:$0xf]
  %v6732 = vld [vmem:[%s3 + $0x13c] sm:$0xf]
  %v6741 = vunpack.c.l.b16 %v6725
  %v6742 = vunpack.c.l.b16 %v6726
  %v6743 = vunpack.c.l.b16 %v6727
  %v6744 = vunpack.c.l.b16 %v6728
  %v6745 = vunpack.c.l.b16 %v6729
  %v6746 = vunpack.c.l.b16 %v6730
  %v6747 = vunpack.c.l.b16 %v6731
  %v6748 = vunpack.c.l.b16 %v6732
  %v6749 = vpack.c.b16 %v6742, %v6741
  %v6750 = vpack.c.b16 %v6744, %v6743
  %v6751 = vpack.c.b16 %v6746, %v6745
  %v6752 = vpack.c.b16 %v6748, %v6747
  %v6758 = vsel %vm6074, %v6724, 0
  %6760 = vmatprep.subr.bf16.mxu0 0
  %6761 = vmatpush1.bf16.msra.mxu0 %v6749
  %6762 = vmatprep.subr.bf16.mxu0 0
  %6763 = vmatpush1.bf16.msra.mxu0 %v6750
  %6764 = vmatprep.subr.bf16.mxu0 0
  %6765 = vmatpush1.bf16.msra.mxu0 %v6751
  %6766 = vmatprep.subr.bf16.mxu0 0
  %6767 = vmatpush1.bf16.msra.mxu0 %v6752
  %6768 = vmatprep.subr.bf16.mxu0 0
  %6769 = vmatpush1.bf16.msra.mxu0 0
  %6770 = vmatprep.subr.bf16.mxu0 0
  %6771 = vmatpush1.bf16.msra.mxu0 0
  %6772 = vmatprep.subr.bf16.mxu0 0
  %6773 = vmatpush1.bf16.msra.mxu0 0
  %6774 = vmatprep.subr.bf16.mxu0 0
  %6775 = vmatpush1.bf16.msra.mxu0 0
  %6776 = vmatprep.subr.bf16.mxu0 0
  %6777 = vmatpush1.bf16.msra.mxu0 0
  %6778 = vmatprep.subr.bf16.mxu0 0
  %6779 = vmatpush1.bf16.msra.mxu0 0
  %6780 = vmatprep.subr.bf16.mxu0 0
  %6781 = vmatpush1.bf16.msra.mxu0 0
  %6782 = vmatprep.subr.bf16.mxu0 0
  %6783 = vmatpush1.bf16.msra.mxu0 0
  %6784 = vmatprep.subr.bf16.mxu0 0
  %6785 = vmatpush1.bf16.msra.mxu0 0
  %6786 = vmatprep.subr.bf16.mxu0 0
  %6787 = vmatpush1.bf16.msra.mxu0 0
  %6788 = vmatprep.subr.bf16.mxu0 0
  %6789 = vmatpush1.bf16.msra.mxu0 0
  %6790 = vmatprep.subr.bf16.mxu0 0
  %6791 = vmatpush1.bf16.msra.mxu0 0
  %6792 = vmatprep.mubr.bf16.mxu0 0
  %6793 = vmatmul.mubr.bf16.gmra.mrb[0].mxu0 %v6758
  %v6794 = vpop.f32.mrb[0].mxu0
  %v6795 = vadd.f32 0.0, %v6794
  %v6796 = vpop.f32.mrb[0].mxu0
  %v6797 = vpop.f32.mrb[0].mxu0
  %v6798 = vpop.f32.mrb[0].mxu0
  %6799 = vdwg.mxu0
  %v6800 = vadd.f32 %v6723, %v6795
  %v6801 = vpack.c.bf16 %v6006, %v6006
  %v6802 = vld [vmem:[%s3 + $0x140] sm:$0xf]
  %v6803 = vld [vmem:[%s3 + $0x144] sm:$0xf]
  %v6804 = vld [vmem:[%s3 + $0x148] sm:$0xf]
  %v6805 = vld [vmem:[%s3 + $0x14c] sm:$0xf]
  %v6806 = vld [vmem:[%s3 + $0x150] sm:$0xf]
  %v6807 = vld [vmem:[%s3 + $0x154] sm:$0xf]
  %v6808 = vld [vmem:[%s3 + $0x158] sm:$0xf]
  %v6809 = vld [vmem:[%s3 + $0x15c] sm:$0xf]
  %v6818 = vunpack.c.l.b16 %v6802
  %v6819 = vunpack.c.l.b16 %v6803
  %v6820 = vunpack.c.l.b16 %v6804
  %v6821 = vunpack.c.l.b16 %v6805
  %v6822 = vunpack.c.l.b16 %v6806
  %v6823 = vunpack.c.l.b16 %v6807
  %v6824 = vunpack.c.l.b16 %v6808
  %v6825 = vunpack.c.l.b16 %v6809
  %v6826 = vpack.c.b16 %v6819, %v6818
  %v6827 = vpack.c.b16 %v6821, %v6820
  %v6828 = vpack.c.b16 %v6823, %v6822
  %v6829 = vpack.c.b16 %v6825, %v6824
  %v6835 = vsel %vm6074, %v6801, 0
  %6837 = vmatprep.subr.bf16.mxu0 0
  %6838 = vmatpush1.bf16.msra.mxu0 %v6826
  %6839 = vmatprep.subr.bf16.mxu0 0
  %6840 = vmatpush1.bf16.msra.mxu0 %v6827
  %6841 = vmatprep.subr.bf16.mxu0 0
  %6842 = vmatpush1.bf16.msra.mxu0 %v6828
  %6843 = vmatprep.subr.bf16.mxu0 0
  %6844 = vmatpush1.bf16.msra.mxu0 %v6829
  %6845 = vmatprep.subr.bf16.mxu0 0
  %6846 = vmatpush1.bf16.msra.mxu0 0
  %6847 = vmatprep.subr.bf16.mxu0 0
  %6848 = vmatpush1.bf16.msra.mxu0 0
  %6849 = vmatprep.subr.bf16.mxu0 0
  %6850 = vmatpush1.bf16.msra.mxu0 0
  %6851 = vmatprep.subr.bf16.mxu0 0
  %6852 = vmatpush1.bf16.msra.mxu0 0
  %6853 = vmatprep.subr.bf16.mxu0 0
  %6854 = vmatpush1.bf16.msra.mxu0 0
  %6855 = vmatprep.subr.bf16.mxu0 0
  %6856 = vmatpush1.bf16.msra.mxu0 0
  %6857 = vmatprep.subr.bf16.mxu0 0
  %6858 = vmatpush1.bf16.msra.mxu0 0
  %6859 = vmatprep.subr.bf16.mxu0 0
  %6860 = vmatpush1.bf16.msra.mxu0 0
  %6861 = vmatprep.subr.bf16.mxu0 0
  %6862 = vmatpush1.bf16.msra.mxu0 0
  %6863 = vmatprep.subr.bf16.mxu0 0
  %6864 = vmatpush1.bf16.msra.mxu0 0
  %6865 = vmatprep.subr.bf16.mxu0 0
  %6866 = vmatpush1.bf16.msra.mxu0 0
  %6867 = vmatprep.subr.bf16.mxu0 0
  %6868 = vmatpush1.bf16.msra.mxu0 0
  %6869 = vmatprep.mubr.bf16.mxu0 0
  %6870 = vmatmul.mubr.bf16.gmra.mrb[0].mxu0 %v6835
  %v6871 = vpop.f32.mrb[0].mxu0
  %v6872 = vadd.f32 0.0, %v6871
  %v6873 = vpop.f32.mrb[0].mxu0
  %v6874 = vpop.f32.mrb[0].mxu0
  %v6875 = vpop.f32.mrb[0].mxu0
  %6876 = vdwg.mxu0
  %v6877 = vadd.f32 %v6800, %v6872
  %v6878 = vpack.c.bf16 %v6007, %v6007
  %v6879 = vld [vmem:[%s3 + $0x160] sm:$0xf]
  %v6880 = vld [vmem:[%s3 + $0x164] sm:$0xf]
  %v6881 = vld [vmem:[%s3 + $0x168] sm:$0xf]
  %v6882 = vld [vmem:[%s3 + $0x16c] sm:$0xf]
  %v6883 = vld [vmem:[%s3 + $0x170] sm:$0xf]
  %v6884 = vld [vmem:[%s3 + $0x174] sm:$0xf]
  %v6885 = vld [vmem:[%s3 + $0x178] sm:$0xf]
  %v6886 = vld [vmem:[%s3 + $0x17c] sm:$0xf]
  %v6895 = vunpack.c.l.b16 %v6879
  %v6896 = vunpack.c.l.b16 %v6880
  %v6897 = vunpack.c.l.b16 %v6881
  %v6898 = vunpack.c.l.b16 %v6882
  %v6899 = vunpack.c.l.b16 %v6883
  %v6900 = vunpack.c.l.b16 %v6884
  %v6901 = vunpack.c.l.b16 %v6885
  %v6902 = vunpack.c.l.b16 %v6886
  %v6903 = vpack.c.b16 %v6896, %v6895
  %v6904 = vpack.c.b16 %v6898, %v6897
  %v6905 = vpack.c.b16 %v6900, %v6899
  %v6906 = vpack.c.b16 %v6902, %v6901
  %v6912 = vsel %vm6074, %v6878, 0
  %6914 = vmatprep.subr.bf16.mxu0 0
  %6915 = vmatpush1.bf16.msra.mxu0 %v6903
  %6916 = vmatprep.subr.bf16.mxu0 0
  %6917 = vmatpush1.bf16.msra.mxu0 %v6904
  %6918 = vmatprep.subr.bf16.mxu0 0
  %6919 = vmatpush1.bf16.msra.mxu0 %v6905
  %6920 = vmatprep.subr.bf16.mxu0 0
  %6921 = vmatpush1.bf16.msra.mxu0 %v6906
  %6922 = vmatprep.subr.bf16.mxu0 0
  %6923 = vmatpush1.bf16.msra.mxu0 0
  %6924 = vmatprep.subr.bf16.mxu0 0
  %6925 = vmatpush1.bf16.msra.mxu0 0
  %6926 = vmatprep.subr.bf16.mxu0 0
  %6927 = vmatpush1.bf16.msra.mxu0 0
  %6928 = vmatprep.subr.bf16.mxu0 0
  %6929 = vmatpush1.bf16.msra.mxu0 0
  %6930 = vmatprep.subr.bf16.mxu0 0
  %6931 = vmatpush1.bf16.msra.mxu0 0
  %6932 = vmatprep.subr.bf16.mxu0 0
  %6933 = vmatpush1.bf16.msra.mxu0 0
  %6934 = vmatprep.subr.bf16.mxu0 0
  %6935 = vmatpush1.bf16.msra.mxu0 0
  %6936 = vmatprep.subr.bf16.mxu0 0
  %6937 = vmatpush1.bf16.msra.mxu0 0
  %6938 = vmatprep.subr.bf16.mxu0 0
  %6939 = vmatpush1.bf16.msra.mxu0 0
  %6940 = vmatprep.subr.bf16.mxu0 0
  %6941 = vmatpush1.bf16.msra.mxu0 0
  %6942 = vmatprep.subr.bf16.mxu0 0
  %6943 = vmatpush1.bf16.msra.mxu0 0
  %6944 = vmatprep.subr.bf16.mxu0 0
  %6945 = vmatpush1.bf16.msra.mxu0 0
  %6946 = vmatprep.mubr.bf16.mxu0 0
  %6947 = vmatmul.mubr.bf16.gmra.mrb[0].mxu0 %v6912
  %v6948 = vpop.f32.mrb[0].mxu0
  %v6949 = vadd.f32 0.0, %v6948
  %v6950 = vpop.f32.mrb[0].mxu0
  %v6951 = vpop.f32.mrb[0].mxu0
  %v6952 = vpop.f32.mrb[0].mxu0
  %6953 = vdwg.mxu0
  %v6954 = vadd.f32 %v6877, %v6949
  %v6955 = vpack.c.bf16 %v6008, %v6008
  %v6956 = vld [vmem:[%s3 + $0x180] sm:$0xf]
  %v6957 = vld [vmem:[%s3 + $0x184] sm:$0xf]
  %v6958 = vld [vmem:[%s3 + $0x188] sm:$0xf]
  %v6959 = vld [vmem:[%s3 + $0x18c] sm:$0xf]
  %v6960 = vld [vmem:[%s3 + $0x190] sm:$0xf]
  %v6961 = vld [vmem:[%s3 + $0x194] sm:$0xf]
  %v6962 = vld [vmem:[%s3 + $0x198] sm:$0xf]
  %v6963 = vld [vmem:[%s3 + $0x19c] sm:$0xf]
  %v6972 = vunpack.c.l.b16 %v6956
  %v6973 = vunpack.c.l.b16 %v6957
  %v6974 = vunpack.c.l.b16 %v6958
  %v6975 = vunpack.c.l.b16 %v6959
  %v6976 = vunpack.c.l.b16 %v6960
  %v6977 = vunpack.c.l.b16 %v6961
  %v6978 = vunpack.c.l.b16 %v6962
  %v6979 = vunpack.c.l.b16 %v6963
  %v6980 = vpack.c.b16 %v6973, %v6972
  %v6981 = vpack.c.b16 %v6975, %v6974
  %v6982 = vpack.c.b16 %v6977, %v6976
  %v6983 = vpack.c.b16 %v6979, %v6978
  %v6989 = vsel %vm6074, %v6955, 0
  %6991 = vmatprep.subr.bf16.mxu0 0
  %6992 = vmatpush1.bf16.msra.mxu0 %v6980
  %6993 = vmatprep.subr.bf16.mxu0 0
  %6994 = vmatpush1.bf16.msra.mxu0 %v6981
  %6995 = vmatprep.subr.bf16.mxu0 0
  %6996 = vmatpush1.bf16.msra.mxu0 %v6982
  %6997 = vmatprep.subr.bf16.mxu0 0
  %6998 = vmatpush1.bf16.msra.mxu0 %v6983
  %6999 = vmatprep.subr.bf16.mxu0 0
  %7000 = vmatpush1.bf16.msra.mxu0 0
  %7001 = vmatprep.subr.bf16.mxu0 0
  %7002 = vmatpush1.bf16.msra.mxu0 0
  %7003 = vmatprep.subr.bf16.mxu0 0
  %7004 = vmatpush1.bf16.msra.mxu0 0
  %7005 = vmatprep.subr.bf16.mxu0 0
  %7006 = vmatpush1.bf16.msra.mxu0 0
  %7007 = vmatprep.subr.bf16.mxu0 0
  %7008 = vmatpush1.bf16.msra.mxu0 0
  %7009 = vmatprep.subr.bf16.mxu0 0
  %7010 = vmatpush1.bf16.msra.mxu0 0
  %7011 = vmatprep.subr.bf16.mxu0 0
  %7012 = vmatpush1.bf16.msra.mxu0 0
  %7013 = vmatprep.subr.bf16.mxu0 0
  %7014 = vmatpush1.bf16.msra.mxu0 0
  %7015 = vmatprep.subr.bf16.mxu0 0
  %7016 = vmatpush1.bf16.msra.mxu0 0
  %7017 = vmatprep.subr.bf16.mxu0 0
  %7018 = vmatpush1.bf16.msra.mxu0 0
  %7019 = vmatprep.subr.bf16.mxu0 0
  %7020 = vmatpush1.bf16.msra.mxu0 0
  %7021 = vmatprep.subr.bf16.mxu0 0
  %7022 = vmatpush1.bf16.msra.mxu0 0
  %7023 = vmatprep.mubr.bf16.mxu0 0
  %7024 = vmatmul.mubr.bf16.gmra.mrb[0].mxu0 %v6989
  %v7025 = vpop.f32.mrb[0].mxu0
  %v7026 = vadd.f32 0.0, %v7025
  %v7027 = vpop.f32.mrb[0].mxu0
  %v7028 = vpop.f32.mrb[0].mxu0
  %v7029 = vpop.f32.mrb[0].mxu0
  %7030 = vdwg.mxu0
  %v7031 = vadd.f32 %v6954, %v7026
  %v7032 = vpack.c.bf16 %v6009, %v6009
  %v7033 = vld [vmem:[%s3 + $0x1a0] sm:$0xf]
  %v7034 = vld [vmem:[%s3 + $0x1a4] sm:$0xf]
  %v7035 = vld [vmem:[%s3 + $0x1a8] sm:$0xf]
  %v7036 = vld [vmem:[%s3 + $0x1ac] sm:$0xf]
  %v7037 = vld [vmem:[%s3 + $0x1b0] sm:$0xf]
  %v7038 = vld [vmem:[%s3 + $0x1b4] sm:$0xf]
  %v7039 = vld [vmem:[%s3 + $0x1b8] sm:$0xf]
  %v7040 = vld [vmem:[%s3 + $0x1bc] sm:$0xf]
  %v7049 = vunpack.c.l.b16 %v7033
  %v7050 = vunpack.c.l.b16 %v7034
  %v7051 = vunpack.c.l.b16 %v7035
  %v7052 = vunpack.c.l.b16 %v7036
  %v7053 = vunpack.c.l.b16 %v7037
  %v7054 = vunpack.c.l.b16 %v7038
  %v7055 = vunpack.c.l.b16 %v7039
  %v7056 = vunpack.c.l.b16 %v7040
  %v7057 = vpack.c.b16 %v7050, %v7049
  %v7058 = vpack.c.b16 %v7052, %v7051
  %v7059 = vpack.c.b16 %v7054, %v7053
  %v7060 = vpack.c.b16 %v7056, %v7055
  %v7066 = vsel %vm6074, %v7032, 0
  %7068 = vmatprep.subr.bf16.mxu0 0
  %7069 = vmatpush1.bf16.msra.mxu0 %v7057
  %7070 = vmatprep.subr.bf16.mxu0 0
  %7071 = vmatpush1.bf16.msra.mxu0 %v7058
  %7072 = vmatprep.subr.bf16.mxu0 0
  %7073 = vmatpush1.bf16.msra.mxu0 %v7059
  %7074 = vmatprep.subr.bf16.mxu0 0
  %7075 = vmatpush1.bf16.msra.mxu0 %v7060
  %7076 = vmatprep.subr.bf16.mxu0 0
  %7077 = vmatpush1.bf16.msra.mxu0 0
  %7078 = vmatprep.subr.bf16.mxu0 0
  %7079 = vmatpush1.bf16.msra.mxu0 0
  %7080 = vmatprep.subr.bf16.mxu0 0
  %7081 = vmatpush1.bf16.msra.mxu0 0
  %7082 = vmatprep.subr.bf16.mxu0 0
  %7083 = vmatpush1.bf16.msra.mxu0 0
  %7084 = vmatprep.subr.bf16.mxu0 0
  %7085 = vmatpush1.bf16.msra.mxu0 0
  %7086 = vmatprep.subr.bf16.mxu0 0
  %7087 = vmatpush1.bf16.msra.mxu0 0
  %7088 = vmatprep.subr.bf16.mxu0 0
  %7089 = vmatpush1.bf16.msra.mxu0 0
  %7090 = vmatprep.subr.bf16.mxu0 0
  %7091 = vmatpush1.bf16.msra.mxu0 0
  %7092 = vmatprep.subr.bf16.mxu0 0
  %7093 = vmatpush1.bf16.msra.mxu0 0
  %7094 = vmatprep.subr.bf16.mxu0 0
  %7095 = vmatpush1.bf16.msra.mxu0 0
  %7096 = vmatprep.subr.bf16.mxu0 0
  %7097 = vmatpush1.bf16.msra.mxu0 0
  %7098 = vmatprep.subr.bf16.mxu0 0
  %7099 = vmatpush1.bf16.msra.mxu0 0
  %7100 = vmatprep.mubr.bf16.mxu0 0
  %7101 = vmatmul.mubr.bf16.gmra.mrb[0].mxu0 %v7066
  %v7102 = vpop.f32.mrb[0].mxu0
  %v7103 = vadd.f32 0.0, %v7102
  %v7104 = vpop.f32.mrb[0].mxu0
  %v7105 = vpop.f32.mrb[0].mxu0
  %v7106 = vpop.f32.mrb[0].mxu0
  %7107 = vdwg.mxu0
  %v7108 = vadd.f32 %v7031, %v7103
  %v7109 = vpack.c.bf16 %v6010, %v6010
  %v7110 = vld [vmem:[%s3 + $0x1c0] sm:$0xf]
  %v7111 = vld [vmem:[%s3 + $0x1c4] sm:$0xf]
  %v7112 = vld [vmem:[%s3 + $0x1c8] sm:$0xf]
  %v7113 = vld [vmem:[%s3 + $0x1cc] sm:$0xf]
  %v7114 = vld [vmem:[%s3 + $0x1d0] sm:$0xf]
  %v7115 = vld [vmem:[%s3 + $0x1d4] sm:$0xf]
  %v7116 = vld [vmem:[%s3 + $0x1d8] sm:$0xf]
  %v7117 = vld [vmem:[%s3 + $0x1dc] sm:$0xf]
  %v7126 = vunpack.c.l.b16 %v7110
  %v7127 = vunpack.c.l.b16 %v7111
  %v7128 = vunpack.c.l.b16 %v7112
  %v7129 = vunpack.c.l.b16 %v7113
  %v7130 = vunpack.c.l.b16 %v7114
  %v7131 = vunpack.c.l.b16 %v7115
  %v7132 = vunpack.c.l.b16 %v7116
  %v7133 = vunpack.c.l.b16 %v7117
  %v7134 = vpack.c.b16 %v7127, %v7126
  %v7135 = vpack.c.b16 %v7129, %v7128
  %v7136 = vpack.c.b16 %v7131, %v7130
  %v7137 = vpack.c.b16 %v7133, %v7132
  %v7143 = vsel %vm6074, %v7109, 0
  %7145 = vmatprep.subr.bf16.mxu0 0
  %7146 = vmatpush1.bf16.msra.mxu0 %v7134
  %7147 = vmatprep.subr.bf16.mxu0 0
  %7148 = vmatpush1.bf16.msra.mxu0 %v7135
  %7149 = vmatprep.subr.bf16.mxu0 0
  %7150 = vmatpush1.bf16.msra.mxu0 %v7136
  %7151 = vmatprep.subr.bf16.mxu0 0
  %7152 = vmatpush1.bf16.msra.mxu0 %v7137
  %7153 = vmatprep.subr.bf16.mxu0 0
  %7154 = vmatpush1.bf16.msra.mxu0 0
  %7155 = vmatprep.subr.bf16.mxu0 0
  %7156 = vmatpush1.bf16.msra.mxu0 0
  %7157 = vmatprep.subr.bf16.mxu0 0
  %7158 = vmatpush1.bf16.msra.mxu0 0
  %7159 = vmatprep.subr.bf16.mxu0 0
  %7160 = vmatpush1.bf16.msra.mxu0 0
  %7161 = vmatprep.subr.bf16.mxu0 0
  %7162 = vmatpush1.bf16.msra.mxu0 0
  %7163 = vmatprep.subr.bf16.mxu0 0
  %7164 = vmatpush1.bf16.msra.mxu0 0
  %7165 = vmatprep.subr.bf16.mxu0 0
  %7166 = vmatpush1.bf16.msra.mxu0 0
  %7167 = vmatprep.subr.bf16.mxu0 0
  %7168 = vmatpush1.bf16.msra.mxu0 0
  %7169 = vmatprep.subr.bf16.mxu0 0
  %7170 = vmatpush1.bf16.msra.mxu0 0
  %7171 = vmatprep.subr.bf16.mxu0 0
  %7172 = vmatpush1.bf16.msra.mxu0 0
  %7173 = vmatprep.subr.bf16.mxu0 0
  %7174 = vmatpush1.bf16.msra.mxu0 0
  %7175 = vmatprep.subr.bf16.mxu0 0
  %7176 = vmatpush1.bf16.msra.mxu0 0
  %7177 = vmatprep.mubr.bf16.mxu0 0
  %7178 = vmatmul.mubr.bf16.gmra.mrb[0].mxu0 %v7143
  %v7179 = vpop.f32.mrb[0].mxu0
  %v7180 = vadd.f32 0.0, %v7179
  %v7181 = vpop.f32.mrb[0].mxu0
  %v7182 = vpop.f32.mrb[0].mxu0
  %v7183 = vpop.f32.mrb[0].mxu0
  %7184 = vdwg.mxu0
  %v7185 = vadd.f32 %v7108, %v7180
  %v7186 = vpack.c.bf16 %v6011, %v6011
  %v7187 = vld [vmem:[%s3 + $0x1e0] sm:$0xf]
  %v7188 = vld [vmem:[%s3 + $0x1e4] sm:$0xf]
  %v7189 = vld [vmem:[%s3 + $0x1e8] sm:$0xf]
  %v7190 = vld [vmem:[%s3 + $0x1ec] sm:$0xf]
  %v7191 = vld [vmem:[%s3 + $0x1f0] sm:$0xf]
  %v7192 = vld [vmem:[%s3 + $0x1f4] sm:$0xf]
  %v7193 = vld [vmem:[%s3 + $0x1f8] sm:$0xf]
  %v7194 = vld [vmem:[%s3 + $0x1fc] sm:$0xf]
  %v7203 = vunpack.c.l.b16 %v7187
  %v7204 = vunpack.c.l.b16 %v7188
  %v7205 = vunpack.c.l.b16 %v7189
  %v7206 = vunpack.c.l.b16 %v7190
  %v7207 = vunpack.c.l.b16 %v7191
  %v7208 = vunpack.c.l.b16 %v7192
  %v7209 = vunpack.c.l.b16 %v7193
  %v7210 = vunpack.c.l.b16 %v7194
  %v7211 = vpack.c.b16 %v7204, %v7203
  %v7212 = vpack.c.b16 %v7206, %v7205
  %v7213 = vpack.c.b16 %v7208, %v7207
  %v7214 = vpack.c.b16 %v7210, %v7209
  %v7220 = vsel %vm6074, %v7186, 0
  %7222 = vmatprep.subr.bf16.mxu0 0
  %7223 = vmatpush1.bf16.msra.mxu0 %v7211
  %7224 = vmatprep.subr.bf16.mxu0 0
  %7225 = vmatpush1.bf16.msra.mxu0 %v7212
  %7226 = vmatprep.subr.bf16.mxu0 0
  %7227 = vmatpush1.bf16.msra.mxu0 %v7213
  %7228 = vmatprep.subr.bf16.mxu0 0
  %7229 = vmatpush1.bf16.msra.mxu0 %v7214
  %7230 = vmatprep.subr.bf16.mxu0 0
  %7231 = vmatpush1.bf16.msra.mxu0 0
  %7232 = vmatprep.subr.bf16.mxu0 0
  %7233 = vmatpush1.bf16.msra.mxu0 0
  %7234 = vmatprep.subr.bf16.mxu0 0
  %7235 = vmatpush1.bf16.msra.mxu0 0
  %7236 = vmatprep.subr.bf16.mxu0 0
  %7237 = vmatpush1.bf16.msra.mxu0 0
  %7238 = vmatprep.subr.bf16.mxu0 0
  %7239 = vmatpush1.bf16.msra.mxu0 0
  %7240 = vmatprep.subr.bf16.mxu0 0
  %7241 = vmatpush1.bf16.msra.mxu0 0
  %7242 = vmatprep.subr.bf16.mxu0 0
  %7243 = vmatpush1.bf16.msra.mxu0 0
  %7244 = vmatprep.subr.bf16.mxu0 0
  %7245 = vmatpush1.bf16.msra.mxu0 0
  %7246 = vmatprep.subr.bf16.mxu0 0
  %7247 = vmatpush1.bf16.msra.mxu0 0
  %7248 = vmatprep.subr.bf16.mxu0 0
  %7249 = vmatpush1.bf16.msra.mxu0 0
  %7250 = vmatprep.subr.bf16.mxu0 0
  %7251 = vmatpush1.bf16.msra.mxu0 0
  %7252 = vmatprep.subr.bf16.mxu0 0
  %7253 = vmatpush1.bf16.msra.mxu0 0
  %7254 = vmatprep.mubr.bf16.mxu0 0
  %7255 = vmatmul.mubr.bf16.gmra.mrb[0].mxu0 %v7220
  %v7256 = vpop.f32.mrb[0].mxu0
  %v7257 = vadd.f32 0.0, %v7256
  %v7258 = vpop.f32.mrb[0].mxu0
  %v7259 = vpop.f32.mrb[0].mxu0
  %v7260 = vpop.f32.mrb[0].mxu0
  %7261 = vdwg.mxu0
  %v7262 = vadd.f32 %v7185, %v7257
  %v7263 = vpack.c.bf16 %v6012, %v6012
  %v7264 = vld [vmem:[%s3 + $0x200] sm:$0xf]
  %v7265 = vld [vmem:[%s3 + $0x204] sm:$0xf]
  %v7266 = vld [vmem:[%s3 + $0x208] sm:$0xf]
  %v7267 = vld [vmem:[%s3 + $0x20c] sm:$0xf]
  %v7268 = vld [vmem:[%s3 + $0x210] sm:$0xf]
  %v7269 = vld [vmem:[%s3 + $0x214] sm:$0xf]
  %v7270 = vld [vmem:[%s3 + $0x218] sm:$0xf]
  %v7271 = vld [vmem:[%s3 + $0x21c] sm:$0xf]
  %v7280 = vunpack.c.l.b16 %v7264
  %v7281 = vunpack.c.l.b16 %v7265
  %v7282 = vunpack.c.l.b16 %v7266
  %v7283 = vunpack.c.l.b16 %v7267
  %v7284 = vunpack.c.l.b16 %v7268
  %v7285 = vunpack.c.l.b16 %v7269
  %v7286 = vunpack.c.l.b16 %v7270
  %v7287 = vunpack.c.l.b16 %v7271
  %v7288 = vpack.c.b16 %v7281, %v7280
  %v7289 = vpack.c.b16 %v7283, %v7282
  %v7290 = vpack.c.b16 %v7285, %v7284
  %v7291 = vpack.c.b16 %v7287, %v7286
  %v7297 = vsel %vm6074, %v7263, 0
  %7299 = vmatprep.subr.bf16.mxu0 0
  %7300 = vmatpush1.bf16.msra.mxu0 %v7288
  %7301 = vmatprep.subr.bf16.mxu0 0
  %7302 = vmatpush1.bf16.msra.mxu0 %v7289
  %7303 = vmatprep.subr.bf16.mxu0 0
  %7304 = vmatpush1.bf16.msra.mxu0 %v7290
  %7305 = vmatprep.subr.bf16.mxu0 0
  %7306 = vmatpush1.bf16.msra.mxu0 %v7291
  %7307 = vmatprep.subr.bf16.mxu0 0
  %7308 = vmatpush1.bf16.msra.mxu0 0
  %7309 = vmatprep.subr.bf16.mxu0 0
  %7310 = vmatpush1.bf16.msra.mxu0 0
  %7311 = vmatprep.subr.bf16.mxu0 0
  %7312 = vmatpush1.bf16.msra.mxu0 0
  %7313 = vmatprep.subr.bf16.mxu0 0
  %7314 = vmatpush1.bf16.msra.mxu0 0
  %7315 = vmatprep.subr.bf16.mxu0 0
  %7316 = vmatpush1.bf16.msra.mxu0 0
  %7317 = vmatprep.subr.bf16.mxu0 0
  %7318 = vmatpush1.bf16.msra.mxu0 0
  %7319 = vmatprep.subr.bf16.mxu0 0
  %7320 = vmatpush1.bf16.msra.mxu0 0
  %7321 = vmatprep.subr.bf16.mxu0 0
  %7322 = vmatpush1.bf16.msra.mxu0 0
  %7323 = vmatprep.subr.bf16.mxu0 0
  %7324 = vmatpush1.bf16.msra.mxu0 0
  %7325 = vmatprep.subr.bf16.mxu0 0
  %7326 = vmatpush1.bf16.msra.mxu0 0
  %7327 = vmatprep.subr.bf16.mxu0 0
  %7328 = vmatpush1.bf16.msra.mxu0 0
  %7329 = vmatprep.subr.bf16.mxu0 0
  %7330 = vmatpush1.bf16.msra.mxu0 0
  %7331 = vmatprep.mubr.bf16.mxu0 0
  %7332 = vmatmul.mubr.bf16.gmra.mrb[0].mxu0 %v7297
  %v7333 = vpop.f32.mrb[0].mxu0
  %v7334 = vadd.f32 0.0, %v7333
  %v7335 = vpop.f32.mrb[0].mxu0
  %v7336 = vpop.f32.mrb[0].mxu0
  %v7337 = vpop.f32.mrb[0].mxu0
  %7338 = vdwg.mxu0
  %v7339 = vadd.f32 %v7262, %v7334
  %v7340 = vpack.c.bf16 %v6013, %v6013
  %v7341 = vld [vmem:[%s3 + $0x220] sm:$0xf]
  %v7342 = vld [vmem:[%s3 + $0x224] sm:$0xf]
  %v7343 = vld [vmem:[%s3 + $0x228] sm:$0xf]
  %v7344 = vld [vmem:[%s3 + $0x22c] sm:$0xf]
  %v7345 = vld [vmem:[%s3 + $0x230] sm:$0xf]
  %v7346 = vld [vmem:[%s3 + $0x234] sm:$0xf]
  %v7347 = vld [vmem:[%s3 + $0x238] sm:$0xf]
  %v7348 = vld [vmem:[%s3 + $0x23c] sm:$0xf]
  %v7357 = vunpack.c.l.b16 %v7341
  %v7358 = vunpack.c.l.b16 %v7342
  %v7359 = vunpack.c.l.b16 %v7343
  %v7360 = vunpack.c.l.b16 %v7344
  %v7361 = vunpack.c.l.b16 %v7345
  %v7362 = vunpack.c.l.b16 %v7346
  %v7363 = vunpack.c.l.b16 %v7347
  %v7364 = vunpack.c.l.b16 %v7348
  %v7365 = vpack.c.b16 %v7358, %v7357
  %v7366 = vpack.c.b16 %v7360, %v7359
  %v7367 = vpack.c.b16 %v7362, %v7361
  %v7368 = vpack.c.b16 %v7364, %v7363
  %v7374 = vsel %vm6074, %v7340, 0
  %7376 = vmatprep.subr.bf16.mxu0 0
  %7377 = vmatpush1.bf16.msra.mxu0 %v7365
  %7378 = vmatprep.subr.bf16.mxu0 0
  %7379 = vmatpush1.bf16.msra.mxu0 %v7366
  %7380 = vmatprep.subr.bf16.mxu0 0
  %7381 = vmatpush1.bf16.msra.mxu0 %v7367
  %7382 = vmatprep.subr.bf16.mxu0 0
  %7383 = vmatpush1.bf16.msra.mxu0 %v7368
  %7384 = vmatprep.subr.bf16.mxu0 0
  %7385 = vmatpush1.bf16.msra.mxu0 0
  %7386 = vmatprep.subr.bf16.mxu0 0
  %7387 = vmatpush1.bf16.msra.mxu0 0
  %7388 = vmatprep.subr.bf16.mxu0 0
  %7389 = vmatpush1.bf16.msra.mxu0 0
  %7390 = vmatprep.subr.bf16.mxu0 0
  %7391 = vmatpush1.bf16.msra.mxu0 0
  %7392 = vmatprep.subr.bf16.mxu0 0
  %7393 = vmatpush1.bf16.msra.mxu0 0
  %7394 = vmatprep.subr.bf16.mxu0 0
  %7395 = vmatpush1.bf16.msra.mxu0 0
  %7396 = vmatprep.subr.bf16.mxu0 0
  %7397 = vmatpush1.bf16.msra.mxu0 0
  %7398 = vmatprep.subr.bf16.mxu0 0
  %7399 = vmatpush1.bf16.msra.mxu0 0
  %7400 = vmatprep.subr.bf16.mxu0 0
  %7401 = vmatpush1.bf16.msra.mxu0 0
  %7402 = vmatprep.subr.bf16.mxu0 0
  %7403 = vmatpush1.bf16.msra.mxu0 0
  %7404 = vmatprep.subr.bf16.mxu0 0
  %7405 = vmatpush1.bf16.msra.mxu0 0
  %7406 = vmatprep.subr.bf16.mxu0 0
  %7407 = vmatpush1.bf16.msra.mxu0 0
  %7408 = vmatprep.mubr.bf16.mxu0 0
  %7409 = vmatmul.mubr.bf16.gmra.mrb[0].mxu0 %v7374
  %v7410 = vpop.f32.mrb[0].mxu0
  %v7411 = vadd.f32 0.0, %v7410
  %v7412 = vpop.f32.mrb[0].mxu0
  %v7413 = vpop.f32.mrb[0].mxu0
  %v7414 = vpop.f32.mrb[0].mxu0
  %7415 = vdwg.mxu0
  %v7416 = vadd.f32 %v7339, %v7411
  %v7417 = vpack.c.bf16 %v6014, %v6014
  %v7418 = vld [vmem:[%s3 + $0x240] sm:$0xf]
  %v7419 = vld [vmem:[%s3 + $0x244] sm:$0xf]
  %v7420 = vld [vmem:[%s3 + $0x248] sm:$0xf]
  %v7421 = vld [vmem:[%s3 + $0x24c] sm:$0xf]
  %v7422 = vld [vmem:[%s3 + $0x250] sm:$0xf]
  %v7423 = vld [vmem:[%s3 + $0x254] sm:$0xf]
  %v7424 = vld [vmem:[%s3 + $0x258] sm:$0xf]
  %v7425 = vld [vmem:[%s3 + $0x25c] sm:$0xf]
  %v7434 = vunpack.c.l.b16 %v7418
  %v7435 = vunpack.c.l.b16 %v7419
  %v7436 = vunpack.c.l.b16 %v7420
  %v7437 = vunpack.c.l.b16 %v7421
  %v7438 = vunpack.c.l.b16 %v7422
  %v7439 = vunpack.c.l.b16 %v7423
  %v7440 = vunpack.c.l.b16 %v7424
  %v7441 = vunpack.c.l.b16 %v7425
  %v7442 = vpack.c.b16 %v7435, %v7434
  %v7443 = vpack.c.b16 %v7437, %v7436
  %v7444 = vpack.c.b16 %v7439, %v7438
  %v7445 = vpack.c.b16 %v7441, %v7440
  %v7451 = vsel %vm6074, %v7417, 0
  %7453 = vmatprep.subr.bf16.mxu0 0
  %7454 = vmatpush1.bf16.msra.mxu0 %v7442
  %7455 = vmatprep.subr.bf16.mxu0 0
  %7456 = vmatpush1.bf16.msra.mxu0 %v7443
  %7457 = vmatprep.subr.bf16.mxu0 0
  %7458 = vmatpush1.bf16.msra.mxu0 %v7444
  %7459 = vmatprep.subr.bf16.mxu0 0
  %7460 = vmatpush1.bf16.msra.mxu0 %v7445
  %7461 = vmatprep.subr.bf16.mxu0 0
  %7462 = vmatpush1.bf16.msra.mxu0 0
  %7463 = vmatprep.subr.bf16.mxu0 0
  %7464 = vmatpush1.bf16.msra.mxu0 0
  %7465 = vmatprep.subr.bf16.mxu0 0
  %7466 = vmatpush1.bf16.msra.mxu0 0
  %7467 = vmatprep.subr.bf16.mxu0 0
  %7468 = vmatpush1.bf16.msra.mxu0 0
  %7469 = vmatprep.subr.bf16.mxu0 0
  %7470 = vmatpush1.bf16.msra.mxu0 0
  %7471 = vmatprep.subr.bf16.mxu0 0
  %7472 = vmatpush1.bf16.msra.mxu0 0
  %7473 = vmatprep.subr.bf16.mxu0 0
  %7474 = vmatpush1.bf16.msra.mxu0 0
  %7475 = vmatprep.subr.bf16.mxu0 0
  %7476 = vmatpush1.bf16.msra.mxu0 0
  %7477 = vmatprep.subr.bf16.mxu0 0
  %7478 = vmatpush1.bf16.msra.mxu0 0
  %7479 = vmatprep.subr.bf16.mxu0 0
  %7480 = vmatpush1.bf16.msra.mxu0 0
  %7481 = vmatprep.subr.bf16.mxu0 0
  %7482 = vmatpush1.bf16.msra.mxu0 0
  %7483 = vmatprep.subr.bf16.mxu0 0
  %7484 = vmatpush1.bf16.msra.mxu0 0
  %7485 = vmatprep.mubr.bf16.mxu0 0
  %7486 = vmatmul.mubr.bf16.gmra.mrb[0].mxu0 %v7451
  %v7487 = vpop.f32.mrb[0].mxu0
  %v7488 = vadd.f32 0.0, %v7487
  %v7489 = vpop.f32.mrb[0].mxu0
  %v7490 = vpop.f32.mrb[0].mxu0
  %v7491 = vpop.f32.mrb[0].mxu0
  %7492 = vdwg.mxu0
  %v7493 = vadd.f32 %v7416, %v7488
  %v7494 = vpack.c.bf16 %v6015, %v6015
  %v7495 = vld [vmem:[%s3 + $0x260] sm:$0xf]
  %v7496 = vld [vmem:[%s3 + $0x264] sm:$0xf]
  %v7497 = vld [vmem:[%s3 + $0x268] sm:$0xf]
  %v7498 = vld [vmem:[%s3 + $0x26c] sm:$0xf]
  %v7499 = vld [vmem:[%s3 + $0x270] sm:$0xf]
  %v7500 = vld [vmem:[%s3 + $0x274] sm:$0xf]
  %v7501 = vld [vmem:[%s3 + $0x278] sm:$0xf]
  %v7502 = vld [vmem:[%s3 + $0x27c] sm:$0xf]
  %v7511 = vunpack.c.l.b16 %v7495
  %v7512 = vunpack.c.l.b16 %v7496
  %v7513 = vunpack.c.l.b16 %v7497
  %v7514 = vunpack.c.l.b16 %v7498
  %v7515 = vunpack.c.l.b16 %v7499
  %v7516 = vunpack.c.l.b16 %v7500
  %v7517 = vunpack.c.l.b16 %v7501
  %v7518 = vunpack.c.l.b16 %v7502
  %v7519 = vpack.c.b16 %v7512, %v7511
  %v7520 = vpack.c.b16 %v7514, %v7513
  %v7521 = vpack.c.b16 %v7516, %v7515
  %v7522 = vpack.c.b16 %v7518, %v7517
  %v7528 = vsel %vm6074, %v7494, 0
  %7530 = vmatprep.subr.bf16.mxu0 0
  %7531 = vmatpush1.bf16.msra.mxu0 %v7519
  %7532 = vmatprep.subr.bf16.mxu0 0
  %7533 = vmatpush1.bf16.msra.mxu0 %v7520
  %7534 = vmatprep.subr.bf16.mxu0 0
  %7535 = vmatpush1.bf16.msra.mxu0 %v7521
  %7536 = vmatprep.subr.bf16.mxu0 0
  %7537 = vmatpush1.bf16.msra.mxu0 %v7522
  %7538 = vmatprep.subr.bf16.mxu0 0
  %7539 = vmatpush1.bf16.msra.mxu0 0
  %7540 = vmatprep.subr.bf16.mxu0 0
  %7541 = vmatpush1.bf16.msra.mxu0 0
  %7542 = vmatprep.subr.bf16.mxu0 0
  %7543 = vmatpush1.bf16.msra.mxu0 0
  %7544 = vmatprep.subr.bf16.mxu0 0
  %7545 = vmatpush1.bf16.msra.mxu0 0
  %7546 = vmatprep.subr.bf16.mxu0 0
  %7547 = vmatpush1.bf16.msra.mxu0 0
  %7548 = vmatprep.subr.bf16.mxu0 0
  %7549 = vmatpush1.bf16.msra.mxu0 0
  %7550 = vmatprep.subr.bf16.mxu0 0
  %7551 = vmatpush1.bf16.msra.mxu0 0
  %7552 = vmatprep.subr.bf16.mxu0 0
  %7553 = vmatpush1.bf16.msra.mxu0 0
  %7554 = vmatprep.subr.bf16.mxu0 0
  %7555 = vmatpush1.bf16.msra.mxu0 0
  %7556 = vmatprep.subr.bf16.mxu0 0
  %7557 = vmatpush1.bf16.msra.mxu0 0
  %7558 = vmatprep.subr.bf16.mxu0 0
  %7559 = vmatpush1.bf16.msra.mxu0 0
  %7560 = vmatprep.subr.bf16.mxu0 0
  %7561 = vmatpush1.bf16.msra.mxu0 0
  %7562 = vmatprep.mubr.bf16.mxu0 0
  %7563 = vmatmul.mubr.bf16.gmra.mrb[0].mxu0 %v7528
  %v7564 = vpop.f32.mrb[0].mxu0
  %v7565 = vadd.f32 0.0, %v7564
  %v7566 = vpop.f32.mrb[0].mxu0
  %v7567 = vpop.f32.mrb[0].mxu0
  %v7568 = vpop.f32.mrb[0].mxu0
  %7569 = vdwg.mxu0
  %v7570 = vadd.f32 %v7493, %v7565
  %v7571 = vpack.c.bf16 %v6016, %v6016
  %v7572 = vld [vmem:[%s3 + $0x280] sm:$0xf]
  %v7573 = vld [vmem:[%s3 + $0x284] sm:$0xf]
  %v7574 = vld [vmem:[%s3 + $0x288] sm:$0xf]
  %v7575 = vld [vmem:[%s3 + $0x28c] sm:$0xf]
  %v7576 = vld [vmem:[%s3 + $0x290] sm:$0xf]
  %v7577 = vld [vmem:[%s3 + $0x294] sm:$0xf]
  %v7578 = vld [vmem:[%s3 + $0x298] sm:$0xf]
  %v7579 = vld [vmem:[%s3 + $0x29c] sm:$0xf]
  %v7588 = vunpack.c.l.b16 %v7572
  %v7589 = vunpack.c.l.b16 %v7573
  %v7590 = vunpack.c.l.b16 %v7574
  %v7591 = vunpack.c.l.b16 %v7575
  %v7592 = vunpack.c.l.b16 %v7576
  %v7593 = vunpack.c.l.b16 %v7577
  %v7594 = vunpack.c.l.b16 %v7578
  %v7595 = vunpack.c.l.b16 %v7579
  %v7596 = vpack.c.b16 %v7589, %v7588
  %v7597 = vpack.c.b16 %v7591, %v7590
  %v7598 = vpack.c.b16 %v7593, %v7592
  %v7599 = vpack.c.b16 %v7595, %v7594
  %v7605 = vsel %vm6074, %v7571, 0
  %7607 = vmatprep.subr.bf16.mxu0 0
  %7608 = vmatpush1.bf16.msra.mxu0 %v7596
  %7609 = vmatprep.subr.bf16.mxu0 0
  %7610 = vmatpush1.bf16.msra.mxu0 %v7597
  %7611 = vmatprep.subr.bf16.mxu0 0
  %7612 = vmatpush1.bf16.msra.mxu0 %v7598
  %7613 = vmatprep.subr.bf16.mxu0 0
  %7614 = vmatpush1.bf16.msra.mxu0 %v7599
  %7615 = vmatprep.subr.bf16.mxu0 0
  %7616 = vmatpush1.bf16.msra.mxu0 0
  %7617 = vmatprep.subr.bf16.mxu0 0
  %7618 = vmatpush1.bf16.msra.mxu0 0
  %7619 = vmatprep.subr.bf16.mxu0 0
  %7620 = vmatpush1.bf16.msra.mxu0 0
  %7621 = vmatprep.subr.bf16.mxu0 0
  %7622 = vmatpush1.bf16.msra.mxu0 0
  %7623 = vmatprep.subr.bf16.mxu0 0
  %7624 = vmatpush1.bf16.msra.mxu0 0
  %7625 = vmatprep.subr.bf16.mxu0 0
  %7626 = vmatpush1.bf16.msra.mxu0 0
  %7627 = vmatprep.subr.bf16.mxu0 0
  %7628 = vmatpush1.bf16.msra.mxu0 0
  %7629 = vmatprep.subr.bf16.mxu0 0
  %7630 = vmatpush1.bf16.msra.mxu0 0
  %7631 = vmatprep.subr.bf16.mxu0 0
  %7632 = vmatpush1.bf16.msra.mxu0 0
  %7633 = vmatprep.subr.bf16.mxu0 0
  %7634 = vmatpush1.bf16.msra.mxu0 0
  %7635 = vmatprep.subr.bf16.mxu0 0
  %7636 = vmatpush1.bf16.msra.mxu0 0
  %7637 = vmatprep.subr.bf16.mxu0 0
  %7638 = vmatpush1.bf16.msra.mxu0 0
  %7639 = vmatprep.mubr.bf16.mxu0 0
  %7640 = vmatmul.mubr.bf16.gmra.mrb[0].mxu0 %v7605
  %v7641 = vpop.f32.mrb[0].mxu0
  %v7642 = vadd.f32 0.0, %v7641
  %v7643 = vpop.f32.mrb[0].mxu0
  %v7644 = vpop.f32.mrb[0].mxu0
  %v7645 = vpop.f32.mrb[0].mxu0
  %7646 = vdwg.mxu0
  %v7647 = vadd.f32 %v7570, %v7642
  %v7648 = vpack.c.bf16 %v6017, %v6017
  %v7649 = vld [vmem:[%s3 + $0x2a0] sm:$0xf]
  %v7650 = vld [vmem:[%s3 + $0x2a4] sm:$0xf]
  %v7651 = vld [vmem:[%s3 + $0x2a8] sm:$0xf]
  %v7652 = vld [vmem:[%s3 + $0x2ac] sm:$0xf]
  %v7653 = vld [vmem:[%s3 + $0x2b0] sm:$0xf]
  %v7654 = vld [vmem:[%s3 + $0x2b4] sm:$0xf]
  %v7655 = vld [vmem:[%s3 + $0x2b8] sm:$0xf]
  %v7656 = vld [vmem:[%s3 + $0x2bc] sm:$0xf]
  %v7665 = vunpack.c.l.b16 %v7649
  %v7666 = vunpack.c.l.b16 %v7650
  %v7667 = vunpack.c.l.b16 %v7651
  %v7668 = vunpack.c.l.b16 %v7652
  %v7669 = vunpack.c.l.b16 %v7653
  %v7670 = vunpack.c.l.b16 %v7654
  %v7671 = vunpack.c.l.b16 %v7655
  %v7672 = vunpack.c.l.b16 %v7656
  %v7673 = vpack.c.b16 %v7666, %v7665
  %v7674 = vpack.c.b16 %v7668, %v7667
  %v7675 = vpack.c.b16 %v7670, %v7669
  %v7676 = vpack.c.b16 %v7672, %v7671
  %v7682 = vsel %vm6074, %v7648, 0
  %7684 = vmatprep.subr.bf16.mxu0 0
  %7685 = vmatpush1.bf16.msra.mxu0 %v7673
  %7686 = vmatprep.subr.bf16.mxu0 0
  %7687 = vmatpush1.bf16.msra.mxu0 %v7674
  %7688 = vmatprep.subr.bf16.mxu0 0
  %7689 = vmatpush1.bf16.msra.mxu0 %v7675
  %7690 = vmatprep.subr.bf16.mxu0 0
  %7691 = vmatpush1.bf16.msra.mxu0 %v7676
  %7692 = vmatprep.subr.bf16.mxu0 0
  %7693 = vmatpush1.bf16.msra.mxu0 0
  %7694 = vmatprep.subr.bf16.mxu0 0
  %7695 = vmatpush1.bf16.msra.mxu0 0
  %7696 = vmatprep.subr.bf16.mxu0 0
  %7697 = vmatpush1.bf16.msra.mxu0 0
  %7698 = vmatprep.subr.bf16.mxu0 0
  %7699 = vmatpush1.bf16.msra.mxu0 0
  %7700 = vmatprep.subr.bf16.mxu0 0
  %7701 = vmatpush1.bf16.msra.mxu0 0
  %7702 = vmatprep.subr.bf16.mxu0 0
  %7703 = vmatpush1.bf16.msra.mxu0 0
  %7704 = vmatprep.subr.bf16.mxu0 0
  %7705 = vmatpush1.bf16.msra.mxu0 0
  %7706 = vmatprep.subr.bf16.mxu0 0
  %7707 = vmatpush1.bf16.msra.mxu0 0
  %7708 = vmatprep.subr.bf16.mxu0 0
  %7709 = vmatpush1.bf16.msra.mxu0 0
  %7710 = vmatprep.subr.bf16.mxu0 0
  %7711 = vmatpush1.bf16.msra.mxu0 0
  %7712 = vmatprep.subr.bf16.mxu0 0
  %7713 = vmatpush1.bf16.msra.mxu0 0
  %7714 = vmatprep.subr.bf16.mxu0 0
  %7715 = vmatpush1.bf16.msra.mxu0 0
  %7716 = vmatprep.mubr.bf16.mxu0 0
  %7717 = vmatmul.mubr.bf16.gmra.mrb[0].mxu0 %v7682
  %v7718 = vpop.f32.mrb[0].mxu0
  %v7719 = vadd.f32 0.0, %v7718
  %v7720 = vpop.f32.mrb[0].mxu0
  %v7721 = vpop.f32.mrb[0].mxu0
  %v7722 = vpop.f32.mrb[0].mxu0
  %7723 = vdwg.mxu0
  %v7724 = vadd.f32 %v7647, %v7719
  %v7725 = vpack.c.bf16 %v6018, %v6018
  %v7726 = vld [vmem:[%s3 + $0x2c0] sm:$0xf]
  %v7727 = vld [vmem:[%s3 + $0x2c4] sm:$0xf]
  %v7728 = vld [vmem:[%s3 + $0x2c8] sm:$0xf]
  %v7729 = vld [vmem:[%s3 + $0x2cc] sm:$0xf]
  %v7730 = vld [vmem:[%s3 + $0x2d0] sm:$0xf]
  %v7731 = vld [vmem:[%s3 + $0x2d4] sm:$0xf]
  %v7732 = vld [vmem:[%s3 + $0x2d8] sm:$0xf]
  %v7733 = vld [vmem:[%s3 + $0x2dc] sm:$0xf]
  %v7742 = vunpack.c.l.b16 %v7726
  %v7743 = vunpack.c.l.b16 %v7727
  %v7744 = vunpack.c.l.b16 %v7728
  %v7745 = vunpack.c.l.b16 %v7729
  %v7746 = vunpack.c.l.b16 %v7730
  %v7747 = vunpack.c.l.b16 %v7731
  %v7748 = vunpack.c.l.b16 %v7732
  %v7749 = vunpack.c.l.b16 %v7733
  %v7750 = vpack.c.b16 %v7743, %v7742
  %v7751 = vpack.c.b16 %v7745, %v7744
  %v7752 = vpack.c.b16 %v7747, %v7746
  %v7753 = vpack.c.b16 %v7749, %v7748
  %v7759 = vsel %vm6074, %v7725, 0
  %7761 = vmatprep.subr.bf16.mxu0 0
  %7762 = vmatpush1.bf16.msra.mxu0 %v7750
  %7763 = vmatprep.subr.bf16.mxu0 0
  %7764 = vmatpush1.bf16.msra.mxu0 %v7751
  %7765 = vmatprep.subr.bf16.mxu0 0
  %7766 = vmatpush1.bf16.msra.mxu0 %v7752
  %7767 = vmatprep.subr.bf16.mxu0 0
  %7768 = vmatpush1.bf16.msra.mxu0 %v7753
  %7769 = vmatprep.subr.bf16.mxu0 0
  %7770 = vmatpush1.bf16.msra.mxu0 0
  %7771 = vmatprep.subr.bf16.mxu0 0
  %7772 = vmatpush1.bf16.msra.mxu0 0
  %7773 = vmatprep.subr.bf16.mxu0 0
  %7774 = vmatpush1.bf16.msra.mxu0 0
  %7775 = vmatprep.subr.bf16.mxu0 0
  %7776 = vmatpush1.bf16.msra.mxu0 0
  %7777 = vmatprep.subr.bf16.mxu0 0
  %7778 = vmatpush1.bf16.msra.mxu0 0
  %7779 = vmatprep.subr.bf16.mxu0 0
  %7780 = vmatpush1.bf16.msra.mxu0 0
  %7781 = vmatprep.subr.bf16.mxu0 0
  %7782 = vmatpush1.bf16.msra.mxu0 0
  %7783 = vmatprep.subr.bf16.mxu0 0
  %7784 = vmatpush1.bf16.msra.mxu0 0
  %7785 = vmatprep.subr.bf16.mxu0 0
  %7786 = vmatpush1.bf16.msra.mxu0 0
  %7787 = vmatprep.subr.bf16.mxu0 0
  %7788 = vmatpush1.bf16.msra.mxu0 0
  %7789 = vmatprep.subr.bf16.mxu0 0
  %7790 = vmatpush1.bf16.msra.mxu0 0
  %7791 = vmatprep.subr.bf16.mxu0 0
  %7792 = vmatpush1.bf16.msra.mxu0 0
  %7793 = vmatprep.mubr.bf16.mxu0 0
  %7794 = vmatmul.mubr.bf16.gmra.mrb[0].mxu0 %v7759
  %v7795 = vpop.f32.mrb[0].mxu0
  %v7796 = vadd.f32 0.0, %v7795
  %v7797 = vpop.f32.mrb[0].mxu0
  %v7798 = vpop.f32.mrb[0].mxu0
  %v7799 = vpop.f32.mrb[0].mxu0
  %7800 = vdwg.mxu0
  %v7801 = vadd.f32 %v7724, %v7796
  %v7802 = vpack.c.bf16 %v6019, %v6019
  %v7803 = vld [vmem:[%s3 + $0x2e0] sm:$0xf]
  %v7804 = vld [vmem:[%s3 + $0x2e4] sm:$0xf]
  %v7805 = vld [vmem:[%s3 + $0x2e8] sm:$0xf]
  %v7806 = vld [vmem:[%s3 + $0x2ec] sm:$0xf]
  %v7807 = vld [vmem:[%s3 + $0x2f0] sm:$0xf]
  %v7808 = vld [vmem:[%s3 + $0x2f4] sm:$0xf]
  %v7809 = vld [vmem:[%s3 + $0x2f8] sm:$0xf]
  %v7810 = vld [vmem:[%s3 + $0x2fc] sm:$0xf]
  %v7819 = vunpack.c.l.b16 %v7803
  %v7820 = vunpack.c.l.b16 %v7804
  %v7821 = vunpack.c.l.b16 %v7805
  %v7822 = vunpack.c.l.b16 %v7806
  %v7823 = vunpack.c.l.b16 %v7807
  %v7824 = vunpack.c.l.b16 %v7808
  %v7825 = vunpack.c.l.b16 %v7809
  %v7826 = vunpack.c.l.b16 %v7810
  %v7827 = vpack.c.b16 %v7820, %v7819
  %v7828 = vpack.c.b16 %v7822, %v7821
  %v7829 = vpack.c.b16 %v7824, %v7823
  %v7830 = vpack.c.b16 %v7826, %v7825
  %v7836 = vsel %vm6074, %v7802, 0
  %7838 = vmatprep.subr.bf16.mxu0 0
  %7839 = vmatpush1.bf16.msra.mxu0 %v7827
  %7840 = vmatprep.subr.bf16.mxu0 0
  %7841 = vmatpush1.bf16.msra.mxu0 %v7828
  %7842 = vmatprep.subr.bf16.mxu0 0
  %7843 = vmatpush1.bf16.msra.mxu0 %v7829
  %7844 = vmatprep.subr.bf16.mxu0 0
  %7845 = vmatpush1.bf16.msra.mxu0 %v7830
  %7846 = vmatprep.subr.bf16.mxu0 0
  %7847 = vmatpush1.bf16.msra.mxu0 0
  %7848 = vmatprep.subr.bf16.mxu0 0
  %7849 = vmatpush1.bf16.msra.mxu0 0
  %7850 = vmatprep.subr.bf16.mxu0 0
  %7851 = vmatpush1.bf16.msra.mxu0 0
  %7852 = vmatprep.subr.bf16.mxu0 0
  %7853 = vmatpush1.bf16.msra.mxu0 0
  %7854 = vmatprep.subr.bf16.mxu0 0
  %7855 = vmatpush1.bf16.msra.mxu0 0
  %7856 = vmatprep.subr.bf16.mxu0 0
  %7857 = vmatpush1.bf16.msra.mxu0 0
  %7858 = vmatprep.subr.bf16.mxu0 0
  %7859 = vmatpush1.bf16.msra.mxu0 0
  %7860 = vmatprep.subr.bf16.mxu0 0
  %7861 = vmatpush1.bf16.msra.mxu0 0
  %7862 = vmatprep.subr.bf16.mxu0 0
  %7863 = vmatpush1.bf16.msra.mxu0 0
  %7864 = vmatprep.subr.bf16.mxu0 0
  %7865 = vmatpush1.bf16.msra.mxu0 0
  %7866 = vmatprep.subr.bf16.mxu0 0
  %7867 = vmatpush1.bf16.msra.mxu0 0
  %7868 = vmatprep.subr.bf16.mxu0 0
  %7869 = vmatpush1.bf16.msra.mxu0 0
  %7870 = vmatprep.mubr.bf16.mxu0 0
  %7871 = vmatmul.mubr.bf16.gmra.mrb[0].mxu0 %v7836
  %v7872 = vpop.f32.mrb[0].mxu0
  %v7873 = vadd.f32 0.0, %v7872
  %v7874 = vpop.f32.mrb[0].mxu0
  %v7875 = vpop.f32.mrb[0].mxu0
  %v7876 = vpop.f32.mrb[0].mxu0
  %7877 = vdwg.mxu0
  %v7878 = vadd.f32 %v7801, %v7873
  %v7879 = vpack.c.bf16 %v6020, %v6020
  %v7880 = vld [vmem:[%s3 + $0x300] sm:$0xf]
  %v7881 = vld [vmem:[%s3 + $0x304] sm:$0xf]
  %v7882 = vld [vmem:[%s3 + $0x308] sm:$0xf]
  %v7883 = vld [vmem:[%s3 + $0x30c] sm:$0xf]
  %v7884 = vld [vmem:[%s3 + $0x310] sm:$0xf]
  %v7885 = vld [vmem:[%s3 + $0x314] sm:$0xf]
  %v7886 = vld [vmem:[%s3 + $0x318] sm:$0xf]
  %v7887 = vld [vmem:[%s3 + $0x31c] sm:$0xf]
  %v7896 = vunpack.c.l.b16 %v7880
  %v7897 = vunpack.c.l.b16 %v7881
  %v7898 = vunpack.c.l.b16 %v7882
  %v7899 = vunpack.c.l.b16 %v7883
  %v7900 = vunpack.c.l.b16 %v7884
  %v7901 = vunpack.c.l.b16 %v7885
  %v7902 = vunpack.c.l.b16 %v7886
  %v7903 = vunpack.c.l.b16 %v7887
  %v7904 = vpack.c.b16 %v7897, %v7896
  %v7905 = vpack.c.b16 %v7899, %v7898
  %v7906 = vpack.c.b16 %v7901, %v7900
  %v7907 = vpack.c.b16 %v7903, %v7902
  %v7913 = vsel %vm6074, %v7879, 0
  %7915 = vmatprep.subr.bf16.mxu0 0
  %7916 = vmatpush1.bf16.msra.mxu0 %v7904
  %7917 = vmatprep.subr.bf16.mxu0 0
  %7918 = vmatpush1.bf16.msra.mxu0 %v7905
  %7919 = vmatprep.subr.bf16.mxu0 0
  %7920 = vmatpush1.bf16.msra.mxu0 %v7906
  %7921 = vmatprep.subr.bf16.mxu0 0
  %7922 = vmatpush1.bf16.msra.mxu0 %v7907
  %7923 = vmatprep.subr.bf16.mxu0 0
  %7924 = vmatpush1.bf16.msra.mxu0 0
  %7925 = vmatprep.subr.bf16.mxu0 0
  %7926 = vmatpush1.bf16.msra.mxu0 0
  %7927 = vmatprep.subr.bf16.mxu0 0
  %7928 = vmatpush1.bf16.msra.mxu0 0
  %7929 = vmatprep.subr.bf16.mxu0 0
  %7930 = vmatpush1.bf16.msra.mxu0 0
  %7931 = vmatprep.subr.bf16.mxu0 0
  %7932 = vmatpush1.bf16.msra.mxu0 0
  %7933 = vmatprep.subr.bf16.mxu0 0
  %7934 = vmatpush1.bf16.msra.mxu0 0
  %7935 = vmatprep.subr.bf16.mxu0 0
  %7936 = vmatpush1.bf16.msra.mxu0 0
  %7937 = vmatprep.subr.bf16.mxu0 0
  %7938 = vmatpush1.bf16.msra.mxu0 0
  %7939 = vmatprep.subr.bf16.mxu0 0
  %7940 = vmatpush1.bf16.msra.mxu0 0
  %7941 = vmatprep.subr.bf16.mxu0 0
  %7942 = vmatpush1.bf16.msra.mxu0 0
  %7943 = vmatprep.subr.bf16.mxu0 0
  %7944 = vmatpush1.bf16.msra.mxu0 0
  %7945 = vmatprep.subr.bf16.mxu0 0
  %7946 = vmatpush1.bf16.msra.mxu0 0
  %7947 = vmatprep.mubr.bf16.mxu0 0
  %7948 = vmatmul.mubr.bf16.gmra.mrb[0].mxu0 %v7913
  %v7949 = vpop.f32.mrb[0].mxu0
  %v7950 = vadd.f32 0.0, %v7949
  %v7951 = vpop.f32.mrb[0].mxu0
  %v7952 = vpop.f32.mrb[0].mxu0
  %v7953 = vpop.f32.mrb[0].mxu0
  %7954 = vdwg.mxu0
  %v7955 = vadd.f32 %v7878, %v7950
  %v7956 = vpack.c.bf16 %v6021, %v6021
  %v7957 = vld [vmem:[%s3 + $0x320] sm:$0xf]
  %v7958 = vld [vmem:[%s3 + $0x324] sm:$0xf]
  %v7959 = vld [vmem:[%s3 + $0x328] sm:$0xf]
  %v7960 = vld [vmem:[%s3 + $0x32c] sm:$0xf]
  %v7961 = vld [vmem:[%s3 + $0x330] sm:$0xf]
  %v7962 = vld [vmem:[%s3 + $0x334] sm:$0xf]
  %v7963 = vld [vmem:[%s3 + $0x338] sm:$0xf]
  %v7964 = vld [vmem:[%s3 + $0x33c] sm:$0xf]
  %v7973 = vunpack.c.l.b16 %v7957
  %v7974 = vunpack.c.l.b16 %v7958
  %v7975 = vunpack.c.l.b16 %v7959
  %v7976 = vunpack.c.l.b16 %v7960
  %v7977 = vunpack.c.l.b16 %v7961
  %v7978 = vunpack.c.l.b16 %v7962
  %v7979 = vunpack.c.l.b16 %v7963
  %v7980 = vunpack.c.l.b16 %v7964
  %v7981 = vpack.c.b16 %v7974, %v7973
  %v7982 = vpack.c.b16 %v7976, %v7975
  %v7983 = vpack.c.b16 %v7978, %v7977
  %v7984 = vpack.c.b16 %v7980, %v7979
  %v7990 = vsel %vm6074, %v7956, 0
  %7992 = vmatprep.subr.bf16.mxu0 0
  %7993 = vmatpush1.bf16.msra.mxu0 %v7981
  %7994 = vmatprep.subr.bf16.mxu0 0
  %7995 = vmatpush1.bf16.msra.mxu0 %v7982
  %7996 = vmatprep.subr.bf16.mxu0 0
  %7997 = vmatpush1.bf16.msra.mxu0 %v7983
  %7998 = vmatprep.subr.bf16.mxu0 0
  %7999 = vmatpush1.bf16.msra.mxu0 %v7984
  %8000 = vmatprep.subr.bf16.mxu0 0
  %8001 = vmatpush1.bf16.msra.mxu0 0
  %8002 = vmatprep.subr.bf16.mxu0 0
  %8003 = vmatpush1.bf16.msra.mxu0 0
  %8004 = vmatprep.subr.bf16.mxu0 0
  %8005 = vmatpush1.bf16.msra.mxu0 0
  %8006 = vmatprep.subr.bf16.mxu0 0
  %8007 = vmatpush1.bf16.msra.mxu0 0
  %8008 = vmatprep.subr.bf16.mxu0 0
  %8009 = vmatpush1.bf16.msra.mxu0 0
  %8010 = vmatprep.subr.bf16.mxu0 0
  %8011 = vmatpush1.bf16.msra.mxu0 0
  %8012 = vmatprep.subr.bf16.mxu0 0
  %8013 = vmatpush1.bf16.msra.mxu0 0
  %8014 = vmatprep.subr.bf16.mxu0 0
  %8015 = vmatpush1.bf16.msra.mxu0 0
  %8016 = vmatprep.subr.bf16.mxu0 0
  %8017 = vmatpush1.bf16.msra.mxu0 0
  %8018 = vmatprep.subr.bf16.mxu0 0
  %8019 = vmatpush1.bf16.msra.mxu0 0
  %8020 = vmatprep.subr.bf16.mxu0 0
  %8021 = vmatpush1.bf16.msra.mxu0 0
  %8022 = vmatprep.subr.bf16.mxu0 0
  %8023 = vmatpush1.bf16.msra.mxu0 0
  %8024 = vmatprep.mubr.bf16.mxu0 0
  %8025 = vmatmul.mubr.bf16.gmra.mrb[0].mxu0 %v7990
  %v8026 = vpop.f32.mrb[0].mxu0
  %v8027 = vadd.f32 0.0, %v8026
  %v8028 = vpop.f32.mrb[0].mxu0
  %v8029 = vpop.f32.mrb[0].mxu0
  %v8030 = vpop.f32.mrb[0].mxu0
  %8031 = vdwg.mxu0
  %v8032 = vadd.f32 %v7955, %v8027
  %v8033 = vpack.c.bf16 %v6022, %v6022
  %v8034 = vld [vmem:[%s3 + $0x340] sm:$0xf]
  %v8035 = vld [vmem:[%s3 + $0x344] sm:$0xf]
  %v8036 = vld [vmem:[%s3 + $0x348] sm:$0xf]
  %v8037 = vld [vmem:[%s3 + $0x34c] sm:$0xf]
  %v8038 = vld [vmem:[%s3 + $0x350] sm:$0xf]
  %v8039 = vld [vmem:[%s3 + $0x354] sm:$0xf]
  %v8040 = vld [vmem:[%s3 + $0x358] sm:$0xf]
  %v8041 = vld [vmem:[%s3 + $0x35c] sm:$0xf]
  %v8050 = vunpack.c.l.b16 %v8034
  %v8051 = vunpack.c.l.b16 %v8035
  %v8052 = vunpack.c.l.b16 %v8036
  %v8053 = vunpack.c.l.b16 %v8037
  %v8054 = vunpack.c.l.b16 %v8038
  %v8055 = vunpack.c.l.b16 %v8039
  %v8056 = vunpack.c.l.b16 %v8040
  %v8057 = vunpack.c.l.b16 %v8041
  %v8058 = vpack.c.b16 %v8051, %v8050
  %v8059 = vpack.c.b16 %v8053, %v8052
  %v8060 = vpack.c.b16 %v8055, %v8054
  %v8061 = vpack.c.b16 %v8057, %v8056
  %v8067 = vsel %vm6074, %v8033, 0
  %8069 = vmatprep.subr.bf16.mxu0 0
  %8070 = vmatpush1.bf16.msra.mxu0 %v8058
  %8071 = vmatprep.subr.bf16.mxu0 0
  %8072 = vmatpush1.bf16.msra.mxu0 %v8059
  %8073 = vmatprep.subr.bf16.mxu0 0
  %8074 = vmatpush1.bf16.msra.mxu0 %v8060
  %8075 = vmatprep.subr.bf16.mxu0 0
  %8076 = vmatpush1.bf16.msra.mxu0 %v8061
  %8077 = vmatprep.subr.bf16.mxu0 0
  %8078 = vmatpush1.bf16.msra.mxu0 0
  %8079 = vmatprep.subr.bf16.mxu0 0
  %8080 = vmatpush1.bf16.msra.mxu0 0
  %8081 = vmatprep.subr.bf16.mxu0 0
  %8082 = vmatpush1.bf16.msra.mxu0 0
  %8083 = vmatprep.subr.bf16.mxu0 0
  %8084 = vmatpush1.bf16.msra.mxu0 0
  %8085 = vmatprep.subr.bf16.mxu0 0
  %8086 = vmatpush1.bf16.msra.mxu0 0
  %8087 = vmatprep.subr.bf16.mxu0 0
  %8088 = vmatpush1.bf16.msra.mxu0 0
  %8089 = vmatprep.subr.bf16.mxu0 0
  %8090 = vmatpush1.bf16.msra.mxu0 0
  %8091 = vmatprep.subr.bf16.mxu0 0
  %8092 = vmatpush1.bf16.msra.mxu0 0
  %8093 = vmatprep.subr.bf16.mxu0 0
  %8094 = vmatpush1.bf16.msra.mxu0 0
  %8095 = vmatprep.subr.bf16.mxu0 0
  %8096 = vmatpush1.bf16.msra.mxu0 0
  %8097 = vmatprep.subr.bf16.mxu0 0
  %8098 = vmatpush1.bf16.msra.mxu0 0
  %8099 = vmatprep.subr.bf16.mxu0 0
  %8100 = vmatpush1.bf16.msra.mxu0 0
  %8101 = vmatprep.mubr.bf16.mxu0 0
  %8102 = vmatmul.mubr.bf16.gmra.mrb[0].mxu0 %v8067
  %v8103 = vpop.f32.mrb[0].mxu0
  %v8104 = vadd.f32 0.0, %v8103
  %v8105 = vpop.f32.mrb[0].mxu0
  %v8106 = vpop.f32.mrb[0].mxu0
  %v8107 = vpop.f32.mrb[0].mxu0
  %8108 = vdwg.mxu0
  %v8109 = vadd.f32 %v8032, %v8104
  %v8110 = vpack.c.bf16 %v6023, %v6023
  %v8111 = vld [vmem:[%s3 + $0x360] sm:$0xf]
  %v8112 = vld [vmem:[%s3 + $0x364] sm:$0xf]
  %v8113 = vld [vmem:[%s3 + $0x368] sm:$0xf]
  %v8114 = vld [vmem:[%s3 + $0x36c] sm:$0xf]
  %v8115 = vld [vmem:[%s3 + $0x370] sm:$0xf]
  %v8116 = vld [vmem:[%s3 + $0x374] sm:$0xf]
  %v8117 = vld [vmem:[%s3 + $0x378] sm:$0xf]
  %v8118 = vld [vmem:[%s3 + $0x37c] sm:$0xf]
  %v8127 = vunpack.c.l.b16 %v8111
  %v8128 = vunpack.c.l.b16 %v8112
  %v8129 = vunpack.c.l.b16 %v8113
  %v8130 = vunpack.c.l.b16 %v8114
  %v8131 = vunpack.c.l.b16 %v8115
  %v8132 = vunpack.c.l.b16 %v8116
  %v8133 = vunpack.c.l.b16 %v8117
  %v8134 = vunpack.c.l.b16 %v8118
  %v8135 = vpack.c.b16 %v8128, %v8127
  %v8136 = vpack.c.b16 %v8130, %v8129
  %v8137 = vpack.c.b16 %v8132, %v8131
  %v8138 = vpack.c.b16 %v8134, %v8133
  %v8144 = vsel %vm6074, %v8110, 0
  %8146 = vmatprep.subr.bf16.mxu0 0
  %8147 = vmatpush1.bf16.msra.mxu0 %v8135
  %8148 = vmatprep.subr.bf16.mxu0 0
  %8149 = vmatpush1.bf16.msra.mxu0 %v8136
  %8150 = vmatprep.subr.bf16.mxu0 0
  %8151 = vmatpush1.bf16.msra.mxu0 %v8137
  %8152 = vmatprep.subr.bf16.mxu0 0
  %8153 = vmatpush1.bf16.msra.mxu0 %v8138
  %8154 = vmatprep.subr.bf16.mxu0 0
  %8155 = vmatpush1.bf16.msra.mxu0 0
  %8156 = vmatprep.subr.bf16.mxu0 0
  %8157 = vmatpush1.bf16.msra.mxu0 0
  %8158 = vmatprep.subr.bf16.mxu0 0
  %8159 = vmatpush1.bf16.msra.mxu0 0
  %8160 = vmatprep.subr.bf16.mxu0 0
  %8161 = vmatpush1.bf16.msra.mxu0 0
  %8162 = vmatprep.subr.bf16.mxu0 0
  %8163 = vmatpush1.bf16.msra.mxu0 0
  %8164 = vmatprep.subr.bf16.mxu0 0
  %8165 = vmatpush1.bf16.msra.mxu0 0
  %8166 = vmatprep.subr.bf16.mxu0 0
  %8167 = vmatpush1.bf16.msra.mxu0 0
  %8168 = vmatprep.subr.bf16.mxu0 0
  %8169 = vmatpush1.bf16.msra.mxu0 0
  %8170 = vmatprep.subr.bf16.mxu0 0
  %8171 = vmatpush1.bf16.msra.mxu0 0
  %8172 = vmatprep.subr.bf16.mxu0 0
  %8173 = vmatpush1.bf16.msra.mxu0 0
  %8174 = vmatprep.subr.bf16.mxu0 0
  %8175 = vmatpush1.bf16.msra.mxu0 0
  %8176 = vmatprep.subr.bf16.mxu0 0
  %8177 = vmatpush1.bf16.msra.mxu0 0
  %8178 = vmatprep.mubr.bf16.mxu0 0
  %8179 = vmatmul.mubr.bf16.gmra.mrb[0].mxu0 %v8144
  %v8180 = vpop.f32.mrb[0].mxu0
  %v8181 = vadd.f32 0.0, %v8180
  %v8182 = vpop.f32.mrb[0].mxu0
  %v8183 = vpop.f32.mrb[0].mxu0
  %v8184 = vpop.f32.mrb[0].mxu0
  %8185 = vdwg.mxu0
  %v8186 = vadd.f32 %v8109, %v8181
  %v8187 = vpack.c.bf16 %v6024, %v6024
  %v8188 = vld [vmem:[%s3 + $0x380] sm:$0xf]
  %v8189 = vld [vmem:[%s3 + $0x384] sm:$0xf]
  %v8190 = vld [vmem:[%s3 + $0x388] sm:$0xf]
  %v8191 = vld [vmem:[%s3 + $0x38c] sm:$0xf]
  %v8192 = vld [vmem:[%s3 + $0x390] sm:$0xf]
  %v8193 = vld [vmem:[%s3 + $0x394] sm:$0xf]
  %v8194 = vld [vmem:[%s3 + $0x398] sm:$0xf]
  %v8195 = vld [vmem:[%s3 + $0x39c] sm:$0xf]
  %v8204 = vunpack.c.l.b16 %v8188
  %v8205 = vunpack.c.l.b16 %v8189
  %v8206 = vunpack.c.l.b16 %v8190
  %v8207 = vunpack.c.l.b16 %v8191
  %v8208 = vunpack.c.l.b16 %v8192
  %v8209 = vunpack.c.l.b16 %v8193
  %v8210 = vunpack.c.l.b16 %v8194
  %v8211 = vunpack.c.l.b16 %v8195
  %v8212 = vpack.c.b16 %v8205, %v8204
  %v8213 = vpack.c.b16 %v8207, %v8206
  %v8214 = vpack.c.b16 %v8209, %v8208
  %v8215 = vpack.c.b16 %v8211, %v8210
  %v8221 = vsel %vm6074, %v8187, 0
  %8223 = vmatprep.subr.bf16.mxu0 0
  %8224 = vmatpush1.bf16.msra.mxu0 %v8212
  %8225 = vmatprep.subr.bf16.mxu0 0
  %8226 = vmatpush1.bf16.msra.mxu0 %v8213
  %8227 = vmatprep.subr.bf16.mxu0 0
  %8228 = vmatpush1.bf16.msra.mxu0 %v8214
  %8229 = vmatprep.subr.bf16.mxu0 0
  %8230 = vmatpush1.bf16.msra.mxu0 %v8215
  %8231 = vmatprep.subr.bf16.mxu0 0
  %8232 = vmatpush1.bf16.msra.mxu0 0
  %8233 = vmatprep.subr.bf16.mxu0 0
  %8234 = vmatpush1.bf16.msra.mxu0 0
  %8235 = vmatprep.subr.bf16.mxu0 0
  %8236 = vmatpush1.bf16.msra.mxu0 0
  %8237 = vmatprep.subr.bf16.mxu0 0
  %8238 = vmatpush1.bf16.msra.mxu0 0
  %8239 = vmatprep.subr.bf16.mxu0 0
  %8240 = vmatpush1.bf16.msra.mxu0 0
  %8241 = vmatprep.subr.bf16.mxu0 0
  %8242 = vmatpush1.bf16.msra.mxu0 0
  %8243 = vmatprep.subr.bf16.mxu0 0
  %8244 = vmatpush1.bf16.msra.mxu0 0
  %8245 = vmatprep.subr.bf16.mxu0 0
  %8246 = vmatpush1.bf16.msra.mxu0 0
  %8247 = vmatprep.subr.bf16.mxu0 0
  %8248 = vmatpush1.bf16.msra.mxu0 0
  %8249 = vmatprep.subr.bf16.mxu0 0
  %8250 = vmatpush1.bf16.msra.mxu0 0
  %8251 = vmatprep.subr.bf16.mxu0 0
  %8252 = vmatpush1.bf16.msra.mxu0 0
  %8253 = vmatprep.subr.bf16.mxu0 0
  %8254 = vmatpush1.bf16.msra.mxu0 0
  %8255 = vmatprep.mubr.bf16.mxu0 0
  %8256 = vmatmul.mubr.bf16.gmra.mrb[0].mxu0 %v8221
  %v8257 = vpop.f32.mrb[0].mxu0
  %v8258 = vadd.f32 0.0, %v8257
  %v8259 = vpop.f32.mrb[0].mxu0
  %v8260 = vpop.f32.mrb[0].mxu0
  %v8261 = vpop.f32.mrb[0].mxu0
  %8262 = vdwg.mxu0
  %v8263 = vadd.f32 %v8186, %v8258
  %v8264 = vpack.c.bf16 %v6025, %v6025
  %v8265 = vld [vmem:[%s3 + $0x3a0] sm:$0xf]
  %v8266 = vld [vmem:[%s3 + $0x3a4] sm:$0xf]
  %v8267 = vld [vmem:[%s3 + $0x3a8] sm:$0xf]
  %v8268 = vld [vmem:[%s3 + $0x3ac] sm:$0xf]
  %v8269 = vld [vmem:[%s3 + $0x3b0] sm:$0xf]
  %v8270 = vld [vmem:[%s3 + $0x3b4] sm:$0xf]
  %v8271 = vld [vmem:[%s3 + $0x3b8] sm:$0xf]
  %v8272 = vld [vmem:[%s3 + $0x3bc] sm:$0xf]
  %v8281 = vunpack.c.l.b16 %v8265
  %v8282 = vunpack.c.l.b16 %v8266
  %v8283 = vunpack.c.l.b16 %v8267
  %v8284 = vunpack.c.l.b16 %v8268
  %v8285 = vunpack.c.l.b16 %v8269
  %v8286 = vunpack.c.l.b16 %v8270
  %v8287 = vunpack.c.l.b16 %v8271
  %v8288 = vunpack.c.l.b16 %v8272
  %v8289 = vpack.c.b16 %v8282, %v8281
  %v8290 = vpack.c.b16 %v8284, %v8283
  %v8291 = vpack.c.b16 %v8286, %v8285
  %v8292 = vpack.c.b16 %v8288, %v8287
  %v8298 = vsel %vm6074, %v8264, 0
  %8300 = vmatprep.subr.bf16.mxu0 0
  %8301 = vmatpush1.bf16.msra.mxu0 %v8289
  %8302 = vmatprep.subr.bf16.mxu0 0
  %8303 = vmatpush1.bf16.msra.mxu0 %v8290
  %8304 = vmatprep.subr.bf16.mxu0 0
  %8305 = vmatpush1.bf16.msra.mxu0 %v8291
  %8306 = vmatprep.subr.bf16.mxu0 0
  %8307 = vmatpush1.bf16.msra.mxu0 %v8292
  %8308 = vmatprep.subr.bf16.mxu0 0
  %8309 = vmatpush1.bf16.msra.mxu0 0
  %8310 = vmatprep.subr.bf16.mxu0 0
  %8311 = vmatpush1.bf16.msra.mxu0 0
  %8312 = vmatprep.subr.bf16.mxu0 0
  %8313 = vmatpush1.bf16.msra.mxu0 0
  %8314 = vmatprep.subr.bf16.mxu0 0
  %8315 = vmatpush1.bf16.msra.mxu0 0
  %8316 = vmatprep.subr.bf16.mxu0 0
  %8317 = vmatpush1.bf16.msra.mxu0 0
  %8318 = vmatprep.subr.bf16.mxu0 0
  %8319 = vmatpush1.bf16.msra.mxu0 0
  %8320 = vmatprep.subr.bf16.mxu0 0
  %8321 = vmatpush1.bf16.msra.mxu0 0
  %8322 = vmatprep.subr.bf16.mxu0 0
  %8323 = vmatpush1.bf16.msra.mxu0 0
  %8324 = vmatprep.subr.bf16.mxu0 0
  %8325 = vmatpush1.bf16.msra.mxu0 0
  %8326 = vmatprep.subr.bf16.mxu0 0
  %8327 = vmatpush1.bf16.msra.mxu0 0
  %8328 = vmatprep.subr.bf16.mxu0 0
  %8329 = vmatpush1.bf16.msra.mxu0 0
  %8330 = vmatprep.subr.bf16.mxu0 0
  %8331 = vmatpush1.bf16.msra.mxu0 0
  %8332 = vmatprep.mubr.bf16.mxu0 0
  %8333 = vmatmul.mubr.bf16.gmra.mrb[0].mxu0 %v8298
  %v8334 = vpop.f32.mrb[0].mxu0
  %v8335 = vadd.f32 0.0, %v8334
  %v8336 = vpop.f32.mrb[0].mxu0
  %v8337 = vpop.f32.mrb[0].mxu0
  %v8338 = vpop.f32.mrb[0].mxu0
  %8339 = vdwg.mxu0
  %v8340 = vadd.f32 %v8263, %v8335
  %v8341 = vpack.c.bf16 %v6026, %v6026
  %v8342 = vld [vmem:[%s3 + $0x3c0] sm:$0xf]
  %v8343 = vld [vmem:[%s3 + $0x3c4] sm:$0xf]
  %v8344 = vld [vmem:[%s3 + $0x3c8] sm:$0xf]
  %v8345 = vld [vmem:[%s3 + $0x3cc] sm:$0xf]
  %v8346 = vld [vmem:[%s3 + $0x3d0] sm:$0xf]
  %v8347 = vld [vmem:[%s3 + $0x3d4] sm:$0xf]
  %v8348 = vld [vmem:[%s3 + $0x3d8] sm:$0xf]
  %v8349 = vld [vmem:[%s3 + $0x3dc] sm:$0xf]
  %v8358 = vunpack.c.l.b16 %v8342
  %v8359 = vunpack.c.l.b16 %v8343
  %v8360 = vunpack.c.l.b16 %v8344
  %v8361 = vunpack.c.l.b16 %v8345
  %v8362 = vunpack.c.l.b16 %v8346
  %v8363 = vunpack.c.l.b16 %v8347
  %v8364 = vunpack.c.l.b16 %v8348
  %v8365 = vunpack.c.l.b16 %v8349
  %v8366 = vpack.c.b16 %v8359, %v8358
  %v8367 = vpack.c.b16 %v8361, %v8360
  %v8368 = vpack.c.b16 %v8363, %v8362
  %v8369 = vpack.c.b16 %v8365, %v8364
  %v8375 = vsel %vm6074, %v8341, 0
  %8377 = vmatprep.subr.bf16.mxu0 0
  %8378 = vmatpush1.bf16.msra.mxu0 %v8366
  %8379 = vmatprep.subr.bf16.mxu0 0
  %8380 = vmatpush1.bf16.msra.mxu0 %v8367
  %8381 = vmatprep.subr.bf16.mxu0 0
  %8382 = vmatpush1.bf16.msra.mxu0 %v8368
  %8383 = vmatprep.subr.bf16.mxu0 0
  %8384 = vmatpush1.bf16.msra.mxu0 %v8369
  %8385 = vmatprep.subr.bf16.mxu0 0
  %8386 = vmatpush1.bf16.msra.mxu0 0
  %8387 = vmatprep.subr.bf16.mxu0 0
  %8388 = vmatpush1.bf16.msra.mxu0 0
  %8389 = vmatprep.subr.bf16.mxu0 0
  %8390 = vmatpush1.bf16.msra.mxu0 0
  %8391 = vmatprep.subr.bf16.mxu0 0
  %8392 = vmatpush1.bf16.msra.mxu0 0
  %8393 = vmatprep.subr.bf16.mxu0 0
  %8394 = vmatpush1.bf16.msra.mxu0 0
  %8395 = vmatprep.subr.bf16.mxu0 0
  %8396 = vmatpush1.bf16.msra.mxu0 0
  %8397 = vmatprep.subr.bf16.mxu0 0
  %8398 = vmatpush1.bf16.msra.mxu0 0
  %8399 = vmatprep.subr.bf16.mxu0 0
  %8400 = vmatpush1.bf16.msra.mxu0 0
  %8401 = vmatprep.subr.bf16.mxu0 0
  %8402 = vmatpush1.bf16.msra.mxu0 0
  %8403 = vmatprep.subr.bf16.mxu0 0
  %8404 = vmatpush1.bf16.msra.mxu0 0
  %8405 = vmatprep.subr.bf16.mxu0 0
  %8406 = vmatpush1.bf16.msra.mxu0 0
  %8407 = vmatprep.subr.bf16.mxu0 0
  %8408 = vmatpush1.bf16.msra.mxu0 0
  %8409 = vmatprep.mubr.bf16.mxu0 0
  %8410 = vmatmul.mubr.bf16.gmra.mrb[0].mxu0 %v8375
  %v8411 = vpop.f32.mrb[0].mxu0
  %v8412 = vadd.f32 0.0, %v8411
  %v8413 = vpop.f32.mrb[0].mxu0
  %v8414 = vpop.f32.mrb[0].mxu0
  %v8415 = vpop.f32.mrb[0].mxu0
  %8416 = vdwg.mxu0
  %v8417 = vadd.f32 %v8340, %v8412
  %v8418 = vpack.c.bf16 %v6027, %v6027
  %v8419 = vld [vmem:[%s3 + $0x3e0] sm:$0xf]
  %v8420 = vld [vmem:[%s3 + $0x3e4] sm:$0xf]
  %v8421 = vld [vmem:[%s3 + $0x3e8] sm:$0xf]
  %v8422 = vld [vmem:[%s3 + $0x3ec] sm:$0xf]
  %v8423 = vld [vmem:[%s3 + $0x3f0] sm:$0xf]
  %v8424 = vld [vmem:[%s3 + $0x3f4] sm:$0xf]
  %v8425 = vld [vmem:[%s3 + $0x3f8] sm:$0xf]
  %v8426 = vld [vmem:[%s3 + $0x3fc] sm:$0xf]
  %v8435 = vunpack.c.l.b16 %v8419
  %v8436 = vunpack.c.l.b16 %v8420
  %v8437 = vunpack.c.l.b16 %v8421
  %v8438 = vunpack.c.l.b16 %v8422
  %v8439 = vunpack.c.l.b16 %v8423
  %v8440 = vunpack.c.l.b16 %v8424
  %v8441 = vunpack.c.l.b16 %v8425
  %v8442 = vunpack.c.l.b16 %v8426
  %v8443 = vpack.c.b16 %v8436, %v8435
  %v8444 = vpack.c.b16 %v8438, %v8437
  %v8445 = vpack.c.b16 %v8440, %v8439
  %v8446 = vpack.c.b16 %v8442, %v8441
  %v8452 = vsel %vm6074, %v8418, 0
  %8454 = vmatprep.subr.bf16.mxu0 0
  %8455 = vmatpush1.bf16.msra.mxu0 %v8443
  %8456 = vmatprep.subr.bf16.mxu0 0
  %8457 = vmatpush1.bf16.msra.mxu0 %v8444
  %8458 = vmatprep.subr.bf16.mxu0 0
  %8459 = vmatpush1.bf16.msra.mxu0 %v8445
  %8460 = vmatprep.subr.bf16.mxu0 0
  %8461 = vmatpush1.bf16.msra.mxu0 %v8446
  %8462 = vmatprep.subr.bf16.mxu0 0
  %8463 = vmatpush1.bf16.msra.mxu0 0
  %8464 = vmatprep.subr.bf16.mxu0 0
  %8465 = vmatpush1.bf16.msra.mxu0 0
  %8466 = vmatprep.subr.bf16.mxu0 0
  %8467 = vmatpush1.bf16.msra.mxu0 0
  %8468 = vmatprep.subr.bf16.mxu0 0
  %8469 = vmatpush1.bf16.msra.mxu0 0
  %8470 = vmatprep.subr.bf16.mxu0 0
  %8471 = vmatpush1.bf16.msra.mxu0 0
  %8472 = vmatprep.subr.bf16.mxu0 0
  %8473 = vmatpush1.bf16.msra.mxu0 0
  %8474 = vmatprep.subr.bf16.mxu0 0
  %8475 = vmatpush1.bf16.msra.mxu0 0
  %8476 = vmatprep.subr.bf16.mxu0 0
  %8477 = vmatpush1.bf16.msra.mxu0 0
  %8478 = vmatprep.subr.bf16.mxu0 0
  %8479 = vmatpush1.bf16.msra.mxu0 0
  %8480 = vmatprep.subr.bf16.mxu0 0
  %8481 = vmatpush1.bf16.msra.mxu0 0
  %8482 = vmatprep.subr.bf16.mxu0 0
  %8483 = vmatpush1.bf16.msra.mxu0 0
  %8484 = vmatprep.subr.bf16.mxu0 0
  %8485 = vmatpush1.bf16.msra.mxu0 0
  %8486 = vmatprep.mubr.bf16.mxu0 0
  %8487 = vmatmul.mubr.bf16.gmra.mrb[0].mxu0 %v8452
  %v8488 = vpop.f32.mrb[0].mxu0
  %v8489 = vadd.f32 0.0, %v8488
  %v8490 = vpop.f32.mrb[0].mxu0
  %v8491 = vpop.f32.mrb[0].mxu0
  %v8492 = vpop.f32.mrb[0].mxu0
  %8493 = vdwg.mxu0
  %v8494 = vadd.f32 %v8417, %v8489
  %v8495 = vpack.c.bf16 %v6028, %v6028
  %v8496 = vld [vmem:[%s3 + $0x400] sm:$0xf]
  %v8497 = vld [vmem:[%s3 + $0x404] sm:$0xf]
  %v8498 = vld [vmem:[%s3 + $0x408] sm:$0xf]
  %v8499 = vld [vmem:[%s3 + $0x40c] sm:$0xf]
  %v8500 = vld [vmem:[%s3 + $0x410] sm:$0xf]
  %v8501 = vld [vmem:[%s3 + $0x414] sm:$0xf]
  %v8502 = vld [vmem:[%s3 + $0x418] sm:$0xf]
  %v8503 = vld [vmem:[%s3 + $0x41c] sm:$0xf]
  %v8512 = vunpack.c.l.b16 %v8496
  %v8513 = vunpack.c.l.b16 %v8497
  %v8514 = vunpack.c.l.b16 %v8498
  %v8515 = vunpack.c.l.b16 %v8499
  %v8516 = vunpack.c.l.b16 %v8500
  %v8517 = vunpack.c.l.b16 %v8501
  %v8518 = vunpack.c.l.b16 %v8502
  %v8519 = vunpack.c.l.b16 %v8503
  %v8520 = vpack.c.b16 %v8513, %v8512
  %v8521 = vpack.c.b16 %v8515, %v8514
  %v8522 = vpack.c.b16 %v8517, %v8516
  %v8523 = vpack.c.b16 %v8519, %v8518
  %v8529 = vsel %vm6074, %v8495, 0
  %8531 = vmatprep.subr.bf16.mxu0 0
  %8532 = vmatpush1.bf16.msra.mxu0 %v8520
  %8533 = vmatprep.subr.bf16.mxu0 0
  %8534 = vmatpush1.bf16.msra.mxu0 %v8521
  %8535 = vmatprep.subr.bf16.mxu0 0
  %8536 = vmatpush1.bf16.msra.mxu0 %v8522
  %8537 = vmatprep.subr.bf16.mxu0 0
  %8538 = vmatpush1.bf16.msra.mxu0 %v8523
  %8539 = vmatprep.subr.bf16.mxu0 0
  %8540 = vmatpush1.bf16.msra.mxu0 0
  %8541 = vmatprep.subr.bf16.mxu0 0
  %8542 = vmatpush1.bf16.msra.mxu0 0
  %8543 = vmatprep.subr.bf16.mxu0 0
  %8544 = vmatpush1.bf16.msra.mxu0 0
  %8545 = vmatprep.subr.bf16.mxu0 0
  %8546 = vmatpush1.bf16.msra.mxu0 0
  %8547 = vmatprep.subr.bf16.mxu0 0
  %8548 = vmatpush1.bf16.msra.mxu0 0
  %8549 = vmatprep.subr.bf16.mxu0 0
  %8550 = vmatpush1.bf16.msra.mxu0 0
  %8551 = vmatprep.subr.bf16.mxu0 0
  %8552 = vmatpush1.bf16.msra.mxu0 0
  %8553 = vmatprep.subr.bf16.mxu0 0
  %8554 = vmatpush1.bf16.msra.mxu0 0
  %8555 = vmatprep.subr.bf16.mxu0 0
  %8556 = vmatpush1.bf16.msra.mxu0 0
  %8557 = vmatprep.subr.bf16.mxu0 0
  %8558 = vmatpush1.bf16.msra.mxu0 0
  %8559 = vmatprep.subr.bf16.mxu0 0
  %8560 = vmatpush1.bf16.msra.mxu0 0
  %8561 = vmatprep.subr.bf16.mxu0 0
  %8562 = vmatpush1.bf16.msra.mxu0 0
  %8563 = vmatprep.mubr.bf16.mxu0 0
  %8564 = vmatmul.mubr.bf16.gmra.mrb[0].mxu0 %v8529
  %v8565 = vpop.f32.mrb[0].mxu0
  %v8566 = vadd.f32 0.0, %v8565
  %v8567 = vpop.f32.mrb[0].mxu0
  %v8568 = vpop.f32.mrb[0].mxu0
  %v8569 = vpop.f32.mrb[0].mxu0
  %8570 = vdwg.mxu0
  %v8571 = vadd.f32 %v8494, %v8566
  %v8572 = vpack.c.bf16 %v6029, %v6029
  %v8573 = vld [vmem:[%s3 + $0x420] sm:$0xf]
  %v8574 = vld [vmem:[%s3 + $0x424] sm:$0xf]
  %v8575 = vld [vmem:[%s3 + $0x428] sm:$0xf]
  %v8576 = vld [vmem:[%s3 + $0x42c] sm:$0xf]
  %v8577 = vld [vmem:[%s3 + $0x430] sm:$0xf]
  %v8578 = vld [vmem:[%s3 + $0x434] sm:$0xf]
  %v8579 = vld [vmem:[%s3 + $0x438] sm:$0xf]
  %v8580 = vld [vmem:[%s3 + $0x43c] sm:$0xf]
  %v8589 = vunpack.c.l.b16 %v8573
  %v8590 = vunpack.c.l.b16 %v8574
  %v8591 = vunpack.c.l.b16 %v8575
  %v8592 = vunpack.c.l.b16 %v8576
  %v8593 = vunpack.c.l.b16 %v8577
  %v8594 = vunpack.c.l.b16 %v8578
  %v8595 = vunpack.c.l.b16 %v8579
  %v8596 = vunpack.c.l.b16 %v8580
  %v8597 = vpack.c.b16 %v8590, %v8589
  %v8598 = vpack.c.b16 %v8592, %v8591
  %v8599 = vpack.c.b16 %v8594, %v8593
  %v8600 = vpack.c.b16 %v8596, %v8595
  %v8606 = vsel %vm6074, %v8572, 0
  %8608 = vmatprep.subr.bf16.mxu0 0
  %8609 = vmatpush1.bf16.msra.mxu0 %v8597
  %8610 = vmatprep.subr.bf16.mxu0 0
  %8611 = vmatpush1.bf16.msra.mxu0 %v8598
  %8612 = vmatprep.subr.bf16.mxu0 0
  %8613 = vmatpush1.bf16.msra.mxu0 %v8599
  %8614 = vmatprep.subr.bf16.mxu0 0
  %8615 = vmatpush1.bf16.msra.mxu0 %v8600
  %8616 = vmatprep.subr.bf16.mxu0 0
  %8617 = vmatpush1.bf16.msra.mxu0 0
  %8618 = vmatprep.subr.bf16.mxu0 0
  %8619 = vmatpush1.bf16.msra.mxu0 0
  %8620 = vmatprep.subr.bf16.mxu0 0
  %8621 = vmatpush1.bf16.msra.mxu0 0
  %8622 = vmatprep.subr.bf16.mxu0 0
  %8623 = vmatpush1.bf16.msra.mxu0 0
  %8624 = vmatprep.subr.bf16.mxu0 0
  %8625 = vmatpush1.bf16.msra.mxu0 0
  %8626 = vmatprep.subr.bf16.mxu0 0
  %8627 = vmatpush1.bf16.msra.mxu0 0
  %8628 = vmatprep.subr.bf16.mxu0 0
  %8629 = vmatpush1.bf16.msra.mxu0 0
  %8630 = vmatprep.subr.bf16.mxu0 0
  %8631 = vmatpush1.bf16.msra.mxu0 0
  %8632 = vmatprep.subr.bf16.mxu0 0
  %8633 = vmatpush1.bf16.msra.mxu0 0
  %8634 = vmatprep.subr.bf16.mxu0 0
  %8635 = vmatpush1.bf16.msra.mxu0 0
  %8636 = vmatprep.subr.bf16.mxu0 0
  %8637 = vmatpush1.bf16.msra.mxu0 0
  %8638 = vmatprep.subr.bf16.mxu0 0
  %8639 = vmatpush1.bf16.msra.mxu0 0
  %8640 = vmatprep.mubr.bf16.mxu0 0
  %8641 = vmatmul.mubr.bf16.gmra.mrb[0].mxu0 %v8606
  %v8642 = vpop.f32.mrb[0].mxu0
  %v8643 = vadd.f32 0.0, %v8642
  %v8644 = vpop.f32.mrb[0].mxu0
  %v8645 = vpop.f32.mrb[0].mxu0
  %v8646 = vpop.f32.mrb[0].mxu0
  %8647 = vdwg.mxu0
  %v8648 = vadd.f32 %v8571, %v8643
  %v8649 = vpack.c.bf16 %v6030, %v6030
  %v8650 = vld [vmem:[%s3 + $0x440] sm:$0xf]
  %v8651 = vld [vmem:[%s3 + $0x444] sm:$0xf]
  %v8652 = vld [vmem:[%s3 + $0x448] sm:$0xf]
  %v8653 = vld [vmem:[%s3 + $0x44c] sm:$0xf]
  %v8654 = vld [vmem:[%s3 + $0x450] sm:$0xf]
  %v8655 = vld [vmem:[%s3 + $0x454] sm:$0xf]
  %v8656 = vld [vmem:[%s3 + $0x458] sm:$0xf]
  %v8657 = vld [vmem:[%s3 + $0x45c] sm:$0xf]
  %v8666 = vunpack.c.l.b16 %v8650
  %v8667 = vunpack.c.l.b16 %v8651
  %v8668 = vunpack.c.l.b16 %v8652
  %v8669 = vunpack.c.l.b16 %v8653
  %v8670 = vunpack.c.l.b16 %v8654
  %v8671 = vunpack.c.l.b16 %v8655
  %v8672 = vunpack.c.l.b16 %v8656
  %v8673 = vunpack.c.l.b16 %v8657
  %v8674 = vpack.c.b16 %v8667, %v8666
  %v8675 = vpack.c.b16 %v8669, %v8668
  %v8676 = vpack.c.b16 %v8671, %v8670
  %v8677 = vpack.c.b16 %v8673, %v8672
  %v8683 = vsel %vm6074, %v8649, 0
  %8685 = vmatprep.subr.bf16.mxu0 0
  %8686 = vmatpush1.bf16.msra.mxu0 %v8674
  %8687 = vmatprep.subr.bf16.mxu0 0
  %8688 = vmatpush1.bf16.msra.mxu0 %v8675
  %8689 = vmatprep.subr.bf16.mxu0 0
  %8690 = vmatpush1.bf16.msra.mxu0 %v8676
  %8691 = vmatprep.subr.bf16.mxu0 0
  %8692 = vmatpush1.bf16.msra.mxu0 %v8677
  %8693 = vmatprep.subr.bf16.mxu0 0
  %8694 = vmatpush1.bf16.msra.mxu0 0
  %8695 = vmatprep.subr.bf16.mxu0 0
  %8696 = vmatpush1.bf16.msra.mxu0 0
  %8697 = vmatprep.subr.bf16.mxu0 0
  %8698 = vmatpush1.bf16.msra.mxu0 0
  %8699 = vmatprep.subr.bf16.mxu0 0
  %8700 = vmatpush1.bf16.msra.mxu0 0
  %8701 = vmatprep.subr.bf16.mxu0 0
  %8702 = vmatpush1.bf16.msra.mxu0 0
  %8703 = vmatprep.subr.bf16.mxu0 0
  %8704 = vmatpush1.bf16.msra.mxu0 0
  %8705 = vmatprep.subr.bf16.mxu0 0
  %8706 = vmatpush1.bf16.msra.mxu0 0
  %8707 = vmatprep.subr.bf16.mxu0 0
  %8708 = vmatpush1.bf16.msra.mxu0 0
  %8709 = vmatprep.subr.bf16.mxu0 0
  %8710 = vmatpush1.bf16.msra.mxu0 0
  %8711 = vmatprep.subr.bf16.mxu0 0
  %8712 = vmatpush1.bf16.msra.mxu0 0
  %8713 = vmatprep.subr.bf16.mxu0 0
  %8714 = vmatpush1.bf16.msra.mxu0 0
  %8715 = vmatprep.subr.bf16.mxu0 0
  %8716 = vmatpush1.bf16.msra.mxu0 0
  %8717 = vmatprep.mubr.bf16.mxu0 0
  %8718 = vmatmul.mubr.bf16.gmra.mrb[0].mxu0 %v8683
  %v8719 = vpop.f32.mrb[0].mxu0
  %v8720 = vadd.f32 0.0, %v8719
  %v8721 = vpop.f32.mrb[0].mxu0
  %v8722 = vpop.f32.mrb[0].mxu0
  %v8723 = vpop.f32.mrb[0].mxu0
  %8724 = vdwg.mxu0
  %v8725 = vadd.f32 %v8648, %v8720
  %v8726 = vpack.c.bf16 %v6031, %v6031
  %v8727 = vld [vmem:[%s3 + $0x460] sm:$0xf]
  %v8728 = vld [vmem:[%s3 + $0x464] sm:$0xf]
  %v8729 = vld [vmem:[%s3 + $0x468] sm:$0xf]
  %v8730 = vld [vmem:[%s3 + $0x46c] sm:$0xf]
  %v8731 = vld [vmem:[%s3 + $0x470] sm:$0xf]
  %v8732 = vld [vmem:[%s3 + $0x474] sm:$0xf]
  %v8733 = vld [vmem:[%s3 + $0x478] sm:$0xf]
  %v8734 = vld [vmem:[%s3 + $0x47c] sm:$0xf]
  %v8743 = vunpack.c.l.b16 %v8727
  %v8744 = vunpack.c.l.b16 %v8728
  %v8745 = vunpack.c.l.b16 %v8729
  %v8746 = vunpack.c.l.b16 %v8730
  %v8747 = vunpack.c.l.b16 %v8731
  %v8748 = vunpack.c.l.b16 %v8732
  %v8749 = vunpack.c.l.b16 %v8733
  %v8750 = vunpack.c.l.b16 %v8734
  %v8751 = vpack.c.b16 %v8744, %v8743
  %v8752 = vpack.c.b16 %v8746, %v8745
  %v8753 = vpack.c.b16 %v8748, %v8747
  %v8754 = vpack.c.b16 %v8750, %v8749
  %v8760 = vsel %vm6074, %v8726, 0
  %8762 = vmatprep.subr.bf16.mxu0 0
  %8763 = vmatpush1.bf16.msra.mxu0 %v8751
  %8764 = vmatprep.subr.bf16.mxu0 0
  %8765 = vmatpush1.bf16.msra.mxu0 %v8752
  %8766 = vmatprep.subr.bf16.mxu0 0
  %8767 = vmatpush1.bf16.msra.mxu0 %v8753
  %8768 = vmatprep.subr.bf16.mxu0 0
  %8769 = vmatpush1.bf16.msra.mxu0 %v8754
  %8770 = vmatprep.subr.bf16.mxu0 0
  %8771 = vmatpush1.bf16.msra.mxu0 0
  %8772 = vmatprep.subr.bf16.mxu0 0
  %8773 = vmatpush1.bf16.msra.mxu0 0
  %8774 = vmatprep.subr.bf16.mxu0 0
  %8775 = vmatpush1.bf16.msra.mxu0 0
  %8776 = vmatprep.subr.bf16.mxu0 0
  %8777 = vmatpush1.bf16.msra.mxu0 0
  %8778 = vmatprep.subr.bf16.mxu0 0
  %8779 = vmatpush1.bf16.msra.mxu0 0
  %8780 = vmatprep.subr.bf16.mxu0 0
  %8781 = vmatpush1.bf16.msra.mxu0 0
  %8782 = vmatprep.subr.bf16.mxu0 0
  %8783 = vmatpush1.bf16.msra.mxu0 0
  %8784 = vmatprep.subr.bf16.mxu0 0
  %8785 = vmatpush1.bf16.msra.mxu0 0
  %8786 = vmatprep.subr.bf16.mxu0 0
  %8787 = vmatpush1.bf16.msra.mxu0 0
  %8788 = vmatprep.subr.bf16.mxu0 0
  %8789 = vmatpush1.bf16.msra.mxu0 0
  %8790 = vmatprep.subr.bf16.mxu0 0
  %8791 = vmatpush1.bf16.msra.mxu0 0
  %8792 = vmatprep.subr.bf16.mxu0 0
  %8793 = vmatpush1.bf16.msra.mxu0 0
  %8794 = vmatprep.mubr.bf16.mxu0 0
  %8795 = vmatmul.mubr.bf16.gmra.mrb[0].mxu0 %v8760
  %v8796 = vpop.f32.mrb[0].mxu0
  %v8797 = vadd.f32 0.0, %v8796
  %v8798 = vpop.f32.mrb[0].mxu0
  %v8799 = vpop.f32.mrb[0].mxu0
  %v8800 = vpop.f32.mrb[0].mxu0
  %8801 = vdwg.mxu0
  %v8802 = vadd.f32 %v8725, %v8797
  %v8803 = vlaneseq
  %v8804 = vshrl.u32 %v8803, 7
  %v8805 = vsub.s32 0, %v8804
  %v8806 = vrot.slane %v23, %v8805
  %v8807 = vadd.f32 %v8802, %v8806
  %v8808 = vmax.f32 %v8807, 0.0
  %v8809 = vpack.c.bf16 %v8808, %v8808
  %v8810 = vld [vmem:[%s3 + $0x480] sm:$0xf]
  %v8811 = vld [vmem:[%s3 + $0x484] sm:$0xf]
  %v8812 = vld [vmem:[%s3 + $0x488] sm:$0xf]
  %v8813 = vld [vmem:[%s3 + $0x48c] sm:$0xf]
  %v8814 = vld [vmem:[%s3 + $0x490] sm:$0xf]
  %v8815 = vld [vmem:[%s3 + $0x494] sm:$0xf]
  %v8816 = vld [vmem:[%s3 + $0x498] sm:$0xf]
  %v8817 = vld [vmem:[%s3 + $0x49c] sm:$0xf]
  %v8818 = vld [vmem:[%s3 + $0x4a0] sm:$0xf]
  %v8819 = vld [vmem:[%s3 + $0x4a4] sm:$0xf]
  %v8820 = vld [vmem:[%s3 + $0x4a8] sm:$0xf]
  %v8821 = vld [vmem:[%s3 + $0x4ac] sm:$0xf]
  %v8822 = vld [vmem:[%s3 + $0x4b0] sm:$0xf]
  %v8823 = vld [vmem:[%s3 + $0x4b4] sm:$0xf]
  %v8824 = vld [vmem:[%s3 + $0x4b8] sm:$0xf]
  %v8825 = vld [vmem:[%s3 + $0x4bc] sm:$0xf]
  %v8826 = vlaneseq
  %v8827 = vshrl.u32 %v8826, 7
  %v8828 = vsub.s32 0, %v8827
  %v8829 = vrot.slane %v24, %v8828
  %v8846 = vunpack.c.l.b16 %v8810
  %v8847 = vunpack.c.l.b16 %v8811
  %v8848 = vunpack.c.l.b16 %v8812
  %v8849 = vunpack.c.l.b16 %v8813
  %v8850 = vunpack.c.l.b16 %v8814
  %v8851 = vunpack.c.l.b16 %v8815
  %v8852 = vunpack.c.l.b16 %v8816
  %v8853 = vunpack.c.l.b16 %v8817
  %v8854 = vunpack.c.l.b16 %v8818
  %v8855 = vunpack.c.l.b16 %v8819
  %v8856 = vunpack.c.l.b16 %v8820
  %v8857 = vunpack.c.l.b16 %v8821
  %v8858 = vunpack.c.l.b16 %v8822
  %v8859 = vunpack.c.l.b16 %v8823
  %v8860 = vunpack.c.l.b16 %v8824
  %v8861 = vunpack.c.l.b16 %v8825
  %v8862 = vpack.c.b16 %v8847, %v8846
  %v8863 = vpack.c.b16 %v8849, %v8848
  %v8864 = vpack.c.b16 %v8851, %v8850
  %v8865 = vpack.c.b16 %v8853, %v8852
  %v8866 = vpack.c.b16 %v8855, %v8854
  %v8867 = vpack.c.b16 %v8857, %v8856
  %v8868 = vpack.c.b16 %v8859, %v8858
  %v8869 = vpack.c.b16 %v8861, %v8860
  %8878 = vmatprep.subr.bf16.mxu0 0
  %8879 = vmatpush1.bf16.msra.mxu0 %v8862
  %8880 = vmatprep.subr.bf16.mxu0 0
  %8881 = vmatpush1.bf16.msra.mxu0 %v8863
  %8882 = vmatprep.subr.bf16.mxu0 0
  %8883 = vmatpush1.bf16.msra.mxu0 %v8864
  %8884 = vmatprep.subr.bf16.mxu0 0
  %8885 = vmatpush1.bf16.msra.mxu0 %v8865
  %8886 = vmatprep.subr.bf16.mxu0 0
  %8887 = vmatpush1.bf16.msra.mxu0 %v8866
  %8888 = vmatprep.subr.bf16.mxu0 0
  %8889 = vmatpush1.bf16.msra.mxu0 %v8867
  %8890 = vmatprep.subr.bf16.mxu0 0
  %8891 = vmatpush1.bf16.msra.mxu0 %v8868
  %8892 = vmatprep.subr.bf16.mxu0 0
  %8893 = vmatpush1.bf16.msra.mxu0 %v8869
  %8894 = vmatprep.subr.bf16.mxu0 0
  %8895 = vmatpush1.bf16.msra.mxu0 0
  %8896 = vmatprep.subr.bf16.mxu0 0
  %8897 = vmatpush1.bf16.msra.mxu0 0
  %8898 = vmatprep.subr.bf16.mxu0 0
  %8899 = vmatpush1.bf16.msra.mxu0 0
  %8900 = vmatprep.subr.bf16.mxu0 0
  %8901 = vmatpush1.bf16.msra.mxu0 0
  %8902 = vmatprep.subr.bf16.mxu0 0
  %8903 = vmatpush1.bf16.msra.mxu0 0
  %8904 = vmatprep.subr.bf16.mxu0 0
  %8905 = vmatpush1.bf16.msra.mxu0 0
  %8906 = vmatprep.subr.bf16.mxu0 0
  %8907 = vmatpush1.bf16.msra.mxu0 0
  %8908 = vmatprep.subr.bf16.mxu0 0
  %8909 = vmatpush1.bf16.msra.mxu0 0
  %8910 = vmatprep.mubr.bf16.mxu0 0
  %8911 = vmatmul.mubr.bf16.gmra.mrb[0].mxu0 %v8809
  %v8912 = vpop.f32.mrb[0].mxu0
  %v8913 = vadd.f32 %v8829, %v8912
  %v8914 = vpop.f32.mrb[0].mxu0
  %v8915 = vpop.f32.mrb[0].mxu0
  %v8916 = vpop.f32.mrb[0].mxu0
  %8917 = vdwg.mxu0
  %8918 = vst [vmem:[%s5] sm:$0xff] %v8913
  // Predicated region
  $region22: #{cnn_forward.1} parent=0 // pred_check
    _
  $region23: #{cnn_forward.1} parent=0 // pred_check_branch
    %8920 = sbr.rel (0) target = $region25
  $region24: #{cnn_forward.1} parent=0 // pred_region
    _
  $region25: #{cnn_forward.1} parent=0 // pred_fallthru
    _
  // Predicated region
  $region26: #{cnn_forward.1} parent=0 // pred_check
    _
  $region27: #{cnn_forward.1} parent=0 // pred_check_branch
    %8922 = sbr.rel (0) target = $region29
  $region28: #{cnn_forward.1} parent=0 // pred_region
    _
  $region29: #{cnn_forward.1} parent=0 // pred_fallthru
    _

</llo_original>
